<compile_context>
chip_gen: v5e
topology: v5e:2x2
jax: 0.10.0
libtpu: 0.0.40
codegen_flags: <defaults>
</compile_context>

<pallas_src>
import numpy as np
import jax
import jax.numpy as jnp
from jax import lax
from jax.experimental import pallas as pl
from jax.experimental.pallas import tpu as pltpu

# ---------------- CQT constants (librosa defaults) ----------------
SR = 8000                          # module's sampling_rate (kept small)
FMIN = 32.70319566257483           # librosa.note_to_hz('C1')
N_BINS = 84
BINS_PER_OCTAVE = 12
HOP = 512
AMIN = 1e-5                        # amplitude_to_db default (amplitude domain)
TOP_DB = 80.0
N_FRAMES = 126                     # module hard-codes output (84, 126)
SIG_LEN = (N_FRAMES - 1) * HOP     # 64000 -> 1 + 64000 // 512 = 126 frames

T_PAD = 128                        # frames padded to MXU-friendly M
K_PAD = 128                        # bins padded to lane width; fused re|im -> 256 lanes
CHUNK = HOP                        # per-dot K tile (== hop so lhs slices stay contiguous)


def _make_cqt_basis(sr):
    """Complex constant-Q filter bank, deterministic (no checkpoint)."""
    Q = 1.0 / (2.0 ** (1.0 / BINS_PER_OCTAVE) - 1.0)
    freqs = FMIN * 2.0 ** (np.arange(N_BINS) / BINS_PER_OCTAVE)
    lengths = np.ceil(Q * sr / freqs).astype(np.int64)
    L = int(lengths.max())
    basis = np.zeros((N_BINS, L), dtype=np.complex128)
    for k in range(N_BINS):
        l = int(lengths[k])
        n = np.arange(l)
        win = 0.5 - 0.5 * np.cos(2.0 * np.pi * n / l)          # periodic hann
        sig = win * np.exp(2j * np.pi * freqs[k] * (n - l // 2) / sr)
        sig = sig / np.abs(sig).sum()                           # L1 normalize
        start = (L - l) // 2                                    # center filter
        basis[k, start:start + l] = sig
    return basis, L


class CQTPallas:
    def __init__(self, sampling_rate):
        self.sr = sampling_rate
        basis, L = _make_cqt_basis(sampling_rate)
        self.L = L
        self.n_chunks = (L + CHUNK - 1) // CHUNK                # 9 for sr=8000
        self.L_pad = self.n_chunks * CHUNK                      # 4608
        # hop-aligned (rows of CHUNK) view of the center-padded signal; the
        # kernel reads rows [a, a + T_PAD) for a in [0, n_chunks)
        need_rows = max(T_PAD + self.n_chunks - 1,
                        (SIG_LEN + 2 * (L // 2) + CHUNK - 1) // CHUNK)
        self.sig_rows = ((need_rows + 7) // 8) * 8              # sublane friendly

        # Fused constant-Q basis: [re | im] along lanes, bf16 for the MXU.
        fused = np.zeros((self.L_pad, 2 * K_PAD), dtype=np.float32)
        fused[:L, :N_BINS] = basis.real.T.astype(np.float32)
        fused[:L, K_PAD:K_PAD + N_BINS] = basis.imag.T.astype(np.float32)
        self.basis = jnp.asarray(fused, dtype=jnp.bfloat16)     # (L_pad, 256)

    # ---------------- Pallas kernel ----------------
    def _kernel(self, sig_ref, basis_ref, o_ref, acc_ref):
        # sig_ref  : (sig_rows, CHUNK)  f32   hop-aligned padded signal
        # basis_ref: (L_pad, 2*K_PAD)   bf16  fused [re | im] filter bank
        # o_ref    : (T_PAD, K_PAD)     f32   dB output (frames x bins, padded)
        # acc_ref  : (T_PAD, 2*K_PAD)   f32   MXU accumulator
        acc_ref[...] = jnp.zeros_like(acc_ref)

        # Implicit im2col: frame t, tap chunk a  ==  signal row (t + a) of the
        # (., CHUNK) view, so each lhs is a contiguous static (T_PAD, CHUNK)
        # slice.  9 bf16 dots of M=128, K=512, N=256 with f32 accumulation.
        for a in range(self.n_chunks):                          # static unroll
            lhs = sig_ref[a:a + T_PAD, :].astype(jnp.bfloat16)  # (128, 512)
            rhs = basis_ref[a * CHUNK:(a + 1) * CHUNK, :]       # (512, 256)
            acc_ref[...] += jnp.dot(lhs, rhs,
                                    preferred_element_type=jnp.float32)

        acc = acc_ref[...]
        re = acc[:, :K_PAD]                                     # lane-aligned halves
        im = acc[:, K_PAD:]
        power = re * re + im * im                               # |CQT|^2, padded

        # rows >= N_FRAMES are padding frames that overlap real signal; zero
        # them so they can never win the ref max (padded bin columns are
        # already exactly 0 because their basis columns are 0).
        row = lax.broadcasted_iota(jnp.int32, power.shape, 0)
        power = jnp.where(row < N_FRAMES, power, 0.0)

        # amplitude_to_db(|CQT|, ref=np.max, amin=1e-5, top_db=80) in the
        # power domain (no sqrt, single max-reduce; max(db) == 0 by
        # construction so the top_db clip is simply -80).
        ref_pow = jnp.max(power)
        db = (10.0 * jnp.log10(jnp.maximum(power, AMIN * AMIN))
              - 10.0 * jnp.log10(jnp.maximum(ref_pow, AMIN * AMIN)))
        o_ref[...] = jnp.maximum(db, -TOP_DB)

    def _pallas_cqt_db(self, sig):
        B = sig.shape[0]
        return pl.pallas_call(
            self._kernel,
            out_shape=jax.ShapeDtypeStruct((B, T_PAD, K_PAD), jnp.float32),
            grid_spec=pltpu.PrefetchScalarGridSpec(
                num_scalar_prefetch=0,
                grid=(B,),
                in_specs=[
                    pl.BlockSpec((None, self.sig_rows, CHUNK),
                                 lambda b: (b, 0, 0)),
                    pl.BlockSpec((self.L_pad, 2 * K_PAD),
                                 lambda b: (0, 0)),
                ],
                out_specs=pl.BlockSpec((None, T_PAD, K_PAD),
                                       lambda b: (b, 0, 0)),
                scratch_shapes=[pltpu.VMEM((T_PAD, 2 * K_PAD), jnp.float32)],
            ),
            compiler_params=pltpu.CompilerParams(
                dimension_semantics=("parallel",)),   # megacore-friendly on v7x
        )(sig, self.basis)

    # ---------------- wrapper (cheap glue: pad + reshape only) ----------------
    def __call__(self, x):
        B = x.shape[0]
        pad = self.L // 2                                       # librosa center=True
        xp = jnp.pad(x.astype(jnp.float32), ((0, 0), (pad, pad)))
        total = self.sig_rows * CHUNK
        xp = jnp.pad(xp, ((0, 0), (0, total - xp.shape[1])))
        sig = xp.reshape(B, self.sig_rows, CHUNK)               # (B, 136, 512)

        out = self._pallas_cqt_db(sig)                          # (B, 128, 128)
        # drop padding, go to torch's (batch, n_bins=84, n_frames=126) layout
        return jnp.transpose(out[:, :N_FRAMES, :N_BINS], (0, 2, 1))


if __name__ == "__main__":
    key = jax.random.PRNGKey(0)
    x = jax.random.normal(key, (2, SIG_LEN), dtype=jnp.float32)  # (B, 64000)

    cqt = CQTPallas(sampling_rate=SR)
    y = jax.block_until_ready(cqt(x))

    assert y.shape == (2, 84, 126), y.shape
    assert y.dtype == jnp.float32
    assert bool(jnp.all(jnp.isfinite(y)))
    # amplitude_to_db(ref=max) + top_db=80 => values in [-80, 0]
    assert float(jnp.max(y)) <= 1e-4 and float(jnp.min(y)) >= -80.0 - 1e-4
    print("KERNEL_OK")
</pallas_src>

<mosaic_0001>
module attributes {stable_mosaic.version = 11 : i64} {
  func.func @_kernel(%arg0: i32, %arg1: memref<1x136x512xf32, #tpu.memory_space<vmem>>, %arg2: memref<4608x256xbf16, #tpu.memory_space<vmem>>, %arg3: memref<1x128x128xf32, #tpu.memory_space<vmem>>, %arg4: memref<128x256xf32, #tpu.memory_space<vmem>>) attributes {dimension_semantics = [#tpu.dimension_semantics<parallel>], iteration_bounds = array<i64: 2>, scalar_prefetch = 0 : i64, scratch_operands = 1 : i64, tpu.core_type = #tpu.core_type<tc>, window_params = [{transform_indices = @transform_0, window_bounds = array<i64: 1, 136, 512>}, {pipeline_mode = #tpu.pipeline_mode<synchronous>, transform_indices = @transform_1, window_bounds = array<i64: 4608, 256>}, {transform_indices = @transform_2, window_bounds = array<i64: 1, 128, 128>}]} {
    %cst = arith.constant 0.000000e+00 : f32
    %0 = vector.broadcast %cst : f32 to vector<128x256xf32>
    %c0 = arith.constant 0 : index
    %c0_0 = arith.constant 0 : index
    %1 = vector.load %arg4[%c0, %c0_0] : memref<128x256xf32, #tpu.memory_space<vmem>>, vector<128x256xf32>
    tpu.vector_store %arg4[%c0, %c0_0], %0 {strides = array<i32>} : memref<128x256xf32, #tpu.memory_space<vmem>>, vector<128x256xf32>,
    %c0_1 = arith.constant 0 : index
    %c0_2 = arith.constant 0 : index
    %c0_3 = arith.constant 0 : index
    %2 = vector.load %arg1[%c0_1, %c0_2, %c0_3] : memref<1x136x512xf32, #tpu.memory_space<vmem>>, vector<1x128x512xf32>
    %3 = vector.shape_cast %2 : vector<1x128x512xf32> to vector<128x512xf32>
    %4 = arith.truncf %3 : vector<128x512xf32> to vector<128x512xbf16>
    %c0_4 = arith.constant 0 : index
    %c0_5 = arith.constant 0 : index
    %5 = vector.load %arg2[%c0_4, %c0_5] : memref<4608x256xbf16, #tpu.memory_space<vmem>>, vector<512x256xbf16>
    %c0_6 = arith.constant 0 : index
    %c0_7 = arith.constant 0 : index
    %6 = vector.load %arg4[%c0_6, %c0_7] : memref<128x256xf32, #tpu.memory_space<vmem>>, vector<128x256xf32>
    %cst_8 = arith.constant dense<0.000000e+00> : vector<128x256xf32>
    %7 = tpu.matmul %4, %5, %cst_8 {dimension_numbers = #tpu.dot_dimension_numbers<[1], [0], [0], [1], [0, 0, 1, 1], [], []>} : vector<128x512xbf16>, vector<512x256xbf16>, vector<128x256xf32> -> vector<128x256xf32>
    %8 = arith.addf %6, %7 : vector<128x256xf32>
    %c0_9 = arith.constant 0 : index
    %c0_10 = arith.constant 0 : index
    %9 = vector.load %arg4[%c0_9, %c0_10] : memref<128x256xf32, #tpu.memory_space<vmem>>, vector<128x256xf32>
    tpu.vector_store %arg4[%c0_9, %c0_10], %8 {strides = array<i32>} : memref<128x256xf32, #tpu.memory_space<vmem>>, vector<128x256xf32>,
    %c0_11 = arith.constant 0 : index
    %c1 = arith.constant 1 : index
    %c0_12 = arith.constant 0 : index
    %10 = vector.load %arg1[%c0_11, %c1, %c0_12] : memref<1x136x512xf32, #tpu.memory_space<vmem>>, vector<1x128x512xf32>
    %11 = vector.shape_cast %10 : vector<1x128x512xf32> to vector<128x512xf32>
    %12 = arith.truncf %11 : vector<128x512xf32> to vector<128x512xbf16>
    %c512 = arith.constant 512 : index
    %c0_13 = arith.constant 0 : index
    %13 = vector.load %arg2[%c512, %c0_13] : memref<4608x256xbf16, #tpu.memory_space<vmem>>, vector<512x256xbf16>
    %c0_14 = arith.constant 0 : index
    %c0_15 = arith.constant 0 : index
    %14 = vector.load %arg4[%c0_14, %c0_15] : memref<128x256xf32, #tpu.memory_space<vmem>>, vector<128x256xf32>
    %cst_16 = arith.constant dense<0.000000e+00> : vector<128x256xf32>
    %15 = tpu.matmul %12, %13, %cst_16 {dimension_numbers = #tpu.dot_dimension_numbers<[1], [0], [0], [1], [0, 0, 1, 1], [], []>} : vector<128x512xbf16>, vector<512x256xbf16>, vector<128x256xf32> -> vector<128x256xf32>
    %16 = arith.addf %14, %15 : vector<128x256xf32>
    %c0_17 = arith.constant 0 : index
    %c0_18 = arith.constant 0 : index
    %17 = vector.load %arg4[%c0_17, %c0_18] : memref<128x256xf32, #tpu.memory_space<vmem>>, vector<128x256xf32>
    tpu.vector_store %arg4[%c0_17, %c0_18], %16 {strides = array<i32>} : memref<128x256xf32, #tpu.memory_space<vmem>>, vector<128x256xf32>,
    %c0_19 = arith.constant 0 : index
    %c2 = arith.constant 2 : index
    %c0_20 = arith.constant 0 : index
    %18 = vector.load %arg1[%c0_19, %c2, %c0_20] : memref<1x136x512xf32, #tpu.memory_space<vmem>>, vector<1x128x512xf32>
    %19 = vector.shape_cast %18 : vector<1x128x512xf32> to vector<128x512xf32>
    %20 = arith.truncf %19 : vector<128x512xf32> to vector<128x512xbf16>
    %c1024 = arith.constant 1024 : index
    %c0_21 = arith.constant 0 : index
    %21 = vector.load %arg2[%c1024, %c0_21] : memref<4608x256xbf16, #tpu.memory_space<vmem>>, vector<512x256xbf16>
    %c0_22 = arith.constant 0 : index
    %c0_23 = arith.constant 0 : index
    %22 = vector.load %arg4[%c0_22, %c0_23] : memref<128x256xf32, #tpu.memory_space<vmem>>, vector<128x256xf32>
    %cst_24 = arith.constant dense<0.000000e+00> : vector<128x256xf32>
    %23 = tpu.matmul %20, %21, %cst_24 {dimension_numbers = #tpu.dot_dimension_numbers<[1], [0], [0], [1], [0, 0, 1, 1], [], []>} : vector<128x512xbf16>, vector<512x256xbf16>, vector<128x256xf32> -> vector<128x256xf32>
    %24 = arith.addf %22, %23 : vector<128x256xf32>
    %c0_25 = arith.constant 0 : index
    %c0_26 = arith.constant 0 : index
    %25 = vector.load %arg4[%c0_25, %c0_26] : memref<128x256xf32, #tpu.memory_space<vmem>>, vector<128x256xf32>
    tpu.vector_store %arg4[%c0_25, %c0_26], %24 {strides = array<i32>} : memref<128x256xf32, #tpu.memory_space<vmem>>, vector<128x256xf32>,
    %c0_27 = arith.constant 0 : index
    %c3 = arith.constant 3 : index
    %c0_28 = arith.constant 0 : index
    %26 = vector.load %arg1[%c0_27, %c3, %c0_28] : memref<1x136x512xf32, #tpu.memory_space<vmem>>, vector<1x128x512xf32>
    %27 = vector.shape_cast %26 : vector<1x128x512xf32> to vector<128x512xf32>
    %28 = arith.truncf %27 : vector<128x512xf32> to vector<128x512xbf16>
    %c1536 = arith.constant 1536 : index
    %c0_29 = arith.constant 0 : index
    %29 = vector.load %arg2[%c1536, %c0_29] : memref<4608x256xbf16, #tpu.memory_space<vmem>>, vector<512x256xbf16>
    %c0_30 = arith.constant 0 : index
    %c0_31 = arith.constant 0 : index
    %30 = vector.load %arg4[%c0_30, %c0_31] : memref<128x256xf32, #tpu.memory_space<vmem>>, vector<128x256xf32>
    %cst_32 = arith.constant dense<0.000000e+00> : vector<128x256xf32>
    %31 = tpu.matmul %28, %29, %cst_32 {dimension_numbers = #tpu.dot_dimension_numbers<[1], [0], [0], [1], [0, 0, 1, 1], [], []>} : vector<128x512xbf16>, vector<512x256xbf16>, vector<128x256xf32> -> vector<128x256xf32>
    %32 = arith.addf %30, %31 : vector<128x256xf32>
    %c0_33 = arith.constant 0 : index
    %c0_34 = arith.constant 0 : index
    %33 = vector.load %arg4[%c0_33, %c0_34] : memref<128x256xf32, #tpu.memory_space<vmem>>, vector<128x256xf32>
    tpu.vector_store %arg4[%c0_33, %c0_34], %32 {strides = array<i32>} : memref<128x256xf32, #tpu.memory_space<vmem>>, vector<128x256xf32>,
    %c0_35 = arith.constant 0 : index
    %c4 = arith.constant 4 : index
    %c0_36 = arith.constant 0 : index
    %34 = vector.load %arg1[%c0_35, %c4, %c0_36] : memref<1x136x512xf32, #tpu.memory_space<vmem>>, vector<1x128x512xf32>
    %35 = vector.shape_cast %34 : vector<1x128x512xf32> to vector<128x512xf32>
    %36 = arith.truncf %35 : vector<128x512xf32> to vector<128x512xbf16>
    %c2048 = arith.constant 2048 : index
    %c0_37 = arith.constant 0 : index
    %37 = vector.load %arg2[%c2048, %c0_37] : memref<4608x256xbf16, #tpu.memory_space<vmem>>, vector<512x256xbf16>
    %c0_38 = arith.constant 0 : index
    %c0_39 = arith.constant 0 : index
    %38 = vector.load %arg4[%c0_38, %c0_39] : memref<128x256xf32, #tpu.memory_space<vmem>>, vector<128x256xf32>
    %cst_40 = arith.constant dense<0.000000e+00> : vector<128x256xf32>
    %39 = tpu.matmul %36, %37, %cst_40 {dimension_numbers = #tpu.dot_dimension_numbers<[1], [0], [0], [1], [0, 0, 1, 1], [], []>} : vector<128x512xbf16>, vector<512x256xbf16>, vector<128x256xf32> -> vector<128x256xf32>
    %40 = arith.addf %38, %39 : vector<128x256xf32>
    %c0_41 = arith.constant 0 : index
    %c0_42 = arith.constant 0 : index
    %41 = vector.load %arg4[%c0_41, %c0_42] : memref<128x256xf32, #tpu.memory_space<vmem>>, vector<128x256xf32>
    tpu.vector_store %arg4[%c0_41, %c0_42], %40 {strides = array<i32>} : memref<128x256xf32, #tpu.memory_space<vmem>>, vector<128x256xf32>,
    %c0_43 = arith.constant 0 : index
    %c5 = arith.constant 5 : index
    %c0_44 = arith.constant 0 : index
    %42 = vector.load %arg1[%c0_43, %c5, %c0_44] : memref<1x136x512xf32, #tpu.memory_space<vmem>>, vector<1x128x512xf32>
    %43 = vector.shape_cast %42 : vector<1x128x512xf32> to vector<128x512xf32>
    %44 = arith.truncf %43 : vector<128x512xf32> to vector<128x512xbf16>
    %c2560 = arith.constant 2560 : index
    %c0_45 = arith.constant 0 : index
    %45 = vector.load %arg2[%c2560, %c0_45] : memref<4608x256xbf16, #tpu.memory_space<vmem>>, vector<512x256xbf16>
    %c0_46 = arith.constant 0 : index
    %c0_47 = arith.constant 0 : index
    %46 = vector.load %arg4[%c0_46, %c0_47] : memref<128x256xf32, #tpu.memory_space<vmem>>, vector<128x256xf32>
    %cst_48 = arith.constant dense<0.000000e+00> : vector<128x256xf32>
    %47 = tpu.matmul %44, %45, %cst_48 {dimension_numbers = #tpu.dot_dimension_numbers<[1], [0], [0], [1], [0, 0, 1, 1], [], []>} : vector<128x512xbf16>, vector<512x256xbf16>, vector<128x256xf32> -> vector<128x256xf32>
    %48 = arith.addf %46, %47 : vector<128x256xf32>
    %c0_49 = arith.constant 0 : index
    %c0_50 = arith.constant 0 : index
    %49 = vector.load %arg4[%c0_49, %c0_50] : memref<128x256xf32, #tpu.memory_space<vmem>>, vector<128x256xf32>
    tpu.vector_store %arg4[%c0_49, %c0_50], %48 {strides = array<i32>} : memref<128x256xf32, #tpu.memory_space<vmem>>, vector<128x256xf32>,
    %c0_51 = arith.constant 0 : index
    %c6 = arith.constant 6 : index
    %c0_52 = arith.constant 0 : index
    %50 = vector.load %arg1[%c0_51, %c6, %c0_52] : memref<1x136x512xf32, #tpu.memory_space<vmem>>, vector<1x128x512xf32>
    %51 = vector.shape_cast %50 : vector<1x128x512xf32> to vector<128x512xf32>
    %52 = arith.truncf %51 : vector<128x512xf32> to vector<128x512xbf16>
    %c3072 = arith.constant 3072 : index
    %c0_53 = arith.constant 0 : index
    %53 = vector.load %arg2[%c3072, %c0_53] : memref<4608x256xbf16, #tpu.memory_space<vmem>>, vector<512x256xbf16>
    %c0_54 = arith.constant 0 : index
    %c0_55 = arith.constant 0 : index
    %54 = vector.load %arg4[%c0_54, %c0_55] : memref<128x256xf32, #tpu.memory_space<vmem>>, vector<128x256xf32>
    %cst_56 = arith.constant dense<0.000000e+00> : vector<128x256xf32>
    %55 = tpu.matmul %52, %53, %cst_56 {dimension_numbers = #tpu.dot_dimension_numbers<[1], [0], [0], [1], [0, 0, 1, 1], [], []>} : vector<128x512xbf16>, vector<512x256xbf16>, vector<128x256xf32> -> vector<128x256xf32>
    %56 = arith.addf %54, %55 : vector<128x256xf32>
    %c0_57 = arith.constant 0 : index
    %c0_58 = arith.constant 0 : index
    %57 = vector.load %arg4[%c0_57, %c0_58] : memref<128x256xf32, #tpu.memory_space<vmem>>, vector<128x256xf32>
    tpu.vector_store %arg4[%c0_57, %c0_58], %56 {strides = array<i32>} : memref<128x256xf32, #tpu.memory_space<vmem>>, vector<128x256xf32>,
    %c0_59 = arith.constant 0 : index
    %c7 = arith.constant 7 : index
    %c0_60 = arith.constant 0 : index
    %58 = vector.load %arg1[%c0_59, %c7, %c0_60] : memref<1x136x512xf32, #tpu.memory_space<vmem>>, vector<1x128x512xf32>
    %59 = vector.shape_cast %58 : vector<1x128x512xf32> to vector<128x512xf32>
    %60 = arith.truncf %59 : vector<128x512xf32> to vector<128x512xbf16>
    %c3584 = arith.constant 3584 : index
    %c0_61 = arith.constant 0 : index
    %61 = vector.load %arg2[%c3584, %c0_61] : memref<4608x256xbf16, #tpu.memory_space<vmem>>, vector<512x256xbf16>
    %c0_62 = arith.constant 0 : index
    %c0_63 = arith.constant 0 : index
    %62 = vector.load %arg4[%c0_62, %c0_63] : memref<128x256xf32, #tpu.memory_space<vmem>>, vector<128x256xf32>
    %cst_64 = arith.constant dense<0.000000e+00> : vector<128x256xf32>
    %63 = tpu.matmul %60, %61, %cst_64 {dimension_numbers = #tpu.dot_dimension_numbers<[1], [0], [0], [1], [0, 0, 1, 1], [], []>} : vector<128x512xbf16>, vector<512x256xbf16>, vector<128x256xf32> -> vector<128x256xf32>
    %64 = arith.addf %62, %63 : vector<128x256xf32>
    %c0_65 = arith.constant 0 : index
    %c0_66 = arith.constant 0 : index
    %65 = vector.load %arg4[%c0_65, %c0_66] : memref<128x256xf32, #tpu.memory_space<vmem>>, vector<128x256xf32>
    tpu.vector_store %arg4[%c0_65, %c0_66], %64 {strides = array<i32>} : memref<128x256xf32, #tpu.memory_space<vmem>>, vector<128x256xf32>,
    %c0_67 = arith.constant 0 : index
    %c8 = arith.constant 8 : index
    %c0_68 = arith.constant 0 : index
    %66 = vector.load %arg1[%c0_67, %c8, %c0_68] : memref<1x136x512xf32, #tpu.memory_space<vmem>>, vector<1x128x512xf32>
    %67 = vector.shape_cast %66 : vector<1x128x512xf32> to vector<128x512xf32>
    %68 = arith.truncf %67 : vector<128x512xf32> to vector<128x512xbf16>
    %c4096 = arith.constant 4096 : index
    %c0_69 = arith.constant 0 : index
    %69 = vector.load %arg2[%c4096, %c0_69] : memref<4608x256xbf16, #tpu.memory_space<vmem>>, vector<512x256xbf16>
    %c0_70 = arith.constant 0 : index
    %c0_71 = arith.constant 0 : index
    %70 = vector.load %arg4[%c0_70, %c0_71] : memref<128x256xf32, #tpu.memory_space<vmem>>, vector<128x256xf32>
    %cst_72 = arith.constant dense<0.000000e+00> : vector<128x256xf32>
    %71 = tpu.matmul %68, %69, %cst_72 {dimension_numbers = #tpu.dot_dimension_numbers<[1], [0], [0], [1], [0, 0, 1, 1], [], []>} : vector<128x512xbf16>, vector<512x256xbf16>, vector<128x256xf32> -> vector<128x256xf32>
    %72 = arith.addf %70, %71 : vector<128x256xf32>
    %c0_73 = arith.constant 0 : index
    %c0_74 = arith.constant 0 : index
    %73 = vector.load %arg4[%c0_73, %c0_74] : memref<128x256xf32, #tpu.memory_space<vmem>>, vector<128x256xf32>
    tpu.vector_store %arg4[%c0_73, %c0_74], %72 {strides = array<i32>} : memref<128x256xf32, #tpu.memory_space<vmem>>, vector<128x256xf32>,
    %c0_75 = arith.constant 0 : index
    %c0_76 = arith.constant 0 : index
    %74 = vector.load %arg4[%c0_75, %c0_76] : memref<128x256xf32, #tpu.memory_space<vmem>>, vector<128x256xf32>
    %75 = vector.extract_strided_slice %74 {offsets = [0, 0], sizes = [128, 128], strides = [1, 1]} : vector<128x256xf32> to vector<128x128xf32>
    %76 = vector.extract_strided_slice %74 {offsets = [0, 128], sizes = [128, 128], strides = [1, 1]} : vector<128x256xf32> to vector<128x128xf32>
    %77 = arith.mulf %75, %75 : vector<128x128xf32>
    %78 = arith.mulf %76, %76 : vector<128x128xf32>
    %79 = arith.addf %77, %78 : vector<128x128xf32>
    %80 = tpu.iota {dimensions = array<i32: 0>} : vector<128x128xi32>
    %c126_i32 = arith.constant 126 : i32
    %81 = vector.broadcast %c126_i32 : i32 to vector<128x128xi32>
    %82 = arith.cmpi slt, %80, %81 : vector<128x128xi32>
    %cst_77 = arith.constant 0.000000e+00 : f32
    %83 = vector.broadcast %cst_77 : f32 to vector<128x128xf32>
    %84 = arith.select %82, %79, %83 : vector<128x128xi1>, vector<128x128xf32>
    %85 = vector.shape_cast %84 : vector<128x128xf32> to vector<1x128x128xf32>
    %cst_78 = arith.constant dense<0xFF800000> : vector<1xf32>
    %86 = vector.multi_reduction <maximumf>, %85, %cst_78 [1, 2] : vector<1x128x128xf32> to vector<1xf32>
    %87 = vector.shape_cast %86 : vector<1xf32> to vector<1x1x1xf32>
    %88 = vector.extract %87[0, 0, 0] : f32 from vector<1x1x1xf32>
    %cst_79 = arith.constant 1.000000e-10 : f32
    %89 = vector.broadcast %cst_79 : f32 to vector<128x128xf32>
    %90 = arith.maximumf %84, %89 : vector<128x128xf32>
    %91 = math.log %90 : vector<128x128xf32>
    %cst_80 = arith.constant 0.434294492 : f32
    %92 = vector.broadcast %cst_80 : f32 to vector<128x128xf32>
    %93 = arith.mulf %91, %92 : vector<128x128xf32>
    %cst_81 = arith.constant 1.000000e+01 : f32
    %94 = vector.broadcast %cst_81 : f32 to vector<128x128xf32>
    %95 = arith.mulf %94, %93 : vector<128x128xf32>
    %cst_82 = arith.constant 1.000000e-10 : f32
    %96 = arith.maximumf %88, %cst_82 : f32
    %97 = math.log %96 : f32
    %cst_83 = arith.constant 0.434294492 : f32
    %98 = arith.mulf %97, %cst_83 : f32
    %cst_84 = arith.constant 1.000000e+01 : f32
    %99 = arith.mulf %cst_84, %98 : f32
    %100 = vector.broadcast %99 : f32 to vector<128x128xf32>
    %101 = arith.subf %95, %100 : vector<128x128xf32>
    %cst_85 = arith.constant -8.000000e+01 : f32
    %102 = vector.broadcast %cst_85 : f32 to vector<128x128xf32>
    %103 = arith.maximumf %101, %102 : vector<128x128xf32>
    %c0_86 = arith.constant 0 : index
    %c0_87 = arith.constant 0 : index
    %c0_88 = arith.constant 0 : index
    %104 = vector.load %arg3[%c0_86, %c0_87, %c0_88] : memref<1x128x128xf32, #tpu.memory_space<vmem>>, vector<1x128x128xf32>
    %105 = vector.shape_cast %104 : vector<1x128x128xf32> to vector<128x128xf32>
    %106 = vector.shape_cast %103 : vector<128x128xf32> to vector<1x128x128xf32>
    tpu.vector_store %arg3[%c0_86, %c0_87, %c0_88], %106 {strides = array<i32>} : memref<1x128x128xf32, #tpu.memory_space<vmem>>, vector<1x128x128xf32>,
    return
  }
  func.func @transform_0(%arg0: i32) -> (i32, i32, i32) {
    %c0_i32 = arith.constant 0 : i32
    %c0_i32_0 = arith.constant 0 : i32
    %c0_i32_1 = arith.constant 0 : i32
    return %arg0, %c0_i32, %c0_i32_0 : i32, i32, i32
  }
  func.func @transform_1(%arg0: i32) -> (i32, i32) {
    %c0_i32 = arith.constant 0 : i32
    %c0_i32_0 = arith.constant 0 : i32
    %c0_i32_1 = arith.constant 0 : i32
    return %c0_i32, %c0_i32_0 : i32, i32
  }
  func.func @transform_2(%arg0: i32) -> (i32, i32, i32) {
    %c0_i32 = arith.constant 0 : i32
    %c0_i32_0 = arith.constant 0 : i32
    %c0_i32_1 = arith.constant 0 : i32
    return %arg0, %c0_i32, %c0_i32_0 : i32, i32, i32
  }
}

</mosaic_0001>

<llo_original>
// kernel: tpu_custom_call.1
$region0: #{tpu_custom_call.1}
  #allocation0 [shape = 'u32[]', space=smem, size = 0x4, offset = 0x4, fixed_abs, tag = 'smem constant byte address 0x4 - core index']
  #allocation1 [shape = 'u32[72,128]{1,0:T(1,128)}', space=vmem, size = 0x9000, scoped, tag = 'internal scratch']
  #allocation2 [shape = 'f32[128,256]{1,0:T(8,128)}', space=vmem, size = 0x20000, scoped, tag = 'scratch operand']
  %s0 = inlined_call_operand.hbm [shape: f32[2,136,512], index: 0, kind: input, shape index: {}]
  %s1 = inlined_call_operand.hbm [shape: bf16[4608,256], index: 1, kind: input, shape index: {}]
  %s2 = inlined_call_operand.hbm [shape: f32[2,128,128], index: 2, kind: output, shape index: {}]
  %s3 = sld [smem:[#allocation0]]
  $region49: #{tpu_custom_call.1} parent=0
    _
  %s5 = ssub.s32 1, %s3
  %s6 = scalar_select 0, %s5, %s3
  $region1: #{tpu_custom_call.1} parent=0
    #allocation3 [shape = 'u8[557056]{0}', space=vmem, size = 0x88000, scoped, tag = 'input window, operand 0']
    #allocation4 [shape = 's32[2]{0}', space=sflag, size = 0x8, scoped, tag = 'scoped memory for tpu_custom_call.1']
    #allocation5 [shape = 's32[2]{0}', space=sflag, size = 0x8, scoped, tag = 'scoped memory for tpu_custom_call.1']
    #allocation6 [shape = 'u8[2359296]{0}', space=vmem, size = 0x240000, scoped, tag = 'input window, operand 1, single buffered']
    #allocation7 [shape = 's32[1]{0}', space=sflag, size = 0x4, scoped, tag = 'scoped memory for tpu_custom_call.1']
    #allocation8 [shape = 'u8[131072]{0}', space=vmem, size = 0x20000, scoped, tag = 'output window, operand 0']
    %7 = vsyncpa [#allocation4], 0
    %s8 = scalar_lea.sflag [#allocation4], 1
    %9 = vsyncpa %s8, 0
    %10 = vsyncpa [#allocation7], 0
    %11 = vsyncpa [#allocation5], 0
    %s12 = scalar_lea.sflag [#allocation5], 1
    %13 = vsyncpa %s12, 0
    loop: start=0, step=1, limit=4
    $region2: #{tpu_custom_call.1} parent=1 // loop_pre_header
      _
    $region3: #{tpu_custom_call.1} parent=1 // loop_header
      %s15 = sphi 0, %s19
      %p16 = scmp.ge.s32.totalorder %s15, 4
      %s25 = sphi 0, %s27
      %s28 = sphi 0, %s25
      %s29 = sphi 0, %s28
      %s45 = sphi 0, %s29
      %s49 = sphi 0, %s49
      %s51 = sphi 0, %s49
      %s52 = sphi 0, %s51
      %s66 = sphi 0, %s52
      %s72 = sphi 0, %s74
      %s75 = sphi 0, %s72
      %s76 = sphi 0, %s75
      %s92 = sphi 0, %s76
    $region4: #{tpu_custom_call.1} parent=1 // loop_header_branch
      %18 = sbr.rel (%p16) target = $region8
    $region5: #{tpu_custom_call.1} parent=1 // loop_body
      %s20 = ssub.s32 %s15, 1
      %s21 = ssub.s32 %s15, 2
      %s22 = sadd.s32 %s15, 1
      %s23 = ssub.s32 %s15, %s22
      %p24 = scmp.eq.s32.totalorder %s23, 0
      %s26 = sadd.s32 %s25, 1
      %s27 = scalar_select %p24, %s25, %s26
      %p30 = pneg %p24
      %p31 = scmp.eq.s32.totalorder %s15, 1
      %p32 = por %p30, %p31
      %p33 = scmp.ne.s32.totalorder %s25, %s28
      %p34 = scmp.eq.s32.totalorder %s15, 0
      %p35 = por %p33, %p34
      %p36 = scmp.ne.s32.totalorder %s25, %s28
      %p37 = scmp.eq.s32.totalorder %s20, 1
      %p38 = por %p36, %p37
      %p39 = scmp.ne.s32.totalorder %s28, %s29
      %p40 = scmp.eq.s32.totalorder %s20, 0
      %p41 = por %p39, %p40
      %p42 = scmp.ne.s32.totalorder %s28, %s29
      %p43 = scmp.eq.s32.totalorder %s21, 1
      %p44 = por %p42, %p43
      %p46 = scmp.ne.s32.totalorder %s29, %s45
      %p47 = scmp.eq.s32.totalorder %s21, 0
      %p48 = por %p46, %p47
      %s50 = sadd.s32 %s49, 1
      %p53 = scmp.eq.s32.totalorder %s15, 1
      %p54 = scmp.ne.s32.totalorder %s49, %s51
      %p55 = scmp.eq.s32.totalorder %s15, 0
      %p56 = por %p54, %p55
      %p57 = scmp.ne.s32.totalorder %s49, %s51
      %p58 = scmp.eq.s32.totalorder %s20, 1
      %p59 = por %p57, %p58
      %p60 = scmp.ne.s32.totalorder %s51, %s52
      %p61 = scmp.eq.s32.totalorder %s20, 0
      %p62 = por %p60, %p61
      %p63 = scmp.ne.s32.totalorder %s51, %s52
      %p64 = scmp.eq.s32.totalorder %s21, 1
      %p65 = por %p63, %p64
      %p67 = scmp.ne.s32.totalorder %s52, %s66
      %p68 = scmp.eq.s32.totalorder %s21, 0
      %p69 = por %p67, %p68
      %s70 = ssub.s32 %s15, %s22
      %p71 = scmp.eq.s32.totalorder %s70, 0
      %s73 = sadd.s32 %s72, 1
      %s74 = scalar_select %p71, %s72, %s73
      %p77 = pneg %p71
      %p78 = scmp.eq.s32.totalorder %s15, 1
      %p79 = por %p77, %p78
      %p80 = scmp.ne.s32.totalorder %s72, %s75
      %p81 = scmp.eq.s32.totalorder %s15, 0
      %p82 = por %p80, %p81
      %p83 = scmp.ne.s32.totalorder %s72, %s75
      %p84 = scmp.eq.s32.totalorder %s20, 1
      %p85 = por %p83, %p84
      %p86 = scmp.ne.s32.totalorder %s75, %s76
      %p87 = scmp.eq.s32.totalorder %s20, 0
      %p88 = por %p86, %p87
      %p89 = scmp.ne.s32.totalorder %s75, %s76
      %p90 = scmp.eq.s32.totalorder %s21, 1
      %p91 = por %p89, %p90
      %p93 = scmp.ne.s32.totalorder %s76, %s92
      %p94 = scmp.eq.s32.totalorder %s21, 0
      %p95 = por %p93, %p94
      %p96 = scmp.le.s32.totalorder 1, %s15
      %p97 = scmp.lt.s32.totalorder %s15, 3
      %p98 = pnand %p96, %p97
      %p99 = pneg %p98
      // Predicated region
      $region9: #{tpu_custom_call.1} parent=5 // pred_check
        _
      $region10: #{tpu_custom_call.1} parent=5 // pred_check_branch
        %101 = sbr.rel (%p98) target = $region12
      $region11: #{tpu_custom_call.1} parent=5 // pred_region
        %s102 = ssub.s32 %s15, 1
        // Predicated region
        $region13: #{tpu_custom_call.1} parent=11 // pred_check
          %p103 = pneg %p62
        $region14: #{tpu_custom_call.1} parent=11 // pred_check_branch
          %105 = sbr.rel (%p103) target = $region16
        $region15: #{tpu_custom_call.1} parent=11 // pred_region
          %107 = vsyncadd [#allocation7], 0
          %s108 = sshll.u32 %s1, 4
          %s109 = int_to_ptr.hbm [resolvable:$true] %s108
          %s110 = sshll.u32 [#allocation6], 4
          %s111 = int_to_ptr.vmem [resolvable:$true] %s110
          %116 = dma.hbm_to_vmem [thread:$0]  %s109, 73728, %s111, [#allocation7], 128, 128, 8
        $region16: #{tpu_custom_call.1} parent=11 // pred_fallthru
          _
      $region12: #{tpu_custom_call.1} parent=5 // pred_fallthru
        _
      %p117 = scmp.lt.s32.totalorder %s15, 2
      // Predicated region
      $region17: #{tpu_custom_call.1} parent=5 // pred_check
        %p118 = pneg %p117
      $region18: #{tpu_custom_call.1} parent=5 // pred_check_branch
        %120 = sbr.rel (%p118) target = $region20
      $region19: #{tpu_custom_call.1} parent=5 // pred_region
        // Predicated region
        $region21: #{tpu_custom_call.1} parent=19 // pred_check
          %p121 = pneg %p35
        $region22: #{tpu_custom_call.1} parent=19 // pred_check_branch
          %123 = sbr.rel (%p121) target = $region24
        $region23: #{tpu_custom_call.1} parent=19 // pred_region
          %s124 = sand.u32 %s25, 1
          %s125 = scalar_lea.sflag [#allocation4], %s124
          %s126 = sand.u32 %s25, 1
          %s127 = smul.addr %s126, 544
          %s128 = scalar_lea.vmem [#allocation3], %s127
          %130 = vsyncadd %s125, 0
          %s131 = smul.addr %s15, 68
          %s132 = smul.addr %s131, 8
          %s133 = scalar_lea.hbm %s0, %s132
          %s134 = sshll.u32 %s133, 4
          %s135 = int_to_ptr.hbm [resolvable:$true] %s134
          %s136 = sshll.u32 %s128, 4
          %s137 = int_to_ptr.vmem [resolvable:$true] %s136
          %142 = dma.hbm_to_vmem [thread:$0]  %s135, 8704, %s137, %s125, 512, 512, 32
        $region24: #{tpu_custom_call.1} parent=19 // pred_fallthru
          _
      $region20: #{tpu_custom_call.1} parent=5 // pred_fallthru
        _
      %p143 = scmp.le.s32.totalorder 1, %s15
      %p144 = scmp.lt.s32.totalorder %s15, 3
      %p145 = pnand %p143, %p144
      %p146 = pneg %p145
      // Predicated region
      $region25: #{tpu_custom_call.1} parent=5 // pred_check
        _
      $region26: #{tpu_custom_call.1} parent=5 // pred_check_branch
        %148 = sbr.rel (%p145) target = $region28
      $region27: #{tpu_custom_call.1} parent=5 // pred_region
        %s149 = ssub.s32 %s15, 1
        %s150 = sand.u32 %s28, 1
        %s151 = scalar_lea.sflag [#allocation4], %s150
        %s152 = sand.u32 %s28, 1
        %s153 = smul.addr %s152, 544
        %s154 = scalar_lea.vmem [#allocation3], %s153
        // Predicated region
        $region29: #{tpu_custom_call.1} parent=27 // pred_check
          %p155 = pneg %p41
        $region30: #{tpu_custom_call.1} parent=27 // pred_check_branch
          %157 = sbr.rel (%p155) target = $region32
        $region31: #{tpu_custom_call.1} parent=27 // pred_region
          %159 = dma.done %s151, 8704
        $region32: #{tpu_custom_call.1} parent=27 // pred_fallthru
          _
        // Predicated region
        $region33: #{tpu_custom_call.1} parent=27 // pred_check
          %p160 = pneg %p62
        $region34: #{tpu_custom_call.1} parent=27 // pred_check_branch
          %162 = sbr.rel (%p160) target = $region36
        $region35: #{tpu_custom_call.1} parent=27 // pred_region
          %164 = dma.done [#allocation7], 73728
        $region36: #{tpu_custom_call.1} parent=27 // pred_fallthru
          _
        %s165 = sand.u32 %s28, 1
        %s166 = scalar_lea.sflag [#allocation4], %s165
        %s167 = sand.u32 %s28, 1
        %s168 = smul.addr %s167, 544
        %s169 = scalar_lea.vmem [#allocation3], %s168
        %p170 = pneg %p41
        %p171 = pneg %p38
        %p172 = pneg %p62
        %p173 = pneg %p59
        %p174 = pneg %p88
        %p175 = pneg %p85
        %s176 = sand.u32 %s75, 1
        %s177 = scalar_lea.sflag [#allocation5], %s176
        %s178 = sand.u32 %s75, 1
        %s179 = smul.addr %s178, 128
        %s180 = scalar_lea.vmem [#allocation8], %s179
        %181 = vst [vmem:[#allocation2] sm:$0xff] 0.0
        %182 = vst [vmem:[#allocation2 + $0x8] sm:$0xff] 0.0
        %183 = vst [vmem:[#allocation2 + $0x10] sm:$0xff] 0.0
        %184 = vst [vmem:[#allocation2 + $0x18] sm:$0xff] 0.0
        %185 = vst [vmem:[#allocation2 + $0x20] sm:$0xff] 0.0
        %186 = vst [vmem:[#allocation2 + $0x28] sm:$0xff] 0.0
        %187 = vst [vmem:[#allocation2 + $0x30] sm:$0xff] 0.0
        %188 = vst [vmem:[#allocation2 + $0x38] sm:$0xff] 0.0
        %189 = vst [vmem:[#allocation2 + $0x40] sm:$0xff] 0.0
        %190 = vst [vmem:[#allocation2 + $0x48] sm:$0xff] 0.0
        %191 = vst [vmem:[#allocation2 + $0x50] sm:$0xff] 0.0
        %192 = vst [vmem:[#allocation2 + $0x58] sm:$0xff] 0.0
        %193 = vst [vmem:[#allocation2 + $0x60] sm:$0xff] 0.0
        %194 = vst [vmem:[#allocation2 + $0x68] sm:$0xff] 0.0
        %195 = vst [vmem:[#allocation2 + $0x70] sm:$0xff] 0.0
        %196 = vst [vmem:[#allocation2 + $0x78] sm:$0xff] 0.0
        %197 = vst [vmem:[#allocation2 + $0x80] sm:$0xff] 0.0
        %198 = vst [vmem:[#allocation2 + $0x88] sm:$0xff] 0.0
        %199 = vst [vmem:[#allocation2 + $0x90] sm:$0xff] 0.0
        %200 = vst [vmem:[#allocation2 + $0x98] sm:$0xff] 0.0
        %201 = vst [vmem:[#allocation2 + $0xa0] sm:$0xff] 0.0
        %202 = vst [vmem:[#allocation2 + $0xa8] sm:$0xff] 0.0
        %203 = vst [vmem:[#allocation2 + $0xb0] sm:$0xff] 0.0
        %204 = vst [vmem:[#allocation2 + $0xb8] sm:$0xff] 0.0
        %205 = vst [vmem:[#allocation2 + $0xc0] sm:$0xff] 0.0
        %206 = vst [vmem:[#allocation2 + $0xc8] sm:$0xff] 0.0
        %207 = vst [vmem:[#allocation2 + $0xd0] sm:$0xff] 0.0
        %208 = vst [vmem:[#allocation2 + $0xd8] sm:$0xff] 0.0
        %209 = vst [vmem:[#allocation2 + $0xe0] sm:$0xff] 0.0
        %210 = vst [vmem:[#allocation2 + $0xe8] sm:$0xff] 0.0
        %211 = vst [vmem:[#allocation2 + $0xf0] sm:$0xff] 0.0
        %212 = vst [vmem:[#allocation2 + $0xf8] sm:$0xff] 0.0
        %v213 = vld [vmem:[%s154] sm:$0xff]
        %v214 = vld [vmem:[%s154 + $0x8] sm:$0xff]
        %v215 = vld [vmem:[%s154 + $0x10] sm:$0xff]
        %v216 = vld [vmem:[%s154 + $0x18] sm:$0xff]
        %v217 = vld [vmem:[%s154 + $0x20] sm:$0xff]
        %v218 = vld [vmem:[%s154 + $0x28] sm:$0xff]
        %v219 = vld [vmem:[%s154 + $0x30] sm:$0xff]
        %v220 = vld [vmem:[%s154 + $0x38] sm:$0xff]
        %v221 = vld [vmem:[%s154 + $0x40] sm:$0xff]
        %v222 = vld [vmem:[%s154 + $0x48] sm:$0xff]
        %v223 = vld [vmem:[%s154 + $0x50] sm:$0xff]
        %v224 = vld [vmem:[%s154 + $0x58] sm:$0xff]
        %v225 = vld [vmem:[%s154 + $0x60] sm:$0xff]
        %v226 = vld [vmem:[%s154 + $0x68] sm:$0xff]
        %v227 = vld [vmem:[%s154 + $0x70] sm:$0xff]
        %v228 = vld [vmem:[%s154 + $0x78] sm:$0xff]
        %v229 = vld [vmem:[%s154 + $0x80] sm:$0xff]
        %v230 = vld [vmem:[%s154 + $0x88] sm:$0xff]
        %v231 = vld [vmem:[%s154 + $0x90] sm:$0xff]
        %v232 = vld [vmem:[%s154 + $0x98] sm:$0xff]
        %v233 = vld [vmem:[%s154 + $0xa0] sm:$0xff]
        %v234 = vld [vmem:[%s154 + $0xa8] sm:$0xff]
        %v235 = vld [vmem:[%s154 + $0xb0] sm:$0xff]
        %v236 = vld [vmem:[%s154 + $0xb8] sm:$0xff]
        %v237 = vld [vmem:[%s154 + $0xc0] sm:$0xff]
        %v238 = vld [vmem:[%s154 + $0xc8] sm:$0xff]
        %v239 = vld [vmem:[%s154 + $0xd0] sm:$0xff]
        %v240 = vld [vmem:[%s154 + $0xd8] sm:$0xff]
        %v241 = vld [vmem:[%s154 + $0xe0] sm:$0xff]
        %v242 = vld [vmem:[%s154 + $0xe8] sm:$0xff]
        %v243 = vld [vmem:[%s154 + $0xf0] sm:$0xff]
        %v244 = vld [vmem:[%s154 + $0xf8] sm:$0xff]
        %v245 = vld [vmem:[%s154 + $0x100] sm:$0xff]
        %v246 = vld [vmem:[%s154 + $0x108] sm:$0xff]
        %v247 = vld [vmem:[%s154 + $0x110] sm:$0xff]
        %v248 = vld [vmem:[%s154 + $0x118] sm:$0xff]
        %v249 = vld [vmem:[%s154 + $0x120] sm:$0xff]
        %v250 = vld [vmem:[%s154 + $0x128] sm:$0xff]
        %v251 = vld [vmem:[%s154 + $0x130] sm:$0xff]
        %v252 = vld [vmem:[%s154 + $0x138] sm:$0xff]
        %v253 = vld [vmem:[%s154 + $0x140] sm:$0xff]
        %v254 = vld [vmem:[%s154 + $0x148] sm:$0xff]
        %v255 = vld [vmem:[%s154 + $0x150] sm:$0xff]
        %v256 = vld [vmem:[%s154 + $0x158] sm:$0xff]
        %v257 = vld [vmem:[%s154 + $0x160] sm:$0xff]
        %v258 = vld [vmem:[%s154 + $0x168] sm:$0xff]
        %v259 = vld [vmem:[%s154 + $0x170] sm:$0xff]
        %v260 = vld [vmem:[%s154 + $0x178] sm:$0xff]
        %v261 = vld [vmem:[%s154 + $0x180] sm:$0xff]
        %v262 = vld [vmem:[%s154 + $0x188] sm:$0xff]
        %v263 = vld [vmem:[%s154 + $0x190] sm:$0xff]
        %v264 = vld [vmem:[%s154 + $0x198] sm:$0xff]
        %v265 = vld [vmem:[%s154 + $0x1a0] sm:$0xff]
        %v266 = vld [vmem:[%s154 + $0x1a8] sm:$0xff]
        %v267 = vld [vmem:[%s154 + $0x1b0] sm:$0xff]
        %v268 = vld [vmem:[%s154 + $0x1b8] sm:$0xff]
        %v269 = vld [vmem:[%s154 + $0x1c0] sm:$0xff]
        %v270 = vld [vmem:[%s154 + $0x1c8] sm:$0xff]
        %v271 = vld [vmem:[%s154 + $0x1d0] sm:$0xff]
        %v272 = vld [vmem:[%s154 + $0x1d8] sm:$0xff]
        %v273 = vld [vmem:[%s154 + $0x1e0] sm:$0xff]
        %v274 = vld [vmem:[%s154 + $0x1e8] sm:$0xff]
        %v275 = vld [vmem:[%s154 + $0x1f0] sm:$0xff]
        %v276 = vld [vmem:[%s154 + $0x1f8] sm:$0xff]
        %v277 = vpack.c.bf16 %v217, %v213
        %v278 = vpack.c.bf16 %v218, %v214
        %v279 = vpack.c.bf16 %v219, %v215
        %v280 = vpack.c.bf16 %v220, %v216
        %v281 = vpack.c.bf16 %v225, %v221
        %v282 = vpack.c.bf16 %v226, %v222
        %v283 = vpack.c.bf16 %v227, %v223
        %v284 = vpack.c.bf16 %v228, %v224
        %v285 = vpack.c.bf16 %v233, %v229
        %v286 = vpack.c.bf16 %v234, %v230
        %v287 = vpack.c.bf16 %v235, %v231
        %v288 = vpack.c.bf16 %v236, %v232
        %v289 = vpack.c.bf16 %v241, %v237
        %v290 = vpack.c.bf16 %v242, %v238
        %v291 = vpack.c.bf16 %v243, %v239
        %v292 = vpack.c.bf16 %v244, %v240
        %v293 = vpack.c.bf16 %v249, %v245
        %v294 = vpack.c.bf16 %v250, %v246
        %v295 = vpack.c.bf16 %v251, %v247
        %v296 = vpack.c.bf16 %v252, %v248
        %v297 = vpack.c.bf16 %v257, %v253
        %v298 = vpack.c.bf16 %v258, %v254
        %v299 = vpack.c.bf16 %v259, %v255
        %v300 = vpack.c.bf16 %v260, %v256
        %v301 = vpack.c.bf16 %v265, %v261
        %v302 = vpack.c.bf16 %v266, %v262
        %v303 = vpack.c.bf16 %v267, %v263
        %v304 = vpack.c.bf16 %v268, %v264
        %v305 = vpack.c.bf16 %v273, %v269
        %v306 = vpack.c.bf16 %v274, %v270
        %v307 = vpack.c.bf16 %v275, %v271
        %v308 = vpack.c.bf16 %v276, %v272
        %v309 = vld [vmem:[#allocation6] sm:$0xff]
        %v310 = vld [vmem:[#allocation6 + $0x8] sm:$0xff]
        %v311 = vld [vmem:[#allocation6 + $0x10] sm:$0xff]
        %v312 = vld [vmem:[#allocation6 + $0x18] sm:$0xff]
        %v313 = vld [vmem:[#allocation6 + $0x20] sm:$0xff]
        %v314 = vld [vmem:[#allocation6 + $0x28] sm:$0xff]
        %v315 = vld [vmem:[#allocation6 + $0x30] sm:$0xff]
        %v316 = vld [vmem:[#allocation6 + $0x38] sm:$0xff]
        %v317 = vld [vmem:[#allocation6 + $0x40] sm:$0xff]
        %v318 = vld [vmem:[#allocation6 + $0x48] sm:$0xff]
        %v319 = vld [vmem:[#allocation6 + $0x50] sm:$0xff]
        %v320 = vld [vmem:[#allocation6 + $0x58] sm:$0xff]
        %v321 = vld [vmem:[#allocation6 + $0x60] sm:$0xff]
        %v322 = vld [vmem:[#allocation6 + $0x68] sm:$0xff]
        %v323 = vld [vmem:[#allocation6 + $0x70] sm:$0xff]
        %v324 = vld [vmem:[#allocation6 + $0x78] sm:$0xff]
        %v325 = vld [vmem:[#allocation6 + $0x80] sm:$0xff]
        %v326 = vld [vmem:[#allocation6 + $0x88] sm:$0xff]
        %v327 = vld [vmem:[#allocation6 + $0x90] sm:$0xff]
        %v328 = vld [vmem:[#allocation6 + $0x98] sm:$0xff]
        %v329 = vld [vmem:[#allocation6 + $0xa0] sm:$0xff]
        %v330 = vld [vmem:[#allocation6 + $0xa8] sm:$0xff]
        %v331 = vld [vmem:[#allocation6 + $0xb0] sm:$0xff]
        %v332 = vld [vmem:[#allocation6 + $0xb8] sm:$0xff]
        %v333 = vld [vmem:[#allocation6 + $0xc0] sm:$0xff]
        %v334 = vld [vmem:[#allocation6 + $0xc8] sm:$0xff]
        %v335 = vld [vmem:[#allocation6 + $0xd0] sm:$0xff]
        %v336 = vld [vmem:[#allocation6 + $0xd8] sm:$0xff]
        %v337 = vld [vmem:[#allocation6 + $0xe0] sm:$0xff]
        %v338 = vld [vmem:[#allocation6 + $0xe8] sm:$0xff]
        %v339 = vld [vmem:[#allocation6 + $0xf0] sm:$0xff]
        %v340 = vld [vmem:[#allocation6 + $0xf8] sm:$0xff]
        %v341 = vld [vmem:[#allocation6 + $0x100] sm:$0xff]
        %v342 = vld [vmem:[#allocation6 + $0x108] sm:$0xff]
        %v343 = vld [vmem:[#allocation6 + $0x110] sm:$0xff]
        %v344 = vld [vmem:[#allocation6 + $0x118] sm:$0xff]
        %v345 = vld [vmem:[#allocation6 + $0x120] sm:$0xff]
        %v346 = vld [vmem:[#allocation6 + $0x128] sm:$0xff]
        %v347 = vld [vmem:[#allocation6 + $0x130] sm:$0xff]
        %v348 = vld [vmem:[#allocation6 + $0x138] sm:$0xff]
        %v349 = vld [vmem:[#allocation6 + $0x140] sm:$0xff]
        %v350 = vld [vmem:[#allocation6 + $0x148] sm:$0xff]
        %v351 = vld [vmem:[#allocation6 + $0x150] sm:$0xff]
        %v352 = vld [vmem:[#allocation6 + $0x158] sm:$0xff]
        %v353 = vld [vmem:[#allocation6 + $0x160] sm:$0xff]
        %v354 = vld [vmem:[#allocation6 + $0x168] sm:$0xff]
        %v355 = vld [vmem:[#allocation6 + $0x170] sm:$0xff]
        %v356 = vld [vmem:[#allocation6 + $0x178] sm:$0xff]
        %v357 = vld [vmem:[#allocation6 + $0x180] sm:$0xff]
        %v358 = vld [vmem:[#allocation6 + $0x188] sm:$0xff]
        %v359 = vld [vmem:[#allocation6 + $0x190] sm:$0xff]
        %v360 = vld [vmem:[#allocation6 + $0x198] sm:$0xff]
        %v361 = vld [vmem:[#allocation6 + $0x1a0] sm:$0xff]
        %v362 = vld [vmem:[#allocation6 + $0x1a8] sm:$0xff]
        %v363 = vld [vmem:[#allocation6 + $0x1b0] sm:$0xff]
        %v364 = vld [vmem:[#allocation6 + $0x1b8] sm:$0xff]
        %v365 = vld [vmem:[#allocation6 + $0x1c0] sm:$0xff]
        %v366 = vld [vmem:[#allocation6 + $0x1c8] sm:$0xff]
        %v367 = vld [vmem:[#allocation6 + $0x1d0] sm:$0xff]
        %v368 = vld [vmem:[#allocation6 + $0x1d8] sm:$0xff]
        %v369 = vld [vmem:[#allocation6 + $0x1e0] sm:$0xff]
        %v370 = vld [vmem:[#allocation6 + $0x1e8] sm:$0xff]
        %v371 = vld [vmem:[#allocation6 + $0x1f0] sm:$0xff]
        %v372 = vld [vmem:[#allocation6 + $0x1f8] sm:$0xff]
        %v373 = vld [vmem:[#allocation2] sm:$0xff]
        %v374 = vld [vmem:[#allocation2 + $0x8] sm:$0xff]
        %v375 = vld [vmem:[#allocation2 + $0x10] sm:$0xff]
        %v376 = vld [vmem:[#allocation2 + $0x18] sm:$0xff]
        %v377 = vld [vmem:[#allocation2 + $0x20] sm:$0xff]
        %v378 = vld [vmem:[#allocation2 + $0x28] sm:$0xff]
        %v379 = vld [vmem:[#allocation2 + $0x30] sm:$0xff]
        %v380 = vld [vmem:[#allocation2 + $0x38] sm:$0xff]
        %v381 = vld [vmem:[#allocation2 + $0x40] sm:$0xff]
        %v382 = vld [vmem:[#allocation2 + $0x48] sm:$0xff]
        %v383 = vld [vmem:[#allocation2 + $0x50] sm:$0xff]
        %v384 = vld [vmem:[#allocation2 + $0x58] sm:$0xff]
        %v385 = vld [vmem:[#allocation2 + $0x60] sm:$0xff]
        %v386 = vld [vmem:[#allocation2 + $0x68] sm:$0xff]
        %v387 = vld [vmem:[#allocation2 + $0x70] sm:$0xff]
        %v388 = vld [vmem:[#allocation2 + $0x78] sm:$0xff]
        %v389 = vld [vmem:[#allocation2 + $0x80] sm:$0xff]
        %v390 = vld [vmem:[#allocation2 + $0x88] sm:$0xff]
        %v391 = vld [vmem:[#allocation2 + $0x90] sm:$0xff]
        %v392 = vld [vmem:[#allocation2 + $0x98] sm:$0xff]
        %v393 = vld [vmem:[#allocation2 + $0xa0] sm:$0xff]
        %v394 = vld [vmem:[#allocation2 + $0xa8] sm:$0xff]
        %v395 = vld [vmem:[#allocation2 + $0xb0] sm:$0xff]
        %v396 = vld [vmem:[#allocation2 + $0xb8] sm:$0xff]
        %v397 = vld [vmem:[#allocation2 + $0xc0] sm:$0xff]
        %v398 = vld [vmem:[#allocation2 + $0xc8] sm:$0xff]
        %v399 = vld [vmem:[#allocation2 + $0xd0] sm:$0xff]
        %v400 = vld [vmem:[#allocation2 + $0xd8] sm:$0xff]
        %v401 = vld [vmem:[#allocation2 + $0xe0] sm:$0xff]
        %v402 = vld [vmem:[#allocation2 + $0xe8] sm:$0xff]
        %v403 = vld [vmem:[#allocation2 + $0xf0] sm:$0xff]
        %v404 = vld [vmem:[#allocation2 + $0xf8] sm:$0xff]
        %v469 = vunpack.c.l.b16 %v309
        %v470 = vunpack.c.h.b16 %v309
        %v471 = vunpack.c.l.b16 %v310
        %v472 = vunpack.c.h.b16 %v310
        %v473 = vunpack.c.l.b16 %v311
        %v474 = vunpack.c.h.b16 %v311
        %v475 = vunpack.c.l.b16 %v312
        %v476 = vunpack.c.h.b16 %v312
        %v477 = vunpack.c.l.b16 %v313
        %v478 = vunpack.c.h.b16 %v313
        %v479 = vunpack.c.l.b16 %v314
        %v480 = vunpack.c.h.b16 %v314
        %v481 = vunpack.c.l.b16 %v315
        %v482 = vunpack.c.h.b16 %v315
        %v483 = vunpack.c.l.b16 %v316
        %v484 = vunpack.c.h.b16 %v316
        %v485 = vunpack.c.l.b16 %v317
        %v486 = vunpack.c.h.b16 %v317
        %v487 = vunpack.c.l.b16 %v318
        %v488 = vunpack.c.h.b16 %v318
        %v489 = vunpack.c.l.b16 %v319
        %v490 = vunpack.c.h.b16 %v319
        %v491 = vunpack.c.l.b16 %v320
        %v492 = vunpack.c.h.b16 %v320
        %v493 = vunpack.c.l.b16 %v321
        %v494 = vunpack.c.h.b16 %v321
        %v495 = vunpack.c.l.b16 %v322
        %v496 = vunpack.c.h.b16 %v322
        %v497 = vunpack.c.l.b16 %v323
        %v498 = vunpack.c.h.b16 %v323
        %v499 = vunpack.c.l.b16 %v324
        %v500 = vunpack.c.h.b16 %v324
        %v501 = vunpack.c.l.b16 %v325
        %v502 = vunpack.c.h.b16 %v325
        %v503 = vunpack.c.l.b16 %v326
        %v504 = vunpack.c.h.b16 %v326
        %v505 = vunpack.c.l.b16 %v327
        %v506 = vunpack.c.h.b16 %v327
        %v507 = vunpack.c.l.b16 %v328
        %v508 = vunpack.c.h.b16 %v328
        %v509 = vunpack.c.l.b16 %v329
        %v510 = vunpack.c.h.b16 %v329
        %v511 = vunpack.c.l.b16 %v330
        %v512 = vunpack.c.h.b16 %v330
        %v513 = vunpack.c.l.b16 %v331
        %v514 = vunpack.c.h.b16 %v331
        %v515 = vunpack.c.l.b16 %v332
        %v516 = vunpack.c.h.b16 %v332
        %v517 = vunpack.c.l.b16 %v333
        %v518 = vunpack.c.h.b16 %v333
        %v519 = vunpack.c.l.b16 %v334
        %v520 = vunpack.c.h.b16 %v334
        %v521 = vunpack.c.l.b16 %v335
        %v522 = vunpack.c.h.b16 %v335
        %v523 = vunpack.c.l.b16 %v336
        %v524 = vunpack.c.h.b16 %v336
        %v525 = vunpack.c.l.b16 %v337
        %v526 = vunpack.c.h.b16 %v337
        %v527 = vunpack.c.l.b16 %v338
        %v528 = vunpack.c.h.b16 %v338
        %v529 = vunpack.c.l.b16 %v339
        %v530 = vunpack.c.h.b16 %v339
        %v531 = vunpack.c.l.b16 %v340
        %v532 = vunpack.c.h.b16 %v340
        %v533 = vunpack.c.l.b16 %v341
        %v534 = vunpack.c.h.b16 %v341
        %v535 = vunpack.c.l.b16 %v342
        %v536 = vunpack.c.h.b16 %v342
        %v537 = vunpack.c.l.b16 %v343
        %v538 = vunpack.c.h.b16 %v343
        %v539 = vunpack.c.l.b16 %v344
        %v540 = vunpack.c.h.b16 %v344
        %v541 = vunpack.c.l.b16 %v345
        %v542 = vunpack.c.h.b16 %v345
        %v543 = vunpack.c.l.b16 %v346
        %v544 = vunpack.c.h.b16 %v346
        %v545 = vunpack.c.l.b16 %v347
        %v546 = vunpack.c.h.b16 %v347
        %v547 = vunpack.c.l.b16 %v348
        %v548 = vunpack.c.h.b16 %v348
        %v549 = vunpack.c.l.b16 %v349
        %v550 = vunpack.c.h.b16 %v349
        %v551 = vunpack.c.l.b16 %v350
        %v552 = vunpack.c.h.b16 %v350
        %v553 = vunpack.c.l.b16 %v351
        %v554 = vunpack.c.h.b16 %v351
        %v555 = vunpack.c.l.b16 %v352
        %v556 = vunpack.c.h.b16 %v352
        %v557 = vunpack.c.l.b16 %v353
        %v558 = vunpack.c.h.b16 %v353
        %v559 = vunpack.c.l.b16 %v354
        %v560 = vunpack.c.h.b16 %v354
        %v561 = vunpack.c.l.b16 %v355
        %v562 = vunpack.c.h.b16 %v355
        %v563 = vunpack.c.l.b16 %v356
        %v564 = vunpack.c.h.b16 %v356
        %v565 = vunpack.c.l.b16 %v357
        %v566 = vunpack.c.h.b16 %v357
        %v567 = vunpack.c.l.b16 %v358
        %v568 = vunpack.c.h.b16 %v358
        %v569 = vunpack.c.l.b16 %v359
        %v570 = vunpack.c.h.b16 %v359
        %v571 = vunpack.c.l.b16 %v360
        %v572 = vunpack.c.h.b16 %v360
        %v573 = vunpack.c.l.b16 %v361
        %v574 = vunpack.c.h.b16 %v361
        %v575 = vunpack.c.l.b16 %v362
        %v576 = vunpack.c.h.b16 %v362
        %v577 = vunpack.c.l.b16 %v363
        %v578 = vunpack.c.h.b16 %v363
        %v579 = vunpack.c.l.b16 %v364
        %v580 = vunpack.c.h.b16 %v364
        %v581 = vunpack.c.l.b16 %v365
        %v582 = vunpack.c.h.b16 %v365
        %v583 = vunpack.c.l.b16 %v366
        %v584 = vunpack.c.h.b16 %v366
        %v585 = vunpack.c.l.b16 %v367
        %v586 = vunpack.c.h.b16 %v367
        %v587 = vunpack.c.l.b16 %v368
        %v588 = vunpack.c.h.b16 %v368
        %v589 = vunpack.c.l.b16 %v369
        %v590 = vunpack.c.h.b16 %v369
        %v591 = vunpack.c.l.b16 %v370
        %v592 = vunpack.c.h.b16 %v370
        %v593 = vunpack.c.l.b16 %v371
        %v594 = vunpack.c.h.b16 %v371
        %v595 = vunpack.c.l.b16 %v372
        %v596 = vunpack.c.h.b16 %v372
        %v597 = vpack.c.b16 %v471, %v469
        %v598 = vpack.c.b16 %v472, %v470
        %v599 = vpack.c.b16 %v475, %v473
        %v600 = vpack.c.b16 %v476, %v474
        %v601 = vpack.c.b16 %v479, %v477
        %v602 = vpack.c.b16 %v480, %v478
        %v603 = vpack.c.b16 %v483, %v481
        %v604 = vpack.c.b16 %v484, %v482
        %v605 = vpack.c.b16 %v487, %v485
        %v606 = vpack.c.b16 %v488, %v486
        %v607 = vpack.c.b16 %v491, %v489
        %v608 = vpack.c.b16 %v492, %v490
        %v609 = vpack.c.b16 %v495, %v493
        %v610 = vpack.c.b16 %v496, %v494
        %v611 = vpack.c.b16 %v499, %v497
        %v612 = vpack.c.b16 %v500, %v498
        %v613 = vpack.c.b16 %v503, %v501
        %v614 = vpack.c.b16 %v504, %v502
        %v615 = vpack.c.b16 %v507, %v505
        %v616 = vpack.c.b16 %v508, %v506
        %v617 = vpack.c.b16 %v511, %v509
        %v618 = vpack.c.b16 %v512, %v510
        %v619 = vpack.c.b16 %v515, %v513
        %v620 = vpack.c.b16 %v516, %v514
        %v621 = vpack.c.b16 %v519, %v517
        %v622 = vpack.c.b16 %v520, %v518
        %v623 = vpack.c.b16 %v523, %v521
        %v624 = vpack.c.b16 %v524, %v522
        %v625 = vpack.c.b16 %v527, %v525
        %v626 = vpack.c.b16 %v528, %v526
        %v627 = vpack.c.b16 %v531, %v529
        %v628 = vpack.c.b16 %v532, %v530
        %v629 = vpack.c.b16 %v535, %v533
        %v630 = vpack.c.b16 %v536, %v534
        %v631 = vpack.c.b16 %v539, %v537
        %v632 = vpack.c.b16 %v540, %v538
        %v633 = vpack.c.b16 %v543, %v541
        %v634 = vpack.c.b16 %v544, %v542
        %v635 = vpack.c.b16 %v547, %v545
        %v636 = vpack.c.b16 %v548, %v546
        %v637 = vpack.c.b16 %v551, %v549
        %v638 = vpack.c.b16 %v552, %v550
        %v639 = vpack.c.b16 %v555, %v553
        %v640 = vpack.c.b16 %v556, %v554
        %v641 = vpack.c.b16 %v559, %v557
        %v642 = vpack.c.b16 %v560, %v558
        %v643 = vpack.c.b16 %v563, %v561
        %v644 = vpack.c.b16 %v564, %v562
        %v645 = vpack.c.b16 %v567, %v565
        %v646 = vpack.c.b16 %v568, %v566
        %v647 = vpack.c.b16 %v571, %v569
        %v648 = vpack.c.b16 %v572, %v570
        %v649 = vpack.c.b16 %v575, %v573
        %v650 = vpack.c.b16 %v576, %v574
        %v651 = vpack.c.b16 %v579, %v577
        %v652 = vpack.c.b16 %v580, %v578
        %v653 = vpack.c.b16 %v583, %v581
        %v654 = vpack.c.b16 %v584, %v582
        %v655 = vpack.c.b16 %v587, %v585
        %v656 = vpack.c.b16 %v588, %v586
        %v657 = vpack.c.b16 %v591, %v589
        %v658 = vpack.c.b16 %v592, %v590
        %v659 = vpack.c.b16 %v595, %v593
        %v660 = vpack.c.b16 %v596, %v594
        %725 = vmatpush.bf16.msra.mxu0 %v611
        %726 = vmatpush.bf16.msra.mxu0 %v609
        %727 = vmatpush.bf16.msra.mxu0 %v607
        %728 = vmatpush.bf16.msra.mxu0 %v605
        %729 = vmatpush.bf16.msra.mxu0 %v603
        %730 = vmatpush.bf16.msra.mxu0 %v601
        %731 = vmatpush.bf16.msra.mxu0 %v599
        %732 = vmatpush.bf16.msra.mxu0 %v597
        %733 = vmatmul.bf16.gmra.mxu0 %v277
        %v734 = vpop.f32.mrf.mxu0
        %v735 = vadd.f32 0.0, %v734
        %v736 = vpop.f32.mrf.mxu0
        %v737 = vadd.f32 0.0, %v736
        %738 = vmatmul.bf16.gmra.mxu0 %v281
        %v739 = vpop.f32.mrf.mxu0
        %v740 = vadd.f32 0.0, %v739
        %v741 = vpop.f32.mrf.mxu0
        %v742 = vadd.f32 0.0, %v741
        %743 = vmatmul.bf16.gmra.mxu0 %v285
        %v744 = vpop.f32.mrf.mxu0
        %v745 = vadd.f32 0.0, %v744
        %v746 = vpop.f32.mrf.mxu0
        %v747 = vadd.f32 0.0, %v746
        %748 = vmatmul.bf16.gmra.mxu0 %v289
        %v749 = vpop.f32.mrf.mxu0
        %v750 = vadd.f32 0.0, %v749
        %v751 = vpop.f32.mrf.mxu0
        %v752 = vadd.f32 0.0, %v751
        %753 = vmatmul.bf16.gmra.mxu0 %v293
        %v754 = vpop.f32.mrf.mxu0
        %v755 = vadd.f32 0.0, %v754
        %v756 = vpop.f32.mrf.mxu0
        %v757 = vadd.f32 0.0, %v756
        %758 = vmatmul.bf16.gmra.mxu0 %v297
        %v759 = vpop.f32.mrf.mxu0
        %v760 = vadd.f32 0.0, %v759
        %v761 = vpop.f32.mrf.mxu0
        %v762 = vadd.f32 0.0, %v761
        %763 = vmatmul.bf16.gmra.mxu0 %v301
        %v764 = vpop.f32.mrf.mxu0
        %v765 = vadd.f32 0.0, %v764
        %v766 = vpop.f32.mrf.mxu0
        %v767 = vadd.f32 0.0, %v766
        %768 = vmatmul.bf16.gmra.mxu0 %v305
        %v769 = vpop.f32.mrf.mxu0
        %v770 = vadd.f32 0.0, %v769
        %v771 = vpop.f32.mrf.mxu0
        %v772 = vadd.f32 0.0, %v771
        %773 = vdwg.mxu0
        %774 = vmatpush.bf16.msra.mxu0 %v627
        %775 = vmatpush.bf16.msra.mxu0 %v625
        %776 = vmatpush.bf16.msra.mxu0 %v623
        %777 = vmatpush.bf16.msra.mxu0 %v621
        %778 = vmatpush.bf16.msra.mxu0 %v619
        %779 = vmatpush.bf16.msra.mxu0 %v617
        %780 = vmatpush.bf16.msra.mxu0 %v615
        %781 = vmatpush.bf16.msra.mxu0 %v613
        %782 = vmatmul.bf16.gmra.mxu0 %v278
        %v783 = vpop.f32.mrf.mxu0
        %v784 = vadd.f32 %v735, %v783
        %v785 = vpop.f32.mrf.mxu0
        %v786 = vadd.f32 %v737, %v785
        %787 = vmatmul.bf16.gmra.mxu0 %v282
        %v788 = vpop.f32.mrf.mxu0
        %v789 = vadd.f32 %v740, %v788
        %v790 = vpop.f32.mrf.mxu0
        %v791 = vadd.f32 %v742, %v790
        %792 = vmatmul.bf16.gmra.mxu0 %v286
        %v793 = vpop.f32.mrf.mxu0
        %v794 = vadd.f32 %v745, %v793
        %v795 = vpop.f32.mrf.mxu0
        %v796 = vadd.f32 %v747, %v795
        %797 = vmatmul.bf16.gmra.mxu0 %v290
        %v798 = vpop.f32.mrf.mxu0
        %v799 = vadd.f32 %v750, %v798
        %v800 = vpop.f32.mrf.mxu0
        %v801 = vadd.f32 %v752, %v800
        %802 = vmatmul.bf16.gmra.mxu0 %v294
        %v803 = vpop.f32.mrf.mxu0
        %v804 = vadd.f32 %v755, %v803
        %v805 = vpop.f32.mrf.mxu0
        %v806 = vadd.f32 %v757, %v805
        %807 = vmatmul.bf16.gmra.mxu0 %v298
        %v808 = vpop.f32.mrf.mxu0
        %v809 = vadd.f32 %v760, %v808
        %v810 = vpop.f32.mrf.mxu0
        %v811 = vadd.f32 %v762, %v810
        %812 = vmatmul.bf16.gmra.mxu0 %v302
        %v813 = vpop.f32.mrf.mxu0
        %v814 = vadd.f32 %v765, %v813
        %v815 = vpop.f32.mrf.mxu0
        %v816 = vadd.f32 %v767, %v815
        %817 = vmatmul.bf16.gmra.mxu0 %v306
        %v818 = vpop.f32.mrf.mxu0
        %v819 = vadd.f32 %v770, %v818
        %v820 = vpop.f32.mrf.mxu0
        %v821 = vadd.f32 %v772, %v820
        %822 = vdwg.mxu0
        %823 = vmatpush.bf16.msra.mxu0 %v643
        %824 = vmatpush.bf16.msra.mxu0 %v641
        %825 = vmatpush.bf16.msra.mxu0 %v639
        %826 = vmatpush.bf16.msra.mxu0 %v637
        %827 = vmatpush.bf16.msra.mxu0 %v635
        %828 = vmatpush.bf16.msra.mxu0 %v633
        %829 = vmatpush.bf16.msra.mxu0 %v631
        %830 = vmatpush.bf16.msra.mxu0 %v629
        %831 = vmatmul.bf16.gmra.mxu0 %v279
        %v832 = vpop.f32.mrf.mxu0
        %v833 = vadd.f32 %v784, %v832
        %v834 = vpop.f32.mrf.mxu0
        %v835 = vadd.f32 %v786, %v834
        %836 = vmatmul.bf16.gmra.mxu0 %v283
        %v837 = vpop.f32.mrf.mxu0
        %v838 = vadd.f32 %v789, %v837
        %v839 = vpop.f32.mrf.mxu0
        %v840 = vadd.f32 %v791, %v839
        %841 = vmatmul.bf16.gmra.mxu0 %v287
        %v842 = vpop.f32.mrf.mxu0
        %v843 = vadd.f32 %v794, %v842
        %v844 = vpop.f32.mrf.mxu0
        %v845 = vadd.f32 %v796, %v844
        %846 = vmatmul.bf16.gmra.mxu0 %v291
        %v847 = vpop.f32.mrf.mxu0
        %v848 = vadd.f32 %v799, %v847
        %v849 = vpop.f32.mrf.mxu0
        %v850 = vadd.f32 %v801, %v849
        %851 = vmatmul.bf16.gmra.mxu0 %v295
        %v852 = vpop.f32.mrf.mxu0
        %v853 = vadd.f32 %v804, %v852
        %v854 = vpop.f32.mrf.mxu0
        %v855 = vadd.f32 %v806, %v854
        %856 = vmatmul.bf16.gmra.mxu0 %v299
        %v857 = vpop.f32.mrf.mxu0
        %v858 = vadd.f32 %v809, %v857
        %v859 = vpop.f32.mrf.mxu0
        %v860 = vadd.f32 %v811, %v859
        %861 = vmatmul.bf16.gmra.mxu0 %v303
        %v862 = vpop.f32.mrf.mxu0
        %v863 = vadd.f32 %v814, %v862
        %v864 = vpop.f32.mrf.mxu0
        %v865 = vadd.f32 %v816, %v864
        %866 = vmatmul.bf16.gmra.mxu0 %v307
        %v867 = vpop.f32.mrf.mxu0
        %v868 = vadd.f32 %v819, %v867
        %v869 = vpop.f32.mrf.mxu0
        %v870 = vadd.f32 %v821, %v869
        %871 = vdwg.mxu0
        %872 = vmatpush.bf16.msra.mxu0 %v659
        %873 = vmatpush.bf16.msra.mxu0 %v657
        %874 = vmatpush.bf16.msra.mxu0 %v655
        %875 = vmatpush.bf16.msra.mxu0 %v653
        %876 = vmatpush.bf16.msra.mxu0 %v651
        %877 = vmatpush.bf16.msra.mxu0 %v649
        %878 = vmatpush.bf16.msra.mxu0 %v647
        %879 = vmatpush.bf16.msra.mxu0 %v645
        %880 = vmatmul.bf16.gmra.mxu0 %v280
        %v881 = vpop.f32.mrf.mxu0
        %v882 = vadd.f32 %v833, %v881
        %v883 = vpop.f32.mrf.mxu0
        %v884 = vadd.f32 %v835, %v883
        %885 = vmatmul.bf16.gmra.mxu0 %v284
        %v886 = vpop.f32.mrf.mxu0
        %v887 = vadd.f32 %v838, %v886
        %v888 = vpop.f32.mrf.mxu0
        %v889 = vadd.f32 %v840, %v888
        %890 = vmatmul.bf16.gmra.mxu0 %v288
        %v891 = vpop.f32.mrf.mxu0
        %v892 = vadd.f32 %v843, %v891
        %v893 = vpop.f32.mrf.mxu0
        %v894 = vadd.f32 %v845, %v893
        %895 = vmatmul.bf16.gmra.mxu0 %v292
        %v896 = vpop.f32.mrf.mxu0
        %v897 = vadd.f32 %v848, %v896
        %v898 = vpop.f32.mrf.mxu0
        %v899 = vadd.f32 %v850, %v898
        %900 = vmatmul.bf16.gmra.mxu0 %v296
        %v901 = vpop.f32.mrf.mxu0
        %v902 = vadd.f32 %v853, %v901
        %v903 = vpop.f32.mrf.mxu0
        %v904 = vadd.f32 %v855, %v903
        %905 = vmatmul.bf16.gmra.mxu0 %v300
        %v906 = vpop.f32.mrf.mxu0
        %v907 = vadd.f32 %v858, %v906
        %v908 = vpop.f32.mrf.mxu0
        %v909 = vadd.f32 %v860, %v908
        %910 = vmatmul.bf16.gmra.mxu0 %v304
        %v911 = vpop.f32.mrf.mxu0
        %v912 = vadd.f32 %v863, %v911
        %v913 = vpop.f32.mrf.mxu0
        %v914 = vadd.f32 %v865, %v913
        %915 = vmatmul.bf16.gmra.mxu0 %v308
        %v916 = vpop.f32.mrf.mxu0
        %v917 = vadd.f32 %v868, %v916
        %v918 = vpop.f32.mrf.mxu0
        %v919 = vadd.f32 %v870, %v918
        %920 = vdwg.mxu0
        %921 = vmatpush.bf16.msra.mxu0 %v612
        %922 = vmatpush.bf16.msra.mxu0 %v610
        %923 = vmatpush.bf16.msra.mxu0 %v608
        %924 = vmatpush.bf16.msra.mxu0 %v606
        %925 = vmatpush.bf16.msra.mxu0 %v604
        %926 = vmatpush.bf16.msra.mxu0 %v602
        %927 = vmatpush.bf16.msra.mxu0 %v600
        %928 = vmatpush.bf16.msra.mxu0 %v598
        %929 = vmatmul.bf16.gmra.mxu0 %v277
        %v930 = vpop.f32.mrf.mxu0
        %v931 = vadd.f32 0.0, %v930
        %v932 = vpop.f32.mrf.mxu0
        %v933 = vadd.f32 0.0, %v932
        %934 = vmatmul.bf16.gmra.mxu0 %v281
        %v935 = vpop.f32.mrf.mxu0
        %v936 = vadd.f32 0.0, %v935
        %v937 = vpop.f32.mrf.mxu0
        %v938 = vadd.f32 0.0, %v937
        %939 = vmatmul.bf16.gmra.mxu0 %v285
        %v940 = vpop.f32.mrf.mxu0
        %v941 = vadd.f32 0.0, %v940
        %v942 = vpop.f32.mrf.mxu0
        %v943 = vadd.f32 0.0, %v942
        %944 = vmatmul.bf16.gmra.mxu0 %v289
        %v945 = vpop.f32.mrf.mxu0
        %v946 = vadd.f32 0.0, %v945
        %v947 = vpop.f32.mrf.mxu0
        %v948 = vadd.f32 0.0, %v947
        %949 = vmatmul.bf16.gmra.mxu0 %v293
        %v950 = vpop.f32.mrf.mxu0
        %v951 = vadd.f32 0.0, %v950
        %v952 = vpop.f32.mrf.mxu0
        %v953 = vadd.f32 0.0, %v952
        %954 = vmatmul.bf16.gmra.mxu0 %v297
        %v955 = vpop.f32.mrf.mxu0
        %v956 = vadd.f32 0.0, %v955
        %v957 = vpop.f32.mrf.mxu0
        %v958 = vadd.f32 0.0, %v957
        %959 = vmatmul.bf16.gmra.mxu0 %v301
        %v960 = vpop.f32.mrf.mxu0
        %v961 = vadd.f32 0.0, %v960
        %v962 = vpop.f32.mrf.mxu0
        %v963 = vadd.f32 0.0, %v962
        %964 = vmatmul.bf16.gmra.mxu0 %v305
        %v965 = vpop.f32.mrf.mxu0
        %v966 = vadd.f32 0.0, %v965
        %v967 = vpop.f32.mrf.mxu0
        %v968 = vadd.f32 0.0, %v967
        %969 = vdwg.mxu0
        %970 = vmatpush.bf16.msra.mxu0 %v628
        %971 = vmatpush.bf16.msra.mxu0 %v626
        %972 = vmatpush.bf16.msra.mxu0 %v624
        %973 = vmatpush.bf16.msra.mxu0 %v622
        %974 = vmatpush.bf16.msra.mxu0 %v620
        %975 = vmatpush.bf16.msra.mxu0 %v618
        %976 = vmatpush.bf16.msra.mxu0 %v616
        %977 = vmatpush.bf16.msra.mxu0 %v614
        %978 = vmatmul.bf16.gmra.mxu0 %v278
        %v979 = vpop.f32.mrf.mxu0
        %v980 = vadd.f32 %v931, %v979
        %v981 = vpop.f32.mrf.mxu0
        %v982 = vadd.f32 %v933, %v981
        %983 = vmatmul.bf16.gmra.mxu0 %v282
        %v984 = vpop.f32.mrf.mxu0
        %v985 = vadd.f32 %v936, %v984
        %v986 = vpop.f32.mrf.mxu0
        %v987 = vadd.f32 %v938, %v986
        %988 = vmatmul.bf16.gmra.mxu0 %v286
        %v989 = vpop.f32.mrf.mxu0
        %v990 = vadd.f32 %v941, %v989
        %v991 = vpop.f32.mrf.mxu0
        %v992 = vadd.f32 %v943, %v991
        %993 = vmatmul.bf16.gmra.mxu0 %v290
        %v994 = vpop.f32.mrf.mxu0
        %v995 = vadd.f32 %v946, %v994
        %v996 = vpop.f32.mrf.mxu0
        %v997 = vadd.f32 %v948, %v996
        %998 = vmatmul.bf16.gmra.mxu0 %v294
        %v999 = vpop.f32.mrf.mxu0
        %v1000 = vadd.f32 %v951, %v999
        %v1001 = vpop.f32.mrf.mxu0
        %v1002 = vadd.f32 %v953, %v1001
        %1003 = vmatmul.bf16.gmra.mxu0 %v298
        %v1004 = vpop.f32.mrf.mxu0
        %v1005 = vadd.f32 %v956, %v1004
        %v1006 = vpop.f32.mrf.mxu0
        %v1007 = vadd.f32 %v958, %v1006
        %1008 = vmatmul.bf16.gmra.mxu0 %v302
        %v1009 = vpop.f32.mrf.mxu0
        %v1010 = vadd.f32 %v961, %v1009
        %v1011 = vpop.f32.mrf.mxu0
        %v1012 = vadd.f32 %v963, %v1011
        %1013 = vmatmul.bf16.gmra.mxu0 %v306
        %v1014 = vpop.f32.mrf.mxu0
        %v1015 = vadd.f32 %v966, %v1014
        %v1016 = vpop.f32.mrf.mxu0
        %v1017 = vadd.f32 %v968, %v1016
        %1018 = vdwg.mxu0
        %1019 = vmatpush.bf16.msra.mxu0 %v644
        %1020 = vmatpush.bf16.msra.mxu0 %v642
        %1021 = vmatpush.bf16.msra.mxu0 %v640
        %1022 = vmatpush.bf16.msra.mxu0 %v638
        %1023 = vmatpush.bf16.msra.mxu0 %v636
        %1024 = vmatpush.bf16.msra.mxu0 %v634
        %1025 = vmatpush.bf16.msra.mxu0 %v632
        %1026 = vmatpush.bf16.msra.mxu0 %v630
        %1027 = vmatmul.bf16.gmra.mxu0 %v279
        %v1028 = vpop.f32.mrf.mxu0
        %v1029 = vadd.f32 %v980, %v1028
        %v1030 = vpop.f32.mrf.mxu0
        %v1031 = vadd.f32 %v982, %v1030
        %1032 = vmatmul.bf16.gmra.mxu0 %v283
        %v1033 = vpop.f32.mrf.mxu0
        %v1034 = vadd.f32 %v985, %v1033
        %v1035 = vpop.f32.mrf.mxu0
        %v1036 = vadd.f32 %v987, %v1035
        %1037 = vmatmul.bf16.gmra.mxu0 %v287
        %v1038 = vpop.f32.mrf.mxu0
        %v1039 = vadd.f32 %v990, %v1038
        %v1040 = vpop.f32.mrf.mxu0
        %v1041 = vadd.f32 %v992, %v1040
        %1042 = vmatmul.bf16.gmra.mxu0 %v291
        %v1043 = vpop.f32.mrf.mxu0
        %v1044 = vadd.f32 %v995, %v1043
        %v1045 = vpop.f32.mrf.mxu0
        %v1046 = vadd.f32 %v997, %v1045
        %1047 = vmatmul.bf16.gmra.mxu0 %v295
        %v1048 = vpop.f32.mrf.mxu0
        %v1049 = vadd.f32 %v1000, %v1048
        %v1050 = vpop.f32.mrf.mxu0
        %v1051 = vadd.f32 %v1002, %v1050
        %1052 = vmatmul.bf16.gmra.mxu0 %v299
        %v1053 = vpop.f32.mrf.mxu0
        %v1054 = vadd.f32 %v1005, %v1053
        %v1055 = vpop.f32.mrf.mxu0
        %v1056 = vadd.f32 %v1007, %v1055
        %1057 = vmatmul.bf16.gmra.mxu0 %v303
        %v1058 = vpop.f32.mrf.mxu0
        %v1059 = vadd.f32 %v1010, %v1058
        %v1060 = vpop.f32.mrf.mxu0
        %v1061 = vadd.f32 %v1012, %v1060
        %1062 = vmatmul.bf16.gmra.mxu0 %v307
        %v1063 = vpop.f32.mrf.mxu0
        %v1064 = vadd.f32 %v1015, %v1063
        %v1065 = vpop.f32.mrf.mxu0
        %v1066 = vadd.f32 %v1017, %v1065
        %1067 = vdwg.mxu0
        %1068 = vmatpush.bf16.msra.mxu0 %v660
        %1069 = vmatpush.bf16.msra.mxu0 %v658
        %1070 = vmatpush.bf16.msra.mxu0 %v656
        %1071 = vmatpush.bf16.msra.mxu0 %v654
        %1072 = vmatpush.bf16.msra.mxu0 %v652
        %1073 = vmatpush.bf16.msra.mxu0 %v650
        %1074 = vmatpush.bf16.msra.mxu0 %v648
        %1075 = vmatpush.bf16.msra.mxu0 %v646
        %1076 = vmatmul.bf16.gmra.mxu0 %v280
        %v1077 = vpop.f32.mrf.mxu0
        %v1078 = vadd.f32 %v1029, %v1077
        %v1079 = vpop.f32.mrf.mxu0
        %v1080 = vadd.f32 %v1031, %v1079
        %1081 = vmatmul.bf16.gmra.mxu0 %v284
        %v1082 = vpop.f32.mrf.mxu0
        %v1083 = vadd.f32 %v1034, %v1082
        %v1084 = vpop.f32.mrf.mxu0
        %v1085 = vadd.f32 %v1036, %v1084
        %1086 = vmatmul.bf16.gmra.mxu0 %v288
        %v1087 = vpop.f32.mrf.mxu0
        %v1088 = vadd.f32 %v1039, %v1087
        %v1089 = vpop.f32.mrf.mxu0
        %v1090 = vadd.f32 %v1041, %v1089
        %1091 = vmatmul.bf16.gmra.mxu0 %v292
        %v1092 = vpop.f32.mrf.mxu0
        %v1093 = vadd.f32 %v1044, %v1092
        %v1094 = vpop.f32.mrf.mxu0
        %v1095 = vadd.f32 %v1046, %v1094
        %1096 = vmatmul.bf16.gmra.mxu0 %v296
        %v1097 = vpop.f32.mrf.mxu0
        %v1098 = vadd.f32 %v1049, %v1097
        %v1099 = vpop.f32.mrf.mxu0
        %v1100 = vadd.f32 %v1051, %v1099
        %1101 = vmatmul.bf16.gmra.mxu0 %v300
        %v1102 = vpop.f32.mrf.mxu0
        %v1103 = vadd.f32 %v1054, %v1102
        %v1104 = vpop.f32.mrf.mxu0
        %v1105 = vadd.f32 %v1056, %v1104
        %1106 = vmatmul.bf16.gmra.mxu0 %v304
        %v1107 = vpop.f32.mrf.mxu0
        %v1108 = vadd.f32 %v1059, %v1107
        %v1109 = vpop.f32.mrf.mxu0
        %v1110 = vadd.f32 %v1061, %v1109
        %1111 = vmatmul.bf16.gmra.mxu0 %v308
        %v1112 = vpop.f32.mrf.mxu0
        %v1113 = vadd.f32 %v1064, %v1112
        %v1114 = vpop.f32.mrf.mxu0
        %v1115 = vadd.f32 %v1066, %v1114
        %1116 = vdwg.mxu0
        %v1117 = vadd.f32 %v373, %v882
        %v1118 = vadd.f32 %v374, %v1078
        %v1119 = vadd.f32 %v375, %v884
        %v1120 = vadd.f32 %v376, %v1080
        %v1121 = vadd.f32 %v377, %v887
        %v1122 = vadd.f32 %v378, %v1083
        %v1123 = vadd.f32 %v379, %v889
        %v1124 = vadd.f32 %v380, %v1085
        %v1125 = vadd.f32 %v381, %v892
        %v1126 = vadd.f32 %v382, %v1088
        %v1127 = vadd.f32 %v383, %v894
        %v1128 = vadd.f32 %v384, %v1090
        %v1129 = vadd.f32 %v385, %v897
        %v1130 = vadd.f32 %v386, %v1093
        %v1131 = vadd.f32 %v387, %v899
        %v1132 = vadd.f32 %v388, %v1095
        %v1133 = vadd.f32 %v389, %v902
        %v1134 = vadd.f32 %v390, %v1098
        %v1135 = vadd.f32 %v391, %v904
        %v1136 = vadd.f32 %v392, %v1100
        %v1137 = vadd.f32 %v393, %v907
        %v1138 = vadd.f32 %v394, %v1103
        %v1139 = vadd.f32 %v395, %v909
        %v1140 = vadd.f32 %v396, %v1105
        %v1141 = vadd.f32 %v397, %v912
        %v1142 = vadd.f32 %v398, %v1108
        %v1143 = vadd.f32 %v399, %v914
        %v1144 = vadd.f32 %v400, %v1110
        %v1145 = vadd.f32 %v401, %v917
        %v1146 = vadd.f32 %v402, %v1113
        %v1147 = vadd.f32 %v403, %v919
        %v1148 = vadd.f32 %v404, %v1115
        %1149 = vst [vmem:[#allocation2] sm:$0xff] %v1117
        %1150 = vst [vmem:[#allocation2 + $0x8] sm:$0xff] %v1118
        %1151 = vst [vmem:[#allocation2 + $0x10] sm:$0xff] %v1119
        %1152 = vst [vmem:[#allocation2 + $0x18] sm:$0xff] %v1120
        %1153 = vst [vmem:[#allocation2 + $0x20] sm:$0xff] %v1121
        %1154 = vst [vmem:[#allocation2 + $0x28] sm:$0xff] %v1122
        %1155 = vst [vmem:[#allocation2 + $0x30] sm:$0xff] %v1123
        %1156 = vst [vmem:[#allocation2 + $0x38] sm:$0xff] %v1124
        %1157 = vst [vmem:[#allocation2 + $0x40] sm:$0xff] %v1125
        %1158 = vst [vmem:[#allocation2 + $0x48] sm:$0xff] %v1126
        %1159 = vst [vmem:[#allocation2 + $0x50] sm:$0xff] %v1127
        %1160 = vst [vmem:[#allocation2 + $0x58] sm:$0xff] %v1128
        %1161 = vst [vmem:[#allocation2 + $0x60] sm:$0xff] %v1129
        %1162 = vst [vmem:[#allocation2 + $0x68] sm:$0xff] %v1130
        %1163 = vst [vmem:[#allocation2 + $0x70] sm:$0xff] %v1131
        %1164 = vst [vmem:[#allocation2 + $0x78] sm:$0xff] %v1132
        %1165 = vst [vmem:[#allocation2 + $0x80] sm:$0xff] %v1133
        %1166 = vst [vmem:[#allocation2 + $0x88] sm:$0xff] %v1134
        %1167 = vst [vmem:[#allocation2 + $0x90] sm:$0xff] %v1135
        %1168 = vst [vmem:[#allocation2 + $0x98] sm:$0xff] %v1136
        %1169 = vst [vmem:[#allocation2 + $0xa0] sm:$0xff] %v1137
        %1170 = vst [vmem:[#allocation2 + $0xa8] sm:$0xff] %v1138
        %1171 = vst [vmem:[#allocation2 + $0xb0] sm:$0xff] %v1139
        %1172 = vst [vmem:[#allocation2 + $0xb8] sm:$0xff] %v1140
        %1173 = vst [vmem:[#allocation2 + $0xc0] sm:$0xff] %v1141
        %1174 = vst [vmem:[#allocation2 + $0xc8] sm:$0xff] %v1142
        %1175 = vst [vmem:[#allocation2 + $0xd0] sm:$0xff] %v1143
        %1176 = vst [vmem:[#allocation2 + $0xd8] sm:$0xff] %v1144
        %1177 = vst [vmem:[#allocation2 + $0xe0] sm:$0xff] %v1145
        %1178 = vst [vmem:[#allocation2 + $0xe8] sm:$0xff] %v1146
        %1179 = vst [vmem:[#allocation2 + $0xf0] sm:$0xff] %v1147
        %1180 = vst [vmem:[#allocation2 + $0xf8] sm:$0xff] %v1148
        %v1181 = vld [vmem:[%s154] sm:$0xfe]
        %v1182 = vld [vmem:[%s154 + $0x8] sm:$0xfe]
        %v1183 = vld [vmem:[%s154 + $0x10] sm:$0xfe]
        %v1184 = vld [vmem:[%s154 + $0x18] sm:$0xfe]
        %v1185 = vld [vmem:[%s154 + $0x20] sm:$0xff]
        %v1186 = vld [vmem:[%s154 + $0x28] sm:$0xff]
        %v1187 = vld [vmem:[%s154 + $0x30] sm:$0xff]
        %v1188 = vld [vmem:[%s154 + $0x38] sm:$0xff]
        %v1189 = vld [vmem:[%s154 + $0x40] sm:$0xff]
        %v1190 = vld [vmem:[%s154 + $0x48] sm:$0xff]
        %v1191 = vld [vmem:[%s154 + $0x50] sm:$0xff]
        %v1192 = vld [vmem:[%s154 + $0x58] sm:$0xff]
        %v1193 = vld [vmem:[%s154 + $0x60] sm:$0xff]
        %v1194 = vld [vmem:[%s154 + $0x68] sm:$0xff]
        %v1195 = vld [vmem:[%s154 + $0x70] sm:$0xff]
        %v1196 = vld [vmem:[%s154 + $0x78] sm:$0xff]
        %v1197 = vld [vmem:[%s154 + $0x80] sm:$0xff]
        %v1198 = vld [vmem:[%s154 + $0x88] sm:$0xff]
        %v1199 = vld [vmem:[%s154 + $0x90] sm:$0xff]
        %v1200 = vld [vmem:[%s154 + $0x98] sm:$0xff]
        %v1201 = vld [vmem:[%s154 + $0xa0] sm:$0xff]
        %v1202 = vld [vmem:[%s154 + $0xa8] sm:$0xff]
        %v1203 = vld [vmem:[%s154 + $0xb0] sm:$0xff]
        %v1204 = vld [vmem:[%s154 + $0xb8] sm:$0xff]
        %v1205 = vld [vmem:[%s154 + $0xc0] sm:$0xff]
        %v1206 = vld [vmem:[%s154 + $0xc8] sm:$0xff]
        %v1207 = vld [vmem:[%s154 + $0xd0] sm:$0xff]
        %v1208 = vld [vmem:[%s154 + $0xd8] sm:$0xff]
        %v1209 = vld [vmem:[%s154 + $0xe0] sm:$0xff]
        %v1210 = vld [vmem:[%s154 + $0xe8] sm:$0xff]
        %v1211 = vld [vmem:[%s154 + $0xf0] sm:$0xff]
        %v1212 = vld [vmem:[%s154 + $0xf8] sm:$0xff]
        %v1213 = vld [vmem:[%s154 + $0x100] sm:$0xff]
        %v1214 = vld [vmem:[%s154 + $0x108] sm:$0xff]
        %v1215 = vld [vmem:[%s154 + $0x110] sm:$0xff]
        %v1216 = vld [vmem:[%s154 + $0x118] sm:$0xff]
        %v1217 = vld [vmem:[%s154 + $0x120] sm:$0xff]
        %v1218 = vld [vmem:[%s154 + $0x128] sm:$0xff]
        %v1219 = vld [vmem:[%s154 + $0x130] sm:$0xff]
        %v1220 = vld [vmem:[%s154 + $0x138] sm:$0xff]
        %v1221 = vld [vmem:[%s154 + $0x140] sm:$0xff]
        %v1222 = vld [vmem:[%s154 + $0x148] sm:$0xff]
        %v1223 = vld [vmem:[%s154 + $0x150] sm:$0xff]
        %v1224 = vld [vmem:[%s154 + $0x158] sm:$0xff]
        %v1225 = vld [vmem:[%s154 + $0x160] sm:$0xff]
        %v1226 = vld [vmem:[%s154 + $0x168] sm:$0xff]
        %v1227 = vld [vmem:[%s154 + $0x170] sm:$0xff]
        %v1228 = vld [vmem:[%s154 + $0x178] sm:$0xff]
        %v1229 = vld [vmem:[%s154 + $0x180] sm:$0xff]
        %v1230 = vld [vmem:[%s154 + $0x188] sm:$0xff]
        %v1231 = vld [vmem:[%s154 + $0x190] sm:$0xff]
        %v1232 = vld [vmem:[%s154 + $0x198] sm:$0xff]
        %v1233 = vld [vmem:[%s154 + $0x1a0] sm:$0xff]
        %v1234 = vld [vmem:[%s154 + $0x1a8] sm:$0xff]
        %v1235 = vld [vmem:[%s154 + $0x1b0] sm:$0xff]
        %v1236 = vld [vmem:[%s154 + $0x1b8] sm:$0xff]
        %v1237 = vld [vmem:[%s154 + $0x1c0] sm:$0xff]
        %v1238 = vld [vmem:[%s154 + $0x1c8] sm:$0xff]
        %v1239 = vld [vmem:[%s154 + $0x1d0] sm:$0xff]
        %v1240 = vld [vmem:[%s154 + $0x1d8] sm:$0xff]
        %v1241 = vld [vmem:[%s154 + $0x1e0] sm:$0xff]
        %v1242 = vld [vmem:[%s154 + $0x1e8] sm:$0xff]
        %v1243 = vld [vmem:[%s154 + $0x1f0] sm:$0xff]
        %v1244 = vld [vmem:[%s154 + $0x1f8] sm:$0xff]
        %v1245 = vld [vmem:[%s154 + $0x200] sm:$0x1]
        %v1246 = vld [vmem:[%s154 + $0x208] sm:$0x1]
        %v1247 = vld [vmem:[%s154 + $0x210] sm:$0x1]
        %v1248 = vld [vmem:[%s154 + $0x218] sm:$0x1]
        %v1249 = vpack.c.bf16 %v1185, %v1181
        %v1250 = vpack.c.bf16 %v1186, %v1182
        %v1251 = vpack.c.bf16 %v1187, %v1183
        %v1252 = vpack.c.bf16 %v1188, %v1184
        %v1253 = vpack.c.bf16 %v1193, %v1189
        %v1254 = vpack.c.bf16 %v1194, %v1190
        %v1255 = vpack.c.bf16 %v1195, %v1191
        %v1256 = vpack.c.bf16 %v1196, %v1192
        %v1257 = vpack.c.bf16 %v1201, %v1197
        %v1258 = vpack.c.bf16 %v1202, %v1198
        %v1259 = vpack.c.bf16 %v1203, %v1199
        %v1260 = vpack.c.bf16 %v1204, %v1200
        %v1261 = vpack.c.bf16 %v1209, %v1205
        %v1262 = vpack.c.bf16 %v1210, %v1206
        %v1263 = vpack.c.bf16 %v1211, %v1207
        %v1264 = vpack.c.bf16 %v1212, %v1208
        %v1265 = vpack.c.bf16 %v1217, %v1213
        %v1266 = vpack.c.bf16 %v1218, %v1214
        %v1267 = vpack.c.bf16 %v1219, %v1215
        %v1268 = vpack.c.bf16 %v1220, %v1216
        %v1269 = vpack.c.bf16 %v1225, %v1221
        %v1270 = vpack.c.bf16 %v1226, %v1222
        %v1271 = vpack.c.bf16 %v1227, %v1223
        %v1272 = vpack.c.bf16 %v1228, %v1224
        %v1273 = vpack.c.bf16 %v1233, %v1229
        %v1274 = vpack.c.bf16 %v1234, %v1230
        %v1275 = vpack.c.bf16 %v1235, %v1231
        %v1276 = vpack.c.bf16 %v1236, %v1232
        %v1277 = vpack.c.bf16 %v1241, %v1237
        %v1278 = vpack.c.bf16 %v1242, %v1238
        %v1279 = vpack.c.bf16 %v1243, %v1239
        %v1280 = vpack.c.bf16 %v1244, %v1240
        %v1281 = vpack.c.bf16 %v1245, %v1245
        %v1282 = vpack.c.bf16 %v1246, %v1246
        %v1283 = vpack.c.bf16 %v1247, %v1247
        %v1284 = vpack.c.bf16 %v1248, %v1248
        %v1285 = vld [vmem:[#allocation6 + $0x200] sm:$0xff]
        %v1286 = vld [vmem:[#allocation6 + $0x208] sm:$0xff]
        %v1287 = vld [vmem:[#allocation6 + $0x210] sm:$0xff]
        %v1288 = vld [vmem:[#allocation6 + $0x218] sm:$0xff]
        %v1289 = vld [vmem:[#allocation6 + $0x220] sm:$0xff]
        %v1290 = vld [vmem:[#allocation6 + $0x228] sm:$0xff]
        %v1291 = vld [vmem:[#allocation6 + $0x230] sm:$0xff]
        %v1292 = vld [vmem:[#allocation6 + $0x238] sm:$0xff]
        %v1293 = vld [vmem:[#allocation6 + $0x240] sm:$0xff]
        %v1294 = vld [vmem:[#allocation6 + $0x248] sm:$0xff]
        %v1295 = vld [vmem:[#allocation6 + $0x250] sm:$0xff]
        %v1296 = vld [vmem:[#allocation6 + $0x258] sm:$0xff]
        %v1297 = vld [vmem:[#allocation6 + $0x260] sm:$0xff]
        %v1298 = vld [vmem:[#allocation6 + $0x268] sm:$0xff]
        %v1299 = vld [vmem:[#allocation6 + $0x270] sm:$0xff]
        %v1300 = vld [vmem:[#allocation6 + $0x278] sm:$0xff]
        %v1301 = vld [vmem:[#allocation6 + $0x280] sm:$0xff]
        %v1302 = vld [vmem:[#allocation6 + $0x288] sm:$0xff]
        %v1303 = vld [vmem:[#allocation6 + $0x290] sm:$0xff]
        %v1304 = vld [vmem:[#allocation6 + $0x298] sm:$0xff]
        %v1305 = vld [vmem:[#allocation6 + $0x2a0] sm:$0xff]
        %v1306 = vld [vmem:[#allocation6 + $0x2a8] sm:$0xff]
        %v1307 = vld [vmem:[#allocation6 + $0x2b0] sm:$0xff]
        %v1308 = vld [vmem:[#allocation6 + $0x2b8] sm:$0xff]
        %v1309 = vld [vmem:[#allocation6 + $0x2c0] sm:$0xff]
        %v1310 = vld [vmem:[#allocation6 + $0x2c8] sm:$0xff]
        %v1311 = vld [vmem:[#allocation6 + $0x2d0] sm:$0xff]
        %v1312 = vld [vmem:[#allocation6 + $0x2d8] sm:$0xff]
        %v1313 = vld [vmem:[#allocation6 + $0x2e0] sm:$0xff]
        %v1314 = vld [vmem:[#allocation6 + $0x2e8] sm:$0xff]
        %v1315 = vld [vmem:[#allocation6 + $0x2f0] sm:$0xff]
        %v1316 = vld [vmem:[#allocation6 + $0x2f8] sm:$0xff]
        %v1317 = vld [vmem:[#allocation6 + $0x300] sm:$0xff]
        %v1318 = vld [vmem:[#allocation6 + $0x308] sm:$0xff]
        %v1319 = vld [vmem:[#allocation6 + $0x310] sm:$0xff]
        %v1320 = vld [vmem:[#allocation6 + $0x318] sm:$0xff]
        %v1321 = vld [vmem:[#allocation6 + $0x320] sm:$0xff]
        %v1322 = vld [vmem:[#allocation6 + $0x328] sm:$0xff]
        %v1323 = vld [vmem:[#allocation6 + $0x330] sm:$0xff]
        %v1324 = vld [vmem:[#allocation6 + $0x338] sm:$0xff]
        %v1325 = vld [vmem:[#allocation6 + $0x340] sm:$0xff]
        %v1326 = vld [vmem:[#allocation6 + $0x348] sm:$0xff]
        %v1327 = vld [vmem:[#allocation6 + $0x350] sm:$0xff]
        %v1328 = vld [vmem:[#allocation6 + $0x358] sm:$0xff]
        %v1329 = vld [vmem:[#allocation6 + $0x360] sm:$0xff]
        %v1330 = vld [vmem:[#allocation6 + $0x368] sm:$0xff]
        %v1331 = vld [vmem:[#allocation6 + $0x370] sm:$0xff]
        %v1332 = vld [vmem:[#allocation6 + $0x378] sm:$0xff]
        %v1333 = vld [vmem:[#allocation6 + $0x380] sm:$0xff]
        %v1334 = vld [vmem:[#allocation6 + $0x388] sm:$0xff]
        %v1335 = vld [vmem:[#allocation6 + $0x390] sm:$0xff]
        %v1336 = vld [vmem:[#allocation6 + $0x398] sm:$0xff]
        %v1337 = vld [vmem:[#allocation6 + $0x3a0] sm:$0xff]
        %v1338 = vld [vmem:[#allocation6 + $0x3a8] sm:$0xff]
        %v1339 = vld [vmem:[#allocation6 + $0x3b0] sm:$0xff]
        %v1340 = vld [vmem:[#allocation6 + $0x3b8] sm:$0xff]
        %v1341 = vld [vmem:[#allocation6 + $0x3c0] sm:$0xff]
        %v1342 = vld [vmem:[#allocation6 + $0x3c8] sm:$0xff]
        %v1343 = vld [vmem:[#allocation6 + $0x3d0] sm:$0xff]
        %v1344 = vld [vmem:[#allocation6 + $0x3d8] sm:$0xff]
        %v1345 = vld [vmem:[#allocation6 + $0x3e0] sm:$0xff]
        %v1346 = vld [vmem:[#allocation6 + $0x3e8] sm:$0xff]
        %v1347 = vld [vmem:[#allocation6 + $0x3f0] sm:$0xff]
        %v1348 = vld [vmem:[#allocation6 + $0x3f8] sm:$0xff]
        %v1349 = vld [vmem:[#allocation2] sm:$0xff]
        %v1350 = vld [vmem:[#allocation2 + $0x8] sm:$0xff]
        %v1351 = vld [vmem:[#allocation2 + $0x10] sm:$0xff]
        %v1352 = vld [vmem:[#allocation2 + $0x18] sm:$0xff]
        %v1353 = vld [vmem:[#allocation2 + $0x20] sm:$0xff]
        %v1354 = vld [vmem:[#allocation2 + $0x28] sm:$0xff]
        %v1355 = vld [vmem:[#allocation2 + $0x30] sm:$0xff]
        %v1356 = vld [vmem:[#allocation2 + $0x38] sm:$0xff]
        %v1357 = vld [vmem:[#allocation2 + $0x40] sm:$0xff]
        %v1358 = vld [vmem:[#allocation2 + $0x48] sm:$0xff]
        %v1359 = vld [vmem:[#allocation2 + $0x50] sm:$0xff]
        %v1360 = vld [vmem:[#allocation2 + $0x58] sm:$0xff]
        %v1361 = vld [vmem:[#allocation2 + $0x60] sm:$0xff]
        %v1362 = vld [vmem:[#allocation2 + $0x68] sm:$0xff]
        %v1363 = vld [vmem:[#allocation2 + $0x70] sm:$0xff]
        %v1364 = vld [vmem:[#allocation2 + $0x78] sm:$0xff]
        %v1365 = vld [vmem:[#allocation2 + $0x80] sm:$0xff]
        %v1366 = vld [vmem:[#allocation2 + $0x88] sm:$0xff]
        %v1367 = vld [vmem:[#allocation2 + $0x90] sm:$0xff]
        %v1368 = vld [vmem:[#allocation2 + $0x98] sm:$0xff]
        %v1369 = vld [vmem:[#allocation2 + $0xa0] sm:$0xff]
        %v1370 = vld [vmem:[#allocation2 + $0xa8] sm:$0xff]
        %v1371 = vld [vmem:[#allocation2 + $0xb0] sm:$0xff]
        %v1372 = vld [vmem:[#allocation2 + $0xb8] sm:$0xff]
        %v1373 = vld [vmem:[#allocation2 + $0xc0] sm:$0xff]
        %v1374 = vld [vmem:[#allocation2 + $0xc8] sm:$0xff]
        %v1375 = vld [vmem:[#allocation2 + $0xd0] sm:$0xff]
        %v1376 = vld [vmem:[#allocation2 + $0xd8] sm:$0xff]
        %v1377 = vld [vmem:[#allocation2 + $0xe0] sm:$0xff]
        %v1378 = vld [vmem:[#allocation2 + $0xe8] sm:$0xff]
        %v1379 = vld [vmem:[#allocation2 + $0xf0] sm:$0xff]
        %v1380 = vld [vmem:[#allocation2 + $0xf8] sm:$0xff]
        %vm1381 = vsmask.f32 7424
        %v1383 = vshrl.u32 %v1249, 16
        %v1385 = vshll.u32 %v1249, 16
        %v1387 = vrot.slane %v1385, 1
        %v1388 = vor.u32 %v1383, %v1387
        %v1390 = vshll.u32 %v1253, 16
        %v1392 = vrot.slane %v1390, 1
        %v1393 = vsel %vm1381, %v1388, %v1392
        %v1395 = vshrl.u32 %v1250, 16
        %v1397 = vshll.u32 %v1250, 16
        %v1399 = vrot.slane %v1397, 1
        %v1400 = vor.u32 %v1395, %v1399
        %v1402 = vshll.u32 %v1254, 16
        %v1404 = vrot.slane %v1402, 1
        %v1405 = vsel %vm1381, %v1400, %v1404
        %v1407 = vshrl.u32 %v1251, 16
        %v1409 = vshll.u32 %v1251, 16
        %v1411 = vrot.slane %v1409, 1
        %v1412 = vor.u32 %v1407, %v1411
        %v1414 = vshll.u32 %v1255, 16
        %v1416 = vrot.slane %v1414, 1
        %v1417 = vsel %vm1381, %v1412, %v1416
        %v1419 = vshrl.u32 %v1252, 16
        %v1421 = vshll.u32 %v1252, 16
        %v1423 = vrot.slane %v1421, 1
        %v1424 = vor.u32 %v1419, %v1423
        %v1426 = vshll.u32 %v1256, 16
        %v1428 = vrot.slane %v1426, 1
        %v1429 = vsel %vm1381, %v1424, %v1428
        %v1430 = vshrl.u32 %v1253, 16
        %v1432 = vor.u32 %v1430, %v1392
        %v1434 = vshll.u32 %v1257, 16
        %v1436 = vrot.slane %v1434, 1
        %v1437 = vsel %vm1381, %v1432, %v1436
        %v1438 = vshrl.u32 %v1254, 16
        %v1440 = vor.u32 %v1438, %v1404
        %v1442 = vshll.u32 %v1258, 16
        %v1444 = vrot.slane %v1442, 1
        %v1445 = vsel %vm1381, %v1440, %v1444
        %v1446 = vshrl.u32 %v1255, 16
        %v1448 = vor.u32 %v1446, %v1416
        %v1450 = vshll.u32 %v1259, 16
        %v1452 = vrot.slane %v1450, 1
        %v1453 = vsel %vm1381, %v1448, %v1452
        %v1454 = vshrl.u32 %v1256, 16
        %v1456 = vor.u32 %v1454, %v1428
        %v1458 = vshll.u32 %v1260, 16
        %v1460 = vrot.slane %v1458, 1
        %v1461 = vsel %vm1381, %v1456, %v1460
        %v1462 = vshrl.u32 %v1257, 16
        %v1464 = vor.u32 %v1462, %v1436
        %v1466 = vshll.u32 %v1261, 16
        %v1468 = vrot.slane %v1466, 1
        %v1469 = vsel %vm1381, %v1464, %v1468
        %v1470 = vshrl.u32 %v1258, 16
        %v1472 = vor.u32 %v1470, %v1444
        %v1474 = vshll.u32 %v1262, 16
        %v1476 = vrot.slane %v1474, 1
        %v1477 = vsel %vm1381, %v1472, %v1476
        %v1478 = vshrl.u32 %v1259, 16
        %v1480 = vor.u32 %v1478, %v1452
        %v1482 = vshll.u32 %v1263, 16
        %v1484 = vrot.slane %v1482, 1
        %v1485 = vsel %vm1381, %v1480, %v1484
        %v1486 = vshrl.u32 %v1260, 16
        %v1488 = vor.u32 %v1486, %v1460
        %v1490 = vshll.u32 %v1264, 16
        %v1492 = vrot.slane %v1490, 1
        %v1493 = vsel %vm1381, %v1488, %v1492
        %v1494 = vshrl.u32 %v1261, 16
        %v1496 = vor.u32 %v1494, %v1468
        %v1498 = vshll.u32 %v1265, 16
        %v1500 = vrot.slane %v1498, 1
        %v1501 = vsel %vm1381, %v1496, %v1500
        %v1502 = vshrl.u32 %v1262, 16
        %v1504 = vor.u32 %v1502, %v1476
        %v1506 = vshll.u32 %v1266, 16
        %v1508 = vrot.slane %v1506, 1
        %v1509 = vsel %vm1381, %v1504, %v1508
        %v1510 = vshrl.u32 %v1263, 16
        %v1512 = vor.u32 %v1510, %v1484
        %v1514 = vshll.u32 %v1267, 16
        %v1516 = vrot.slane %v1514, 1
        %v1517 = vsel %vm1381, %v1512, %v1516
        %v1518 = vshrl.u32 %v1264, 16
        %v1520 = vor.u32 %v1518, %v1492
        %v1522 = vshll.u32 %v1268, 16
        %v1524 = vrot.slane %v1522, 1
        %v1525 = vsel %vm1381, %v1520, %v1524
        %v1526 = vshrl.u32 %v1265, 16
        %v1528 = vor.u32 %v1526, %v1500
        %v1530 = vshll.u32 %v1269, 16
        %v1532 = vrot.slane %v1530, 1
        %v1533 = vsel %vm1381, %v1528, %v1532
        %v1534 = vshrl.u32 %v1266, 16
        %v1536 = vor.u32 %v1534, %v1508
        %v1538 = vshll.u32 %v1270, 16
        %v1540 = vrot.slane %v1538, 1
        %v1541 = vsel %vm1381, %v1536, %v1540
        %v1542 = vshrl.u32 %v1267, 16
        %v1544 = vor.u32 %v1542, %v1516
        %v1546 = vshll.u32 %v1271, 16
        %v1548 = vrot.slane %v1546, 1
        %v1549 = vsel %vm1381, %v1544, %v1548
        %v1550 = vshrl.u32 %v1268, 16
        %v1552 = vor.u32 %v1550, %v1524
        %v1554 = vshll.u32 %v1272, 16
        %v1556 = vrot.slane %v1554, 1
        %v1557 = vsel %vm1381, %v1552, %v1556
        %v1558 = vshrl.u32 %v1269, 16
        %v1560 = vor.u32 %v1558, %v1532
        %v1562 = vshll.u32 %v1273, 16
        %v1564 = vrot.slane %v1562, 1
        %v1565 = vsel %vm1381, %v1560, %v1564
        %v1566 = vshrl.u32 %v1270, 16
        %v1568 = vor.u32 %v1566, %v1540
        %v1570 = vshll.u32 %v1274, 16
        %v1572 = vrot.slane %v1570, 1
        %v1573 = vsel %vm1381, %v1568, %v1572
        %v1574 = vshrl.u32 %v1271, 16
        %v1576 = vor.u32 %v1574, %v1548
        %v1578 = vshll.u32 %v1275, 16
        %v1580 = vrot.slane %v1578, 1
        %v1581 = vsel %vm1381, %v1576, %v1580
        %v1582 = vshrl.u32 %v1272, 16
        %v1584 = vor.u32 %v1582, %v1556
        %v1586 = vshll.u32 %v1276, 16
        %v1588 = vrot.slane %v1586, 1
        %v1589 = vsel %vm1381, %v1584, %v1588
        %v1590 = vshrl.u32 %v1273, 16
        %v1592 = vor.u32 %v1590, %v1564
        %v1594 = vshll.u32 %v1277, 16
        %v1596 = vrot.slane %v1594, 1
        %v1597 = vsel %vm1381, %v1592, %v1596
        %v1598 = vshrl.u32 %v1274, 16
        %v1600 = vor.u32 %v1598, %v1572
        %v1602 = vshll.u32 %v1278, 16
        %v1604 = vrot.slane %v1602, 1
        %v1605 = vsel %vm1381, %v1600, %v1604
        %v1606 = vshrl.u32 %v1275, 16
        %v1608 = vor.u32 %v1606, %v1580
        %v1610 = vshll.u32 %v1279, 16
        %v1612 = vrot.slane %v1610, 1
        %v1613 = vsel %vm1381, %v1608, %v1612
        %v1614 = vshrl.u32 %v1276, 16
        %v1616 = vor.u32 %v1614, %v1588
        %v1618 = vshll.u32 %v1280, 16
        %v1620 = vrot.slane %v1618, 1
        %v1621 = vsel %vm1381, %v1616, %v1620
        %v1622 = vshrl.u32 %v1277, 16
        %v1624 = vor.u32 %v1622, %v1596
        %v1626 = vshll.u32 %v1281, 16
        %v1628 = vrot.slane %v1626, 1
        %v1629 = vsel %vm1381, %v1624, %v1628
        %v1630 = vshrl.u32 %v1278, 16
        %v1632 = vor.u32 %v1630, %v1604
        %v1634 = vshll.u32 %v1282, 16
        %v1636 = vrot.slane %v1634, 1
        %v1637 = vsel %vm1381, %v1632, %v1636
        %v1638 = vshrl.u32 %v1279, 16
        %v1640 = vor.u32 %v1638, %v1612
        %v1642 = vshll.u32 %v1283, 16
        %v1644 = vrot.slane %v1642, 1
        %v1645 = vsel %vm1381, %v1640, %v1644
        %v1646 = vshrl.u32 %v1280, 16
        %v1648 = vor.u32 %v1646, %v1620
        %v1650 = vshll.u32 %v1284, 16
        %v1652 = vrot.slane %v1650, 1
        %v1653 = vsel %vm1381, %v1648, %v1652
        %v1750 = vunpack.c.l.b16 %v1285
        %v1751 = vunpack.c.h.b16 %v1285
        %v1752 = vunpack.c.l.b16 %v1286
        %v1753 = vunpack.c.h.b16 %v1286
        %v1754 = vunpack.c.l.b16 %v1287
        %v1755 = vunpack.c.h.b16 %v1287
        %v1756 = vunpack.c.l.b16 %v1288
        %v1757 = vunpack.c.h.b16 %v1288
        %v1758 = vunpack.c.l.b16 %v1289
        %v1759 = vunpack.c.h.b16 %v1289
        %v1760 = vunpack.c.l.b16 %v1290
        %v1761 = vunpack.c.h.b16 %v1290
        %v1762 = vunpack.c.l.b16 %v1291
        %v1763 = vunpack.c.h.b16 %v1291
        %v1764 = vunpack.c.l.b16 %v1292
        %v1765 = vunpack.c.h.b16 %v1292
        %v1766 = vunpack.c.l.b16 %v1293
        %v1767 = vunpack.c.h.b16 %v1293
        %v1768 = vunpack.c.l.b16 %v1294
        %v1769 = vunpack.c.h.b16 %v1294
        %v1770 = vunpack.c.l.b16 %v1295
        %v1771 = vunpack.c.h.b16 %v1295
        %v1772 = vunpack.c.l.b16 %v1296
        %v1773 = vunpack.c.h.b16 %v1296
        %v1774 = vunpack.c.l.b16 %v1297
        %v1775 = vunpack.c.h.b16 %v1297
        %v1776 = vunpack.c.l.b16 %v1298
        %v1777 = vunpack.c.h.b16 %v1298
        %v1778 = vunpack.c.l.b16 %v1299
        %v1779 = vunpack.c.h.b16 %v1299
        %v1780 = vunpack.c.l.b16 %v1300
        %v1781 = vunpack.c.h.b16 %v1300
        %v1782 = vunpack.c.l.b16 %v1301
        %v1783 = vunpack.c.h.b16 %v1301
        %v1784 = vunpack.c.l.b16 %v1302
        %v1785 = vunpack.c.h.b16 %v1302
        %v1786 = vunpack.c.l.b16 %v1303
        %v1787 = vunpack.c.h.b16 %v1303
        %v1788 = vunpack.c.l.b16 %v1304
        %v1789 = vunpack.c.h.b16 %v1304
        %v1790 = vunpack.c.l.b16 %v1305
        %v1791 = vunpack.c.h.b16 %v1305
        %v1792 = vunpack.c.l.b16 %v1306
        %v1793 = vunpack.c.h.b16 %v1306
        %v1794 = vunpack.c.l.b16 %v1307
        %v1795 = vunpack.c.h.b16 %v1307
        %v1796 = vunpack.c.l.b16 %v1308
        %v1797 = vunpack.c.h.b16 %v1308
        %v1798 = vunpack.c.l.b16 %v1309
        %v1799 = vunpack.c.h.b16 %v1309
        %v1800 = vunpack.c.l.b16 %v1310
        %v1801 = vunpack.c.h.b16 %v1310
        %v1802 = vunpack.c.l.b16 %v1311
        %v1803 = vunpack.c.h.b16 %v1311
        %v1804 = vunpack.c.l.b16 %v1312
        %v1805 = vunpack.c.h.b16 %v1312
        %v1806 = vunpack.c.l.b16 %v1313
        %v1807 = vunpack.c.h.b16 %v1313
        %v1808 = vunpack.c.l.b16 %v1314
        %v1809 = vunpack.c.h.b16 %v1314
        %v1810 = vunpack.c.l.b16 %v1315
        %v1811 = vunpack.c.h.b16 %v1315
        %v1812 = vunpack.c.l.b16 %v1316
        %v1813 = vunpack.c.h.b16 %v1316
        %v1814 = vunpack.c.l.b16 %v1317
        %v1815 = vunpack.c.h.b16 %v1317
        %v1816 = vunpack.c.l.b16 %v1318
        %v1817 = vunpack.c.h.b16 %v1318
        %v1818 = vunpack.c.l.b16 %v1319
        %v1819 = vunpack.c.h.b16 %v1319
        %v1820 = vunpack.c.l.b16 %v1320
        %v1821 = vunpack.c.h.b16 %v1320
        %v1822 = vunpack.c.l.b16 %v1321
        %v1823 = vunpack.c.h.b16 %v1321
        %v1824 = vunpack.c.l.b16 %v1322
        %v1825 = vunpack.c.h.b16 %v1322
        %v1826 = vunpack.c.l.b16 %v1323
        %v1827 = vunpack.c.h.b16 %v1323
        %v1828 = vunpack.c.l.b16 %v1324
        %v1829 = vunpack.c.h.b16 %v1324
        %v1830 = vunpack.c.l.b16 %v1325
        %v1831 = vunpack.c.h.b16 %v1325
        %v1832 = vunpack.c.l.b16 %v1326
        %v1833 = vunpack.c.h.b16 %v1326
        %v1834 = vunpack.c.l.b16 %v1327
        %v1835 = vunpack.c.h.b16 %v1327
        %v1836 = vunpack.c.l.b16 %v1328
        %v1837 = vunpack.c.h.b16 %v1328
        %v1838 = vunpack.c.l.b16 %v1329
        %v1839 = vunpack.c.h.b16 %v1329
        %v1840 = vunpack.c.l.b16 %v1330
        %v1841 = vunpack.c.h.b16 %v1330
        %v1842 = vunpack.c.l.b16 %v1331
        %v1843 = vunpack.c.h.b16 %v1331
        %v1844 = vunpack.c.l.b16 %v1332
        %v1845 = vunpack.c.h.b16 %v1332
        %v1846 = vunpack.c.l.b16 %v1333
        %v1847 = vunpack.c.h.b16 %v1333
        %v1848 = vunpack.c.l.b16 %v1334
        %v1849 = vunpack.c.h.b16 %v1334
        %v1850 = vunpack.c.l.b16 %v1335
        %v1851 = vunpack.c.h.b16 %v1335
        %v1852 = vunpack.c.l.b16 %v1336
        %v1853 = vunpack.c.h.b16 %v1336
        %v1854 = vunpack.c.l.b16 %v1337
        %v1855 = vunpack.c.h.b16 %v1337
        %v1856 = vunpack.c.l.b16 %v1338
        %v1857 = vunpack.c.h.b16 %v1338
        %v1858 = vunpack.c.l.b16 %v1339
        %v1859 = vunpack.c.h.b16 %v1339
        %v1860 = vunpack.c.l.b16 %v1340
        %v1861 = vunpack.c.h.b16 %v1340
        %v1862 = vunpack.c.l.b16 %v1341
        %v1863 = vunpack.c.h.b16 %v1341
        %v1864 = vunpack.c.l.b16 %v1342
        %v1865 = vunpack.c.h.b16 %v1342
        %v1866 = vunpack.c.l.b16 %v1343
        %v1867 = vunpack.c.h.b16 %v1343
        %v1868 = vunpack.c.l.b16 %v1344
        %v1869 = vunpack.c.h.b16 %v1344
        %v1870 = vunpack.c.l.b16 %v1345
        %v1871 = vunpack.c.h.b16 %v1345
        %v1872 = vunpack.c.l.b16 %v1346
        %v1873 = vunpack.c.h.b16 %v1346
        %v1874 = vunpack.c.l.b16 %v1347
        %v1875 = vunpack.c.h.b16 %v1347
        %v1876 = vunpack.c.l.b16 %v1348
        %v1877 = vunpack.c.h.b16 %v1348
        %v1878 = vpack.c.b16 %v1752, %v1750
        %v1879 = vpack.c.b16 %v1753, %v1751
        %v1880 = vpack.c.b16 %v1756, %v1754
        %v1881 = vpack.c.b16 %v1757, %v1755
        %v1882 = vpack.c.b16 %v1760, %v1758
        %v1883 = vpack.c.b16 %v1761, %v1759
        %v1884 = vpack.c.b16 %v1764, %v1762
        %v1885 = vpack.c.b16 %v1765, %v1763
        %v1886 = vpack.c.b16 %v1768, %v1766
        %v1887 = vpack.c.b16 %v1769, %v1767
        %v1888 = vpack.c.b16 %v1772, %v1770
        %v1889 = vpack.c.b16 %v1773, %v1771
        %v1890 = vpack.c.b16 %v1776, %v1774
        %v1891 = vpack.c.b16 %v1777, %v1775
        %v1892 = vpack.c.b16 %v1780, %v1778
        %v1893 = vpack.c.b16 %v1781, %v1779
        %v1894 = vpack.c.b16 %v1784, %v1782
        %v1895 = vpack.c.b16 %v1785, %v1783
        %v1896 = vpack.c.b16 %v1788, %v1786
        %v1897 = vpack.c.b16 %v1789, %v1787
        %v1898 = vpack.c.b16 %v1792, %v1790
        %v1899 = vpack.c.b16 %v1793, %v1791
        %v1900 = vpack.c.b16 %v1796, %v1794
        %v1901 = vpack.c.b16 %v1797, %v1795
        %v1902 = vpack.c.b16 %v1800, %v1798
        %v1903 = vpack.c.b16 %v1801, %v1799
        %v1904 = vpack.c.b16 %v1804, %v1802
        %v1905 = vpack.c.b16 %v1805, %v1803
        %v1906 = vpack.c.b16 %v1808, %v1806
        %v1907 = vpack.c.b16 %v1809, %v1807
        %v1908 = vpack.c.b16 %v1812, %v1810
        %v1909 = vpack.c.b16 %v1813, %v1811
        %v1910 = vpack.c.b16 %v1816, %v1814
        %v1911 = vpack.c.b16 %v1817, %v1815
        %v1912 = vpack.c.b16 %v1820, %v1818
        %v1913 = vpack.c.b16 %v1821, %v1819
        %v1914 = vpack.c.b16 %v1824, %v1822
        %v1915 = vpack.c.b16 %v1825, %v1823
        %v1916 = vpack.c.b16 %v1828, %v1826
        %v1917 = vpack.c.b16 %v1829, %v1827
        %v1918 = vpack.c.b16 %v1832, %v1830
        %v1919 = vpack.c.b16 %v1833, %v1831
        %v1920 = vpack.c.b16 %v1836, %v1834
        %v1921 = vpack.c.b16 %v1837, %v1835
        %v1922 = vpack.c.b16 %v1840, %v1838
        %v1923 = vpack.c.b16 %v1841, %v1839
        %v1924 = vpack.c.b16 %v1844, %v1842
        %v1925 = vpack.c.b16 %v1845, %v1843
        %v1926 = vpack.c.b16 %v1848, %v1846
        %v1927 = vpack.c.b16 %v1849, %v1847
        %v1928 = vpack.c.b16 %v1852, %v1850
        %v1929 = vpack.c.b16 %v1853, %v1851
        %v1930 = vpack.c.b16 %v1856, %v1854
        %v1931 = vpack.c.b16 %v1857, %v1855
        %v1932 = vpack.c.b16 %v1860, %v1858
        %v1933 = vpack.c.b16 %v1861, %v1859
        %v1934 = vpack.c.b16 %v1864, %v1862
        %v1935 = vpack.c.b16 %v1865, %v1863
        %v1936 = vpack.c.b16 %v1868, %v1866
        %v1937 = vpack.c.b16 %v1869, %v1867
        %v1938 = vpack.c.b16 %v1872, %v1870
        %v1939 = vpack.c.b16 %v1873, %v1871
        %v1940 = vpack.c.b16 %v1876, %v1874
        %v1941 = vpack.c.b16 %v1877, %v1875
        %2006 = vmatpush.bf16.msra.mxu0 %v1892
        %2007 = vmatpush.bf16.msra.mxu0 %v1890
        %2008 = vmatpush.bf16.msra.mxu0 %v1888
        %2009 = vmatpush.bf16.msra.mxu0 %v1886
        %2010 = vmatpush.bf16.msra.mxu0 %v1884
        %2011 = vmatpush.bf16.msra.mxu0 %v1882
        %2012 = vmatpush.bf16.msra.mxu0 %v1880
        %2013 = vmatpush.bf16.msra.mxu0 %v1878
        %2014 = vmatmul.bf16.gmra.mxu0 %v1393
        %v2015 = vpop.f32.mrf.mxu0
        %v2016 = vadd.f32 0.0, %v2015
        %v2017 = vpop.f32.mrf.mxu0
        %v2018 = vadd.f32 0.0, %v2017
        %2019 = vmatmul.bf16.gmra.mxu0 %v1437
        %v2020 = vpop.f32.mrf.mxu0
        %v2021 = vadd.f32 0.0, %v2020
        %v2022 = vpop.f32.mrf.mxu0
        %v2023 = vadd.f32 0.0, %v2022
        %2024 = vmatmul.bf16.gmra.mxu0 %v1469
        %v2025 = vpop.f32.mrf.mxu0
        %v2026 = vadd.f32 0.0, %v2025
        %v2027 = vpop.f32.mrf.mxu0
        %v2028 = vadd.f32 0.0, %v2027
        %2029 = vmatmul.bf16.gmra.mxu0 %v1501
        %v2030 = vpop.f32.mrf.mxu0
        %v2031 = vadd.f32 0.0, %v2030
        %v2032 = vpop.f32.mrf.mxu0
        %v2033 = vadd.f32 0.0, %v2032
        %2034 = vmatmul.bf16.gmra.mxu0 %v1533
        %v2035 = vpop.f32.mrf.mxu0
        %v2036 = vadd.f32 0.0, %v2035
        %v2037 = vpop.f32.mrf.mxu0
        %v2038 = vadd.f32 0.0, %v2037
        %2039 = vmatmul.bf16.gmra.mxu0 %v1565
        %v2040 = vpop.f32.mrf.mxu0
        %v2041 = vadd.f32 0.0, %v2040
        %v2042 = vpop.f32.mrf.mxu0
        %v2043 = vadd.f32 0.0, %v2042
        %2044 = vmatmul.bf16.gmra.mxu0 %v1597
        %v2045 = vpop.f32.mrf.mxu0
        %v2046 = vadd.f32 0.0, %v2045
        %v2047 = vpop.f32.mrf.mxu0
        %v2048 = vadd.f32 0.0, %v2047
        %2049 = vmatmul.bf16.gmra.mxu0 %v1629
        %v2050 = vpop.f32.mrf.mxu0
        %v2051 = vadd.f32 0.0, %v2050
        %v2052 = vpop.f32.mrf.mxu0
        %v2053 = vadd.f32 0.0, %v2052
        %2054 = vdwg.mxu0
        %2055 = vmatpush.bf16.msra.mxu0 %v1908
        %2056 = vmatpush.bf16.msra.mxu0 %v1906
        %2057 = vmatpush.bf16.msra.mxu0 %v1904
        %2058 = vmatpush.bf16.msra.mxu0 %v1902
        %2059 = vmatpush.bf16.msra.mxu0 %v1900
        %2060 = vmatpush.bf16.msra.mxu0 %v1898
        %2061 = vmatpush.bf16.msra.mxu0 %v1896
        %2062 = vmatpush.bf16.msra.mxu0 %v1894
        %2063 = vmatmul.bf16.gmra.mxu0 %v1405
        %v2064 = vpop.f32.mrf.mxu0
        %v2065 = vadd.f32 %v2016, %v2064
        %v2066 = vpop.f32.mrf.mxu0
        %v2067 = vadd.f32 %v2018, %v2066
        %2068 = vmatmul.bf16.gmra.mxu0 %v1445
        %v2069 = vpop.f32.mrf.mxu0
        %v2070 = vadd.f32 %v2021, %v2069
        %v2071 = vpop.f32.mrf.mxu0
        %v2072 = vadd.f32 %v2023, %v2071
        %2073 = vmatmul.bf16.gmra.mxu0 %v1477
        %v2074 = vpop.f32.mrf.mxu0
        %v2075 = vadd.f32 %v2026, %v2074
        %v2076 = vpop.f32.mrf.mxu0
        %v2077 = vadd.f32 %v2028, %v2076
        %2078 = vmatmul.bf16.gmra.mxu0 %v1509
        %v2079 = vpop.f32.mrf.mxu0
        %v2080 = vadd.f32 %v2031, %v2079
        %v2081 = vpop.f32.mrf.mxu0
        %v2082 = vadd.f32 %v2033, %v2081
        %2083 = vmatmul.bf16.gmra.mxu0 %v1541
        %v2084 = vpop.f32.mrf.mxu0
        %v2085 = vadd.f32 %v2036, %v2084
        %v2086 = vpop.f32.mrf.mxu0
        %v2087 = vadd.f32 %v2038, %v2086
        %2088 = vmatmul.bf16.gmra.mxu0 %v1573
        %v2089 = vpop.f32.mrf.mxu0
        %v2090 = vadd.f32 %v2041, %v2089
        %v2091 = vpop.f32.mrf.mxu0
        %v2092 = vadd.f32 %v2043, %v2091
        %2093 = vmatmul.bf16.gmra.mxu0 %v1605
        %v2094 = vpop.f32.mrf.mxu0
        %v2095 = vadd.f32 %v2046, %v2094
        %v2096 = vpop.f32.mrf.mxu0
        %v2097 = vadd.f32 %v2048, %v2096
        %2098 = vmatmul.bf16.gmra.mxu0 %v1637
        %v2099 = vpop.f32.mrf.mxu0
        %v2100 = vadd.f32 %v2051, %v2099
        %v2101 = vpop.f32.mrf.mxu0
        %v2102 = vadd.f32 %v2053, %v2101
        %2103 = vdwg.mxu0
        %2104 = vmatpush.bf16.msra.mxu0 %v1924
        %2105 = vmatpush.bf16.msra.mxu0 %v1922
        %2106 = vmatpush.bf16.msra.mxu0 %v1920
        %2107 = vmatpush.bf16.msra.mxu0 %v1918
        %2108 = vmatpush.bf16.msra.mxu0 %v1916
        %2109 = vmatpush.bf16.msra.mxu0 %v1914
        %2110 = vmatpush.bf16.msra.mxu0 %v1912
        %2111 = vmatpush.bf16.msra.mxu0 %v1910
        %2112 = vmatmul.bf16.gmra.mxu0 %v1417
        %v2113 = vpop.f32.mrf.mxu0
        %v2114 = vadd.f32 %v2065, %v2113
        %v2115 = vpop.f32.mrf.mxu0
        %v2116 = vadd.f32 %v2067, %v2115
        %2117 = vmatmul.bf16.gmra.mxu0 %v1453
        %v2118 = vpop.f32.mrf.mxu0
        %v2119 = vadd.f32 %v2070, %v2118
        %v2120 = vpop.f32.mrf.mxu0
        %v2121 = vadd.f32 %v2072, %v2120
        %2122 = vmatmul.bf16.gmra.mxu0 %v1485
        %v2123 = vpop.f32.mrf.mxu0
        %v2124 = vadd.f32 %v2075, %v2123
        %v2125 = vpop.f32.mrf.mxu0
        %v2126 = vadd.f32 %v2077, %v2125
        %2127 = vmatmul.bf16.gmra.mxu0 %v1517
        %v2128 = vpop.f32.mrf.mxu0
        %v2129 = vadd.f32 %v2080, %v2128
        %v2130 = vpop.f32.mrf.mxu0
        %v2131 = vadd.f32 %v2082, %v2130
        %2132 = vmatmul.bf16.gmra.mxu0 %v1549
        %v2133 = vpop.f32.mrf.mxu0
        %v2134 = vadd.f32 %v2085, %v2133
        %v2135 = vpop.f32.mrf.mxu0
        %v2136 = vadd.f32 %v2087, %v2135
        %2137 = vmatmul.bf16.gmra.mxu0 %v1581
        %v2138 = vpop.f32.mrf.mxu0
        %v2139 = vadd.f32 %v2090, %v2138
        %v2140 = vpop.f32.mrf.mxu0
        %v2141 = vadd.f32 %v2092, %v2140
        %2142 = vmatmul.bf16.gmra.mxu0 %v1613
        %v2143 = vpop.f32.mrf.mxu0
        %v2144 = vadd.f32 %v2095, %v2143
        %v2145 = vpop.f32.mrf.mxu0
        %v2146 = vadd.f32 %v2097, %v2145
        %2147 = vmatmul.bf16.gmra.mxu0 %v1645
        %v2148 = vpop.f32.mrf.mxu0
        %v2149 = vadd.f32 %v2100, %v2148
        %v2150 = vpop.f32.mrf.mxu0
        %v2151 = vadd.f32 %v2102, %v2150
        %2152 = vdwg.mxu0
        %2153 = vmatpush.bf16.msra.mxu0 %v1940
        %2154 = vmatpush.bf16.msra.mxu0 %v1938
        %2155 = vmatpush.bf16.msra.mxu0 %v1936
        %2156 = vmatpush.bf16.msra.mxu0 %v1934
        %2157 = vmatpush.bf16.msra.mxu0 %v1932
        %2158 = vmatpush.bf16.msra.mxu0 %v1930
        %2159 = vmatpush.bf16.msra.mxu0 %v1928
        %2160 = vmatpush.bf16.msra.mxu0 %v1926
        %2161 = vmatmul.bf16.gmra.mxu0 %v1429
        %v2162 = vpop.f32.mrf.mxu0
        %v2163 = vadd.f32 %v2114, %v2162
        %v2164 = vpop.f32.mrf.mxu0
        %v2165 = vadd.f32 %v2116, %v2164
        %2166 = vmatmul.bf16.gmra.mxu0 %v1461
        %v2167 = vpop.f32.mrf.mxu0
        %v2168 = vadd.f32 %v2119, %v2167
        %v2169 = vpop.f32.mrf.mxu0
        %v2170 = vadd.f32 %v2121, %v2169
        %2171 = vmatmul.bf16.gmra.mxu0 %v1493
        %v2172 = vpop.f32.mrf.mxu0
        %v2173 = vadd.f32 %v2124, %v2172
        %v2174 = vpop.f32.mrf.mxu0
        %v2175 = vadd.f32 %v2126, %v2174
        %2176 = vmatmul.bf16.gmra.mxu0 %v1525
        %v2177 = vpop.f32.mrf.mxu0
        %v2178 = vadd.f32 %v2129, %v2177
        %v2179 = vpop.f32.mrf.mxu0
        %v2180 = vadd.f32 %v2131, %v2179
        %2181 = vmatmul.bf16.gmra.mxu0 %v1557
        %v2182 = vpop.f32.mrf.mxu0
        %v2183 = vadd.f32 %v2134, %v2182
        %v2184 = vpop.f32.mrf.mxu0
        %v2185 = vadd.f32 %v2136, %v2184
        %2186 = vmatmul.bf16.gmra.mxu0 %v1589
        %v2187 = vpop.f32.mrf.mxu0
        %v2188 = vadd.f32 %v2139, %v2187
        %v2189 = vpop.f32.mrf.mxu0
        %v2190 = vadd.f32 %v2141, %v2189
        %2191 = vmatmul.bf16.gmra.mxu0 %v1621
        %v2192 = vpop.f32.mrf.mxu0
        %v2193 = vadd.f32 %v2144, %v2192
        %v2194 = vpop.f32.mrf.mxu0
        %v2195 = vadd.f32 %v2146, %v2194
        %2196 = vmatmul.bf16.gmra.mxu0 %v1653
        %v2197 = vpop.f32.mrf.mxu0
        %v2198 = vadd.f32 %v2149, %v2197
        %v2199 = vpop.f32.mrf.mxu0
        %v2200 = vadd.f32 %v2151, %v2199
        %2201 = vdwg.mxu0
        %2202 = vmatpush.bf16.msra.mxu0 %v1893
        %2203 = vmatpush.bf16.msra.mxu0 %v1891
        %2204 = vmatpush.bf16.msra.mxu0 %v1889
        %2205 = vmatpush.bf16.msra.mxu0 %v1887
        %2206 = vmatpush.bf16.msra.mxu0 %v1885
        %2207 = vmatpush.bf16.msra.mxu0 %v1883
        %2208 = vmatpush.bf16.msra.mxu0 %v1881
        %2209 = vmatpush.bf16.msra.mxu0 %v1879
        %2210 = vmatmul.bf16.gmra.mxu0 %v1393
        %v2211 = vpop.f32.mrf.mxu0
        %v2212 = vadd.f32 0.0, %v2211
        %v2213 = vpop.f32.mrf.mxu0
        %v2214 = vadd.f32 0.0, %v2213
        %2215 = vmatmul.bf16.gmra.mxu0 %v1437
        %v2216 = vpop.f32.mrf.mxu0
        %v2217 = vadd.f32 0.0, %v2216
        %v2218 = vpop.f32.mrf.mxu0
        %v2219 = vadd.f32 0.0, %v2218
        %2220 = vmatmul.bf16.gmra.mxu0 %v1469
        %v2221 = vpop.f32.mrf.mxu0
        %v2222 = vadd.f32 0.0, %v2221
        %v2223 = vpop.f32.mrf.mxu0
        %v2224 = vadd.f32 0.0, %v2223
        %2225 = vmatmul.bf16.gmra.mxu0 %v1501
        %v2226 = vpop.f32.mrf.mxu0
        %v2227 = vadd.f32 0.0, %v2226
        %v2228 = vpop.f32.mrf.mxu0
        %v2229 = vadd.f32 0.0, %v2228
        %2230 = vmatmul.bf16.gmra.mxu0 %v1533
        %v2231 = vpop.f32.mrf.mxu0
        %v2232 = vadd.f32 0.0, %v2231
        %v2233 = vpop.f32.mrf.mxu0
        %v2234 = vadd.f32 0.0, %v2233
        %2235 = vmatmul.bf16.gmra.mxu0 %v1565
        %v2236 = vpop.f32.mrf.mxu0
        %v2237 = vadd.f32 0.0, %v2236
        %v2238 = vpop.f32.mrf.mxu0
        %v2239 = vadd.f32 0.0, %v2238
        %2240 = vmatmul.bf16.gmra.mxu0 %v1597
        %v2241 = vpop.f32.mrf.mxu0
        %v2242 = vadd.f32 0.0, %v2241
        %v2243 = vpop.f32.mrf.mxu0
        %v2244 = vadd.f32 0.0, %v2243
        %2245 = vmatmul.bf16.gmra.mxu0 %v1629
        %v2246 = vpop.f32.mrf.mxu0
        %v2247 = vadd.f32 0.0, %v2246
        %v2248 = vpop.f32.mrf.mxu0
        %v2249 = vadd.f32 0.0, %v2248
        %2250 = vdwg.mxu0
        %2251 = vmatpush.bf16.msra.mxu0 %v1909
        %2252 = vmatpush.bf16.msra.mxu0 %v1907
        %2253 = vmatpush.bf16.msra.mxu0 %v1905
        %2254 = vmatpush.bf16.msra.mxu0 %v1903
        %2255 = vmatpush.bf16.msra.mxu0 %v1901
        %2256 = vmatpush.bf16.msra.mxu0 %v1899
        %2257 = vmatpush.bf16.msra.mxu0 %v1897
        %2258 = vmatpush.bf16.msra.mxu0 %v1895
        %2259 = vmatmul.bf16.gmra.mxu0 %v1405
        %v2260 = vpop.f32.mrf.mxu0
        %v2261 = vadd.f32 %v2212, %v2260
        %v2262 = vpop.f32.mrf.mxu0
        %v2263 = vadd.f32 %v2214, %v2262
        %2264 = vmatmul.bf16.gmra.mxu0 %v1445
        %v2265 = vpop.f32.mrf.mxu0
        %v2266 = vadd.f32 %v2217, %v2265
        %v2267 = vpop.f32.mrf.mxu0
        %v2268 = vadd.f32 %v2219, %v2267
        %2269 = vmatmul.bf16.gmra.mxu0 %v1477
        %v2270 = vpop.f32.mrf.mxu0
        %v2271 = vadd.f32 %v2222, %v2270
        %v2272 = vpop.f32.mrf.mxu0
        %v2273 = vadd.f32 %v2224, %v2272
        %2274 = vmatmul.bf16.gmra.mxu0 %v1509
        %v2275 = vpop.f32.mrf.mxu0
        %v2276 = vadd.f32 %v2227, %v2275
        %v2277 = vpop.f32.mrf.mxu0
        %v2278 = vadd.f32 %v2229, %v2277
        %2279 = vmatmul.bf16.gmra.mxu0 %v1541
        %v2280 = vpop.f32.mrf.mxu0
        %v2281 = vadd.f32 %v2232, %v2280
        %v2282 = vpop.f32.mrf.mxu0
        %v2283 = vadd.f32 %v2234, %v2282
        %2284 = vmatmul.bf16.gmra.mxu0 %v1573
        %v2285 = vpop.f32.mrf.mxu0
        %v2286 = vadd.f32 %v2237, %v2285
        %v2287 = vpop.f32.mrf.mxu0
        %v2288 = vadd.f32 %v2239, %v2287
        %2289 = vmatmul.bf16.gmra.mxu0 %v1605
        %v2290 = vpop.f32.mrf.mxu0
        %v2291 = vadd.f32 %v2242, %v2290
        %v2292 = vpop.f32.mrf.mxu0
        %v2293 = vadd.f32 %v2244, %v2292
        %2294 = vmatmul.bf16.gmra.mxu0 %v1637
        %v2295 = vpop.f32.mrf.mxu0
        %v2296 = vadd.f32 %v2247, %v2295
        %v2297 = vpop.f32.mrf.mxu0
        %v2298 = vadd.f32 %v2249, %v2297
        %2299 = vdwg.mxu0
        %2300 = vmatpush.bf16.msra.mxu0 %v1925
        %2301 = vmatpush.bf16.msra.mxu0 %v1923
        %2302 = vmatpush.bf16.msra.mxu0 %v1921
        %2303 = vmatpush.bf16.msra.mxu0 %v1919
        %2304 = vmatpush.bf16.msra.mxu0 %v1917
        %2305 = vmatpush.bf16.msra.mxu0 %v1915
        %2306 = vmatpush.bf16.msra.mxu0 %v1913
        %2307 = vmatpush.bf16.msra.mxu0 %v1911
        %2308 = vmatmul.bf16.gmra.mxu0 %v1417
        %v2309 = vpop.f32.mrf.mxu0
        %v2310 = vadd.f32 %v2261, %v2309
        %v2311 = vpop.f32.mrf.mxu0
        %v2312 = vadd.f32 %v2263, %v2311
        %2313 = vmatmul.bf16.gmra.mxu0 %v1453
        %v2314 = vpop.f32.mrf.mxu0
        %v2315 = vadd.f32 %v2266, %v2314
        %v2316 = vpop.f32.mrf.mxu0
        %v2317 = vadd.f32 %v2268, %v2316
        %2318 = vmatmul.bf16.gmra.mxu0 %v1485
        %v2319 = vpop.f32.mrf.mxu0
        %v2320 = vadd.f32 %v2271, %v2319
        %v2321 = vpop.f32.mrf.mxu0
        %v2322 = vadd.f32 %v2273, %v2321
        %2323 = vmatmul.bf16.gmra.mxu0 %v1517
        %v2324 = vpop.f32.mrf.mxu0
        %v2325 = vadd.f32 %v2276, %v2324
        %v2326 = vpop.f32.mrf.mxu0
        %v2327 = vadd.f32 %v2278, %v2326
        %2328 = vmatmul.bf16.gmra.mxu0 %v1549
        %v2329 = vpop.f32.mrf.mxu0
        %v2330 = vadd.f32 %v2281, %v2329
        %v2331 = vpop.f32.mrf.mxu0
        %v2332 = vadd.f32 %v2283, %v2331
        %2333 = vmatmul.bf16.gmra.mxu0 %v1581
        %v2334 = vpop.f32.mrf.mxu0
        %v2335 = vadd.f32 %v2286, %v2334
        %v2336 = vpop.f32.mrf.mxu0
        %v2337 = vadd.f32 %v2288, %v2336
        %2338 = vmatmul.bf16.gmra.mxu0 %v1613
        %v2339 = vpop.f32.mrf.mxu0
        %v2340 = vadd.f32 %v2291, %v2339
        %v2341 = vpop.f32.mrf.mxu0
        %v2342 = vadd.f32 %v2293, %v2341
        %2343 = vmatmul.bf16.gmra.mxu0 %v1645
        %v2344 = vpop.f32.mrf.mxu0
        %v2345 = vadd.f32 %v2296, %v2344
        %v2346 = vpop.f32.mrf.mxu0
        %v2347 = vadd.f32 %v2298, %v2346
        %2348 = vdwg.mxu0
        %2349 = vmatpush.bf16.msra.mxu0 %v1941
        %2350 = vmatpush.bf16.msra.mxu0 %v1939
        %2351 = vmatpush.bf16.msra.mxu0 %v1937
        %2352 = vmatpush.bf16.msra.mxu0 %v1935
        %2353 = vmatpush.bf16.msra.mxu0 %v1933
        %2354 = vmatpush.bf16.msra.mxu0 %v1931
        %2355 = vmatpush.bf16.msra.mxu0 %v1929
        %2356 = vmatpush.bf16.msra.mxu0 %v1927
        %2357 = vmatmul.bf16.gmra.mxu0 %v1429
        %v2358 = vpop.f32.mrf.mxu0
        %v2359 = vadd.f32 %v2310, %v2358
        %v2360 = vpop.f32.mrf.mxu0
        %v2361 = vadd.f32 %v2312, %v2360
        %2362 = vmatmul.bf16.gmra.mxu0 %v1461
        %v2363 = vpop.f32.mrf.mxu0
        %v2364 = vadd.f32 %v2315, %v2363
        %v2365 = vpop.f32.mrf.mxu0
        %v2366 = vadd.f32 %v2317, %v2365
        %2367 = vmatmul.bf16.gmra.mxu0 %v1493
        %v2368 = vpop.f32.mrf.mxu0
        %v2369 = vadd.f32 %v2320, %v2368
        %v2370 = vpop.f32.mrf.mxu0
        %v2371 = vadd.f32 %v2322, %v2370
        %2372 = vmatmul.bf16.gmra.mxu0 %v1525
        %v2373 = vpop.f32.mrf.mxu0
        %v2374 = vadd.f32 %v2325, %v2373
        %v2375 = vpop.f32.mrf.mxu0
        %v2376 = vadd.f32 %v2327, %v2375
        %2377 = vmatmul.bf16.gmra.mxu0 %v1557
        %v2378 = vpop.f32.mrf.mxu0
        %v2379 = vadd.f32 %v2330, %v2378
        %v2380 = vpop.f32.mrf.mxu0
        %v2381 = vadd.f32 %v2332, %v2380
        %2382 = vmatmul.bf16.gmra.mxu0 %v1589
        %v2383 = vpop.f32.mrf.mxu0
        %v2384 = vadd.f32 %v2335, %v2383
        %v2385 = vpop.f32.mrf.mxu0
        %v2386 = vadd.f32 %v2337, %v2385
        %2387 = vmatmul.bf16.gmra.mxu0 %v1621
        %v2388 = vpop.f32.mrf.mxu0
        %v2389 = vadd.f32 %v2340, %v2388
        %v2390 = vpop.f32.mrf.mxu0
        %v2391 = vadd.f32 %v2342, %v2390
        %2392 = vmatmul.bf16.gmra.mxu0 %v1653
        %v2393 = vpop.f32.mrf.mxu0
        %v2394 = vadd.f32 %v2345, %v2393
        %v2395 = vpop.f32.mrf.mxu0
        %v2396 = vadd.f32 %v2347, %v2395
        %2397 = vdwg.mxu0
        %v2398 = vadd.f32 %v1349, %v2163
        %v2399 = vadd.f32 %v1350, %v2359
        %v2400 = vadd.f32 %v1351, %v2165
        %v2401 = vadd.f32 %v1352, %v2361
        %v2402 = vadd.f32 %v1353, %v2168
        %v2403 = vadd.f32 %v1354, %v2364
        %v2404 = vadd.f32 %v1355, %v2170
        %v2405 = vadd.f32 %v1356, %v2366
        %v2406 = vadd.f32 %v1357, %v2173
        %v2407 = vadd.f32 %v1358, %v2369
        %v2408 = vadd.f32 %v1359, %v2175
        %v2409 = vadd.f32 %v1360, %v2371
        %v2410 = vadd.f32 %v1361, %v2178
        %v2411 = vadd.f32 %v1362, %v2374
        %v2412 = vadd.f32 %v1363, %v2180
        %v2413 = vadd.f32 %v1364, %v2376
        %v2414 = vadd.f32 %v1365, %v2183
        %v2415 = vadd.f32 %v1366, %v2379
        %v2416 = vadd.f32 %v1367, %v2185
        %v2417 = vadd.f32 %v1368, %v2381
        %v2418 = vadd.f32 %v1369, %v2188
        %v2419 = vadd.f32 %v1370, %v2384
        %v2420 = vadd.f32 %v1371, %v2190
        %v2421 = vadd.f32 %v1372, %v2386
        %v2422 = vadd.f32 %v1373, %v2193
        %v2423 = vadd.f32 %v1374, %v2389
        %v2424 = vadd.f32 %v1375, %v2195
        %v2425 = vadd.f32 %v1376, %v2391
        %v2426 = vadd.f32 %v1377, %v2198
        %v2427 = vadd.f32 %v1378, %v2394
        %v2428 = vadd.f32 %v1379, %v2200
        %v2429 = vadd.f32 %v1380, %v2396
        %2430 = vst [vmem:[#allocation2] sm:$0xff] %v2398
        %2431 = vst [vmem:[#allocation2 + $0x8] sm:$0xff] %v2399
        %2432 = vst [vmem:[#allocation2 + $0x10] sm:$0xff] %v2400
        %2433 = vst [vmem:[#allocation2 + $0x18] sm:$0xff] %v2401
        %2434 = vst [vmem:[#allocation2 + $0x20] sm:$0xff] %v2402
        %2435 = vst [vmem:[#allocation2 + $0x28] sm:$0xff] %v2403
        %2436 = vst [vmem:[#allocation2 + $0x30] sm:$0xff] %v2404
        %2437 = vst [vmem:[#allocation2 + $0x38] sm:$0xff] %v2405
        %2438 = vst [vmem:[#allocation2 + $0x40] sm:$0xff] %v2406
        %2439 = vst [vmem:[#allocation2 + $0x48] sm:$0xff] %v2407
        %2440 = vst [vmem:[#allocation2 + $0x50] sm:$0xff] %v2408
        %2441 = vst [vmem:[#allocation2 + $0x58] sm:$0xff] %v2409
        %2442 = vst [vmem:[#allocation2 + $0x60] sm:$0xff] %v2410
        %2443 = vst [vmem:[#allocation2 + $0x68] sm:$0xff] %v2411
        %2444 = vst [vmem:[#allocation2 + $0x70] sm:$0xff] %v2412
        %2445 = vst [vmem:[#allocation2 + $0x78] sm:$0xff] %v2413
        %2446 = vst [vmem:[#allocation2 + $0x80] sm:$0xff] %v2414
        %2447 = vst [vmem:[#allocation2 + $0x88] sm:$0xff] %v2415
        %2448 = vst [vmem:[#allocation2 + $0x90] sm:$0xff] %v2416
        %2449 = vst [vmem:[#allocation2 + $0x98] sm:$0xff] %v2417
        %2450 = vst [vmem:[#allocation2 + $0xa0] sm:$0xff] %v2418
        %2451 = vst [vmem:[#allocation2 + $0xa8] sm:$0xff] %v2419
        %2452 = vst [vmem:[#allocation2 + $0xb0] sm:$0xff] %v2420
        %2453 = vst [vmem:[#allocation2 + $0xb8] sm:$0xff] %v2421
        %2454 = vst [vmem:[#allocation2 + $0xc0] sm:$0xff] %v2422
        %2455 = vst [vmem:[#allocation2 + $0xc8] sm:$0xff] %v2423
        %2456 = vst [vmem:[#allocation2 + $0xd0] sm:$0xff] %v2424
        %2457 = vst [vmem:[#allocation2 + $0xd8] sm:$0xff] %v2425
        %2458 = vst [vmem:[#allocation2 + $0xe0] sm:$0xff] %v2426
        %2459 = vst [vmem:[#allocation2 + $0xe8] sm:$0xff] %v2427
        %2460 = vst [vmem:[#allocation2 + $0xf0] sm:$0xff] %v2428
        %2461 = vst [vmem:[#allocation2 + $0xf8] sm:$0xff] %v2429
        %v2462 = vld [vmem:[%s154] sm:$0xfc]
        %v2463 = vld [vmem:[%s154 + $0x8] sm:$0xfc]
        %v2464 = vld [vmem:[%s154 + $0x10] sm:$0xfc]
        %v2465 = vld [vmem:[%s154 + $0x18] sm:$0xfc]
        %v2466 = vld [vmem:[%s154 + $0x20] sm:$0xff]
        %v2467 = vld [vmem:[%s154 + $0x28] sm:$0xff]
        %v2468 = vld [vmem:[%s154 + $0x30] sm:$0xff]
        %v2469 = vld [vmem:[%s154 + $0x38] sm:$0xff]
        %v2470 = vld [vmem:[%s154 + $0x40] sm:$0xff]
        %v2471 = vld [vmem:[%s154 + $0x48] sm:$0xff]
        %v2472 = vld [vmem:[%s154 + $0x50] sm:$0xff]
        %v2473 = vld [vmem:[%s154 + $0x58] sm:$0xff]
        %v2474 = vld [vmem:[%s154 + $0x60] sm:$0xff]
        %v2475 = vld [vmem:[%s154 + $0x68] sm:$0xff]
        %v2476 = vld [vmem:[%s154 + $0x70] sm:$0xff]
        %v2477 = vld [vmem:[%s154 + $0x78] sm:$0xff]
        %v2478 = vld [vmem:[%s154 + $0x80] sm:$0xff]
        %v2479 = vld [vmem:[%s154 + $0x88] sm:$0xff]
        %v2480 = vld [vmem:[%s154 + $0x90] sm:$0xff]
        %v2481 = vld [vmem:[%s154 + $0x98] sm:$0xff]
        %v2482 = vld [vmem:[%s154 + $0xa0] sm:$0xff]
        %v2483 = vld [vmem:[%s154 + $0xa8] sm:$0xff]
        %v2484 = vld [vmem:[%s154 + $0xb0] sm:$0xff]
        %v2485 = vld [vmem:[%s154 + $0xb8] sm:$0xff]
        %v2486 = vld [vmem:[%s154 + $0xc0] sm:$0xff]
        %v2487 = vld [vmem:[%s154 + $0xc8] sm:$0xff]
        %v2488 = vld [vmem:[%s154 + $0xd0] sm:$0xff]
        %v2489 = vld [vmem:[%s154 + $0xd8] sm:$0xff]
        %v2490 = vld [vmem:[%s154 + $0xe0] sm:$0xff]
        %v2491 = vld [vmem:[%s154 + $0xe8] sm:$0xff]
        %v2492 = vld [vmem:[%s154 + $0xf0] sm:$0xff]
        %v2493 = vld [vmem:[%s154 + $0xf8] sm:$0xff]
        %v2494 = vld [vmem:[%s154 + $0x100] sm:$0xff]
        %v2495 = vld [vmem:[%s154 + $0x108] sm:$0xff]
        %v2496 = vld [vmem:[%s154 + $0x110] sm:$0xff]
        %v2497 = vld [vmem:[%s154 + $0x118] sm:$0xff]
        %v2498 = vld [vmem:[%s154 + $0x120] sm:$0xff]
        %v2499 = vld [vmem:[%s154 + $0x128] sm:$0xff]
        %v2500 = vld [vmem:[%s154 + $0x130] sm:$0xff]
        %v2501 = vld [vmem:[%s154 + $0x138] sm:$0xff]
        %v2502 = vld [vmem:[%s154 + $0x140] sm:$0xff]
        %v2503 = vld [vmem:[%s154 + $0x148] sm:$0xff]
        %v2504 = vld [vmem:[%s154 + $0x150] sm:$0xff]
        %v2505 = vld [vmem:[%s154 + $0x158] sm:$0xff]
        %v2506 = vld [vmem:[%s154 + $0x160] sm:$0xff]
        %v2507 = vld [vmem:[%s154 + $0x168] sm:$0xff]
        %v2508 = vld [vmem:[%s154 + $0x170] sm:$0xff]
        %v2509 = vld [vmem:[%s154 + $0x178] sm:$0xff]
        %v2510 = vld [vmem:[%s154 + $0x180] sm:$0xff]
        %v2511 = vld [vmem:[%s154 + $0x188] sm:$0xff]
        %v2512 = vld [vmem:[%s154 + $0x190] sm:$0xff]
        %v2513 = vld [vmem:[%s154 + $0x198] sm:$0xff]
        %v2514 = vld [vmem:[%s154 + $0x1a0] sm:$0xff]
        %v2515 = vld [vmem:[%s154 + $0x1a8] sm:$0xff]
        %v2516 = vld [vmem:[%s154 + $0x1b0] sm:$0xff]
        %v2517 = vld [vmem:[%s154 + $0x1b8] sm:$0xff]
        %v2518 = vld [vmem:[%s154 + $0x1c0] sm:$0xff]
        %v2519 = vld [vmem:[%s154 + $0x1c8] sm:$0xff]
        %v2520 = vld [vmem:[%s154 + $0x1d0] sm:$0xff]
        %v2521 = vld [vmem:[%s154 + $0x1d8] sm:$0xff]
        %v2522 = vld [vmem:[%s154 + $0x1e0] sm:$0xff]
        %v2523 = vld [vmem:[%s154 + $0x1e8] sm:$0xff]
        %v2524 = vld [vmem:[%s154 + $0x1f0] sm:$0xff]
        %v2525 = vld [vmem:[%s154 + $0x1f8] sm:$0xff]
        %v2526 = vld [vmem:[%s154 + $0x200] sm:$0x3]
        %v2527 = vld [vmem:[%s154 + $0x208] sm:$0x3]
        %v2528 = vld [vmem:[%s154 + $0x210] sm:$0x3]
        %v2529 = vld [vmem:[%s154 + $0x218] sm:$0x3]
        %v2530 = vpack.c.bf16 %v2466, %v2462
        %v2531 = vpack.c.bf16 %v2467, %v2463
        %v2532 = vpack.c.bf16 %v2468, %v2464
        %v2533 = vpack.c.bf16 %v2469, %v2465
        %v2534 = vpack.c.bf16 %v2474, %v2470
        %v2535 = vpack.c.bf16 %v2475, %v2471
        %v2536 = vpack.c.bf16 %v2476, %v2472
        %v2537 = vpack.c.bf16 %v2477, %v2473
        %v2538 = vpack.c.bf16 %v2482, %v2478
        %v2539 = vpack.c.bf16 %v2483, %v2479
        %v2540 = vpack.c.bf16 %v2484, %v2480
        %v2541 = vpack.c.bf16 %v2485, %v2481
        %v2542 = vpack.c.bf16 %v2490, %v2486
        %v2543 = vpack.c.bf16 %v2491, %v2487
        %v2544 = vpack.c.bf16 %v2492, %v2488
        %v2545 = vpack.c.bf16 %v2493, %v2489
        %v2546 = vpack.c.bf16 %v2498, %v2494
        %v2547 = vpack.c.bf16 %v2499, %v2495
        %v2548 = vpack.c.bf16 %v2500, %v2496
        %v2549 = vpack.c.bf16 %v2501, %v2497
        %v2550 = vpack.c.bf16 %v2506, %v2502
        %v2551 = vpack.c.bf16 %v2507, %v2503
        %v2552 = vpack.c.bf16 %v2508, %v2504
        %v2553 = vpack.c.bf16 %v2509, %v2505
        %v2554 = vpack.c.bf16 %v2514, %v2510
        %v2555 = vpack.c.bf16 %v2515, %v2511
        %v2556 = vpack.c.bf16 %v2516, %v2512
        %v2557 = vpack.c.bf16 %v2517, %v2513
        %v2558 = vpack.c.bf16 %v2522, %v2518
        %v2559 = vpack.c.bf16 %v2523, %v2519
        %v2560 = vpack.c.bf16 %v2524, %v2520
        %v2561 = vpack.c.bf16 %v2525, %v2521
        %v2562 = vpack.c.bf16 %v2526, %v2526
        %v2563 = vpack.c.bf16 %v2527, %v2527
        %v2564 = vpack.c.bf16 %v2528, %v2528
        %v2565 = vpack.c.bf16 %v2529, %v2529
        %v2566 = vld [vmem:[#allocation6 + $0x400] sm:$0xff]
        %v2567 = vld [vmem:[#allocation6 + $0x408] sm:$0xff]
        %v2568 = vld [vmem:[#allocation6 + $0x410] sm:$0xff]
        %v2569 = vld [vmem:[#allocation6 + $0x418] sm:$0xff]
        %v2570 = vld [vmem:[#allocation6 + $0x420] sm:$0xff]
        %v2571 = vld [vmem:[#allocation6 + $0x428] sm:$0xff]
        %v2572 = vld [vmem:[#allocation6 + $0x430] sm:$0xff]
        %v2573 = vld [vmem:[#allocation6 + $0x438] sm:$0xff]
        %v2574 = vld [vmem:[#allocation6 + $0x440] sm:$0xff]
        %v2575 = vld [vmem:[#allocation6 + $0x448] sm:$0xff]
        %v2576 = vld [vmem:[#allocation6 + $0x450] sm:$0xff]
        %v2577 = vld [vmem:[#allocation6 + $0x458] sm:$0xff]
        %v2578 = vld [vmem:[#allocation6 + $0x460] sm:$0xff]
        %v2579 = vld [vmem:[#allocation6 + $0x468] sm:$0xff]
        %v2580 = vld [vmem:[#allocation6 + $0x470] sm:$0xff]
        %v2581 = vld [vmem:[#allocation6 + $0x478] sm:$0xff]
        %v2582 = vld [vmem:[#allocation6 + $0x480] sm:$0xff]
        %v2583 = vld [vmem:[#allocation6 + $0x488] sm:$0xff]
        %v2584 = vld [vmem:[#allocation6 + $0x490] sm:$0xff]
        %v2585 = vld [vmem:[#allocation6 + $0x498] sm:$0xff]
        %v2586 = vld [vmem:[#allocation6 + $0x4a0] sm:$0xff]
        %v2587 = vld [vmem:[#allocation6 + $0x4a8] sm:$0xff]
        %v2588 = vld [vmem:[#allocation6 + $0x4b0] sm:$0xff]
        %v2589 = vld [vmem:[#allocation6 + $0x4b8] sm:$0xff]
        %v2590 = vld [vmem:[#allocation6 + $0x4c0] sm:$0xff]
        %v2591 = vld [vmem:[#allocation6 + $0x4c8] sm:$0xff]
        %v2592 = vld [vmem:[#allocation6 + $0x4d0] sm:$0xff]
        %v2593 = vld [vmem:[#allocation6 + $0x4d8] sm:$0xff]
        %v2594 = vld [vmem:[#allocation6 + $0x4e0] sm:$0xff]
        %v2595 = vld [vmem:[#allocation6 + $0x4e8] sm:$0xff]
        %v2596 = vld [vmem:[#allocation6 + $0x4f0] sm:$0xff]
        %v2597 = vld [vmem:[#allocation6 + $0x4f8] sm:$0xff]
        %v2598 = vld [vmem:[#allocation6 + $0x500] sm:$0xff]
        %v2599 = vld [vmem:[#allocation6 + $0x508] sm:$0xff]
        %v2600 = vld [vmem:[#allocation6 + $0x510] sm:$0xff]
        %v2601 = vld [vmem:[#allocation6 + $0x518] sm:$0xff]
        %v2602 = vld [vmem:[#allocation6 + $0x520] sm:$0xff]
        %v2603 = vld [vmem:[#allocation6 + $0x528] sm:$0xff]
        %v2604 = vld [vmem:[#allocation6 + $0x530] sm:$0xff]
        %v2605 = vld [vmem:[#allocation6 + $0x538] sm:$0xff]
        %v2606 = vld [vmem:[#allocation6 + $0x540] sm:$0xff]
        %v2607 = vld [vmem:[#allocation6 + $0x548] sm:$0xff]
        %v2608 = vld [vmem:[#allocation6 + $0x550] sm:$0xff]
        %v2609 = vld [vmem:[#allocation6 + $0x558] sm:$0xff]
        %v2610 = vld [vmem:[#allocation6 + $0x560] sm:$0xff]
        %v2611 = vld [vmem:[#allocation6 + $0x568] sm:$0xff]
        %v2612 = vld [vmem:[#allocation6 + $0x570] sm:$0xff]
        %v2613 = vld [vmem:[#allocation6 + $0x578] sm:$0xff]
        %v2614 = vld [vmem:[#allocation6 + $0x580] sm:$0xff]
        %v2615 = vld [vmem:[#allocation6 + $0x588] sm:$0xff]
        %v2616 = vld [vmem:[#allocation6 + $0x590] sm:$0xff]
        %v2617 = vld [vmem:[#allocation6 + $0x598] sm:$0xff]
        %v2618 = vld [vmem:[#allocation6 + $0x5a0] sm:$0xff]
        %v2619 = vld [vmem:[#allocation6 + $0x5a8] sm:$0xff]
        %v2620 = vld [vmem:[#allocation6 + $0x5b0] sm:$0xff]
        %v2621 = vld [vmem:[#allocation6 + $0x5b8] sm:$0xff]
        %v2622 = vld [vmem:[#allocation6 + $0x5c0] sm:$0xff]
        %v2623 = vld [vmem:[#allocation6 + $0x5c8] sm:$0xff]
        %v2624 = vld [vmem:[#allocation6 + $0x5d0] sm:$0xff]
        %v2625 = vld [vmem:[#allocation6 + $0x5d8] sm:$0xff]
        %v2626 = vld [vmem:[#allocation6 + $0x5e0] sm:$0xff]
        %v2627 = vld [vmem:[#allocation6 + $0x5e8] sm:$0xff]
        %v2628 = vld [vmem:[#allocation6 + $0x5f0] sm:$0xff]
        %v2629 = vld [vmem:[#allocation6 + $0x5f8] sm:$0xff]
        %v2630 = vld [vmem:[#allocation2] sm:$0xff]
        %v2631 = vld [vmem:[#allocation2 + $0x8] sm:$0xff]
        %v2632 = vld [vmem:[#allocation2 + $0x10] sm:$0xff]
        %v2633 = vld [vmem:[#allocation2 + $0x18] sm:$0xff]
        %v2634 = vld [vmem:[#allocation2 + $0x20] sm:$0xff]
        %v2635 = vld [vmem:[#allocation2 + $0x28] sm:$0xff]
        %v2636 = vld [vmem:[#allocation2 + $0x30] sm:$0xff]
        %v2637 = vld [vmem:[#allocation2 + $0x38] sm:$0xff]
        %v2638 = vld [vmem:[#allocation2 + $0x40] sm:$0xff]
        %v2639 = vld [vmem:[#allocation2 + $0x48] sm:$0xff]
        %v2640 = vld [vmem:[#allocation2 + $0x50] sm:$0xff]
        %v2641 = vld [vmem:[#allocation2 + $0x58] sm:$0xff]
        %v2642 = vld [vmem:[#allocation2 + $0x60] sm:$0xff]
        %v2643 = vld [vmem:[#allocation2 + $0x68] sm:$0xff]
        %v2644 = vld [vmem:[#allocation2 + $0x70] sm:$0xff]
        %v2645 = vld [vmem:[#allocation2 + $0x78] sm:$0xff]
        %v2646 = vld [vmem:[#allocation2 + $0x80] sm:$0xff]
        %v2647 = vld [vmem:[#allocation2 + $0x88] sm:$0xff]
        %v2648 = vld [vmem:[#allocation2 + $0x90] sm:$0xff]
        %v2649 = vld [vmem:[#allocation2 + $0x98] sm:$0xff]
        %v2650 = vld [vmem:[#allocation2 + $0xa0] sm:$0xff]
        %v2651 = vld [vmem:[#allocation2 + $0xa8] sm:$0xff]
        %v2652 = vld [vmem:[#allocation2 + $0xb0] sm:$0xff]
        %v2653 = vld [vmem:[#allocation2 + $0xb8] sm:$0xff]
        %v2654 = vld [vmem:[#allocation2 + $0xc0] sm:$0xff]
        %v2655 = vld [vmem:[#allocation2 + $0xc8] sm:$0xff]
        %v2656 = vld [vmem:[#allocation2 + $0xd0] sm:$0xff]
        %v2657 = vld [vmem:[#allocation2 + $0xd8] sm:$0xff]
        %v2658 = vld [vmem:[#allocation2 + $0xe0] sm:$0xff]
        %v2659 = vld [vmem:[#allocation2 + $0xe8] sm:$0xff]
        %v2660 = vld [vmem:[#allocation2 + $0xf0] sm:$0xff]
        %v2661 = vld [vmem:[#allocation2 + $0xf8] sm:$0xff]
        %vm2698 = vcmask 1046528
        %v2699 = vrot.slane %v2530, 1
        %v2700 = vrot.slane %v2534, 1
        %v2701 = vsel %vm2698, %v2699, %v2700
        %v2702 = vrot.slane %v2531, 1
        %v2703 = vrot.slane %v2535, 1
        %v2704 = vsel %vm2698, %v2702, %v2703
        %v2705 = vrot.slane %v2532, 1
        %v2706 = vrot.slane %v2536, 1
        %v2707 = vsel %vm2698, %v2705, %v2706
        %v2708 = vrot.slane %v2533, 1
        %v2709 = vrot.slane %v2537, 1
        %v2710 = vsel %vm2698, %v2708, %v2709
        %v2711 = vrot.slane %v2538, 1
        %v2712 = vsel %vm2698, %v2700, %v2711
        %v2713 = vrot.slane %v2539, 1
        %v2714 = vsel %vm2698, %v2703, %v2713
        %v2715 = vrot.slane %v2540, 1
        %v2716 = vsel %vm2698, %v2706, %v2715
        %v2717 = vrot.slane %v2541, 1
        %v2718 = vsel %vm2698, %v2709, %v2717
        %v2719 = vrot.slane %v2542, 1
        %v2720 = vsel %vm2698, %v2711, %v2719
        %v2721 = vrot.slane %v2543, 1
        %v2722 = vsel %vm2698, %v2713, %v2721
        %v2723 = vrot.slane %v2544, 1
        %v2724 = vsel %vm2698, %v2715, %v2723
        %v2725 = vrot.slane %v2545, 1
        %v2726 = vsel %vm2698, %v2717, %v2725
        %v2727 = vrot.slane %v2546, 1
        %v2728 = vsel %vm2698, %v2719, %v2727
        %v2729 = vrot.slane %v2547, 1
        %v2730 = vsel %vm2698, %v2721, %v2729
        %v2731 = vrot.slane %v2548, 1
        %v2732 = vsel %vm2698, %v2723, %v2731
        %v2733 = vrot.slane %v2549, 1
        %v2734 = vsel %vm2698, %v2725, %v2733
        %v2735 = vrot.slane %v2550, 1
        %v2736 = vsel %vm2698, %v2727, %v2735
        %v2737 = vrot.slane %v2551, 1
        %v2738 = vsel %vm2698, %v2729, %v2737
        %v2739 = vrot.slane %v2552, 1
        %v2740 = vsel %vm2698, %v2731, %v2739
        %v2741 = vrot.slane %v2553, 1
        %v2742 = vsel %vm2698, %v2733, %v2741
        %v2743 = vrot.slane %v2554, 1
        %v2744 = vsel %vm2698, %v2735, %v2743
        %v2745 = vrot.slane %v2555, 1
        %v2746 = vsel %vm2698, %v2737, %v2745
        %v2747 = vrot.slane %v2556, 1
        %v2748 = vsel %vm2698, %v2739, %v2747
        %v2749 = vrot.slane %v2557, 1
        %v2750 = vsel %vm2698, %v2741, %v2749
        %v2751 = vrot.slane %v2558, 1
        %v2752 = vsel %vm2698, %v2743, %v2751
        %v2753 = vrot.slane %v2559, 1
        %v2754 = vsel %vm2698, %v2745, %v2753
        %v2755 = vrot.slane %v2560, 1
        %v2756 = vsel %vm2698, %v2747, %v2755
        %v2757 = vrot.slane %v2561, 1
        %v2758 = vsel %vm2698, %v2749, %v2757
        %v2759 = vrot.slane %v2562, 1
        %v2760 = vsel %vm2698, %v2751, %v2759
        %v2761 = vrot.slane %v2563, 1
        %v2762 = vsel %vm2698, %v2753, %v2761
        %v2763 = vrot.slane %v2564, 1
        %v2764 = vsel %vm2698, %v2755, %v2763
        %v2765 = vrot.slane %v2565, 1
        %v2766 = vsel %vm2698, %v2757, %v2765
        %v2863 = vunpack.c.l.b16 %v2566
        %v2864 = vunpack.c.h.b16 %v2566
        %v2865 = vunpack.c.l.b16 %v2567
        %v2866 = vunpack.c.h.b16 %v2567
        %v2867 = vunpack.c.l.b16 %v2568
        %v2868 = vunpack.c.h.b16 %v2568
        %v2869 = vunpack.c.l.b16 %v2569
        %v2870 = vunpack.c.h.b16 %v2569
        %v2871 = vunpack.c.l.b16 %v2570
        %v2872 = vunpack.c.h.b16 %v2570
        %v2873 = vunpack.c.l.b16 %v2571
        %v2874 = vunpack.c.h.b16 %v2571
        %v2875 = vunpack.c.l.b16 %v2572
        %v2876 = vunpack.c.h.b16 %v2572
        %v2877 = vunpack.c.l.b16 %v2573
        %v2878 = vunpack.c.h.b16 %v2573
        %v2879 = vunpack.c.l.b16 %v2574
        %v2880 = vunpack.c.h.b16 %v2574
        %v2881 = vunpack.c.l.b16 %v2575
        %v2882 = vunpack.c.h.b16 %v2575
        %v2883 = vunpack.c.l.b16 %v2576
        %v2884 = vunpack.c.h.b16 %v2576
        %v2885 = vunpack.c.l.b16 %v2577
        %v2886 = vunpack.c.h.b16 %v2577
        %v2887 = vunpack.c.l.b16 %v2578
        %v2888 = vunpack.c.h.b16 %v2578
        %v2889 = vunpack.c.l.b16 %v2579
        %v2890 = vunpack.c.h.b16 %v2579
        %v2891 = vunpack.c.l.b16 %v2580
        %v2892 = vunpack.c.h.b16 %v2580
        %v2893 = vunpack.c.l.b16 %v2581
        %v2894 = vunpack.c.h.b16 %v2581
        %v2895 = vunpack.c.l.b16 %v2582
        %v2896 = vunpack.c.h.b16 %v2582
        %v2897 = vunpack.c.l.b16 %v2583
        %v2898 = vunpack.c.h.b16 %v2583
        %v2899 = vunpack.c.l.b16 %v2584
        %v2900 = vunpack.c.h.b16 %v2584
        %v2901 = vunpack.c.l.b16 %v2585
        %v2902 = vunpack.c.h.b16 %v2585
        %v2903 = vunpack.c.l.b16 %v2586
        %v2904 = vunpack.c.h.b16 %v2586
        %v2905 = vunpack.c.l.b16 %v2587
        %v2906 = vunpack.c.h.b16 %v2587
        %v2907 = vunpack.c.l.b16 %v2588
        %v2908 = vunpack.c.h.b16 %v2588
        %v2909 = vunpack.c.l.b16 %v2589
        %v2910 = vunpack.c.h.b16 %v2589
        %v2911 = vunpack.c.l.b16 %v2590
        %v2912 = vunpack.c.h.b16 %v2590
        %v2913 = vunpack.c.l.b16 %v2591
        %v2914 = vunpack.c.h.b16 %v2591
        %v2915 = vunpack.c.l.b16 %v2592
        %v2916 = vunpack.c.h.b16 %v2592
        %v2917 = vunpack.c.l.b16 %v2593
        %v2918 = vunpack.c.h.b16 %v2593
        %v2919 = vunpack.c.l.b16 %v2594
        %v2920 = vunpack.c.h.b16 %v2594
        %v2921 = vunpack.c.l.b16 %v2595
        %v2922 = vunpack.c.h.b16 %v2595
        %v2923 = vunpack.c.l.b16 %v2596
        %v2924 = vunpack.c.h.b16 %v2596
        %v2925 = vunpack.c.l.b16 %v2597
        %v2926 = vunpack.c.h.b16 %v2597
        %v2927 = vunpack.c.l.b16 %v2598
        %v2928 = vunpack.c.h.b16 %v2598
        %v2929 = vunpack.c.l.b16 %v2599
        %v2930 = vunpack.c.h.b16 %v2599
        %v2931 = vunpack.c.l.b16 %v2600
        %v2932 = vunpack.c.h.b16 %v2600
        %v2933 = vunpack.c.l.b16 %v2601
        %v2934 = vunpack.c.h.b16 %v2601
        %v2935 = vunpack.c.l.b16 %v2602
        %v2936 = vunpack.c.h.b16 %v2602
        %v2937 = vunpack.c.l.b16 %v2603
        %v2938 = vunpack.c.h.b16 %v2603
        %v2939 = vunpack.c.l.b16 %v2604
        %v2940 = vunpack.c.h.b16 %v2604
        %v2941 = vunpack.c.l.b16 %v2605
        %v2942 = vunpack.c.h.b16 %v2605
        %v2943 = vunpack.c.l.b16 %v2606
        %v2944 = vunpack.c.h.b16 %v2606
        %v2945 = vunpack.c.l.b16 %v2607
        %v2946 = vunpack.c.h.b16 %v2607
        %v2947 = vunpack.c.l.b16 %v2608
        %v2948 = vunpack.c.h.b16 %v2608
        %v2949 = vunpack.c.l.b16 %v2609
        %v2950 = vunpack.c.h.b16 %v2609
        %v2951 = vunpack.c.l.b16 %v2610
        %v2952 = vunpack.c.h.b16 %v2610
        %v2953 = vunpack.c.l.b16 %v2611
        %v2954 = vunpack.c.h.b16 %v2611
        %v2955 = vunpack.c.l.b16 %v2612
        %v2956 = vunpack.c.h.b16 %v2612
        %v2957 = vunpack.c.l.b16 %v2613
        %v2958 = vunpack.c.h.b16 %v2613
        %v2959 = vunpack.c.l.b16 %v2614
        %v2960 = vunpack.c.h.b16 %v2614
        %v2961 = vunpack.c.l.b16 %v2615
        %v2962 = vunpack.c.h.b16 %v2615
        %v2963 = vunpack.c.l.b16 %v2616
        %v2964 = vunpack.c.h.b16 %v2616
        %v2965 = vunpack.c.l.b16 %v2617
        %v2966 = vunpack.c.h.b16 %v2617
        %v2967 = vunpack.c.l.b16 %v2618
        %v2968 = vunpack.c.h.b16 %v2618
        %v2969 = vunpack.c.l.b16 %v2619
        %v2970 = vunpack.c.h.b16 %v2619
        %v2971 = vunpack.c.l.b16 %v2620
        %v2972 = vunpack.c.h.b16 %v2620
        %v2973 = vunpack.c.l.b16 %v2621
        %v2974 = vunpack.c.h.b16 %v2621
        %v2975 = vunpack.c.l.b16 %v2622
        %v2976 = vunpack.c.h.b16 %v2622
        %v2977 = vunpack.c.l.b16 %v2623
        %v2978 = vunpack.c.h.b16 %v2623
        %v2979 = vunpack.c.l.b16 %v2624
        %v2980 = vunpack.c.h.b16 %v2624
        %v2981 = vunpack.c.l.b16 %v2625
        %v2982 = vunpack.c.h.b16 %v2625
        %v2983 = vunpack.c.l.b16 %v2626
        %v2984 = vunpack.c.h.b16 %v2626
        %v2985 = vunpack.c.l.b16 %v2627
        %v2986 = vunpack.c.h.b16 %v2627
        %v2987 = vunpack.c.l.b16 %v2628
        %v2988 = vunpack.c.h.b16 %v2628
        %v2989 = vunpack.c.l.b16 %v2629
        %v2990 = vunpack.c.h.b16 %v2629
        %v2991 = vpack.c.b16 %v2865, %v2863
        %v2992 = vpack.c.b16 %v2866, %v2864
        %v2993 = vpack.c.b16 %v2869, %v2867
        %v2994 = vpack.c.b16 %v2870, %v2868
        %v2995 = vpack.c.b16 %v2873, %v2871
        %v2996 = vpack.c.b16 %v2874, %v2872
        %v2997 = vpack.c.b16 %v2877, %v2875
        %v2998 = vpack.c.b16 %v2878, %v2876
        %v2999 = vpack.c.b16 %v2881, %v2879
        %v3000 = vpack.c.b16 %v2882, %v2880
        %v3001 = vpack.c.b16 %v2885, %v2883
        %v3002 = vpack.c.b16 %v2886, %v2884
        %v3003 = vpack.c.b16 %v2889, %v2887
        %v3004 = vpack.c.b16 %v2890, %v2888
        %v3005 = vpack.c.b16 %v2893, %v2891
        %v3006 = vpack.c.b16 %v2894, %v2892
        %v3007 = vpack.c.b16 %v2897, %v2895
        %v3008 = vpack.c.b16 %v2898, %v2896
        %v3009 = vpack.c.b16 %v2901, %v2899
        %v3010 = vpack.c.b16 %v2902, %v2900
        %v3011 = vpack.c.b16 %v2905, %v2903
        %v3012 = vpack.c.b16 %v2906, %v2904
        %v3013 = vpack.c.b16 %v2909, %v2907
        %v3014 = vpack.c.b16 %v2910, %v2908
        %v3015 = vpack.c.b16 %v2913, %v2911
        %v3016 = vpack.c.b16 %v2914, %v2912
        %v3017 = vpack.c.b16 %v2917, %v2915
        %v3018 = vpack.c.b16 %v2918, %v2916
        %v3019 = vpack.c.b16 %v2921, %v2919
        %v3020 = vpack.c.b16 %v2922, %v2920
        %v3021 = vpack.c.b16 %v2925, %v2923
        %v3022 = vpack.c.b16 %v2926, %v2924
        %v3023 = vpack.c.b16 %v2929, %v2927
        %v3024 = vpack.c.b16 %v2930, %v2928
        %v3025 = vpack.c.b16 %v2933, %v2931
        %v3026 = vpack.c.b16 %v2934, %v2932
        %v3027 = vpack.c.b16 %v2937, %v2935
        %v3028 = vpack.c.b16 %v2938, %v2936
        %v3029 = vpack.c.b16 %v2941, %v2939
        %v3030 = vpack.c.b16 %v2942, %v2940
        %v3031 = vpack.c.b16 %v2945, %v2943
        %v3032 = vpack.c.b16 %v2946, %v2944
        %v3033 = vpack.c.b16 %v2949, %v2947
        %v3034 = vpack.c.b16 %v2950, %v2948
        %v3035 = vpack.c.b16 %v2953, %v2951
        %v3036 = vpack.c.b16 %v2954, %v2952
        %v3037 = vpack.c.b16 %v2957, %v2955
        %v3038 = vpack.c.b16 %v2958, %v2956
        %v3039 = vpack.c.b16 %v2961, %v2959
        %v3040 = vpack.c.b16 %v2962, %v2960
        %v3041 = vpack.c.b16 %v2965, %v2963
        %v3042 = vpack.c.b16 %v2966, %v2964
        %v3043 = vpack.c.b16 %v2969, %v2967
        %v3044 = vpack.c.b16 %v2970, %v2968
        %v3045 = vpack.c.b16 %v2973, %v2971
        %v3046 = vpack.c.b16 %v2974, %v2972
        %v3047 = vpack.c.b16 %v2977, %v2975
        %v3048 = vpack.c.b16 %v2978, %v2976
        %v3049 = vpack.c.b16 %v2981, %v2979
        %v3050 = vpack.c.b16 %v2982, %v2980
        %v3051 = vpack.c.b16 %v2985, %v2983
        %v3052 = vpack.c.b16 %v2986, %v2984
        %v3053 = vpack.c.b16 %v2989, %v2987
        %v3054 = vpack.c.b16 %v2990, %v2988
        %3119 = vmatpush.bf16.msra.mxu0 %v3005
        %3120 = vmatpush.bf16.msra.mxu0 %v3003
        %3121 = vmatpush.bf16.msra.mxu0 %v3001
        %3122 = vmatpush.bf16.msra.mxu0 %v2999
        %3123 = vmatpush.bf16.msra.mxu0 %v2997
        %3124 = vmatpush.bf16.msra.mxu0 %v2995
        %3125 = vmatpush.bf16.msra.mxu0 %v2993
        %3126 = vmatpush.bf16.msra.mxu0 %v2991
        %3127 = vmatmul.bf16.gmra.mxu0 %v2701
        %v3128 = vpop.f32.mrf.mxu0
        %v3129 = vadd.f32 0.0, %v3128
        %v3130 = vpop.f32.mrf.mxu0
        %v3131 = vadd.f32 0.0, %v3130
        %3132 = vmatmul.bf16.gmra.mxu0 %v2712
        %v3133 = vpop.f32.mrf.mxu0
        %v3134 = vadd.f32 0.0, %v3133
        %v3135 = vpop.f32.mrf.mxu0
        %v3136 = vadd.f32 0.0, %v3135
        %3137 = vmatmul.bf16.gmra.mxu0 %v2720
        %v3138 = vpop.f32.mrf.mxu0
        %v3139 = vadd.f32 0.0, %v3138
        %v3140 = vpop.f32.mrf.mxu0
        %v3141 = vadd.f32 0.0, %v3140
        %3142 = vmatmul.bf16.gmra.mxu0 %v2728
        %v3143 = vpop.f32.mrf.mxu0
        %v3144 = vadd.f32 0.0, %v3143
        %v3145 = vpop.f32.mrf.mxu0
        %v3146 = vadd.f32 0.0, %v3145
        %3147 = vmatmul.bf16.gmra.mxu0 %v2736
        %v3148 = vpop.f32.mrf.mxu0
        %v3149 = vadd.f32 0.0, %v3148
        %v3150 = vpop.f32.mrf.mxu0
        %v3151 = vadd.f32 0.0, %v3150
        %3152 = vmatmul.bf16.gmra.mxu0 %v2744
        %v3153 = vpop.f32.mrf.mxu0
        %v3154 = vadd.f32 0.0, %v3153
        %v3155 = vpop.f32.mrf.mxu0
        %v3156 = vadd.f32 0.0, %v3155
        %3157 = vmatmul.bf16.gmra.mxu0 %v2752
        %v3158 = vpop.f32.mrf.mxu0
        %v3159 = vadd.f32 0.0, %v3158
        %v3160 = vpop.f32.mrf.mxu0
        %v3161 = vadd.f32 0.0, %v3160
        %3162 = vmatmul.bf16.gmra.mxu0 %v2760
        %v3163 = vpop.f32.mrf.mxu0
        %v3164 = vadd.f32 0.0, %v3163
        %v3165 = vpop.f32.mrf.mxu0
        %v3166 = vadd.f32 0.0, %v3165
        %3167 = vdwg.mxu0
        %3168 = vmatpush.bf16.msra.mxu0 %v3021
        %3169 = vmatpush.bf16.msra.mxu0 %v3019
        %3170 = vmatpush.bf16.msra.mxu0 %v3017
        %3171 = vmatpush.bf16.msra.mxu0 %v3015
        %3172 = vmatpush.bf16.msra.mxu0 %v3013
        %3173 = vmatpush.bf16.msra.mxu0 %v3011
        %3174 = vmatpush.bf16.msra.mxu0 %v3009
        %3175 = vmatpush.bf16.msra.mxu0 %v3007
        %3176 = vmatmul.bf16.gmra.mxu0 %v2704
        %v3177 = vpop.f32.mrf.mxu0
        %v3178 = vadd.f32 %v3129, %v3177
        %v3179 = vpop.f32.mrf.mxu0
        %v3180 = vadd.f32 %v3131, %v3179
        %3181 = vmatmul.bf16.gmra.mxu0 %v2714
        %v3182 = vpop.f32.mrf.mxu0
        %v3183 = vadd.f32 %v3134, %v3182
        %v3184 = vpop.f32.mrf.mxu0
        %v3185 = vadd.f32 %v3136, %v3184
        %3186 = vmatmul.bf16.gmra.mxu0 %v2722
        %v3187 = vpop.f32.mrf.mxu0
        %v3188 = vadd.f32 %v3139, %v3187
        %v3189 = vpop.f32.mrf.mxu0
        %v3190 = vadd.f32 %v3141, %v3189
        %3191 = vmatmul.bf16.gmra.mxu0 %v2730
        %v3192 = vpop.f32.mrf.mxu0
        %v3193 = vadd.f32 %v3144, %v3192
        %v3194 = vpop.f32.mrf.mxu0
        %v3195 = vadd.f32 %v3146, %v3194
        %3196 = vmatmul.bf16.gmra.mxu0 %v2738
        %v3197 = vpop.f32.mrf.mxu0
        %v3198 = vadd.f32 %v3149, %v3197
        %v3199 = vpop.f32.mrf.mxu0
        %v3200 = vadd.f32 %v3151, %v3199
        %3201 = vmatmul.bf16.gmra.mxu0 %v2746
        %v3202 = vpop.f32.mrf.mxu0
        %v3203 = vadd.f32 %v3154, %v3202
        %v3204 = vpop.f32.mrf.mxu0
        %v3205 = vadd.f32 %v3156, %v3204
        %3206 = vmatmul.bf16.gmra.mxu0 %v2754
        %v3207 = vpop.f32.mrf.mxu0
        %v3208 = vadd.f32 %v3159, %v3207
        %v3209 = vpop.f32.mrf.mxu0
        %v3210 = vadd.f32 %v3161, %v3209
        %3211 = vmatmul.bf16.gmra.mxu0 %v2762
        %v3212 = vpop.f32.mrf.mxu0
        %v3213 = vadd.f32 %v3164, %v3212
        %v3214 = vpop.f32.mrf.mxu0
        %v3215 = vadd.f32 %v3166, %v3214
        %3216 = vdwg.mxu0
        %3217 = vmatpush.bf16.msra.mxu0 %v3037
        %3218 = vmatpush.bf16.msra.mxu0 %v3035
        %3219 = vmatpush.bf16.msra.mxu0 %v3033
        %3220 = vmatpush.bf16.msra.mxu0 %v3031
        %3221 = vmatpush.bf16.msra.mxu0 %v3029
        %3222 = vmatpush.bf16.msra.mxu0 %v3027
        %3223 = vmatpush.bf16.msra.mxu0 %v3025
        %3224 = vmatpush.bf16.msra.mxu0 %v3023
        %3225 = vmatmul.bf16.gmra.mxu0 %v2707
        %v3226 = vpop.f32.mrf.mxu0
        %v3227 = vadd.f32 %v3178, %v3226
        %v3228 = vpop.f32.mrf.mxu0
        %v3229 = vadd.f32 %v3180, %v3228
        %3230 = vmatmul.bf16.gmra.mxu0 %v2716
        %v3231 = vpop.f32.mrf.mxu0
        %v3232 = vadd.f32 %v3183, %v3231
        %v3233 = vpop.f32.mrf.mxu0
        %v3234 = vadd.f32 %v3185, %v3233
        %3235 = vmatmul.bf16.gmra.mxu0 %v2724
        %v3236 = vpop.f32.mrf.mxu0
        %v3237 = vadd.f32 %v3188, %v3236
        %v3238 = vpop.f32.mrf.mxu0
        %v3239 = vadd.f32 %v3190, %v3238
        %3240 = vmatmul.bf16.gmra.mxu0 %v2732
        %v3241 = vpop.f32.mrf.mxu0
        %v3242 = vadd.f32 %v3193, %v3241
        %v3243 = vpop.f32.mrf.mxu0
        %v3244 = vadd.f32 %v3195, %v3243
        %3245 = vmatmul.bf16.gmra.mxu0 %v2740
        %v3246 = vpop.f32.mrf.mxu0
        %v3247 = vadd.f32 %v3198, %v3246
        %v3248 = vpop.f32.mrf.mxu0
        %v3249 = vadd.f32 %v3200, %v3248
        %3250 = vmatmul.bf16.gmra.mxu0 %v2748
        %v3251 = vpop.f32.mrf.mxu0
        %v3252 = vadd.f32 %v3203, %v3251
        %v3253 = vpop.f32.mrf.mxu0
        %v3254 = vadd.f32 %v3205, %v3253
        %3255 = vmatmul.bf16.gmra.mxu0 %v2756
        %v3256 = vpop.f32.mrf.mxu0
        %v3257 = vadd.f32 %v3208, %v3256
        %v3258 = vpop.f32.mrf.mxu0
        %v3259 = vadd.f32 %v3210, %v3258
        %3260 = vmatmul.bf16.gmra.mxu0 %v2764
        %v3261 = vpop.f32.mrf.mxu0
        %v3262 = vadd.f32 %v3213, %v3261
        %v3263 = vpop.f32.mrf.mxu0
        %v3264 = vadd.f32 %v3215, %v3263
        %3265 = vdwg.mxu0
        %3266 = vmatpush.bf16.msra.mxu0 %v3053
        %3267 = vmatpush.bf16.msra.mxu0 %v3051
        %3268 = vmatpush.bf16.msra.mxu0 %v3049
        %3269 = vmatpush.bf16.msra.mxu0 %v3047
        %3270 = vmatpush.bf16.msra.mxu0 %v3045
        %3271 = vmatpush.bf16.msra.mxu0 %v3043
        %3272 = vmatpush.bf16.msra.mxu0 %v3041
        %3273 = vmatpush.bf16.msra.mxu0 %v3039
        %3274 = vmatmul.bf16.gmra.mxu0 %v2710
        %v3275 = vpop.f32.mrf.mxu0
        %v3276 = vadd.f32 %v3227, %v3275
        %v3277 = vpop.f32.mrf.mxu0
        %v3278 = vadd.f32 %v3229, %v3277
        %3279 = vmatmul.bf16.gmra.mxu0 %v2718
        %v3280 = vpop.f32.mrf.mxu0
        %v3281 = vadd.f32 %v3232, %v3280
        %v3282 = vpop.f32.mrf.mxu0
        %v3283 = vadd.f32 %v3234, %v3282
        %3284 = vmatmul.bf16.gmra.mxu0 %v2726
        %v3285 = vpop.f32.mrf.mxu0
        %v3286 = vadd.f32 %v3237, %v3285
        %v3287 = vpop.f32.mrf.mxu0
        %v3288 = vadd.f32 %v3239, %v3287
        %3289 = vmatmul.bf16.gmra.mxu0 %v2734
        %v3290 = vpop.f32.mrf.mxu0
        %v3291 = vadd.f32 %v3242, %v3290
        %v3292 = vpop.f32.mrf.mxu0
        %v3293 = vadd.f32 %v3244, %v3292
        %3294 = vmatmul.bf16.gmra.mxu0 %v2742
        %v3295 = vpop.f32.mrf.mxu0
        %v3296 = vadd.f32 %v3247, %v3295
        %v3297 = vpop.f32.mrf.mxu0
        %v3298 = vadd.f32 %v3249, %v3297
        %3299 = vmatmul.bf16.gmra.mxu0 %v2750
        %v3300 = vpop.f32.mrf.mxu0
        %v3301 = vadd.f32 %v3252, %v3300
        %v3302 = vpop.f32.mrf.mxu0
        %v3303 = vadd.f32 %v3254, %v3302
        %3304 = vmatmul.bf16.gmra.mxu0 %v2758
        %v3305 = vpop.f32.mrf.mxu0
        %v3306 = vadd.f32 %v3257, %v3305
        %v3307 = vpop.f32.mrf.mxu0
        %v3308 = vadd.f32 %v3259, %v3307
        %3309 = vmatmul.bf16.gmra.mxu0 %v2766
        %v3310 = vpop.f32.mrf.mxu0
        %v3311 = vadd.f32 %v3262, %v3310
        %v3312 = vpop.f32.mrf.mxu0
        %v3313 = vadd.f32 %v3264, %v3312
        %3314 = vdwg.mxu0
        %3315 = vmatpush.bf16.msra.mxu0 %v3006
        %3316 = vmatpush.bf16.msra.mxu0 %v3004
        %3317 = vmatpush.bf16.msra.mxu0 %v3002
        %3318 = vmatpush.bf16.msra.mxu0 %v3000
        %3319 = vmatpush.bf16.msra.mxu0 %v2998
        %3320 = vmatpush.bf16.msra.mxu0 %v2996
        %3321 = vmatpush.bf16.msra.mxu0 %v2994
        %3322 = vmatpush.bf16.msra.mxu0 %v2992
        %3323 = vmatmul.bf16.gmra.mxu0 %v2701
        %v3324 = vpop.f32.mrf.mxu0
        %v3325 = vadd.f32 0.0, %v3324
        %v3326 = vpop.f32.mrf.mxu0
        %v3327 = vadd.f32 0.0, %v3326
        %3328 = vmatmul.bf16.gmra.mxu0 %v2712
        %v3329 = vpop.f32.mrf.mxu0
        %v3330 = vadd.f32 0.0, %v3329
        %v3331 = vpop.f32.mrf.mxu0
        %v3332 = vadd.f32 0.0, %v3331
        %3333 = vmatmul.bf16.gmra.mxu0 %v2720
        %v3334 = vpop.f32.mrf.mxu0
        %v3335 = vadd.f32 0.0, %v3334
        %v3336 = vpop.f32.mrf.mxu0
        %v3337 = vadd.f32 0.0, %v3336
        %3338 = vmatmul.bf16.gmra.mxu0 %v2728
        %v3339 = vpop.f32.mrf.mxu0
        %v3340 = vadd.f32 0.0, %v3339
        %v3341 = vpop.f32.mrf.mxu0
        %v3342 = vadd.f32 0.0, %v3341
        %3343 = vmatmul.bf16.gmra.mxu0 %v2736
        %v3344 = vpop.f32.mrf.mxu0
        %v3345 = vadd.f32 0.0, %v3344
        %v3346 = vpop.f32.mrf.mxu0
        %v3347 = vadd.f32 0.0, %v3346
        %3348 = vmatmul.bf16.gmra.mxu0 %v2744
        %v3349 = vpop.f32.mrf.mxu0
        %v3350 = vadd.f32 0.0, %v3349
        %v3351 = vpop.f32.mrf.mxu0
        %v3352 = vadd.f32 0.0, %v3351
        %3353 = vmatmul.bf16.gmra.mxu0 %v2752
        %v3354 = vpop.f32.mrf.mxu0
        %v3355 = vadd.f32 0.0, %v3354
        %v3356 = vpop.f32.mrf.mxu0
        %v3357 = vadd.f32 0.0, %v3356
        %3358 = vmatmul.bf16.gmra.mxu0 %v2760
        %v3359 = vpop.f32.mrf.mxu0
        %v3360 = vadd.f32 0.0, %v3359
        %v3361 = vpop.f32.mrf.mxu0
        %v3362 = vadd.f32 0.0, %v3361
        %3363 = vdwg.mxu0
        %3364 = vmatpush.bf16.msra.mxu0 %v3022
        %3365 = vmatpush.bf16.msra.mxu0 %v3020
        %3366 = vmatpush.bf16.msra.mxu0 %v3018
        %3367 = vmatpush.bf16.msra.mxu0 %v3016
        %3368 = vmatpush.bf16.msra.mxu0 %v3014
        %3369 = vmatpush.bf16.msra.mxu0 %v3012
        %3370 = vmatpush.bf16.msra.mxu0 %v3010
        %3371 = vmatpush.bf16.msra.mxu0 %v3008
        %3372 = vmatmul.bf16.gmra.mxu0 %v2704
        %v3373 = vpop.f32.mrf.mxu0
        %v3374 = vadd.f32 %v3325, %v3373
        %v3375 = vpop.f32.mrf.mxu0
        %v3376 = vadd.f32 %v3327, %v3375
        %3377 = vmatmul.bf16.gmra.mxu0 %v2714
        %v3378 = vpop.f32.mrf.mxu0
        %v3379 = vadd.f32 %v3330, %v3378
        %v3380 = vpop.f32.mrf.mxu0
        %v3381 = vadd.f32 %v3332, %v3380
        %3382 = vmatmul.bf16.gmra.mxu0 %v2722
        %v3383 = vpop.f32.mrf.mxu0
        %v3384 = vadd.f32 %v3335, %v3383
        %v3385 = vpop.f32.mrf.mxu0
        %v3386 = vadd.f32 %v3337, %v3385
        %3387 = vmatmul.bf16.gmra.mxu0 %v2730
        %v3388 = vpop.f32.mrf.mxu0
        %v3389 = vadd.f32 %v3340, %v3388
        %v3390 = vpop.f32.mrf.mxu0
        %v3391 = vadd.f32 %v3342, %v3390
        %3392 = vmatmul.bf16.gmra.mxu0 %v2738
        %v3393 = vpop.f32.mrf.mxu0
        %v3394 = vadd.f32 %v3345, %v3393
        %v3395 = vpop.f32.mrf.mxu0
        %v3396 = vadd.f32 %v3347, %v3395
        %3397 = vmatmul.bf16.gmra.mxu0 %v2746
        %v3398 = vpop.f32.mrf.mxu0
        %v3399 = vadd.f32 %v3350, %v3398
        %v3400 = vpop.f32.mrf.mxu0
        %v3401 = vadd.f32 %v3352, %v3400
        %3402 = vmatmul.bf16.gmra.mxu0 %v2754
        %v3403 = vpop.f32.mrf.mxu0
        %v3404 = vadd.f32 %v3355, %v3403
        %v3405 = vpop.f32.mrf.mxu0
        %v3406 = vadd.f32 %v3357, %v3405
        %3407 = vmatmul.bf16.gmra.mxu0 %v2762
        %v3408 = vpop.f32.mrf.mxu0
        %v3409 = vadd.f32 %v3360, %v3408
        %v3410 = vpop.f32.mrf.mxu0
        %v3411 = vadd.f32 %v3362, %v3410
        %3412 = vdwg.mxu0
        %3413 = vmatpush.bf16.msra.mxu0 %v3038
        %3414 = vmatpush.bf16.msra.mxu0 %v3036
        %3415 = vmatpush.bf16.msra.mxu0 %v3034
        %3416 = vmatpush.bf16.msra.mxu0 %v3032
        %3417 = vmatpush.bf16.msra.mxu0 %v3030
        %3418 = vmatpush.bf16.msra.mxu0 %v3028
        %3419 = vmatpush.bf16.msra.mxu0 %v3026
        %3420 = vmatpush.bf16.msra.mxu0 %v3024
        %3421 = vmatmul.bf16.gmra.mxu0 %v2707
        %v3422 = vpop.f32.mrf.mxu0
        %v3423 = vadd.f32 %v3374, %v3422
        %v3424 = vpop.f32.mrf.mxu0
        %v3425 = vadd.f32 %v3376, %v3424
        %3426 = vmatmul.bf16.gmra.mxu0 %v2716
        %v3427 = vpop.f32.mrf.mxu0
        %v3428 = vadd.f32 %v3379, %v3427
        %v3429 = vpop.f32.mrf.mxu0
        %v3430 = vadd.f32 %v3381, %v3429
        %3431 = vmatmul.bf16.gmra.mxu0 %v2724
        %v3432 = vpop.f32.mrf.mxu0
        %v3433 = vadd.f32 %v3384, %v3432
        %v3434 = vpop.f32.mrf.mxu0
        %v3435 = vadd.f32 %v3386, %v3434
        %3436 = vmatmul.bf16.gmra.mxu0 %v2732
        %v3437 = vpop.f32.mrf.mxu0
        %v3438 = vadd.f32 %v3389, %v3437
        %v3439 = vpop.f32.mrf.mxu0
        %v3440 = vadd.f32 %v3391, %v3439
        %3441 = vmatmul.bf16.gmra.mxu0 %v2740
        %v3442 = vpop.f32.mrf.mxu0
        %v3443 = vadd.f32 %v3394, %v3442
        %v3444 = vpop.f32.mrf.mxu0
        %v3445 = vadd.f32 %v3396, %v3444
        %3446 = vmatmul.bf16.gmra.mxu0 %v2748
        %v3447 = vpop.f32.mrf.mxu0
        %v3448 = vadd.f32 %v3399, %v3447
        %v3449 = vpop.f32.mrf.mxu0
        %v3450 = vadd.f32 %v3401, %v3449
        %3451 = vmatmul.bf16.gmra.mxu0 %v2756
        %v3452 = vpop.f32.mrf.mxu0
        %v3453 = vadd.f32 %v3404, %v3452
        %v3454 = vpop.f32.mrf.mxu0
        %v3455 = vadd.f32 %v3406, %v3454
        %3456 = vmatmul.bf16.gmra.mxu0 %v2764
        %v3457 = vpop.f32.mrf.mxu0
        %v3458 = vadd.f32 %v3409, %v3457
        %v3459 = vpop.f32.mrf.mxu0
        %v3460 = vadd.f32 %v3411, %v3459
        %3461 = vdwg.mxu0
        %3462 = vmatpush.bf16.msra.mxu0 %v3054
        %3463 = vmatpush.bf16.msra.mxu0 %v3052
        %3464 = vmatpush.bf16.msra.mxu0 %v3050
        %3465 = vmatpush.bf16.msra.mxu0 %v3048
        %3466 = vmatpush.bf16.msra.mxu0 %v3046
        %3467 = vmatpush.bf16.msra.mxu0 %v3044
        %3468 = vmatpush.bf16.msra.mxu0 %v3042
        %3469 = vmatpush.bf16.msra.mxu0 %v3040
        %3470 = vmatmul.bf16.gmra.mxu0 %v2710
        %v3471 = vpop.f32.mrf.mxu0
        %v3472 = vadd.f32 %v3423, %v3471
        %v3473 = vpop.f32.mrf.mxu0
        %v3474 = vadd.f32 %v3425, %v3473
        %3475 = vmatmul.bf16.gmra.mxu0 %v2718
        %v3476 = vpop.f32.mrf.mxu0
        %v3477 = vadd.f32 %v3428, %v3476
        %v3478 = vpop.f32.mrf.mxu0
        %v3479 = vadd.f32 %v3430, %v3478
        %3480 = vmatmul.bf16.gmra.mxu0 %v2726
        %v3481 = vpop.f32.mrf.mxu0
        %v3482 = vadd.f32 %v3433, %v3481
        %v3483 = vpop.f32.mrf.mxu0
        %v3484 = vadd.f32 %v3435, %v3483
        %3485 = vmatmul.bf16.gmra.mxu0 %v2734
        %v3486 = vpop.f32.mrf.mxu0
        %v3487 = vadd.f32 %v3438, %v3486
        %v3488 = vpop.f32.mrf.mxu0
        %v3489 = vadd.f32 %v3440, %v3488
        %3490 = vmatmul.bf16.gmra.mxu0 %v2742
        %v3491 = vpop.f32.mrf.mxu0
        %v3492 = vadd.f32 %v3443, %v3491
        %v3493 = vpop.f32.mrf.mxu0
        %v3494 = vadd.f32 %v3445, %v3493
        %3495 = vmatmul.bf16.gmra.mxu0 %v2750
        %v3496 = vpop.f32.mrf.mxu0
        %v3497 = vadd.f32 %v3448, %v3496
        %v3498 = vpop.f32.mrf.mxu0
        %v3499 = vadd.f32 %v3450, %v3498
        %3500 = vmatmul.bf16.gmra.mxu0 %v2758
        %v3501 = vpop.f32.mrf.mxu0
        %v3502 = vadd.f32 %v3453, %v3501
        %v3503 = vpop.f32.mrf.mxu0
        %v3504 = vadd.f32 %v3455, %v3503
        %3505 = vmatmul.bf16.gmra.mxu0 %v2766
        %v3506 = vpop.f32.mrf.mxu0
        %v3507 = vadd.f32 %v3458, %v3506
        %v3508 = vpop.f32.mrf.mxu0
        %v3509 = vadd.f32 %v3460, %v3508
        %3510 = vdwg.mxu0
        %v3511 = vadd.f32 %v2630, %v3276
        %v3512 = vadd.f32 %v2631, %v3472
        %v3513 = vadd.f32 %v2632, %v3278
        %v3514 = vadd.f32 %v2633, %v3474
        %v3515 = vadd.f32 %v2634, %v3281
        %v3516 = vadd.f32 %v2635, %v3477
        %v3517 = vadd.f32 %v2636, %v3283
        %v3518 = vadd.f32 %v2637, %v3479
        %v3519 = vadd.f32 %v2638, %v3286
        %v3520 = vadd.f32 %v2639, %v3482
        %v3521 = vadd.f32 %v2640, %v3288
        %v3522 = vadd.f32 %v2641, %v3484
        %v3523 = vadd.f32 %v2642, %v3291
        %v3524 = vadd.f32 %v2643, %v3487
        %v3525 = vadd.f32 %v2644, %v3293
        %v3526 = vadd.f32 %v2645, %v3489
        %v3527 = vadd.f32 %v2646, %v3296
        %v3528 = vadd.f32 %v2647, %v3492
        %v3529 = vadd.f32 %v2648, %v3298
        %v3530 = vadd.f32 %v2649, %v3494
        %v3531 = vadd.f32 %v2650, %v3301
        %v3532 = vadd.f32 %v2651, %v3497
        %v3533 = vadd.f32 %v2652, %v3303
        %v3534 = vadd.f32 %v2653, %v3499
        %v3535 = vadd.f32 %v2654, %v3306
        %v3536 = vadd.f32 %v2655, %v3502
        %v3537 = vadd.f32 %v2656, %v3308
        %v3538 = vadd.f32 %v2657, %v3504
        %v3539 = vadd.f32 %v2658, %v3311
        %v3540 = vadd.f32 %v2659, %v3507
        %v3541 = vadd.f32 %v2660, %v3313
        %v3542 = vadd.f32 %v2661, %v3509
        %3543 = vst [vmem:[#allocation2] sm:$0xff] %v3511
        %3544 = vst [vmem:[#allocation2 + $0x8] sm:$0xff] %v3512
        %3545 = vst [vmem:[#allocation2 + $0x10] sm:$0xff] %v3513
        %3546 = vst [vmem:[#allocation2 + $0x18] sm:$0xff] %v3514
        %3547 = vst [vmem:[#allocation2 + $0x20] sm:$0xff] %v3515
        %3548 = vst [vmem:[#allocation2 + $0x28] sm:$0xff] %v3516
        %3549 = vst [vmem:[#allocation2 + $0x30] sm:$0xff] %v3517
        %3550 = vst [vmem:[#allocation2 + $0x38] sm:$0xff] %v3518
        %3551 = vst [vmem:[#allocation2 + $0x40] sm:$0xff] %v3519
        %3552 = vst [vmem:[#allocation2 + $0x48] sm:$0xff] %v3520
        %3553 = vst [vmem:[#allocation2 + $0x50] sm:$0xff] %v3521
        %3554 = vst [vmem:[#allocation2 + $0x58] sm:$0xff] %v3522
        %3555 = vst [vmem:[#allocation2 + $0x60] sm:$0xff] %v3523
        %3556 = vst [vmem:[#allocation2 + $0x68] sm:$0xff] %v3524
        %3557 = vst [vmem:[#allocation2 + $0x70] sm:$0xff] %v3525
        %3558 = vst [vmem:[#allocation2 + $0x78] sm:$0xff] %v3526
        %3559 = vst [vmem:[#allocation2 + $0x80] sm:$0xff] %v3527
        %3560 = vst [vmem:[#allocation2 + $0x88] sm:$0xff] %v3528
        %3561 = vst [vmem:[#allocation2 + $0x90] sm:$0xff] %v3529
        %3562 = vst [vmem:[#allocation2 + $0x98] sm:$0xff] %v3530
        %3563 = vst [vmem:[#allocation2 + $0xa0] sm:$0xff] %v3531
        %3564 = vst [vmem:[#allocation2 + $0xa8] sm:$0xff] %v3532
        %3565 = vst [vmem:[#allocation2 + $0xb0] sm:$0xff] %v3533
        %3566 = vst [vmem:[#allocation2 + $0xb8] sm:$0xff] %v3534
        %3567 = vst [vmem:[#allocation2 + $0xc0] sm:$0xff] %v3535
        %3568 = vst [vmem:[#allocation2 + $0xc8] sm:$0xff] %v3536
        %3569 = vst [vmem:[#allocation2 + $0xd0] sm:$0xff] %v3537
        %3570 = vst [vmem:[#allocation2 + $0xd8] sm:$0xff] %v3538
        %3571 = vst [vmem:[#allocation2 + $0xe0] sm:$0xff] %v3539
        %3572 = vst [vmem:[#allocation2 + $0xe8] sm:$0xff] %v3540
        %3573 = vst [vmem:[#allocation2 + $0xf0] sm:$0xff] %v3541
        %3574 = vst [vmem:[#allocation2 + $0xf8] sm:$0xff] %v3542
        %v3575 = vld [vmem:[%s154] sm:$0xf8]
        %v3576 = vld [vmem:[%s154 + $0x8] sm:$0xf8]
        %v3577 = vld [vmem:[%s154 + $0x10] sm:$0xf8]
        %v3578 = vld [vmem:[%s154 + $0x18] sm:$0xf8]
        %v3579 = vld [vmem:[%s154 + $0x20] sm:$0xff]
        %v3580 = vld [vmem:[%s154 + $0x28] sm:$0xff]
        %v3581 = vld [vmem:[%s154 + $0x30] sm:$0xff]
        %v3582 = vld [vmem:[%s154 + $0x38] sm:$0xff]
        %v3583 = vld [vmem:[%s154 + $0x40] sm:$0xff]
        %v3584 = vld [vmem:[%s154 + $0x48] sm:$0xff]
        %v3585 = vld [vmem:[%s154 + $0x50] sm:$0xff]
        %v3586 = vld [vmem:[%s154 + $0x58] sm:$0xff]
        %v3587 = vld [vmem:[%s154 + $0x60] sm:$0xff]
        %v3588 = vld [vmem:[%s154 + $0x68] sm:$0xff]
        %v3589 = vld [vmem:[%s154 + $0x70] sm:$0xff]
        %v3590 = vld [vmem:[%s154 + $0x78] sm:$0xff]
        %v3591 = vld [vmem:[%s154 + $0x80] sm:$0xff]
        %v3592 = vld [vmem:[%s154 + $0x88] sm:$0xff]
        %v3593 = vld [vmem:[%s154 + $0x90] sm:$0xff]
        %v3594 = vld [vmem:[%s154 + $0x98] sm:$0xff]
        %v3595 = vld [vmem:[%s154 + $0xa0] sm:$0xff]
        %v3596 = vld [vmem:[%s154 + $0xa8] sm:$0xff]
        %v3597 = vld [vmem:[%s154 + $0xb0] sm:$0xff]
        %v3598 = vld [vmem:[%s154 + $0xb8] sm:$0xff]
        %v3599 = vld [vmem:[%s154 + $0xc0] sm:$0xff]
        %v3600 = vld [vmem:[%s154 + $0xc8] sm:$0xff]
        %v3601 = vld [vmem:[%s154 + $0xd0] sm:$0xff]
        %v3602 = vld [vmem:[%s154 + $0xd8] sm:$0xff]
        %v3603 = vld [vmem:[%s154 + $0xe0] sm:$0xff]
        %v3604 = vld [vmem:[%s154 + $0xe8] sm:$0xff]
        %v3605 = vld [vmem:[%s154 + $0xf0] sm:$0xff]
        %v3606 = vld [vmem:[%s154 + $0xf8] sm:$0xff]
        %v3607 = vld [vmem:[%s154 + $0x100] sm:$0xff]
        %v3608 = vld [vmem:[%s154 + $0x108] sm:$0xff]
        %v3609 = vld [vmem:[%s154 + $0x110] sm:$0xff]
        %v3610 = vld [vmem:[%s154 + $0x118] sm:$0xff]
        %v3611 = vld [vmem:[%s154 + $0x120] sm:$0xff]
        %v3612 = vld [vmem:[%s154 + $0x128] sm:$0xff]
        %v3613 = vld [vmem:[%s154 + $0x130] sm:$0xff]
        %v3614 = vld [vmem:[%s154 + $0x138] sm:$0xff]
        %v3615 = vld [vmem:[%s154 + $0x140] sm:$0xff]
        %v3616 = vld [vmem:[%s154 + $0x148] sm:$0xff]
        %v3617 = vld [vmem:[%s154 + $0x150] sm:$0xff]
        %v3618 = vld [vmem:[%s154 + $0x158] sm:$0xff]
        %v3619 = vld [vmem:[%s154 + $0x160] sm:$0xff]
        %v3620 = vld [vmem:[%s154 + $0x168] sm:$0xff]
        %v3621 = vld [vmem:[%s154 + $0x170] sm:$0xff]
        %v3622 = vld [vmem:[%s154 + $0x178] sm:$0xff]
        %v3623 = vld [vmem:[%s154 + $0x180] sm:$0xff]
        %v3624 = vld [vmem:[%s154 + $0x188] sm:$0xff]
        %v3625 = vld [vmem:[%s154 + $0x190] sm:$0xff]
        %v3626 = vld [vmem:[%s154 + $0x198] sm:$0xff]
        %v3627 = vld [vmem:[%s154 + $0x1a0] sm:$0xff]
        %v3628 = vld [vmem:[%s154 + $0x1a8] sm:$0xff]
        %v3629 = vld [vmem:[%s154 + $0x1b0] sm:$0xff]
        %v3630 = vld [vmem:[%s154 + $0x1b8] sm:$0xff]
        %v3631 = vld [vmem:[%s154 + $0x1c0] sm:$0xff]
        %v3632 = vld [vmem:[%s154 + $0x1c8] sm:$0xff]
        %v3633 = vld [vmem:[%s154 + $0x1d0] sm:$0xff]
        %v3634 = vld [vmem:[%s154 + $0x1d8] sm:$0xff]
        %v3635 = vld [vmem:[%s154 + $0x1e0] sm:$0xff]
        %v3636 = vld [vmem:[%s154 + $0x1e8] sm:$0xff]
        %v3637 = vld [vmem:[%s154 + $0x1f0] sm:$0xff]
        %v3638 = vld [vmem:[%s154 + $0x1f8] sm:$0xff]
        %v3639 = vld [vmem:[%s154 + $0x200] sm:$0x7]
        %v3640 = vld [vmem:[%s154 + $0x208] sm:$0x7]
        %v3641 = vld [vmem:[%s154 + $0x210] sm:$0x7]
        %v3642 = vld [vmem:[%s154 + $0x218] sm:$0x7]
        %v3643 = vpack.c.bf16 %v3579, %v3575
        %v3644 = vpack.c.bf16 %v3580, %v3576
        %v3645 = vpack.c.bf16 %v3581, %v3577
        %v3646 = vpack.c.bf16 %v3582, %v3578
        %v3647 = vpack.c.bf16 %v3587, %v3583
        %v3648 = vpack.c.bf16 %v3588, %v3584
        %v3649 = vpack.c.bf16 %v3589, %v3585
        %v3650 = vpack.c.bf16 %v3590, %v3586
        %v3651 = vpack.c.bf16 %v3595, %v3591
        %v3652 = vpack.c.bf16 %v3596, %v3592
        %v3653 = vpack.c.bf16 %v3597, %v3593
        %v3654 = vpack.c.bf16 %v3598, %v3594
        %v3655 = vpack.c.bf16 %v3603, %v3599
        %v3656 = vpack.c.bf16 %v3604, %v3600
        %v3657 = vpack.c.bf16 %v3605, %v3601
        %v3658 = vpack.c.bf16 %v3606, %v3602
        %v3659 = vpack.c.bf16 %v3611, %v3607
        %v3660 = vpack.c.bf16 %v3612, %v3608
        %v3661 = vpack.c.bf16 %v3613, %v3609
        %v3662 = vpack.c.bf16 %v3614, %v3610
        %v3663 = vpack.c.bf16 %v3619, %v3615
        %v3664 = vpack.c.bf16 %v3620, %v3616
        %v3665 = vpack.c.bf16 %v3621, %v3617
        %v3666 = vpack.c.bf16 %v3622, %v3618
        %v3667 = vpack.c.bf16 %v3627, %v3623
        %v3668 = vpack.c.bf16 %v3628, %v3624
        %v3669 = vpack.c.bf16 %v3629, %v3625
        %v3670 = vpack.c.bf16 %v3630, %v3626
        %v3671 = vpack.c.bf16 %v3635, %v3631
        %v3672 = vpack.c.bf16 %v3636, %v3632
        %v3673 = vpack.c.bf16 %v3637, %v3633
        %v3674 = vpack.c.bf16 %v3638, %v3634
        %v3675 = vpack.c.bf16 %v3639, %v3639
        %v3676 = vpack.c.bf16 %v3640, %v3640
        %v3677 = vpack.c.bf16 %v3641, %v3641
        %v3678 = vpack.c.bf16 %v3642, %v3642
        %v3679 = vld [vmem:[#allocation6 + $0x600] sm:$0xff]
        %v3680 = vld [vmem:[#allocation6 + $0x608] sm:$0xff]
        %v3681 = vld [vmem:[#allocation6 + $0x610] sm:$0xff]
        %v3682 = vld [vmem:[#allocation6 + $0x618] sm:$0xff]
        %v3683 = vld [vmem:[#allocation6 + $0x620] sm:$0xff]
        %v3684 = vld [vmem:[#allocation6 + $0x628] sm:$0xff]
        %v3685 = vld [vmem:[#allocation6 + $0x630] sm:$0xff]
        %v3686 = vld [vmem:[#allocation6 + $0x638] sm:$0xff]
        %v3687 = vld [vmem:[#allocation6 + $0x640] sm:$0xff]
        %v3688 = vld [vmem:[#allocation6 + $0x648] sm:$0xff]
        %v3689 = vld [vmem:[#allocation6 + $0x650] sm:$0xff]
        %v3690 = vld [vmem:[#allocation6 + $0x658] sm:$0xff]
        %v3691 = vld [vmem:[#allocation6 + $0x660] sm:$0xff]
        %v3692 = vld [vmem:[#allocation6 + $0x668] sm:$0xff]
        %v3693 = vld [vmem:[#allocation6 + $0x670] sm:$0xff]
        %v3694 = vld [vmem:[#allocation6 + $0x678] sm:$0xff]
        %v3695 = vld [vmem:[#allocation6 + $0x680] sm:$0xff]
        %v3696 = vld [vmem:[#allocation6 + $0x688] sm:$0xff]
        %v3697 = vld [vmem:[#allocation6 + $0x690] sm:$0xff]
        %v3698 = vld [vmem:[#allocation6 + $0x698] sm:$0xff]
        %v3699 = vld [vmem:[#allocation6 + $0x6a0] sm:$0xff]
        %v3700 = vld [vmem:[#allocation6 + $0x6a8] sm:$0xff]
        %v3701 = vld [vmem:[#allocation6 + $0x6b0] sm:$0xff]
        %v3702 = vld [vmem:[#allocation6 + $0x6b8] sm:$0xff]
        %v3703 = vld [vmem:[#allocation6 + $0x6c0] sm:$0xff]
        %v3704 = vld [vmem:[#allocation6 + $0x6c8] sm:$0xff]
        %v3705 = vld [vmem:[#allocation6 + $0x6d0] sm:$0xff]
        %v3706 = vld [vmem:[#allocation6 + $0x6d8] sm:$0xff]
        %v3707 = vld [vmem:[#allocation6 + $0x6e0] sm:$0xff]
        %v3708 = vld [vmem:[#allocation6 + $0x6e8] sm:$0xff]
        %v3709 = vld [vmem:[#allocation6 + $0x6f0] sm:$0xff]
        %v3710 = vld [vmem:[#allocation6 + $0x6f8] sm:$0xff]
        %v3711 = vld [vmem:[#allocation6 + $0x700] sm:$0xff]
        %v3712 = vld [vmem:[#allocation6 + $0x708] sm:$0xff]
        %v3713 = vld [vmem:[#allocation6 + $0x710] sm:$0xff]
        %v3714 = vld [vmem:[#allocation6 + $0x718] sm:$0xff]
        %v3715 = vld [vmem:[#allocation6 + $0x720] sm:$0xff]
        %v3716 = vld [vmem:[#allocation6 + $0x728] sm:$0xff]
        %v3717 = vld [vmem:[#allocation6 + $0x730] sm:$0xff]
        %v3718 = vld [vmem:[#allocation6 + $0x738] sm:$0xff]
        %v3719 = vld [vmem:[#allocation6 + $0x740] sm:$0xff]
        %v3720 = vld [vmem:[#allocation6 + $0x748] sm:$0xff]
        %v3721 = vld [vmem:[#allocation6 + $0x750] sm:$0xff]
        %v3722 = vld [vmem:[#allocation6 + $0x758] sm:$0xff]
        %v3723 = vld [vmem:[#allocation6 + $0x760] sm:$0xff]
        %v3724 = vld [vmem:[#allocation6 + $0x768] sm:$0xff]
        %v3725 = vld [vmem:[#allocation6 + $0x770] sm:$0xff]
        %v3726 = vld [vmem:[#allocation6 + $0x778] sm:$0xff]
        %v3727 = vld [vmem:[#allocation6 + $0x780] sm:$0xff]
        %v3728 = vld [vmem:[#allocation6 + $0x788] sm:$0xff]
        %v3729 = vld [vmem:[#allocation6 + $0x790] sm:$0xff]
        %v3730 = vld [vmem:[#allocation6 + $0x798] sm:$0xff]
        %v3731 = vld [vmem:[#allocation6 + $0x7a0] sm:$0xff]
        %v3732 = vld [vmem:[#allocation6 + $0x7a8] sm:$0xff]
        %v3733 = vld [vmem:[#allocation6 + $0x7b0] sm:$0xff]
        %v3734 = vld [vmem:[#allocation6 + $0x7b8] sm:$0xff]
        %v3735 = vld [vmem:[#allocation6 + $0x7c0] sm:$0xff]
        %v3736 = vld [vmem:[#allocation6 + $0x7c8] sm:$0xff]
        %v3737 = vld [vmem:[#allocation6 + $0x7d0] sm:$0xff]
        %v3738 = vld [vmem:[#allocation6 + $0x7d8] sm:$0xff]
        %v3739 = vld [vmem:[#allocation6 + $0x7e0] sm:$0xff]
        %v3740 = vld [vmem:[#allocation6 + $0x7e8] sm:$0xff]
        %v3741 = vld [vmem:[#allocation6 + $0x7f0] sm:$0xff]
        %v3742 = vld [vmem:[#allocation6 + $0x7f8] sm:$0xff]
        %v3743 = vld [vmem:[#allocation2] sm:$0xff]
        %v3744 = vld [vmem:[#allocation2 + $0x8] sm:$0xff]
        %v3745 = vld [vmem:[#allocation2 + $0x10] sm:$0xff]
        %v3746 = vld [vmem:[#allocation2 + $0x18] sm:$0xff]
        %v3747 = vld [vmem:[#allocation2 + $0x20] sm:$0xff]
        %v3748 = vld [vmem:[#allocation2 + $0x28] sm:$0xff]
        %v3749 = vld [vmem:[#allocation2 + $0x30] sm:$0xff]
        %v3750 = vld [vmem:[#allocation2 + $0x38] sm:$0xff]
        %v3751 = vld [vmem:[#allocation2 + $0x40] sm:$0xff]
        %v3752 = vld [vmem:[#allocation2 + $0x48] sm:$0xff]
        %v3753 = vld [vmem:[#allocation2 + $0x50] sm:$0xff]
        %v3754 = vld [vmem:[#allocation2 + $0x58] sm:$0xff]
        %v3755 = vld [vmem:[#allocation2 + $0x60] sm:$0xff]
        %v3756 = vld [vmem:[#allocation2 + $0x68] sm:$0xff]
        %v3757 = vld [vmem:[#allocation2 + $0x70] sm:$0xff]
        %v3758 = vld [vmem:[#allocation2 + $0x78] sm:$0xff]
        %v3759 = vld [vmem:[#allocation2 + $0x80] sm:$0xff]
        %v3760 = vld [vmem:[#allocation2 + $0x88] sm:$0xff]
        %v3761 = vld [vmem:[#allocation2 + $0x90] sm:$0xff]
        %v3762 = vld [vmem:[#allocation2 + $0x98] sm:$0xff]
        %v3763 = vld [vmem:[#allocation2 + $0xa0] sm:$0xff]
        %v3764 = vld [vmem:[#allocation2 + $0xa8] sm:$0xff]
        %v3765 = vld [vmem:[#allocation2 + $0xb0] sm:$0xff]
        %v3766 = vld [vmem:[#allocation2 + $0xb8] sm:$0xff]
        %v3767 = vld [vmem:[#allocation2 + $0xc0] sm:$0xff]
        %v3768 = vld [vmem:[#allocation2 + $0xc8] sm:$0xff]
        %v3769 = vld [vmem:[#allocation2 + $0xd0] sm:$0xff]
        %v3770 = vld [vmem:[#allocation2 + $0xd8] sm:$0xff]
        %v3771 = vld [vmem:[#allocation2 + $0xe0] sm:$0xff]
        %v3772 = vld [vmem:[#allocation2 + $0xe8] sm:$0xff]
        %v3773 = vld [vmem:[#allocation2 + $0xf0] sm:$0xff]
        %v3774 = vld [vmem:[#allocation2 + $0xf8] sm:$0xff]
        %vm3775 = vsmask.f32 6400
        %v3777 = vshrl.u32 %v3643, 16
        %v3779 = vrot.slane %v3777, 1
        %v3780 = vshll.u32 %v3643, 16
        %v3782 = vrot.slane %v3780, 2
        %v3783 = vor.u32 %v3779, %v3782
        %v3785 = vshrl.u32 %v3647, 16
        %v3787 = vrot.slane %v3785, 1
        %v3788 = vshll.u32 %v3647, 16
        %v3790 = vrot.slane %v3788, 2
        %v3791 = vor.u32 %v3787, %v3790
        %v3792 = vsel %vm3775, %v3783, %v3791
        %v3794 = vshrl.u32 %v3644, 16
        %v3796 = vrot.slane %v3794, 1
        %v3797 = vshll.u32 %v3644, 16
        %v3799 = vrot.slane %v3797, 2
        %v3800 = vor.u32 %v3796, %v3799
        %v3802 = vshrl.u32 %v3648, 16
        %v3804 = vrot.slane %v3802, 1
        %v3805 = vshll.u32 %v3648, 16
        %v3807 = vrot.slane %v3805, 2
        %v3808 = vor.u32 %v3804, %v3807
        %v3809 = vsel %vm3775, %v3800, %v3808
        %v3811 = vshrl.u32 %v3645, 16
        %v3813 = vrot.slane %v3811, 1
        %v3814 = vshll.u32 %v3645, 16
        %v3816 = vrot.slane %v3814, 2
        %v3817 = vor.u32 %v3813, %v3816
        %v3819 = vshrl.u32 %v3649, 16
        %v3821 = vrot.slane %v3819, 1
        %v3822 = vshll.u32 %v3649, 16
        %v3824 = vrot.slane %v3822, 2
        %v3825 = vor.u32 %v3821, %v3824
        %v3826 = vsel %vm3775, %v3817, %v3825
        %v3828 = vshrl.u32 %v3646, 16
        %v3830 = vrot.slane %v3828, 1
        %v3831 = vshll.u32 %v3646, 16
        %v3833 = vrot.slane %v3831, 2
        %v3834 = vor.u32 %v3830, %v3833
        %v3836 = vshrl.u32 %v3650, 16
        %v3838 = vrot.slane %v3836, 1
        %v3839 = vshll.u32 %v3650, 16
        %v3841 = vrot.slane %v3839, 2
        %v3842 = vor.u32 %v3838, %v3841
        %v3843 = vsel %vm3775, %v3834, %v3842
        %v3845 = vshrl.u32 %v3651, 16
        %v3847 = vrot.slane %v3845, 1
        %v3848 = vshll.u32 %v3651, 16
        %v3850 = vrot.slane %v3848, 2
        %v3851 = vor.u32 %v3847, %v3850
        %v3852 = vsel %vm3775, %v3791, %v3851
        %v3854 = vshrl.u32 %v3652, 16
        %v3856 = vrot.slane %v3854, 1
        %v3857 = vshll.u32 %v3652, 16
        %v3859 = vrot.slane %v3857, 2
        %v3860 = vor.u32 %v3856, %v3859
        %v3861 = vsel %vm3775, %v3808, %v3860
        %v3863 = vshrl.u32 %v3653, 16
        %v3865 = vrot.slane %v3863, 1
        %v3866 = vshll.u32 %v3653, 16
        %v3868 = vrot.slane %v3866, 2
        %v3869 = vor.u32 %v3865, %v3868
        %v3870 = vsel %vm3775, %v3825, %v3869
        %v3872 = vshrl.u32 %v3654, 16
        %v3874 = vrot.slane %v3872, 1
        %v3875 = vshll.u32 %v3654, 16
        %v3877 = vrot.slane %v3875, 2
        %v3878 = vor.u32 %v3874, %v3877
        %v3879 = vsel %vm3775, %v3842, %v3878
        %v3881 = vshrl.u32 %v3655, 16
        %v3883 = vrot.slane %v3881, 1
        %v3884 = vshll.u32 %v3655, 16
        %v3886 = vrot.slane %v3884, 2
        %v3887 = vor.u32 %v3883, %v3886
        %v3888 = vsel %vm3775, %v3851, %v3887
        %v3890 = vshrl.u32 %v3656, 16
        %v3892 = vrot.slane %v3890, 1
        %v3893 = vshll.u32 %v3656, 16
        %v3895 = vrot.slane %v3893, 2
        %v3896 = vor.u32 %v3892, %v3895
        %v3897 = vsel %vm3775, %v3860, %v3896
        %v3899 = vshrl.u32 %v3657, 16
        %v3901 = vrot.slane %v3899, 1
        %v3902 = vshll.u32 %v3657, 16
        %v3904 = vrot.slane %v3902, 2
        %v3905 = vor.u32 %v3901, %v3904
        %v3906 = vsel %vm3775, %v3869, %v3905
        %v3908 = vshrl.u32 %v3658, 16
        %v3910 = vrot.slane %v3908, 1
        %v3911 = vshll.u32 %v3658, 16
        %v3913 = vrot.slane %v3911, 2
        %v3914 = vor.u32 %v3910, %v3913
        %v3915 = vsel %vm3775, %v3878, %v3914
        %v3917 = vshrl.u32 %v3659, 16
        %v3919 = vrot.slane %v3917, 1
        %v3920 = vshll.u32 %v3659, 16
        %v3922 = vrot.slane %v3920, 2
        %v3923 = vor.u32 %v3919, %v3922
        %v3924 = vsel %vm3775, %v3887, %v3923
        %v3926 = vshrl.u32 %v3660, 16
        %v3928 = vrot.slane %v3926, 1
        %v3929 = vshll.u32 %v3660, 16
        %v3931 = vrot.slane %v3929, 2
        %v3932 = vor.u32 %v3928, %v3931
        %v3933 = vsel %vm3775, %v3896, %v3932
        %v3935 = vshrl.u32 %v3661, 16
        %v3937 = vrot.slane %v3935, 1
        %v3938 = vshll.u32 %v3661, 16
        %v3940 = vrot.slane %v3938, 2
        %v3941 = vor.u32 %v3937, %v3940
        %v3942 = vsel %vm3775, %v3905, %v3941
        %v3944 = vshrl.u32 %v3662, 16
        %v3946 = vrot.slane %v3944, 1
        %v3947 = vshll.u32 %v3662, 16
        %v3949 = vrot.slane %v3947, 2
        %v3950 = vor.u32 %v3946, %v3949
        %v3951 = vsel %vm3775, %v3914, %v3950
        %v3953 = vshrl.u32 %v3663, 16
        %v3955 = vrot.slane %v3953, 1
        %v3956 = vshll.u32 %v3663, 16
        %v3958 = vrot.slane %v3956, 2
        %v3959 = vor.u32 %v3955, %v3958
        %v3960 = vsel %vm3775, %v3923, %v3959
        %v3962 = vshrl.u32 %v3664, 16
        %v3964 = vrot.slane %v3962, 1
        %v3965 = vshll.u32 %v3664, 16
        %v3967 = vrot.slane %v3965, 2
        %v3968 = vor.u32 %v3964, %v3967
        %v3969 = vsel %vm3775, %v3932, %v3968
        %v3971 = vshrl.u32 %v3665, 16
        %v3973 = vrot.slane %v3971, 1
        %v3974 = vshll.u32 %v3665, 16
        %v3976 = vrot.slane %v3974, 2
        %v3977 = vor.u32 %v3973, %v3976
        %v3978 = vsel %vm3775, %v3941, %v3977
        %v3980 = vshrl.u32 %v3666, 16
        %v3982 = vrot.slane %v3980, 1
        %v3983 = vshll.u32 %v3666, 16
        %v3985 = vrot.slane %v3983, 2
        %v3986 = vor.u32 %v3982, %v3985
        %v3987 = vsel %vm3775, %v3950, %v3986
        %v3989 = vshrl.u32 %v3667, 16
        %v3991 = vrot.slane %v3989, 1
        %v3992 = vshll.u32 %v3667, 16
        %v3994 = vrot.slane %v3992, 2
        %v3995 = vor.u32 %v3991, %v3994
        %v3996 = vsel %vm3775, %v3959, %v3995
        %v3998 = vshrl.u32 %v3668, 16
        %v4000 = vrot.slane %v3998, 1
        %v4001 = vshll.u32 %v3668, 16
        %v4003 = vrot.slane %v4001, 2
        %v4004 = vor.u32 %v4000, %v4003
        %v4005 = vsel %vm3775, %v3968, %v4004
        %v4007 = vshrl.u32 %v3669, 16
        %v4009 = vrot.slane %v4007, 1
        %v4010 = vshll.u32 %v3669, 16
        %v4012 = vrot.slane %v4010, 2
        %v4013 = vor.u32 %v4009, %v4012
        %v4014 = vsel %vm3775, %v3977, %v4013
        %v4016 = vshrl.u32 %v3670, 16
        %v4018 = vrot.slane %v4016, 1
        %v4019 = vshll.u32 %v3670, 16
        %v4021 = vrot.slane %v4019, 2
        %v4022 = vor.u32 %v4018, %v4021
        %v4023 = vsel %vm3775, %v3986, %v4022
        %v4025 = vshrl.u32 %v3671, 16
        %v4027 = vrot.slane %v4025, 1
        %v4028 = vshll.u32 %v3671, 16
        %v4030 = vrot.slane %v4028, 2
        %v4031 = vor.u32 %v4027, %v4030
        %v4032 = vsel %vm3775, %v3995, %v4031
        %v4034 = vshrl.u32 %v3672, 16
        %v4036 = vrot.slane %v4034, 1
        %v4037 = vshll.u32 %v3672, 16
        %v4039 = vrot.slane %v4037, 2
        %v4040 = vor.u32 %v4036, %v4039
        %v4041 = vsel %vm3775, %v4004, %v4040
        %v4043 = vshrl.u32 %v3673, 16
        %v4045 = vrot.slane %v4043, 1
        %v4046 = vshll.u32 %v3673, 16
        %v4048 = vrot.slane %v4046, 2
        %v4049 = vor.u32 %v4045, %v4048
        %v4050 = vsel %vm3775, %v4013, %v4049
        %v4052 = vshrl.u32 %v3674, 16
        %v4054 = vrot.slane %v4052, 1
        %v4055 = vshll.u32 %v3674, 16
        %v4057 = vrot.slane %v4055, 2
        %v4058 = vor.u32 %v4054, %v4057
        %v4059 = vsel %vm3775, %v4022, %v4058
        %v4061 = vshrl.u32 %v3675, 16
        %v4063 = vrot.slane %v4061, 1
        %v4064 = vshll.u32 %v3675, 16
        %v4066 = vrot.slane %v4064, 2
        %v4067 = vor.u32 %v4063, %v4066
        %v4068 = vsel %vm3775, %v4031, %v4067
        %v4070 = vshrl.u32 %v3676, 16
        %v4072 = vrot.slane %v4070, 1
        %v4073 = vshll.u32 %v3676, 16
        %v4075 = vrot.slane %v4073, 2
        %v4076 = vor.u32 %v4072, %v4075
        %v4077 = vsel %vm3775, %v4040, %v4076
        %v4079 = vshrl.u32 %v3677, 16
        %v4081 = vrot.slane %v4079, 1
        %v4082 = vshll.u32 %v3677, 16
        %v4084 = vrot.slane %v4082, 2
        %v4085 = vor.u32 %v4081, %v4084
        %v4086 = vsel %vm3775, %v4049, %v4085
        %v4088 = vshrl.u32 %v3678, 16
        %v4090 = vrot.slane %v4088, 1
        %v4091 = vshll.u32 %v3678, 16
        %v4093 = vrot.slane %v4091, 2
        %v4094 = vor.u32 %v4090, %v4093
        %v4095 = vsel %vm3775, %v4058, %v4094
        %v4192 = vunpack.c.l.b16 %v3679
        %v4193 = vunpack.c.h.b16 %v3679
        %v4194 = vunpack.c.l.b16 %v3680
        %v4195 = vunpack.c.h.b16 %v3680
        %v4196 = vunpack.c.l.b16 %v3681
        %v4197 = vunpack.c.h.b16 %v3681
        %v4198 = vunpack.c.l.b16 %v3682
        %v4199 = vunpack.c.h.b16 %v3682
        %v4200 = vunpack.c.l.b16 %v3683
        %v4201 = vunpack.c.h.b16 %v3683
        %v4202 = vunpack.c.l.b16 %v3684
        %v4203 = vunpack.c.h.b16 %v3684
        %v4204 = vunpack.c.l.b16 %v3685
        %v4205 = vunpack.c.h.b16 %v3685
        %v4206 = vunpack.c.l.b16 %v3686
        %v4207 = vunpack.c.h.b16 %v3686
        %v4208 = vunpack.c.l.b16 %v3687
        %v4209 = vunpack.c.h.b16 %v3687
        %v4210 = vunpack.c.l.b16 %v3688
        %v4211 = vunpack.c.h.b16 %v3688
        %v4212 = vunpack.c.l.b16 %v3689
        %v4213 = vunpack.c.h.b16 %v3689
        %v4214 = vunpack.c.l.b16 %v3690
        %v4215 = vunpack.c.h.b16 %v3690
        %v4216 = vunpack.c.l.b16 %v3691
        %v4217 = vunpack.c.h.b16 %v3691
        %v4218 = vunpack.c.l.b16 %v3692
        %v4219 = vunpack.c.h.b16 %v3692
        %v4220 = vunpack.c.l.b16 %v3693
        %v4221 = vunpack.c.h.b16 %v3693
        %v4222 = vunpack.c.l.b16 %v3694
        %v4223 = vunpack.c.h.b16 %v3694
        %v4224 = vunpack.c.l.b16 %v3695
        %v4225 = vunpack.c.h.b16 %v3695
        %v4226 = vunpack.c.l.b16 %v3696
        %v4227 = vunpack.c.h.b16 %v3696
        %v4228 = vunpack.c.l.b16 %v3697
        %v4229 = vunpack.c.h.b16 %v3697
        %v4230 = vunpack.c.l.b16 %v3698
        %v4231 = vunpack.c.h.b16 %v3698
        %v4232 = vunpack.c.l.b16 %v3699
        %v4233 = vunpack.c.h.b16 %v3699
        %v4234 = vunpack.c.l.b16 %v3700
        %v4235 = vunpack.c.h.b16 %v3700
        %v4236 = vunpack.c.l.b16 %v3701
        %v4237 = vunpack.c.h.b16 %v3701
        %v4238 = vunpack.c.l.b16 %v3702
        %v4239 = vunpack.c.h.b16 %v3702
        %v4240 = vunpack.c.l.b16 %v3703
        %v4241 = vunpack.c.h.b16 %v3703
        %v4242 = vunpack.c.l.b16 %v3704
        %v4243 = vunpack.c.h.b16 %v3704
        %v4244 = vunpack.c.l.b16 %v3705
        %v4245 = vunpack.c.h.b16 %v3705
        %v4246 = vunpack.c.l.b16 %v3706
        %v4247 = vunpack.c.h.b16 %v3706
        %v4248 = vunpack.c.l.b16 %v3707
        %v4249 = vunpack.c.h.b16 %v3707
        %v4250 = vunpack.c.l.b16 %v3708
        %v4251 = vunpack.c.h.b16 %v3708
        %v4252 = vunpack.c.l.b16 %v3709
        %v4253 = vunpack.c.h.b16 %v3709
        %v4254 = vunpack.c.l.b16 %v3710
        %v4255 = vunpack.c.h.b16 %v3710
        %v4256 = vunpack.c.l.b16 %v3711
        %v4257 = vunpack.c.h.b16 %v3711
        %v4258 = vunpack.c.l.b16 %v3712
        %v4259 = vunpack.c.h.b16 %v3712
        %v4260 = vunpack.c.l.b16 %v3713
        %v4261 = vunpack.c.h.b16 %v3713
        %v4262 = vunpack.c.l.b16 %v3714
        %v4263 = vunpack.c.h.b16 %v3714
        %v4264 = vunpack.c.l.b16 %v3715
        %v4265 = vunpack.c.h.b16 %v3715
        %v4266 = vunpack.c.l.b16 %v3716
        %v4267 = vunpack.c.h.b16 %v3716
        %v4268 = vunpack.c.l.b16 %v3717
        %v4269 = vunpack.c.h.b16 %v3717
        %v4270 = vunpack.c.l.b16 %v3718
        %v4271 = vunpack.c.h.b16 %v3718
        %v4272 = vunpack.c.l.b16 %v3719
        %v4273 = vunpack.c.h.b16 %v3719
        %v4274 = vunpack.c.l.b16 %v3720
        %v4275 = vunpack.c.h.b16 %v3720
        %v4276 = vunpack.c.l.b16 %v3721
        %v4277 = vunpack.c.h.b16 %v3721
        %v4278 = vunpack.c.l.b16 %v3722
        %v4279 = vunpack.c.h.b16 %v3722
        %v4280 = vunpack.c.l.b16 %v3723
        %v4281 = vunpack.c.h.b16 %v3723
        %v4282 = vunpack.c.l.b16 %v3724
        %v4283 = vunpack.c.h.b16 %v3724
        %v4284 = vunpack.c.l.b16 %v3725
        %v4285 = vunpack.c.h.b16 %v3725
        %v4286 = vunpack.c.l.b16 %v3726
        %v4287 = vunpack.c.h.b16 %v3726
        %v4288 = vunpack.c.l.b16 %v3727
        %v4289 = vunpack.c.h.b16 %v3727
        %v4290 = vunpack.c.l.b16 %v3728
        %v4291 = vunpack.c.h.b16 %v3728
        %v4292 = vunpack.c.l.b16 %v3729
        %v4293 = vunpack.c.h.b16 %v3729
        %v4294 = vunpack.c.l.b16 %v3730
        %v4295 = vunpack.c.h.b16 %v3730
        %v4296 = vunpack.c.l.b16 %v3731
        %v4297 = vunpack.c.h.b16 %v3731
        %v4298 = vunpack.c.l.b16 %v3732
        %v4299 = vunpack.c.h.b16 %v3732
        %v4300 = vunpack.c.l.b16 %v3733
        %v4301 = vunpack.c.h.b16 %v3733
        %v4302 = vunpack.c.l.b16 %v3734
        %v4303 = vunpack.c.h.b16 %v3734
        %v4304 = vunpack.c.l.b16 %v3735
        %v4305 = vunpack.c.h.b16 %v3735
        %v4306 = vunpack.c.l.b16 %v3736
        %v4307 = vunpack.c.h.b16 %v3736
        %v4308 = vunpack.c.l.b16 %v3737
        %v4309 = vunpack.c.h.b16 %v3737
        %v4310 = vunpack.c.l.b16 %v3738
        %v4311 = vunpack.c.h.b16 %v3738
        %v4312 = vunpack.c.l.b16 %v3739
        %v4313 = vunpack.c.h.b16 %v3739
        %v4314 = vunpack.c.l.b16 %v3740
        %v4315 = vunpack.c.h.b16 %v3740
        %v4316 = vunpack.c.l.b16 %v3741
        %v4317 = vunpack.c.h.b16 %v3741
        %v4318 = vunpack.c.l.b16 %v3742
        %v4319 = vunpack.c.h.b16 %v3742
        %v4320 = vpack.c.b16 %v4194, %v4192
        %v4321 = vpack.c.b16 %v4195, %v4193
        %v4322 = vpack.c.b16 %v4198, %v4196
        %v4323 = vpack.c.b16 %v4199, %v4197
        %v4324 = vpack.c.b16 %v4202, %v4200
        %v4325 = vpack.c.b16 %v4203, %v4201
        %v4326 = vpack.c.b16 %v4206, %v4204
        %v4327 = vpack.c.b16 %v4207, %v4205
        %v4328 = vpack.c.b16 %v4210, %v4208
        %v4329 = vpack.c.b16 %v4211, %v4209
        %v4330 = vpack.c.b16 %v4214, %v4212
        %v4331 = vpack.c.b16 %v4215, %v4213
        %v4332 = vpack.c.b16 %v4218, %v4216
        %v4333 = vpack.c.b16 %v4219, %v4217
        %v4334 = vpack.c.b16 %v4222, %v4220
        %v4335 = vpack.c.b16 %v4223, %v4221
        %v4336 = vpack.c.b16 %v4226, %v4224
        %v4337 = vpack.c.b16 %v4227, %v4225
        %v4338 = vpack.c.b16 %v4230, %v4228
        %v4339 = vpack.c.b16 %v4231, %v4229
        %v4340 = vpack.c.b16 %v4234, %v4232
        %v4341 = vpack.c.b16 %v4235, %v4233
        %v4342 = vpack.c.b16 %v4238, %v4236
        %v4343 = vpack.c.b16 %v4239, %v4237
        %v4344 = vpack.c.b16 %v4242, %v4240
        %v4345 = vpack.c.b16 %v4243, %v4241
        %v4346 = vpack.c.b16 %v4246, %v4244
        %v4347 = vpack.c.b16 %v4247, %v4245
        %v4348 = vpack.c.b16 %v4250, %v4248
        %v4349 = vpack.c.b16 %v4251, %v4249
        %v4350 = vpack.c.b16 %v4254, %v4252
        %v4351 = vpack.c.b16 %v4255, %v4253
        %v4352 = vpack.c.b16 %v4258, %v4256
        %v4353 = vpack.c.b16 %v4259, %v4257
        %v4354 = vpack.c.b16 %v4262, %v4260
        %v4355 = vpack.c.b16 %v4263, %v4261
        %v4356 = vpack.c.b16 %v4266, %v4264
        %v4357 = vpack.c.b16 %v4267, %v4265
        %v4358 = vpack.c.b16 %v4270, %v4268
        %v4359 = vpack.c.b16 %v4271, %v4269
        %v4360 = vpack.c.b16 %v4274, %v4272
        %v4361 = vpack.c.b16 %v4275, %v4273
        %v4362 = vpack.c.b16 %v4278, %v4276
        %v4363 = vpack.c.b16 %v4279, %v4277
        %v4364 = vpack.c.b16 %v4282, %v4280
        %v4365 = vpack.c.b16 %v4283, %v4281
        %v4366 = vpack.c.b16 %v4286, %v4284
        %v4367 = vpack.c.b16 %v4287, %v4285
        %v4368 = vpack.c.b16 %v4290, %v4288
        %v4369 = vpack.c.b16 %v4291, %v4289
        %v4370 = vpack.c.b16 %v4294, %v4292
        %v4371 = vpack.c.b16 %v4295, %v4293
        %v4372 = vpack.c.b16 %v4298, %v4296
        %v4373 = vpack.c.b16 %v4299, %v4297
        %v4374 = vpack.c.b16 %v4302, %v4300
        %v4375 = vpack.c.b16 %v4303, %v4301
        %v4376 = vpack.c.b16 %v4306, %v4304
        %v4377 = vpack.c.b16 %v4307, %v4305
        %v4378 = vpack.c.b16 %v4310, %v4308
        %v4379 = vpack.c.b16 %v4311, %v4309
        %v4380 = vpack.c.b16 %v4314, %v4312
        %v4381 = vpack.c.b16 %v4315, %v4313
        %v4382 = vpack.c.b16 %v4318, %v4316
        %v4383 = vpack.c.b16 %v4319, %v4317
        %4448 = vmatpush.bf16.msra.mxu0 %v4334
        %4449 = vmatpush.bf16.msra.mxu0 %v4332
        %4450 = vmatpush.bf16.msra.mxu0 %v4330
        %4451 = vmatpush.bf16.msra.mxu0 %v4328
        %4452 = vmatpush.bf16.msra.mxu0 %v4326
        %4453 = vmatpush.bf16.msra.mxu0 %v4324
        %4454 = vmatpush.bf16.msra.mxu0 %v4322
        %4455 = vmatpush.bf16.msra.mxu0 %v4320
        %4456 = vmatmul.bf16.gmra.mxu0 %v3792
        %v4457 = vpop.f32.mrf.mxu0
        %v4458 = vadd.f32 0.0, %v4457
        %v4459 = vpop.f32.mrf.mxu0
        %v4460 = vadd.f32 0.0, %v4459
        %4461 = vmatmul.bf16.gmra.mxu0 %v3852
        %v4462 = vpop.f32.mrf.mxu0
        %v4463 = vadd.f32 0.0, %v4462
        %v4464 = vpop.f32.mrf.mxu0
        %v4465 = vadd.f32 0.0, %v4464
        %4466 = vmatmul.bf16.gmra.mxu0 %v3888
        %v4467 = vpop.f32.mrf.mxu0
        %v4468 = vadd.f32 0.0, %v4467
        %v4469 = vpop.f32.mrf.mxu0
        %v4470 = vadd.f32 0.0, %v4469
        %4471 = vmatmul.bf16.gmra.mxu0 %v3924
        %v4472 = vpop.f32.mrf.mxu0
        %v4473 = vadd.f32 0.0, %v4472
        %v4474 = vpop.f32.mrf.mxu0
        %v4475 = vadd.f32 0.0, %v4474
        %4476 = vmatmul.bf16.gmra.mxu0 %v3960
        %v4477 = vpop.f32.mrf.mxu0
        %v4478 = vadd.f32 0.0, %v4477
        %v4479 = vpop.f32.mrf.mxu0
        %v4480 = vadd.f32 0.0, %v4479
        %4481 = vmatmul.bf16.gmra.mxu0 %v3996
        %v4482 = vpop.f32.mrf.mxu0
        %v4483 = vadd.f32 0.0, %v4482
        %v4484 = vpop.f32.mrf.mxu0
        %v4485 = vadd.f32 0.0, %v4484
        %4486 = vmatmul.bf16.gmra.mxu0 %v4032
        %v4487 = vpop.f32.mrf.mxu0
        %v4488 = vadd.f32 0.0, %v4487
        %v4489 = vpop.f32.mrf.mxu0
        %v4490 = vadd.f32 0.0, %v4489
        %4491 = vmatmul.bf16.gmra.mxu0 %v4068
        %v4492 = vpop.f32.mrf.mxu0
        %v4493 = vadd.f32 0.0, %v4492
        %v4494 = vpop.f32.mrf.mxu0
        %v4495 = vadd.f32 0.0, %v4494
        %4496 = vdwg.mxu0
        %4497 = vmatpush.bf16.msra.mxu0 %v4350
        %4498 = vmatpush.bf16.msra.mxu0 %v4348
        %4499 = vmatpush.bf16.msra.mxu0 %v4346
        %4500 = vmatpush.bf16.msra.mxu0 %v4344
        %4501 = vmatpush.bf16.msra.mxu0 %v4342
        %4502 = vmatpush.bf16.msra.mxu0 %v4340
        %4503 = vmatpush.bf16.msra.mxu0 %v4338
        %4504 = vmatpush.bf16.msra.mxu0 %v4336
        %4505 = vmatmul.bf16.gmra.mxu0 %v3809
        %v4506 = vpop.f32.mrf.mxu0
        %v4507 = vadd.f32 %v4458, %v4506
        %v4508 = vpop.f32.mrf.mxu0
        %v4509 = vadd.f32 %v4460, %v4508
        %4510 = vmatmul.bf16.gmra.mxu0 %v3861
        %v4511 = vpop.f32.mrf.mxu0
        %v4512 = vadd.f32 %v4463, %v4511
        %v4513 = vpop.f32.mrf.mxu0
        %v4514 = vadd.f32 %v4465, %v4513
        %4515 = vmatmul.bf16.gmra.mxu0 %v3897
        %v4516 = vpop.f32.mrf.mxu0
        %v4517 = vadd.f32 %v4468, %v4516
        %v4518 = vpop.f32.mrf.mxu0
        %v4519 = vadd.f32 %v4470, %v4518
        %4520 = vmatmul.bf16.gmra.mxu0 %v3933
        %v4521 = vpop.f32.mrf.mxu0
        %v4522 = vadd.f32 %v4473, %v4521
        %v4523 = vpop.f32.mrf.mxu0
        %v4524 = vadd.f32 %v4475, %v4523
        %4525 = vmatmul.bf16.gmra.mxu0 %v3969
        %v4526 = vpop.f32.mrf.mxu0
        %v4527 = vadd.f32 %v4478, %v4526
        %v4528 = vpop.f32.mrf.mxu0
        %v4529 = vadd.f32 %v4480, %v4528
        %4530 = vmatmul.bf16.gmra.mxu0 %v4005
        %v4531 = vpop.f32.mrf.mxu0
        %v4532 = vadd.f32 %v4483, %v4531
        %v4533 = vpop.f32.mrf.mxu0
        %v4534 = vadd.f32 %v4485, %v4533
        %4535 = vmatmul.bf16.gmra.mxu0 %v4041
        %v4536 = vpop.f32.mrf.mxu0
        %v4537 = vadd.f32 %v4488, %v4536
        %v4538 = vpop.f32.mrf.mxu0
        %v4539 = vadd.f32 %v4490, %v4538
        %4540 = vmatmul.bf16.gmra.mxu0 %v4077
        %v4541 = vpop.f32.mrf.mxu0
        %v4542 = vadd.f32 %v4493, %v4541
        %v4543 = vpop.f32.mrf.mxu0
        %v4544 = vadd.f32 %v4495, %v4543
        %4545 = vdwg.mxu0
        %4546 = vmatpush.bf16.msra.mxu0 %v4366
        %4547 = vmatpush.bf16.msra.mxu0 %v4364
        %4548 = vmatpush.bf16.msra.mxu0 %v4362
        %4549 = vmatpush.bf16.msra.mxu0 %v4360
        %4550 = vmatpush.bf16.msra.mxu0 %v4358
        %4551 = vmatpush.bf16.msra.mxu0 %v4356
        %4552 = vmatpush.bf16.msra.mxu0 %v4354
        %4553 = vmatpush.bf16.msra.mxu0 %v4352
        %4554 = vmatmul.bf16.gmra.mxu0 %v3826
        %v4555 = vpop.f32.mrf.mxu0
        %v4556 = vadd.f32 %v4507, %v4555
        %v4557 = vpop.f32.mrf.mxu0
        %v4558 = vadd.f32 %v4509, %v4557
        %4559 = vmatmul.bf16.gmra.mxu0 %v3870
        %v4560 = vpop.f32.mrf.mxu0
        %v4561 = vadd.f32 %v4512, %v4560
        %v4562 = vpop.f32.mrf.mxu0
        %v4563 = vadd.f32 %v4514, %v4562
        %4564 = vmatmul.bf16.gmra.mxu0 %v3906
        %v4565 = vpop.f32.mrf.mxu0
        %v4566 = vadd.f32 %v4517, %v4565
        %v4567 = vpop.f32.mrf.mxu0
        %v4568 = vadd.f32 %v4519, %v4567
        %4569 = vmatmul.bf16.gmra.mxu0 %v3942
        %v4570 = vpop.f32.mrf.mxu0
        %v4571 = vadd.f32 %v4522, %v4570
        %v4572 = vpop.f32.mrf.mxu0
        %v4573 = vadd.f32 %v4524, %v4572
        %4574 = vmatmul.bf16.gmra.mxu0 %v3978
        %v4575 = vpop.f32.mrf.mxu0
        %v4576 = vadd.f32 %v4527, %v4575
        %v4577 = vpop.f32.mrf.mxu0
        %v4578 = vadd.f32 %v4529, %v4577
        %4579 = vmatmul.bf16.gmra.mxu0 %v4014
        %v4580 = vpop.f32.mrf.mxu0
        %v4581 = vadd.f32 %v4532, %v4580
        %v4582 = vpop.f32.mrf.mxu0
        %v4583 = vadd.f32 %v4534, %v4582
        %4584 = vmatmul.bf16.gmra.mxu0 %v4050
        %v4585 = vpop.f32.mrf.mxu0
        %v4586 = vadd.f32 %v4537, %v4585
        %v4587 = vpop.f32.mrf.mxu0
        %v4588 = vadd.f32 %v4539, %v4587
        %4589 = vmatmul.bf16.gmra.mxu0 %v4086
        %v4590 = vpop.f32.mrf.mxu0
        %v4591 = vadd.f32 %v4542, %v4590
        %v4592 = vpop.f32.mrf.mxu0
        %v4593 = vadd.f32 %v4544, %v4592
        %4594 = vdwg.mxu0
        %4595 = vmatpush.bf16.msra.mxu0 %v4382
        %4596 = vmatpush.bf16.msra.mxu0 %v4380
        %4597 = vmatpush.bf16.msra.mxu0 %v4378
        %4598 = vmatpush.bf16.msra.mxu0 %v4376
        %4599 = vmatpush.bf16.msra.mxu0 %v4374
        %4600 = vmatpush.bf16.msra.mxu0 %v4372
        %4601 = vmatpush.bf16.msra.mxu0 %v4370
        %4602 = vmatpush.bf16.msra.mxu0 %v4368
        %4603 = vmatmul.bf16.gmra.mxu0 %v3843
        %v4604 = vpop.f32.mrf.mxu0
        %v4605 = vadd.f32 %v4556, %v4604
        %v4606 = vpop.f32.mrf.mxu0
        %v4607 = vadd.f32 %v4558, %v4606
        %4608 = vmatmul.bf16.gmra.mxu0 %v3879
        %v4609 = vpop.f32.mrf.mxu0
        %v4610 = vadd.f32 %v4561, %v4609
        %v4611 = vpop.f32.mrf.mxu0
        %v4612 = vadd.f32 %v4563, %v4611
        %4613 = vmatmul.bf16.gmra.mxu0 %v3915
        %v4614 = vpop.f32.mrf.mxu0
        %v4615 = vadd.f32 %v4566, %v4614
        %v4616 = vpop.f32.mrf.mxu0
        %v4617 = vadd.f32 %v4568, %v4616
        %4618 = vmatmul.bf16.gmra.mxu0 %v3951
        %v4619 = vpop.f32.mrf.mxu0
        %v4620 = vadd.f32 %v4571, %v4619
        %v4621 = vpop.f32.mrf.mxu0
        %v4622 = vadd.f32 %v4573, %v4621
        %4623 = vmatmul.bf16.gmra.mxu0 %v3987
        %v4624 = vpop.f32.mrf.mxu0
        %v4625 = vadd.f32 %v4576, %v4624
        %v4626 = vpop.f32.mrf.mxu0
        %v4627 = vadd.f32 %v4578, %v4626
        %4628 = vmatmul.bf16.gmra.mxu0 %v4023
        %v4629 = vpop.f32.mrf.mxu0
        %v4630 = vadd.f32 %v4581, %v4629
        %v4631 = vpop.f32.mrf.mxu0
        %v4632 = vadd.f32 %v4583, %v4631
        %4633 = vmatmul.bf16.gmra.mxu0 %v4059
        %v4634 = vpop.f32.mrf.mxu0
        %v4635 = vadd.f32 %v4586, %v4634
        %v4636 = vpop.f32.mrf.mxu0
        %v4637 = vadd.f32 %v4588, %v4636
        %4638 = vmatmul.bf16.gmra.mxu0 %v4095
        %v4639 = vpop.f32.mrf.mxu0
        %v4640 = vadd.f32 %v4591, %v4639
        %v4641 = vpop.f32.mrf.mxu0
        %v4642 = vadd.f32 %v4593, %v4641
        %4643 = vdwg.mxu0
        %4644 = vmatpush.bf16.msra.mxu0 %v4335
        %4645 = vmatpush.bf16.msra.mxu0 %v4333
        %4646 = vmatpush.bf16.msra.mxu0 %v4331
        %4647 = vmatpush.bf16.msra.mxu0 %v4329
        %4648 = vmatpush.bf16.msra.mxu0 %v4327
        %4649 = vmatpush.bf16.msra.mxu0 %v4325
        %4650 = vmatpush.bf16.msra.mxu0 %v4323
        %4651 = vmatpush.bf16.msra.mxu0 %v4321
        %4652 = vmatmul.bf16.gmra.mxu0 %v3792
        %v4653 = vpop.f32.mrf.mxu0
        %v4654 = vadd.f32 0.0, %v4653
        %v4655 = vpop.f32.mrf.mxu0
        %v4656 = vadd.f32 0.0, %v4655
        %4657 = vmatmul.bf16.gmra.mxu0 %v3852
        %v4658 = vpop.f32.mrf.mxu0
        %v4659 = vadd.f32 0.0, %v4658
        %v4660 = vpop.f32.mrf.mxu0
        %v4661 = vadd.f32 0.0, %v4660
        %4662 = vmatmul.bf16.gmra.mxu0 %v3888
        %v4663 = vpop.f32.mrf.mxu0
        %v4664 = vadd.f32 0.0, %v4663
        %v4665 = vpop.f32.mrf.mxu0
        %v4666 = vadd.f32 0.0, %v4665
        %4667 = vmatmul.bf16.gmra.mxu0 %v3924
        %v4668 = vpop.f32.mrf.mxu0
        %v4669 = vadd.f32 0.0, %v4668
        %v4670 = vpop.f32.mrf.mxu0
        %v4671 = vadd.f32 0.0, %v4670
        %4672 = vmatmul.bf16.gmra.mxu0 %v3960
        %v4673 = vpop.f32.mrf.mxu0
        %v4674 = vadd.f32 0.0, %v4673
        %v4675 = vpop.f32.mrf.mxu0
        %v4676 = vadd.f32 0.0, %v4675
        %4677 = vmatmul.bf16.gmra.mxu0 %v3996
        %v4678 = vpop.f32.mrf.mxu0
        %v4679 = vadd.f32 0.0, %v4678
        %v4680 = vpop.f32.mrf.mxu0
        %v4681 = vadd.f32 0.0, %v4680
        %4682 = vmatmul.bf16.gmra.mxu0 %v4032
        %v4683 = vpop.f32.mrf.mxu0
        %v4684 = vadd.f32 0.0, %v4683
        %v4685 = vpop.f32.mrf.mxu0
        %v4686 = vadd.f32 0.0, %v4685
        %4687 = vmatmul.bf16.gmra.mxu0 %v4068
        %v4688 = vpop.f32.mrf.mxu0
        %v4689 = vadd.f32 0.0, %v4688
        %v4690 = vpop.f32.mrf.mxu0
        %v4691 = vadd.f32 0.0, %v4690
        %4692 = vdwg.mxu0
        %4693 = vmatpush.bf16.msra.mxu0 %v4351
        %4694 = vmatpush.bf16.msra.mxu0 %v4349
        %4695 = vmatpush.bf16.msra.mxu0 %v4347
        %4696 = vmatpush.bf16.msra.mxu0 %v4345
        %4697 = vmatpush.bf16.msra.mxu0 %v4343
        %4698 = vmatpush.bf16.msra.mxu0 %v4341
        %4699 = vmatpush.bf16.msra.mxu0 %v4339
        %4700 = vmatpush.bf16.msra.mxu0 %v4337
        %4701 = vmatmul.bf16.gmra.mxu0 %v3809
        %v4702 = vpop.f32.mrf.mxu0
        %v4703 = vadd.f32 %v4654, %v4702
        %v4704 = vpop.f32.mrf.mxu0
        %v4705 = vadd.f32 %v4656, %v4704
        %4706 = vmatmul.bf16.gmra.mxu0 %v3861
        %v4707 = vpop.f32.mrf.mxu0
        %v4708 = vadd.f32 %v4659, %v4707
        %v4709 = vpop.f32.mrf.mxu0
        %v4710 = vadd.f32 %v4661, %v4709
        %4711 = vmatmul.bf16.gmra.mxu0 %v3897
        %v4712 = vpop.f32.mrf.mxu0
        %v4713 = vadd.f32 %v4664, %v4712
        %v4714 = vpop.f32.mrf.mxu0
        %v4715 = vadd.f32 %v4666, %v4714
        %4716 = vmatmul.bf16.gmra.mxu0 %v3933
        %v4717 = vpop.f32.mrf.mxu0
        %v4718 = vadd.f32 %v4669, %v4717
        %v4719 = vpop.f32.mrf.mxu0
        %v4720 = vadd.f32 %v4671, %v4719
        %4721 = vmatmul.bf16.gmra.mxu0 %v3969
        %v4722 = vpop.f32.mrf.mxu0
        %v4723 = vadd.f32 %v4674, %v4722
        %v4724 = vpop.f32.mrf.mxu0
        %v4725 = vadd.f32 %v4676, %v4724
        %4726 = vmatmul.bf16.gmra.mxu0 %v4005
        %v4727 = vpop.f32.mrf.mxu0
        %v4728 = vadd.f32 %v4679, %v4727
        %v4729 = vpop.f32.mrf.mxu0
        %v4730 = vadd.f32 %v4681, %v4729
        %4731 = vmatmul.bf16.gmra.mxu0 %v4041
        %v4732 = vpop.f32.mrf.mxu0
        %v4733 = vadd.f32 %v4684, %v4732
        %v4734 = vpop.f32.mrf.mxu0
        %v4735 = vadd.f32 %v4686, %v4734
        %4736 = vmatmul.bf16.gmra.mxu0 %v4077
        %v4737 = vpop.f32.mrf.mxu0
        %v4738 = vadd.f32 %v4689, %v4737
        %v4739 = vpop.f32.mrf.mxu0
        %v4740 = vadd.f32 %v4691, %v4739
        %4741 = vdwg.mxu0
        %4742 = vmatpush.bf16.msra.mxu0 %v4367
        %4743 = vmatpush.bf16.msra.mxu0 %v4365
        %4744 = vmatpush.bf16.msra.mxu0 %v4363
        %4745 = vmatpush.bf16.msra.mxu0 %v4361
        %4746 = vmatpush.bf16.msra.mxu0 %v4359
        %4747 = vmatpush.bf16.msra.mxu0 %v4357
        %4748 = vmatpush.bf16.msra.mxu0 %v4355
        %4749 = vmatpush.bf16.msra.mxu0 %v4353
        %4750 = vmatmul.bf16.gmra.mxu0 %v3826
        %v4751 = vpop.f32.mrf.mxu0
        %v4752 = vadd.f32 %v4703, %v4751
        %v4753 = vpop.f32.mrf.mxu0
        %v4754 = vadd.f32 %v4705, %v4753
        %4755 = vmatmul.bf16.gmra.mxu0 %v3870
        %v4756 = vpop.f32.mrf.mxu0
        %v4757 = vadd.f32 %v4708, %v4756
        %v4758 = vpop.f32.mrf.mxu0
        %v4759 = vadd.f32 %v4710, %v4758
        %4760 = vmatmul.bf16.gmra.mxu0 %v3906
        %v4761 = vpop.f32.mrf.mxu0
        %v4762 = vadd.f32 %v4713, %v4761
        %v4763 = vpop.f32.mrf.mxu0
        %v4764 = vadd.f32 %v4715, %v4763
        %4765 = vmatmul.bf16.gmra.mxu0 %v3942
        %v4766 = vpop.f32.mrf.mxu0
        %v4767 = vadd.f32 %v4718, %v4766
        %v4768 = vpop.f32.mrf.mxu0
        %v4769 = vadd.f32 %v4720, %v4768
        %4770 = vmatmul.bf16.gmra.mxu0 %v3978
        %v4771 = vpop.f32.mrf.mxu0
        %v4772 = vadd.f32 %v4723, %v4771
        %v4773 = vpop.f32.mrf.mxu0
        %v4774 = vadd.f32 %v4725, %v4773
        %4775 = vmatmul.bf16.gmra.mxu0 %v4014
        %v4776 = vpop.f32.mrf.mxu0
        %v4777 = vadd.f32 %v4728, %v4776
        %v4778 = vpop.f32.mrf.mxu0
        %v4779 = vadd.f32 %v4730, %v4778
        %4780 = vmatmul.bf16.gmra.mxu0 %v4050
        %v4781 = vpop.f32.mrf.mxu0
        %v4782 = vadd.f32 %v4733, %v4781
        %v4783 = vpop.f32.mrf.mxu0
        %v4784 = vadd.f32 %v4735, %v4783
        %4785 = vmatmul.bf16.gmra.mxu0 %v4086
        %v4786 = vpop.f32.mrf.mxu0
        %v4787 = vadd.f32 %v4738, %v4786
        %v4788 = vpop.f32.mrf.mxu0
        %v4789 = vadd.f32 %v4740, %v4788
        %4790 = vdwg.mxu0
        %4791 = vmatpush.bf16.msra.mxu0 %v4383
        %4792 = vmatpush.bf16.msra.mxu0 %v4381
        %4793 = vmatpush.bf16.msra.mxu0 %v4379
        %4794 = vmatpush.bf16.msra.mxu0 %v4377
        %4795 = vmatpush.bf16.msra.mxu0 %v4375
        %4796 = vmatpush.bf16.msra.mxu0 %v4373
        %4797 = vmatpush.bf16.msra.mxu0 %v4371
        %4798 = vmatpush.bf16.msra.mxu0 %v4369
        %4799 = vmatmul.bf16.gmra.mxu0 %v3843
        %v4800 = vpop.f32.mrf.mxu0
        %v4801 = vadd.f32 %v4752, %v4800
        %v4802 = vpop.f32.mrf.mxu0
        %v4803 = vadd.f32 %v4754, %v4802
        %4804 = vmatmul.bf16.gmra.mxu0 %v3879
        %v4805 = vpop.f32.mrf.mxu0
        %v4806 = vadd.f32 %v4757, %v4805
        %v4807 = vpop.f32.mrf.mxu0
        %v4808 = vadd.f32 %v4759, %v4807
        %4809 = vmatmul.bf16.gmra.mxu0 %v3915
        %v4810 = vpop.f32.mrf.mxu0
        %v4811 = vadd.f32 %v4762, %v4810
        %v4812 = vpop.f32.mrf.mxu0
        %v4813 = vadd.f32 %v4764, %v4812
        %4814 = vmatmul.bf16.gmra.mxu0 %v3951
        %v4815 = vpop.f32.mrf.mxu0
        %v4816 = vadd.f32 %v4767, %v4815
        %v4817 = vpop.f32.mrf.mxu0
        %v4818 = vadd.f32 %v4769, %v4817
        %4819 = vmatmul.bf16.gmra.mxu0 %v3987
        %v4820 = vpop.f32.mrf.mxu0
        %v4821 = vadd.f32 %v4772, %v4820
        %v4822 = vpop.f32.mrf.mxu0
        %v4823 = vadd.f32 %v4774, %v4822
        %4824 = vmatmul.bf16.gmra.mxu0 %v4023
        %v4825 = vpop.f32.mrf.mxu0
        %v4826 = vadd.f32 %v4777, %v4825
        %v4827 = vpop.f32.mrf.mxu0
        %v4828 = vadd.f32 %v4779, %v4827
        %4829 = vmatmul.bf16.gmra.mxu0 %v4059
        %v4830 = vpop.f32.mrf.mxu0
        %v4831 = vadd.f32 %v4782, %v4830
        %v4832 = vpop.f32.mrf.mxu0
        %v4833 = vadd.f32 %v4784, %v4832
        %4834 = vmatmul.bf16.gmra.mxu0 %v4095
        %v4835 = vpop.f32.mrf.mxu0
        %v4836 = vadd.f32 %v4787, %v4835
        %v4837 = vpop.f32.mrf.mxu0
        %v4838 = vadd.f32 %v4789, %v4837
        %4839 = vdwg.mxu0
        %v4840 = vadd.f32 %v3743, %v4605
        %v4841 = vadd.f32 %v3744, %v4801
        %v4842 = vadd.f32 %v3745, %v4607
        %v4843 = vadd.f32 %v3746, %v4803
        %v4844 = vadd.f32 %v3747, %v4610
        %v4845 = vadd.f32 %v3748, %v4806
        %v4846 = vadd.f32 %v3749, %v4612
        %v4847 = vadd.f32 %v3750, %v4808
        %v4848 = vadd.f32 %v3751, %v4615
        %v4849 = vadd.f32 %v3752, %v4811
        %v4850 = vadd.f32 %v3753, %v4617
        %v4851 = vadd.f32 %v3754, %v4813
        %v4852 = vadd.f32 %v3755, %v4620
        %v4853 = vadd.f32 %v3756, %v4816
        %v4854 = vadd.f32 %v3757, %v4622
        %v4855 = vadd.f32 %v3758, %v4818
        %v4856 = vadd.f32 %v3759, %v4625
        %v4857 = vadd.f32 %v3760, %v4821
        %v4858 = vadd.f32 %v3761, %v4627
        %v4859 = vadd.f32 %v3762, %v4823
        %v4860 = vadd.f32 %v3763, %v4630
        %v4861 = vadd.f32 %v3764, %v4826
        %v4862 = vadd.f32 %v3765, %v4632
        %v4863 = vadd.f32 %v3766, %v4828
        %v4864 = vadd.f32 %v3767, %v4635
        %v4865 = vadd.f32 %v3768, %v4831
        %v4866 = vadd.f32 %v3769, %v4637
        %v4867 = vadd.f32 %v3770, %v4833
        %v4868 = vadd.f32 %v3771, %v4640
        %v4869 = vadd.f32 %v3772, %v4836
        %v4870 = vadd.f32 %v3773, %v4642
        %v4871 = vadd.f32 %v3774, %v4838
        %4872 = vst [vmem:[#allocation2] sm:$0xff] %v4840
        %4873 = vst [vmem:[#allocation2 + $0x8] sm:$0xff] %v4841
        %4874 = vst [vmem:[#allocation2 + $0x10] sm:$0xff] %v4842
        %4875 = vst [vmem:[#allocation2 + $0x18] sm:$0xff] %v4843
        %4876 = vst [vmem:[#allocation2 + $0x20] sm:$0xff] %v4844
        %4877 = vst [vmem:[#allocation2 + $0x28] sm:$0xff] %v4845
        %4878 = vst [vmem:[#allocation2 + $0x30] sm:$0xff] %v4846
        %4879 = vst [vmem:[#allocation2 + $0x38] sm:$0xff] %v4847
        %4880 = vst [vmem:[#allocation2 + $0x40] sm:$0xff] %v4848
        %4881 = vst [vmem:[#allocation2 + $0x48] sm:$0xff] %v4849
        %4882 = vst [vmem:[#allocation2 + $0x50] sm:$0xff] %v4850
        %4883 = vst [vmem:[#allocation2 + $0x58] sm:$0xff] %v4851
        %4884 = vst [vmem:[#allocation2 + $0x60] sm:$0xff] %v4852
        %4885 = vst [vmem:[#allocation2 + $0x68] sm:$0xff] %v4853
        %4886 = vst [vmem:[#allocation2 + $0x70] sm:$0xff] %v4854
        %4887 = vst [vmem:[#allocation2 + $0x78] sm:$0xff] %v4855
        %4888 = vst [vmem:[#allocation2 + $0x80] sm:$0xff] %v4856
        %4889 = vst [vmem:[#allocation2 + $0x88] sm:$0xff] %v4857
        %4890 = vst [vmem:[#allocation2 + $0x90] sm:$0xff] %v4858
        %4891 = vst [vmem:[#allocation2 + $0x98] sm:$0xff] %v4859
        %4892 = vst [vmem:[#allocation2 + $0xa0] sm:$0xff] %v4860
        %4893 = vst [vmem:[#allocation2 + $0xa8] sm:$0xff] %v4861
        %4894 = vst [vmem:[#allocation2 + $0xb0] sm:$0xff] %v4862
        %4895 = vst [vmem:[#allocation2 + $0xb8] sm:$0xff] %v4863
        %4896 = vst [vmem:[#allocation2 + $0xc0] sm:$0xff] %v4864
        %4897 = vst [vmem:[#allocation2 + $0xc8] sm:$0xff] %v4865
        %4898 = vst [vmem:[#allocation2 + $0xd0] sm:$0xff] %v4866
        %4899 = vst [vmem:[#allocation2 + $0xd8] sm:$0xff] %v4867
        %4900 = vst [vmem:[#allocation2 + $0xe0] sm:$0xff] %v4868
        %4901 = vst [vmem:[#allocation2 + $0xe8] sm:$0xff] %v4869
        %4902 = vst [vmem:[#allocation2 + $0xf0] sm:$0xff] %v4870
        %4903 = vst [vmem:[#allocation2 + $0xf8] sm:$0xff] %v4871
        %v4904 = vld [vmem:[%s154] sm:$0xf0]
        %v4905 = vld [vmem:[%s154 + $0x8] sm:$0xf0]
        %v4906 = vld [vmem:[%s154 + $0x10] sm:$0xf0]
        %v4907 = vld [vmem:[%s154 + $0x18] sm:$0xf0]
        %v4908 = vld [vmem:[%s154 + $0x20] sm:$0xff]
        %v4909 = vld [vmem:[%s154 + $0x28] sm:$0xff]
        %v4910 = vld [vmem:[%s154 + $0x30] sm:$0xff]
        %v4911 = vld [vmem:[%s154 + $0x38] sm:$0xff]
        %v4912 = vld [vmem:[%s154 + $0x40] sm:$0xff]
        %v4913 = vld [vmem:[%s154 + $0x48] sm:$0xff]
        %v4914 = vld [vmem:[%s154 + $0x50] sm:$0xff]
        %v4915 = vld [vmem:[%s154 + $0x58] sm:$0xff]
        %v4916 = vld [vmem:[%s154 + $0x60] sm:$0xff]
        %v4917 = vld [vmem:[%s154 + $0x68] sm:$0xff]
        %v4918 = vld [vmem:[%s154 + $0x70] sm:$0xff]
        %v4919 = vld [vmem:[%s154 + $0x78] sm:$0xff]
        %v4920 = vld [vmem:[%s154 + $0x80] sm:$0xff]
        %v4921 = vld [vmem:[%s154 + $0x88] sm:$0xff]
        %v4922 = vld [vmem:[%s154 + $0x90] sm:$0xff]
        %v4923 = vld [vmem:[%s154 + $0x98] sm:$0xff]
        %v4924 = vld [vmem:[%s154 + $0xa0] sm:$0xff]
        %v4925 = vld [vmem:[%s154 + $0xa8] sm:$0xff]
        %v4926 = vld [vmem:[%s154 + $0xb0] sm:$0xff]
        %v4927 = vld [vmem:[%s154 + $0xb8] sm:$0xff]
        %v4928 = vld [vmem:[%s154 + $0xc0] sm:$0xff]
        %v4929 = vld [vmem:[%s154 + $0xc8] sm:$0xff]
        %v4930 = vld [vmem:[%s154 + $0xd0] sm:$0xff]
        %v4931 = vld [vmem:[%s154 + $0xd8] sm:$0xff]
        %v4932 = vld [vmem:[%s154 + $0xe0] sm:$0xff]
        %v4933 = vld [vmem:[%s154 + $0xe8] sm:$0xff]
        %v4934 = vld [vmem:[%s154 + $0xf0] sm:$0xff]
        %v4935 = vld [vmem:[%s154 + $0xf8] sm:$0xff]
        %v4936 = vld [vmem:[%s154 + $0x100] sm:$0xff]
        %v4937 = vld [vmem:[%s154 + $0x108] sm:$0xff]
        %v4938 = vld [vmem:[%s154 + $0x110] sm:$0xff]
        %v4939 = vld [vmem:[%s154 + $0x118] sm:$0xff]
        %v4940 = vld [vmem:[%s154 + $0x120] sm:$0xff]
        %v4941 = vld [vmem:[%s154 + $0x128] sm:$0xff]
        %v4942 = vld [vmem:[%s154 + $0x130] sm:$0xff]
        %v4943 = vld [vmem:[%s154 + $0x138] sm:$0xff]
        %v4944 = vld [vmem:[%s154 + $0x140] sm:$0xff]
        %v4945 = vld [vmem:[%s154 + $0x148] sm:$0xff]
        %v4946 = vld [vmem:[%s154 + $0x150] sm:$0xff]
        %v4947 = vld [vmem:[%s154 + $0x158] sm:$0xff]
        %v4948 = vld [vmem:[%s154 + $0x160] sm:$0xff]
        %v4949 = vld [vmem:[%s154 + $0x168] sm:$0xff]
        %v4950 = vld [vmem:[%s154 + $0x170] sm:$0xff]
        %v4951 = vld [vmem:[%s154 + $0x178] sm:$0xff]
        %v4952 = vld [vmem:[%s154 + $0x180] sm:$0xff]
        %v4953 = vld [vmem:[%s154 + $0x188] sm:$0xff]
        %v4954 = vld [vmem:[%s154 + $0x190] sm:$0xff]
        %v4955 = vld [vmem:[%s154 + $0x198] sm:$0xff]
        %v4956 = vld [vmem:[%s154 + $0x1a0] sm:$0xff]
        %v4957 = vld [vmem:[%s154 + $0x1a8] sm:$0xff]
        %v4958 = vld [vmem:[%s154 + $0x1b0] sm:$0xff]
        %v4959 = vld [vmem:[%s154 + $0x1b8] sm:$0xff]
        %v4960 = vld [vmem:[%s154 + $0x1c0] sm:$0xff]
        %v4961 = vld [vmem:[%s154 + $0x1c8] sm:$0xff]
        %v4962 = vld [vmem:[%s154 + $0x1d0] sm:$0xff]
        %v4963 = vld [vmem:[%s154 + $0x1d8] sm:$0xff]
        %v4964 = vld [vmem:[%s154 + $0x1e0] sm:$0xff]
        %v4965 = vld [vmem:[%s154 + $0x1e8] sm:$0xff]
        %v4966 = vld [vmem:[%s154 + $0x1f0] sm:$0xff]
        %v4967 = vld [vmem:[%s154 + $0x1f8] sm:$0xff]
        %v4968 = vld [vmem:[%s154 + $0x200] sm:$0xf]
        %v4969 = vld [vmem:[%s154 + $0x208] sm:$0xf]
        %v4970 = vld [vmem:[%s154 + $0x210] sm:$0xf]
        %v4971 = vld [vmem:[%s154 + $0x218] sm:$0xf]
        %v4972 = vpack.c.bf16 %v4908, %v4904
        %v4973 = vpack.c.bf16 %v4909, %v4905
        %v4974 = vpack.c.bf16 %v4910, %v4906
        %v4975 = vpack.c.bf16 %v4911, %v4907
        %v4976 = vpack.c.bf16 %v4916, %v4912
        %v4977 = vpack.c.bf16 %v4917, %v4913
        %v4978 = vpack.c.bf16 %v4918, %v4914
        %v4979 = vpack.c.bf16 %v4919, %v4915
        %v4980 = vpack.c.bf16 %v4924, %v4920
        %v4981 = vpack.c.bf16 %v4925, %v4921
        %v4982 = vpack.c.bf16 %v4926, %v4922
        %v4983 = vpack.c.bf16 %v4927, %v4923
        %v4984 = vpack.c.bf16 %v4932, %v4928
        %v4985 = vpack.c.bf16 %v4933, %v4929
        %v4986 = vpack.c.bf16 %v4934, %v4930
        %v4987 = vpack.c.bf16 %v4935, %v4931
        %v4988 = vpack.c.bf16 %v4940, %v4936
        %v4989 = vpack.c.bf16 %v4941, %v4937
        %v4990 = vpack.c.bf16 %v4942, %v4938
        %v4991 = vpack.c.bf16 %v4943, %v4939
        %v4992 = vpack.c.bf16 %v4948, %v4944
        %v4993 = vpack.c.bf16 %v4949, %v4945
        %v4994 = vpack.c.bf16 %v4950, %v4946
        %v4995 = vpack.c.bf16 %v4951, %v4947
        %v4996 = vpack.c.bf16 %v4956, %v4952
        %v4997 = vpack.c.bf16 %v4957, %v4953
        %v4998 = vpack.c.bf16 %v4958, %v4954
        %v4999 = vpack.c.bf16 %v4959, %v4955
        %v5000 = vpack.c.bf16 %v4964, %v4960
        %v5001 = vpack.c.bf16 %v4965, %v4961
        %v5002 = vpack.c.bf16 %v4966, %v4962
        %v5003 = vpack.c.bf16 %v4967, %v4963
        %v5004 = vpack.c.bf16 %v4968, %v4968
        %v5005 = vpack.c.bf16 %v4969, %v4969
        %v5006 = vpack.c.bf16 %v4970, %v4970
        %v5007 = vpack.c.bf16 %v4971, %v4971
        %v5008 = vld [vmem:[#allocation6 + $0x800] sm:$0xff]
        %v5009 = vld [vmem:[#allocation6 + $0x808] sm:$0xff]
        %v5010 = vld [vmem:[#allocation6 + $0x810] sm:$0xff]
        %v5011 = vld [vmem:[#allocation6 + $0x818] sm:$0xff]
        %v5012 = vld [vmem:[#allocation6 + $0x820] sm:$0xff]
        %v5013 = vld [vmem:[#allocation6 + $0x828] sm:$0xff]
        %v5014 = vld [vmem:[#allocation6 + $0x830] sm:$0xff]
        %v5015 = vld [vmem:[#allocation6 + $0x838] sm:$0xff]
        %v5016 = vld [vmem:[#allocation6 + $0x840] sm:$0xff]
        %v5017 = vld [vmem:[#allocation6 + $0x848] sm:$0xff]
        %v5018 = vld [vmem:[#allocation6 + $0x850] sm:$0xff]
        %v5019 = vld [vmem:[#allocation6 + $0x858] sm:$0xff]
        %v5020 = vld [vmem:[#allocation6 + $0x860] sm:$0xff]
        %v5021 = vld [vmem:[#allocation6 + $0x868] sm:$0xff]
        %v5022 = vld [vmem:[#allocation6 + $0x870] sm:$0xff]
        %v5023 = vld [vmem:[#allocation6 + $0x878] sm:$0xff]
        %v5024 = vld [vmem:[#allocation6 + $0x880] sm:$0xff]
        %v5025 = vld [vmem:[#allocation6 + $0x888] sm:$0xff]
        %v5026 = vld [vmem:[#allocation6 + $0x890] sm:$0xff]
        %v5027 = vld [vmem:[#allocation6 + $0x898] sm:$0xff]
        %v5028 = vld [vmem:[#allocation6 + $0x8a0] sm:$0xff]
        %v5029 = vld [vmem:[#allocation6 + $0x8a8] sm:$0xff]
        %v5030 = vld [vmem:[#allocation6 + $0x8b0] sm:$0xff]
        %v5031 = vld [vmem:[#allocation6 + $0x8b8] sm:$0xff]
        %v5032 = vld [vmem:[#allocation6 + $0x8c0] sm:$0xff]
        %v5033 = vld [vmem:[#allocation6 + $0x8c8] sm:$0xff]
        %v5034 = vld [vmem:[#allocation6 + $0x8d0] sm:$0xff]
        %v5035 = vld [vmem:[#allocation6 + $0x8d8] sm:$0xff]
        %v5036 = vld [vmem:[#allocation6 + $0x8e0] sm:$0xff]
        %v5037 = vld [vmem:[#allocation6 + $0x8e8] sm:$0xff]
        %v5038 = vld [vmem:[#allocation6 + $0x8f0] sm:$0xff]
        %v5039 = vld [vmem:[#allocation6 + $0x8f8] sm:$0xff]
        %v5040 = vld [vmem:[#allocation6 + $0x900] sm:$0xff]
        %v5041 = vld [vmem:[#allocation6 + $0x908] sm:$0xff]
        %v5042 = vld [vmem:[#allocation6 + $0x910] sm:$0xff]
        %v5043 = vld [vmem:[#allocation6 + $0x918] sm:$0xff]
        %v5044 = vld [vmem:[#allocation6 + $0x920] sm:$0xff]
        %v5045 = vld [vmem:[#allocation6 + $0x928] sm:$0xff]
        %v5046 = vld [vmem:[#allocation6 + $0x930] sm:$0xff]
        %v5047 = vld [vmem:[#allocation6 + $0x938] sm:$0xff]
        %v5048 = vld [vmem:[#allocation6 + $0x940] sm:$0xff]
        %v5049 = vld [vmem:[#allocation6 + $0x948] sm:$0xff]
        %v5050 = vld [vmem:[#allocation6 + $0x950] sm:$0xff]
        %v5051 = vld [vmem:[#allocation6 + $0x958] sm:$0xff]
        %v5052 = vld [vmem:[#allocation6 + $0x960] sm:$0xff]
        %v5053 = vld [vmem:[#allocation6 + $0x968] sm:$0xff]
        %v5054 = vld [vmem:[#allocation6 + $0x970] sm:$0xff]
        %v5055 = vld [vmem:[#allocation6 + $0x978] sm:$0xff]
        %v5056 = vld [vmem:[#allocation6 + $0x980] sm:$0xff]
        %v5057 = vld [vmem:[#allocation6 + $0x988] sm:$0xff]
        %v5058 = vld [vmem:[#allocation6 + $0x990] sm:$0xff]
        %v5059 = vld [vmem:[#allocation6 + $0x998] sm:$0xff]
        %v5060 = vld [vmem:[#allocation6 + $0x9a0] sm:$0xff]
        %v5061 = vld [vmem:[#allocation6 + $0x9a8] sm:$0xff]
        %v5062 = vld [vmem:[#allocation6 + $0x9b0] sm:$0xff]
        %v5063 = vld [vmem:[#allocation6 + $0x9b8] sm:$0xff]
        %v5064 = vld [vmem:[#allocation6 + $0x9c0] sm:$0xff]
        %v5065 = vld [vmem:[#allocation6 + $0x9c8] sm:$0xff]
        %v5066 = vld [vmem:[#allocation6 + $0x9d0] sm:$0xff]
        %v5067 = vld [vmem:[#allocation6 + $0x9d8] sm:$0xff]
        %v5068 = vld [vmem:[#allocation6 + $0x9e0] sm:$0xff]
        %v5069 = vld [vmem:[#allocation6 + $0x9e8] sm:$0xff]
        %v5070 = vld [vmem:[#allocation6 + $0x9f0] sm:$0xff]
        %v5071 = vld [vmem:[#allocation6 + $0x9f8] sm:$0xff]
        %v5072 = vld [vmem:[#allocation2] sm:$0xff]
        %v5073 = vld [vmem:[#allocation2 + $0x8] sm:$0xff]
        %v5074 = vld [vmem:[#allocation2 + $0x10] sm:$0xff]
        %v5075 = vld [vmem:[#allocation2 + $0x18] sm:$0xff]
        %v5076 = vld [vmem:[#allocation2 + $0x20] sm:$0xff]
        %v5077 = vld [vmem:[#allocation2 + $0x28] sm:$0xff]
        %v5078 = vld [vmem:[#allocation2 + $0x30] sm:$0xff]
        %v5079 = vld [vmem:[#allocation2 + $0x38] sm:$0xff]
        %v5080 = vld [vmem:[#allocation2 + $0x40] sm:$0xff]
        %v5081 = vld [vmem:[#allocation2 + $0x48] sm:$0xff]
        %v5082 = vld [vmem:[#allocation2 + $0x50] sm:$0xff]
        %v5083 = vld [vmem:[#allocation2 + $0x58] sm:$0xff]
        %v5084 = vld [vmem:[#allocation2 + $0x60] sm:$0xff]
        %v5085 = vld [vmem:[#allocation2 + $0x68] sm:$0xff]
        %v5086 = vld [vmem:[#allocation2 + $0x70] sm:$0xff]
        %v5087 = vld [vmem:[#allocation2 + $0x78] sm:$0xff]
        %v5088 = vld [vmem:[#allocation2 + $0x80] sm:$0xff]
        %v5089 = vld [vmem:[#allocation2 + $0x88] sm:$0xff]
        %v5090 = vld [vmem:[#allocation2 + $0x90] sm:$0xff]
        %v5091 = vld [vmem:[#allocation2 + $0x98] sm:$0xff]
        %v5092 = vld [vmem:[#allocation2 + $0xa0] sm:$0xff]
        %v5093 = vld [vmem:[#allocation2 + $0xa8] sm:$0xff]
        %v5094 = vld [vmem:[#allocation2 + $0xb0] sm:$0xff]
        %v5095 = vld [vmem:[#allocation2 + $0xb8] sm:$0xff]
        %v5096 = vld [vmem:[#allocation2 + $0xc0] sm:$0xff]
        %v5097 = vld [vmem:[#allocation2 + $0xc8] sm:$0xff]
        %v5098 = vld [vmem:[#allocation2 + $0xd0] sm:$0xff]
        %v5099 = vld [vmem:[#allocation2 + $0xd8] sm:$0xff]
        %v5100 = vld [vmem:[#allocation2 + $0xe0] sm:$0xff]
        %v5101 = vld [vmem:[#allocation2 + $0xe8] sm:$0xff]
        %v5102 = vld [vmem:[#allocation2 + $0xf0] sm:$0xff]
        %v5103 = vld [vmem:[#allocation2 + $0xf8] sm:$0xff]
        %vm5140 = vcmask 1045504
        %v5141 = vrot.slane %v4972, 2
        %v5142 = vrot.slane %v4976, 2
        %v5143 = vsel %vm5140, %v5141, %v5142
        %v5144 = vrot.slane %v4973, 2
        %v5145 = vrot.slane %v4977, 2
        %v5146 = vsel %vm5140, %v5144, %v5145
        %v5147 = vrot.slane %v4974, 2
        %v5148 = vrot.slane %v4978, 2
        %v5149 = vsel %vm5140, %v5147, %v5148
        %v5150 = vrot.slane %v4975, 2
        %v5151 = vrot.slane %v4979, 2
        %v5152 = vsel %vm5140, %v5150, %v5151
        %v5153 = vrot.slane %v4980, 2
        %v5154 = vsel %vm5140, %v5142, %v5153
        %v5155 = vrot.slane %v4981, 2
        %v5156 = vsel %vm5140, %v5145, %v5155
        %v5157 = vrot.slane %v4982, 2
        %v5158 = vsel %vm5140, %v5148, %v5157
        %v5159 = vrot.slane %v4983, 2
        %v5160 = vsel %vm5140, %v5151, %v5159
        %v5161 = vrot.slane %v4984, 2
        %v5162 = vsel %vm5140, %v5153, %v5161
        %v5163 = vrot.slane %v4985, 2
        %v5164 = vsel %vm5140, %v5155, %v5163
        %v5165 = vrot.slane %v4986, 2
        %v5166 = vsel %vm5140, %v5157, %v5165
        %v5167 = vrot.slane %v4987, 2
        %v5168 = vsel %vm5140, %v5159, %v5167
        %v5169 = vrot.slane %v4988, 2
        %v5170 = vsel %vm5140, %v5161, %v5169
        %v5171 = vrot.slane %v4989, 2
        %v5172 = vsel %vm5140, %v5163, %v5171
        %v5173 = vrot.slane %v4990, 2
        %v5174 = vsel %vm5140, %v5165, %v5173
        %v5175 = vrot.slane %v4991, 2
        %v5176 = vsel %vm5140, %v5167, %v5175
        %v5177 = vrot.slane %v4992, 2
        %v5178 = vsel %vm5140, %v5169, %v5177
        %v5179 = vrot.slane %v4993, 2
        %v5180 = vsel %vm5140, %v5171, %v5179
        %v5181 = vrot.slane %v4994, 2
        %v5182 = vsel %vm5140, %v5173, %v5181
        %v5183 = vrot.slane %v4995, 2
        %v5184 = vsel %vm5140, %v5175, %v5183
        %v5185 = vrot.slane %v4996, 2
        %v5186 = vsel %vm5140, %v5177, %v5185
        %v5187 = vrot.slane %v4997, 2
        %v5188 = vsel %vm5140, %v5179, %v5187
        %v5189 = vrot.slane %v4998, 2
        %v5190 = vsel %vm5140, %v5181, %v5189
        %v5191 = vrot.slane %v4999, 2
        %v5192 = vsel %vm5140, %v5183, %v5191
        %v5193 = vrot.slane %v5000, 2
        %v5194 = vsel %vm5140, %v5185, %v5193
        %v5195 = vrot.slane %v5001, 2
        %v5196 = vsel %vm5140, %v5187, %v5195
        %v5197 = vrot.slane %v5002, 2
        %v5198 = vsel %vm5140, %v5189, %v5197
        %v5199 = vrot.slane %v5003, 2
        %v5200 = vsel %vm5140, %v5191, %v5199
        %v5201 = vrot.slane %v5004, 2
        %v5202 = vsel %vm5140, %v5193, %v5201
        %v5203 = vrot.slane %v5005, 2
        %v5204 = vsel %vm5140, %v5195, %v5203
        %v5205 = vrot.slane %v5006, 2
        %v5206 = vsel %vm5140, %v5197, %v5205
        %v5207 = vrot.slane %v5007, 2
        %v5208 = vsel %vm5140, %v5199, %v5207
        %v5305 = vunpack.c.l.b16 %v5008
        %v5306 = vunpack.c.h.b16 %v5008
        %v5307 = vunpack.c.l.b16 %v5009
        %v5308 = vunpack.c.h.b16 %v5009
        %v5309 = vunpack.c.l.b16 %v5010
        %v5310 = vunpack.c.h.b16 %v5010
        %v5311 = vunpack.c.l.b16 %v5011
        %v5312 = vunpack.c.h.b16 %v5011
        %v5313 = vunpack.c.l.b16 %v5012
        %v5314 = vunpack.c.h.b16 %v5012
        %v5315 = vunpack.c.l.b16 %v5013
        %v5316 = vunpack.c.h.b16 %v5013
        %v5317 = vunpack.c.l.b16 %v5014
        %v5318 = vunpack.c.h.b16 %v5014
        %v5319 = vunpack.c.l.b16 %v5015
        %v5320 = vunpack.c.h.b16 %v5015
        %v5321 = vunpack.c.l.b16 %v5016
        %v5322 = vunpack.c.h.b16 %v5016
        %v5323 = vunpack.c.l.b16 %v5017
        %v5324 = vunpack.c.h.b16 %v5017
        %v5325 = vunpack.c.l.b16 %v5018
        %v5326 = vunpack.c.h.b16 %v5018
        %v5327 = vunpack.c.l.b16 %v5019
        %v5328 = vunpack.c.h.b16 %v5019
        %v5329 = vunpack.c.l.b16 %v5020
        %v5330 = vunpack.c.h.b16 %v5020
        %v5331 = vunpack.c.l.b16 %v5021
        %v5332 = vunpack.c.h.b16 %v5021
        %v5333 = vunpack.c.l.b16 %v5022
        %v5334 = vunpack.c.h.b16 %v5022
        %v5335 = vunpack.c.l.b16 %v5023
        %v5336 = vunpack.c.h.b16 %v5023
        %v5337 = vunpack.c.l.b16 %v5024
        %v5338 = vunpack.c.h.b16 %v5024
        %v5339 = vunpack.c.l.b16 %v5025
        %v5340 = vunpack.c.h.b16 %v5025
        %v5341 = vunpack.c.l.b16 %v5026
        %v5342 = vunpack.c.h.b16 %v5026
        %v5343 = vunpack.c.l.b16 %v5027
        %v5344 = vunpack.c.h.b16 %v5027
        %v5345 = vunpack.c.l.b16 %v5028
        %v5346 = vunpack.c.h.b16 %v5028
        %v5347 = vunpack.c.l.b16 %v5029
        %v5348 = vunpack.c.h.b16 %v5029
        %v5349 = vunpack.c.l.b16 %v5030
        %v5350 = vunpack.c.h.b16 %v5030
        %v5351 = vunpack.c.l.b16 %v5031
        %v5352 = vunpack.c.h.b16 %v5031
        %v5353 = vunpack.c.l.b16 %v5032
        %v5354 = vunpack.c.h.b16 %v5032
        %v5355 = vunpack.c.l.b16 %v5033
        %v5356 = vunpack.c.h.b16 %v5033
        %v5357 = vunpack.c.l.b16 %v5034
        %v5358 = vunpack.c.h.b16 %v5034
        %v5359 = vunpack.c.l.b16 %v5035
        %v5360 = vunpack.c.h.b16 %v5035
        %v5361 = vunpack.c.l.b16 %v5036
        %v5362 = vunpack.c.h.b16 %v5036
        %v5363 = vunpack.c.l.b16 %v5037
        %v5364 = vunpack.c.h.b16 %v5037
        %v5365 = vunpack.c.l.b16 %v5038
        %v5366 = vunpack.c.h.b16 %v5038
        %v5367 = vunpack.c.l.b16 %v5039
        %v5368 = vunpack.c.h.b16 %v5039
        %v5369 = vunpack.c.l.b16 %v5040
        %v5370 = vunpack.c.h.b16 %v5040
        %v5371 = vunpack.c.l.b16 %v5041
        %v5372 = vunpack.c.h.b16 %v5041
        %v5373 = vunpack.c.l.b16 %v5042
        %v5374 = vunpack.c.h.b16 %v5042
        %v5375 = vunpack.c.l.b16 %v5043
        %v5376 = vunpack.c.h.b16 %v5043
        %v5377 = vunpack.c.l.b16 %v5044
        %v5378 = vunpack.c.h.b16 %v5044
        %v5379 = vunpack.c.l.b16 %v5045
        %v5380 = vunpack.c.h.b16 %v5045
        %v5381 = vunpack.c.l.b16 %v5046
        %v5382 = vunpack.c.h.b16 %v5046
        %v5383 = vunpack.c.l.b16 %v5047
        %v5384 = vunpack.c.h.b16 %v5047
        %v5385 = vunpack.c.l.b16 %v5048
        %v5386 = vunpack.c.h.b16 %v5048
        %v5387 = vunpack.c.l.b16 %v5049
        %v5388 = vunpack.c.h.b16 %v5049
        %v5389 = vunpack.c.l.b16 %v5050
        %v5390 = vunpack.c.h.b16 %v5050
        %v5391 = vunpack.c.l.b16 %v5051
        %v5392 = vunpack.c.h.b16 %v5051
        %v5393 = vunpack.c.l.b16 %v5052
        %v5394 = vunpack.c.h.b16 %v5052
        %v5395 = vunpack.c.l.b16 %v5053
        %v5396 = vunpack.c.h.b16 %v5053
        %v5397 = vunpack.c.l.b16 %v5054
        %v5398 = vunpack.c.h.b16 %v5054
        %v5399 = vunpack.c.l.b16 %v5055
        %v5400 = vunpack.c.h.b16 %v5055
        %v5401 = vunpack.c.l.b16 %v5056
        %v5402 = vunpack.c.h.b16 %v5056
        %v5403 = vunpack.c.l.b16 %v5057
        %v5404 = vunpack.c.h.b16 %v5057
        %v5405 = vunpack.c.l.b16 %v5058
        %v5406 = vunpack.c.h.b16 %v5058
        %v5407 = vunpack.c.l.b16 %v5059
        %v5408 = vunpack.c.h.b16 %v5059
        %v5409 = vunpack.c.l.b16 %v5060
        %v5410 = vunpack.c.h.b16 %v5060
        %v5411 = vunpack.c.l.b16 %v5061
        %v5412 = vunpack.c.h.b16 %v5061
        %v5413 = vunpack.c.l.b16 %v5062
        %v5414 = vunpack.c.h.b16 %v5062
        %v5415 = vunpack.c.l.b16 %v5063
        %v5416 = vunpack.c.h.b16 %v5063
        %v5417 = vunpack.c.l.b16 %v5064
        %v5418 = vunpack.c.h.b16 %v5064
        %v5419 = vunpack.c.l.b16 %v5065
        %v5420 = vunpack.c.h.b16 %v5065
        %v5421 = vunpack.c.l.b16 %v5066
        %v5422 = vunpack.c.h.b16 %v5066
        %v5423 = vunpack.c.l.b16 %v5067
        %v5424 = vunpack.c.h.b16 %v5067
        %v5425 = vunpack.c.l.b16 %v5068
        %v5426 = vunpack.c.h.b16 %v5068
        %v5427 = vunpack.c.l.b16 %v5069
        %v5428 = vunpack.c.h.b16 %v5069
        %v5429 = vunpack.c.l.b16 %v5070
        %v5430 = vunpack.c.h.b16 %v5070
        %v5431 = vunpack.c.l.b16 %v5071
        %v5432 = vunpack.c.h.b16 %v5071
        %v5433 = vpack.c.b16 %v5307, %v5305
        %v5434 = vpack.c.b16 %v5308, %v5306
        %v5435 = vpack.c.b16 %v5311, %v5309
        %v5436 = vpack.c.b16 %v5312, %v5310
        %v5437 = vpack.c.b16 %v5315, %v5313
        %v5438 = vpack.c.b16 %v5316, %v5314
        %v5439 = vpack.c.b16 %v5319, %v5317
        %v5440 = vpack.c.b16 %v5320, %v5318
        %v5441 = vpack.c.b16 %v5323, %v5321
        %v5442 = vpack.c.b16 %v5324, %v5322
        %v5443 = vpack.c.b16 %v5327, %v5325
        %v5444 = vpack.c.b16 %v5328, %v5326
        %v5445 = vpack.c.b16 %v5331, %v5329
        %v5446 = vpack.c.b16 %v5332, %v5330
        %v5447 = vpack.c.b16 %v5335, %v5333
        %v5448 = vpack.c.b16 %v5336, %v5334
        %v5449 = vpack.c.b16 %v5339, %v5337
        %v5450 = vpack.c.b16 %v5340, %v5338
        %v5451 = vpack.c.b16 %v5343, %v5341
        %v5452 = vpack.c.b16 %v5344, %v5342
        %v5453 = vpack.c.b16 %v5347, %v5345
        %v5454 = vpack.c.b16 %v5348, %v5346
        %v5455 = vpack.c.b16 %v5351, %v5349
        %v5456 = vpack.c.b16 %v5352, %v5350
        %v5457 = vpack.c.b16 %v5355, %v5353
        %v5458 = vpack.c.b16 %v5356, %v5354
        %v5459 = vpack.c.b16 %v5359, %v5357
        %v5460 = vpack.c.b16 %v5360, %v5358
        %v5461 = vpack.c.b16 %v5363, %v5361
        %v5462 = vpack.c.b16 %v5364, %v5362
        %v5463 = vpack.c.b16 %v5367, %v5365
        %v5464 = vpack.c.b16 %v5368, %v5366
        %v5465 = vpack.c.b16 %v5371, %v5369
        %v5466 = vpack.c.b16 %v5372, %v5370
        %v5467 = vpack.c.b16 %v5375, %v5373
        %v5468 = vpack.c.b16 %v5376, %v5374
        %v5469 = vpack.c.b16 %v5379, %v5377
        %v5470 = vpack.c.b16 %v5380, %v5378
        %v5471 = vpack.c.b16 %v5383, %v5381
        %v5472 = vpack.c.b16 %v5384, %v5382
        %v5473 = vpack.c.b16 %v5387, %v5385
        %v5474 = vpack.c.b16 %v5388, %v5386
        %v5475 = vpack.c.b16 %v5391, %v5389
        %v5476 = vpack.c.b16 %v5392, %v5390
        %v5477 = vpack.c.b16 %v5395, %v5393
        %v5478 = vpack.c.b16 %v5396, %v5394
        %v5479 = vpack.c.b16 %v5399, %v5397
        %v5480 = vpack.c.b16 %v5400, %v5398
        %v5481 = vpack.c.b16 %v5403, %v5401
        %v5482 = vpack.c.b16 %v5404, %v5402
        %v5483 = vpack.c.b16 %v5407, %v5405
        %v5484 = vpack.c.b16 %v5408, %v5406
        %v5485 = vpack.c.b16 %v5411, %v5409
        %v5486 = vpack.c.b16 %v5412, %v5410
        %v5487 = vpack.c.b16 %v5415, %v5413
        %v5488 = vpack.c.b16 %v5416, %v5414
        %v5489 = vpack.c.b16 %v5419, %v5417
        %v5490 = vpack.c.b16 %v5420, %v5418
        %v5491 = vpack.c.b16 %v5423, %v5421
        %v5492 = vpack.c.b16 %v5424, %v5422
        %v5493 = vpack.c.b16 %v5427, %v5425
        %v5494 = vpack.c.b16 %v5428, %v5426
        %v5495 = vpack.c.b16 %v5431, %v5429
        %v5496 = vpack.c.b16 %v5432, %v5430
        %5561 = vmatpush.bf16.msra.mxu0 %v5447
        %5562 = vmatpush.bf16.msra.mxu0 %v5445
        %5563 = vmatpush.bf16.msra.mxu0 %v5443
        %5564 = vmatpush.bf16.msra.mxu0 %v5441
        %5565 = vmatpush.bf16.msra.mxu0 %v5439
        %5566 = vmatpush.bf16.msra.mxu0 %v5437
        %5567 = vmatpush.bf16.msra.mxu0 %v5435
        %5568 = vmatpush.bf16.msra.mxu0 %v5433
        %5569 = vmatmul.bf16.gmra.mxu0 %v5143
        %v5570 = vpop.f32.mrf.mxu0
        %v5571 = vadd.f32 0.0, %v5570
        %v5572 = vpop.f32.mrf.mxu0
        %v5573 = vadd.f32 0.0, %v5572
        %5574 = vmatmul.bf16.gmra.mxu0 %v5154
        %v5575 = vpop.f32.mrf.mxu0
        %v5576 = vadd.f32 0.0, %v5575
        %v5577 = vpop.f32.mrf.mxu0
        %v5578 = vadd.f32 0.0, %v5577
        %5579 = vmatmul.bf16.gmra.mxu0 %v5162
        %v5580 = vpop.f32.mrf.mxu0
        %v5581 = vadd.f32 0.0, %v5580
        %v5582 = vpop.f32.mrf.mxu0
        %v5583 = vadd.f32 0.0, %v5582
        %5584 = vmatmul.bf16.gmra.mxu0 %v5170
        %v5585 = vpop.f32.mrf.mxu0
        %v5586 = vadd.f32 0.0, %v5585
        %v5587 = vpop.f32.mrf.mxu0
        %v5588 = vadd.f32 0.0, %v5587
        %5589 = vmatmul.bf16.gmra.mxu0 %v5178
        %v5590 = vpop.f32.mrf.mxu0
        %v5591 = vadd.f32 0.0, %v5590
        %v5592 = vpop.f32.mrf.mxu0
        %v5593 = vadd.f32 0.0, %v5592
        %5594 = vmatmul.bf16.gmra.mxu0 %v5186
        %v5595 = vpop.f32.mrf.mxu0
        %v5596 = vadd.f32 0.0, %v5595
        %v5597 = vpop.f32.mrf.mxu0
        %v5598 = vadd.f32 0.0, %v5597
        %5599 = vmatmul.bf16.gmra.mxu0 %v5194
        %v5600 = vpop.f32.mrf.mxu0
        %v5601 = vadd.f32 0.0, %v5600
        %v5602 = vpop.f32.mrf.mxu0
        %v5603 = vadd.f32 0.0, %v5602
        %5604 = vmatmul.bf16.gmra.mxu0 %v5202
        %v5605 = vpop.f32.mrf.mxu0
        %v5606 = vadd.f32 0.0, %v5605
        %v5607 = vpop.f32.mrf.mxu0
        %v5608 = vadd.f32 0.0, %v5607
        %5609 = vdwg.mxu0
        %5610 = vmatpush.bf16.msra.mxu0 %v5463
        %5611 = vmatpush.bf16.msra.mxu0 %v5461
        %5612 = vmatpush.bf16.msra.mxu0 %v5459
        %5613 = vmatpush.bf16.msra.mxu0 %v5457
        %5614 = vmatpush.bf16.msra.mxu0 %v5455
        %5615 = vmatpush.bf16.msra.mxu0 %v5453
        %5616 = vmatpush.bf16.msra.mxu0 %v5451
        %5617 = vmatpush.bf16.msra.mxu0 %v5449
        %5618 = vmatmul.bf16.gmra.mxu0 %v5146
        %v5619 = vpop.f32.mrf.mxu0
        %v5620 = vadd.f32 %v5571, %v5619
        %v5621 = vpop.f32.mrf.mxu0
        %v5622 = vadd.f32 %v5573, %v5621
        %5623 = vmatmul.bf16.gmra.mxu0 %v5156
        %v5624 = vpop.f32.mrf.mxu0
        %v5625 = vadd.f32 %v5576, %v5624
        %v5626 = vpop.f32.mrf.mxu0
        %v5627 = vadd.f32 %v5578, %v5626
        %5628 = vmatmul.bf16.gmra.mxu0 %v5164
        %v5629 = vpop.f32.mrf.mxu0
        %v5630 = vadd.f32 %v5581, %v5629
        %v5631 = vpop.f32.mrf.mxu0
        %v5632 = vadd.f32 %v5583, %v5631
        %5633 = vmatmul.bf16.gmra.mxu0 %v5172
        %v5634 = vpop.f32.mrf.mxu0
        %v5635 = vadd.f32 %v5586, %v5634
        %v5636 = vpop.f32.mrf.mxu0
        %v5637 = vadd.f32 %v5588, %v5636
        %5638 = vmatmul.bf16.gmra.mxu0 %v5180
        %v5639 = vpop.f32.mrf.mxu0
        %v5640 = vadd.f32 %v5591, %v5639
        %v5641 = vpop.f32.mrf.mxu0
        %v5642 = vadd.f32 %v5593, %v5641
        %5643 = vmatmul.bf16.gmra.mxu0 %v5188
        %v5644 = vpop.f32.mrf.mxu0
        %v5645 = vadd.f32 %v5596, %v5644
        %v5646 = vpop.f32.mrf.mxu0
        %v5647 = vadd.f32 %v5598, %v5646
        %5648 = vmatmul.bf16.gmra.mxu0 %v5196
        %v5649 = vpop.f32.mrf.mxu0
        %v5650 = vadd.f32 %v5601, %v5649
        %v5651 = vpop.f32.mrf.mxu0
        %v5652 = vadd.f32 %v5603, %v5651
        %5653 = vmatmul.bf16.gmra.mxu0 %v5204
        %v5654 = vpop.f32.mrf.mxu0
        %v5655 = vadd.f32 %v5606, %v5654
        %v5656 = vpop.f32.mrf.mxu0
        %v5657 = vadd.f32 %v5608, %v5656
        %5658 = vdwg.mxu0
        %5659 = vmatpush.bf16.msra.mxu0 %v5479
        %5660 = vmatpush.bf16.msra.mxu0 %v5477
        %5661 = vmatpush.bf16.msra.mxu0 %v5475
        %5662 = vmatpush.bf16.msra.mxu0 %v5473
        %5663 = vmatpush.bf16.msra.mxu0 %v5471
        %5664 = vmatpush.bf16.msra.mxu0 %v5469
        %5665 = vmatpush.bf16.msra.mxu0 %v5467
        %5666 = vmatpush.bf16.msra.mxu0 %v5465
        %5667 = vmatmul.bf16.gmra.mxu0 %v5149
        %v5668 = vpop.f32.mrf.mxu0
        %v5669 = vadd.f32 %v5620, %v5668
        %v5670 = vpop.f32.mrf.mxu0
        %v5671 = vadd.f32 %v5622, %v5670
        %5672 = vmatmul.bf16.gmra.mxu0 %v5158
        %v5673 = vpop.f32.mrf.mxu0
        %v5674 = vadd.f32 %v5625, %v5673
        %v5675 = vpop.f32.mrf.mxu0
        %v5676 = vadd.f32 %v5627, %v5675
        %5677 = vmatmul.bf16.gmra.mxu0 %v5166
        %v5678 = vpop.f32.mrf.mxu0
        %v5679 = vadd.f32 %v5630, %v5678
        %v5680 = vpop.f32.mrf.mxu0
        %v5681 = vadd.f32 %v5632, %v5680
        %5682 = vmatmul.bf16.gmra.mxu0 %v5174
        %v5683 = vpop.f32.mrf.mxu0
        %v5684 = vadd.f32 %v5635, %v5683
        %v5685 = vpop.f32.mrf.mxu0
        %v5686 = vadd.f32 %v5637, %v5685
        %5687 = vmatmul.bf16.gmra.mxu0 %v5182
        %v5688 = vpop.f32.mrf.mxu0
        %v5689 = vadd.f32 %v5640, %v5688
        %v5690 = vpop.f32.mrf.mxu0
        %v5691 = vadd.f32 %v5642, %v5690
        %5692 = vmatmul.bf16.gmra.mxu0 %v5190
        %v5693 = vpop.f32.mrf.mxu0
        %v5694 = vadd.f32 %v5645, %v5693
        %v5695 = vpop.f32.mrf.mxu0
        %v5696 = vadd.f32 %v5647, %v5695
        %5697 = vmatmul.bf16.gmra.mxu0 %v5198
        %v5698 = vpop.f32.mrf.mxu0
        %v5699 = vadd.f32 %v5650, %v5698
        %v5700 = vpop.f32.mrf.mxu0
        %v5701 = vadd.f32 %v5652, %v5700
        %5702 = vmatmul.bf16.gmra.mxu0 %v5206
        %v5703 = vpop.f32.mrf.mxu0
        %v5704 = vadd.f32 %v5655, %v5703
        %v5705 = vpop.f32.mrf.mxu0
        %v5706 = vadd.f32 %v5657, %v5705
        %5707 = vdwg.mxu0
        %5708 = vmatpush.bf16.msra.mxu0 %v5495
        %5709 = vmatpush.bf16.msra.mxu0 %v5493
        %5710 = vmatpush.bf16.msra.mxu0 %v5491
        %5711 = vmatpush.bf16.msra.mxu0 %v5489
        %5712 = vmatpush.bf16.msra.mxu0 %v5487
        %5713 = vmatpush.bf16.msra.mxu0 %v5485
        %5714 = vmatpush.bf16.msra.mxu0 %v5483
        %5715 = vmatpush.bf16.msra.mxu0 %v5481
        %5716 = vmatmul.bf16.gmra.mxu0 %v5152
        %v5717 = vpop.f32.mrf.mxu0
        %v5718 = vadd.f32 %v5669, %v5717
        %v5719 = vpop.f32.mrf.mxu0
        %v5720 = vadd.f32 %v5671, %v5719
        %5721 = vmatmul.bf16.gmra.mxu0 %v5160
        %v5722 = vpop.f32.mrf.mxu0
        %v5723 = vadd.f32 %v5674, %v5722
        %v5724 = vpop.f32.mrf.mxu0
        %v5725 = vadd.f32 %v5676, %v5724
        %5726 = vmatmul.bf16.gmra.mxu0 %v5168
        %v5727 = vpop.f32.mrf.mxu0
        %v5728 = vadd.f32 %v5679, %v5727
        %v5729 = vpop.f32.mrf.mxu0
        %v5730 = vadd.f32 %v5681, %v5729
        %5731 = vmatmul.bf16.gmra.mxu0 %v5176
        %v5732 = vpop.f32.mrf.mxu0
        %v5733 = vadd.f32 %v5684, %v5732
        %v5734 = vpop.f32.mrf.mxu0
        %v5735 = vadd.f32 %v5686, %v5734
        %5736 = vmatmul.bf16.gmra.mxu0 %v5184
        %v5737 = vpop.f32.mrf.mxu0
        %v5738 = vadd.f32 %v5689, %v5737
        %v5739 = vpop.f32.mrf.mxu0
        %v5740 = vadd.f32 %v5691, %v5739
        %5741 = vmatmul.bf16.gmra.mxu0 %v5192
        %v5742 = vpop.f32.mrf.mxu0
        %v5743 = vadd.f32 %v5694, %v5742
        %v5744 = vpop.f32.mrf.mxu0
        %v5745 = vadd.f32 %v5696, %v5744
        %5746 = vmatmul.bf16.gmra.mxu0 %v5200
        %v5747 = vpop.f32.mrf.mxu0
        %v5748 = vadd.f32 %v5699, %v5747
        %v5749 = vpop.f32.mrf.mxu0
        %v5750 = vadd.f32 %v5701, %v5749
        %5751 = vmatmul.bf16.gmra.mxu0 %v5208
        %v5752 = vpop.f32.mrf.mxu0
        %v5753 = vadd.f32 %v5704, %v5752
        %v5754 = vpop.f32.mrf.mxu0
        %v5755 = vadd.f32 %v5706, %v5754
        %5756 = vdwg.mxu0
        %5757 = vmatpush.bf16.msra.mxu0 %v5448
        %5758 = vmatpush.bf16.msra.mxu0 %v5446
        %5759 = vmatpush.bf16.msra.mxu0 %v5444
        %5760 = vmatpush.bf16.msra.mxu0 %v5442
        %5761 = vmatpush.bf16.msra.mxu0 %v5440
        %5762 = vmatpush.bf16.msra.mxu0 %v5438
        %5763 = vmatpush.bf16.msra.mxu0 %v5436
        %5764 = vmatpush.bf16.msra.mxu0 %v5434
        %5765 = vmatmul.bf16.gmra.mxu0 %v5143
        %v5766 = vpop.f32.mrf.mxu0
        %v5767 = vadd.f32 0.0, %v5766
        %v5768 = vpop.f32.mrf.mxu0
        %v5769 = vadd.f32 0.0, %v5768
        %5770 = vmatmul.bf16.gmra.mxu0 %v5154
        %v5771 = vpop.f32.mrf.mxu0
        %v5772 = vadd.f32 0.0, %v5771
        %v5773 = vpop.f32.mrf.mxu0
        %v5774 = vadd.f32 0.0, %v5773
        %5775 = vmatmul.bf16.gmra.mxu0 %v5162
        %v5776 = vpop.f32.mrf.mxu0
        %v5777 = vadd.f32 0.0, %v5776
        %v5778 = vpop.f32.mrf.mxu0
        %v5779 = vadd.f32 0.0, %v5778
        %5780 = vmatmul.bf16.gmra.mxu0 %v5170
        %v5781 = vpop.f32.mrf.mxu0
        %v5782 = vadd.f32 0.0, %v5781
        %v5783 = vpop.f32.mrf.mxu0
        %v5784 = vadd.f32 0.0, %v5783
        %5785 = vmatmul.bf16.gmra.mxu0 %v5178
        %v5786 = vpop.f32.mrf.mxu0
        %v5787 = vadd.f32 0.0, %v5786
        %v5788 = vpop.f32.mrf.mxu0
        %v5789 = vadd.f32 0.0, %v5788
        %5790 = vmatmul.bf16.gmra.mxu0 %v5186
        %v5791 = vpop.f32.mrf.mxu0
        %v5792 = vadd.f32 0.0, %v5791
        %v5793 = vpop.f32.mrf.mxu0
        %v5794 = vadd.f32 0.0, %v5793
        %5795 = vmatmul.bf16.gmra.mxu0 %v5194
        %v5796 = vpop.f32.mrf.mxu0
        %v5797 = vadd.f32 0.0, %v5796
        %v5798 = vpop.f32.mrf.mxu0
        %v5799 = vadd.f32 0.0, %v5798
        %5800 = vmatmul.bf16.gmra.mxu0 %v5202
        %v5801 = vpop.f32.mrf.mxu0
        %v5802 = vadd.f32 0.0, %v5801
        %v5803 = vpop.f32.mrf.mxu0
        %v5804 = vadd.f32 0.0, %v5803
        %5805 = vdwg.mxu0
        %5806 = vmatpush.bf16.msra.mxu0 %v5464
        %5807 = vmatpush.bf16.msra.mxu0 %v5462
        %5808 = vmatpush.bf16.msra.mxu0 %v5460
        %5809 = vmatpush.bf16.msra.mxu0 %v5458
        %5810 = vmatpush.bf16.msra.mxu0 %v5456
        %5811 = vmatpush.bf16.msra.mxu0 %v5454
        %5812 = vmatpush.bf16.msra.mxu0 %v5452
        %5813 = vmatpush.bf16.msra.mxu0 %v5450
        %5814 = vmatmul.bf16.gmra.mxu0 %v5146
        %v5815 = vpop.f32.mrf.mxu0
        %v5816 = vadd.f32 %v5767, %v5815
        %v5817 = vpop.f32.mrf.mxu0
        %v5818 = vadd.f32 %v5769, %v5817
        %5819 = vmatmul.bf16.gmra.mxu0 %v5156
        %v5820 = vpop.f32.mrf.mxu0
        %v5821 = vadd.f32 %v5772, %v5820
        %v5822 = vpop.f32.mrf.mxu0
        %v5823 = vadd.f32 %v5774, %v5822
        %5824 = vmatmul.bf16.gmra.mxu0 %v5164
        %v5825 = vpop.f32.mrf.mxu0
        %v5826 = vadd.f32 %v5777, %v5825
        %v5827 = vpop.f32.mrf.mxu0
        %v5828 = vadd.f32 %v5779, %v5827
        %5829 = vmatmul.bf16.gmra.mxu0 %v5172
        %v5830 = vpop.f32.mrf.mxu0
        %v5831 = vadd.f32 %v5782, %v5830
        %v5832 = vpop.f32.mrf.mxu0
        %v5833 = vadd.f32 %v5784, %v5832
        %5834 = vmatmul.bf16.gmra.mxu0 %v5180
        %v5835 = vpop.f32.mrf.mxu0
        %v5836 = vadd.f32 %v5787, %v5835
        %v5837 = vpop.f32.mrf.mxu0
        %v5838 = vadd.f32 %v5789, %v5837
        %5839 = vmatmul.bf16.gmra.mxu0 %v5188
        %v5840 = vpop.f32.mrf.mxu0
        %v5841 = vadd.f32 %v5792, %v5840
        %v5842 = vpop.f32.mrf.mxu0
        %v5843 = vadd.f32 %v5794, %v5842
        %5844 = vmatmul.bf16.gmra.mxu0 %v5196
        %v5845 = vpop.f32.mrf.mxu0
        %v5846 = vadd.f32 %v5797, %v5845
        %v5847 = vpop.f32.mrf.mxu0
        %v5848 = vadd.f32 %v5799, %v5847
        %5849 = vmatmul.bf16.gmra.mxu0 %v5204
        %v5850 = vpop.f32.mrf.mxu0
        %v5851 = vadd.f32 %v5802, %v5850
        %v5852 = vpop.f32.mrf.mxu0
        %v5853 = vadd.f32 %v5804, %v5852
        %5854 = vdwg.mxu0
        %5855 = vmatpush.bf16.msra.mxu0 %v5480
        %5856 = vmatpush.bf16.msra.mxu0 %v5478
        %5857 = vmatpush.bf16.msra.mxu0 %v5476
        %5858 = vmatpush.bf16.msra.mxu0 %v5474
        %5859 = vmatpush.bf16.msra.mxu0 %v5472
        %5860 = vmatpush.bf16.msra.mxu0 %v5470
        %5861 = vmatpush.bf16.msra.mxu0 %v5468
        %5862 = vmatpush.bf16.msra.mxu0 %v5466
        %5863 = vmatmul.bf16.gmra.mxu0 %v5149
        %v5864 = vpop.f32.mrf.mxu0
        %v5865 = vadd.f32 %v5816, %v5864
        %v5866 = vpop.f32.mrf.mxu0
        %v5867 = vadd.f32 %v5818, %v5866
        %5868 = vmatmul.bf16.gmra.mxu0 %v5158
        %v5869 = vpop.f32.mrf.mxu0
        %v5870 = vadd.f32 %v5821, %v5869
        %v5871 = vpop.f32.mrf.mxu0
        %v5872 = vadd.f32 %v5823, %v5871
        %5873 = vmatmul.bf16.gmra.mxu0 %v5166
        %v5874 = vpop.f32.mrf.mxu0
        %v5875 = vadd.f32 %v5826, %v5874
        %v5876 = vpop.f32.mrf.mxu0
        %v5877 = vadd.f32 %v5828, %v5876
        %5878 = vmatmul.bf16.gmra.mxu0 %v5174
        %v5879 = vpop.f32.mrf.mxu0
        %v5880 = vadd.f32 %v5831, %v5879
        %v5881 = vpop.f32.mrf.mxu0
        %v5882 = vadd.f32 %v5833, %v5881
        %5883 = vmatmul.bf16.gmra.mxu0 %v5182
        %v5884 = vpop.f32.mrf.mxu0
        %v5885 = vadd.f32 %v5836, %v5884
        %v5886 = vpop.f32.mrf.mxu0
        %v5887 = vadd.f32 %v5838, %v5886
        %5888 = vmatmul.bf16.gmra.mxu0 %v5190
        %v5889 = vpop.f32.mrf.mxu0
        %v5890 = vadd.f32 %v5841, %v5889
        %v5891 = vpop.f32.mrf.mxu0
        %v5892 = vadd.f32 %v5843, %v5891
        %5893 = vmatmul.bf16.gmra.mxu0 %v5198
        %v5894 = vpop.f32.mrf.mxu0
        %v5895 = vadd.f32 %v5846, %v5894
        %v5896 = vpop.f32.mrf.mxu0
        %v5897 = vadd.f32 %v5848, %v5896
        %5898 = vmatmul.bf16.gmra.mxu0 %v5206
        %v5899 = vpop.f32.mrf.mxu0
        %v5900 = vadd.f32 %v5851, %v5899
        %v5901 = vpop.f32.mrf.mxu0
        %v5902 = vadd.f32 %v5853, %v5901
        %5903 = vdwg.mxu0
        %5904 = vmatpush.bf16.msra.mxu0 %v5496
        %5905 = vmatpush.bf16.msra.mxu0 %v5494
        %5906 = vmatpush.bf16.msra.mxu0 %v5492
        %5907 = vmatpush.bf16.msra.mxu0 %v5490
        %5908 = vmatpush.bf16.msra.mxu0 %v5488
        %5909 = vmatpush.bf16.msra.mxu0 %v5486
        %5910 = vmatpush.bf16.msra.mxu0 %v5484
        %5911 = vmatpush.bf16.msra.mxu0 %v5482
        %5912 = vmatmul.bf16.gmra.mxu0 %v5152
        %v5913 = vpop.f32.mrf.mxu0
        %v5914 = vadd.f32 %v5865, %v5913
        %v5915 = vpop.f32.mrf.mxu0
        %v5916 = vadd.f32 %v5867, %v5915
        %5917 = vmatmul.bf16.gmra.mxu0 %v5160
        %v5918 = vpop.f32.mrf.mxu0
        %v5919 = vadd.f32 %v5870, %v5918
        %v5920 = vpop.f32.mrf.mxu0
        %v5921 = vadd.f32 %v5872, %v5920
        %5922 = vmatmul.bf16.gmra.mxu0 %v5168
        %v5923 = vpop.f32.mrf.mxu0
        %v5924 = vadd.f32 %v5875, %v5923
        %v5925 = vpop.f32.mrf.mxu0
        %v5926 = vadd.f32 %v5877, %v5925
        %5927 = vmatmul.bf16.gmra.mxu0 %v5176
        %v5928 = vpop.f32.mrf.mxu0
        %v5929 = vadd.f32 %v5880, %v5928
        %v5930 = vpop.f32.mrf.mxu0
        %v5931 = vadd.f32 %v5882, %v5930
        %5932 = vmatmul.bf16.gmra.mxu0 %v5184
        %v5933 = vpop.f32.mrf.mxu0
        %v5934 = vadd.f32 %v5885, %v5933
        %v5935 = vpop.f32.mrf.mxu0
        %v5936 = vadd.f32 %v5887, %v5935
        %5937 = vmatmul.bf16.gmra.mxu0 %v5192
        %v5938 = vpop.f32.mrf.mxu0
        %v5939 = vadd.f32 %v5890, %v5938
        %v5940 = vpop.f32.mrf.mxu0
        %v5941 = vadd.f32 %v5892, %v5940
        %5942 = vmatmul.bf16.gmra.mxu0 %v5200
        %v5943 = vpop.f32.mrf.mxu0
        %v5944 = vadd.f32 %v5895, %v5943
        %v5945 = vpop.f32.mrf.mxu0
        %v5946 = vadd.f32 %v5897, %v5945
        %5947 = vmatmul.bf16.gmra.mxu0 %v5208
        %v5948 = vpop.f32.mrf.mxu0
        %v5949 = vadd.f32 %v5900, %v5948
        %v5950 = vpop.f32.mrf.mxu0
        %v5951 = vadd.f32 %v5902, %v5950
        %5952 = vdwg.mxu0
        %v5953 = vadd.f32 %v5072, %v5718
        %v5954 = vadd.f32 %v5073, %v5914
        %v5955 = vadd.f32 %v5074, %v5720
        %v5956 = vadd.f32 %v5075, %v5916
        %v5957 = vadd.f32 %v5076, %v5723
        %v5958 = vadd.f32 %v5077, %v5919
        %v5959 = vadd.f32 %v5078, %v5725
        %v5960 = vadd.f32 %v5079, %v5921
        %v5961 = vadd.f32 %v5080, %v5728
        %v5962 = vadd.f32 %v5081, %v5924
        %v5963 = vadd.f32 %v5082, %v5730
        %v5964 = vadd.f32 %v5083, %v5926
        %v5965 = vadd.f32 %v5084, %v5733
        %v5966 = vadd.f32 %v5085, %v5929
        %v5967 = vadd.f32 %v5086, %v5735
        %v5968 = vadd.f32 %v5087, %v5931
        %v5969 = vadd.f32 %v5088, %v5738
        %v5970 = vadd.f32 %v5089, %v5934
        %v5971 = vadd.f32 %v5090, %v5740
        %v5972 = vadd.f32 %v5091, %v5936
        %v5973 = vadd.f32 %v5092, %v5743
        %v5974 = vadd.f32 %v5093, %v5939
        %v5975 = vadd.f32 %v5094, %v5745
        %v5976 = vadd.f32 %v5095, %v5941
        %v5977 = vadd.f32 %v5096, %v5748
        %v5978 = vadd.f32 %v5097, %v5944
        %v5979 = vadd.f32 %v5098, %v5750
        %v5980 = vadd.f32 %v5099, %v5946
        %v5981 = vadd.f32 %v5100, %v5753
        %v5982 = vadd.f32 %v5101, %v5949
        %v5983 = vadd.f32 %v5102, %v5755
        %v5984 = vadd.f32 %v5103, %v5951
        %5985 = vst [vmem:[#allocation2] sm:$0xff] %v5953
        %5986 = vst [vmem:[#allocation2 + $0x8] sm:$0xff] %v5954
        %5987 = vst [vmem:[#allocation2 + $0x10] sm:$0xff] %v5955
        %5988 = vst [vmem:[#allocation2 + $0x18] sm:$0xff] %v5956
        %5989 = vst [vmem:[#allocation2 + $0x20] sm:$0xff] %v5957
        %5990 = vst [vmem:[#allocation2 + $0x28] sm:$0xff] %v5958
        %5991 = vst [vmem:[#allocation2 + $0x30] sm:$0xff] %v5959
        %5992 = vst [vmem:[#allocation2 + $0x38] sm:$0xff] %v5960
        %5993 = vst [vmem:[#allocation2 + $0x40] sm:$0xff] %v5961
        %5994 = vst [vmem:[#allocation2 + $0x48] sm:$0xff] %v5962
        %5995 = vst [vmem:[#allocation2 + $0x50] sm:$0xff] %v5963
        %5996 = vst [vmem:[#allocation2 + $0x58] sm:$0xff] %v5964
        %5997 = vst [vmem:[#allocation2 + $0x60] sm:$0xff] %v5965
        %5998 = vst [vmem:[#allocation2 + $0x68] sm:$0xff] %v5966
        %5999 = vst [vmem:[#allocation2 + $0x70] sm:$0xff] %v5967
        %6000 = vst [vmem:[#allocation2 + $0x78] sm:$0xff] %v5968
        %6001 = vst [vmem:[#allocation2 + $0x80] sm:$0xff] %v5969
        %6002 = vst [vmem:[#allocation2 + $0x88] sm:$0xff] %v5970
        %6003 = vst [vmem:[#allocation2 + $0x90] sm:$0xff] %v5971
        %6004 = vst [vmem:[#allocation2 + $0x98] sm:$0xff] %v5972
        %6005 = vst [vmem:[#allocation2 + $0xa0] sm:$0xff] %v5973
        %6006 = vst [vmem:[#allocation2 + $0xa8] sm:$0xff] %v5974
        %6007 = vst [vmem:[#allocation2 + $0xb0] sm:$0xff] %v5975
        %6008 = vst [vmem:[#allocation2 + $0xb8] sm:$0xff] %v5976
        %6009 = vst [vmem:[#allocation2 + $0xc0] sm:$0xff] %v5977
        %6010 = vst [vmem:[#allocation2 + $0xc8] sm:$0xff] %v5978
        %6011 = vst [vmem:[#allocation2 + $0xd0] sm:$0xff] %v5979
        %6012 = vst [vmem:[#allocation2 + $0xd8] sm:$0xff] %v5980
        %6013 = vst [vmem:[#allocation2 + $0xe0] sm:$0xff] %v5981
        %6014 = vst [vmem:[#allocation2 + $0xe8] sm:$0xff] %v5982
        %6015 = vst [vmem:[#allocation2 + $0xf0] sm:$0xff] %v5983
        %6016 = vst [vmem:[#allocation2 + $0xf8] sm:$0xff] %v5984
        %v6017 = vld [vmem:[%s154] sm:$0xe0]
        %v6018 = vld [vmem:[%s154 + $0x8] sm:$0xe0]
        %v6019 = vld [vmem:[%s154 + $0x10] sm:$0xe0]
        %v6020 = vld [vmem:[%s154 + $0x18] sm:$0xe0]
        %v6021 = vld [vmem:[%s154 + $0x20] sm:$0xff]
        %v6022 = vld [vmem:[%s154 + $0x28] sm:$0xff]
        %v6023 = vld [vmem:[%s154 + $0x30] sm:$0xff]
        %v6024 = vld [vmem:[%s154 + $0x38] sm:$0xff]
        %v6025 = vld [vmem:[%s154 + $0x40] sm:$0xff]
        %v6026 = vld [vmem:[%s154 + $0x48] sm:$0xff]
        %v6027 = vld [vmem:[%s154 + $0x50] sm:$0xff]
        %v6028 = vld [vmem:[%s154 + $0x58] sm:$0xff]
        %v6029 = vld [vmem:[%s154 + $0x60] sm:$0xff]
        %v6030 = vld [vmem:[%s154 + $0x68] sm:$0xff]
        %v6031 = vld [vmem:[%s154 + $0x70] sm:$0xff]
        %v6032 = vld [vmem:[%s154 + $0x78] sm:$0xff]
        %v6033 = vld [vmem:[%s154 + $0x80] sm:$0xff]
        %v6034 = vld [vmem:[%s154 + $0x88] sm:$0xff]
        %v6035 = vld [vmem:[%s154 + $0x90] sm:$0xff]
        %v6036 = vld [vmem:[%s154 + $0x98] sm:$0xff]
        %v6037 = vld [vmem:[%s154 + $0xa0] sm:$0xff]
        %v6038 = vld [vmem:[%s154 + $0xa8] sm:$0xff]
        %v6039 = vld [vmem:[%s154 + $0xb0] sm:$0xff]
        %v6040 = vld [vmem:[%s154 + $0xb8] sm:$0xff]
        %v6041 = vld [vmem:[%s154 + $0xc0] sm:$0xff]
        %v6042 = vld [vmem:[%s154 + $0xc8] sm:$0xff]
        %v6043 = vld [vmem:[%s154 + $0xd0] sm:$0xff]
        %v6044 = vld [vmem:[%s154 + $0xd8] sm:$0xff]
        %v6045 = vld [vmem:[%s154 + $0xe0] sm:$0xff]
        %v6046 = vld [vmem:[%s154 + $0xe8] sm:$0xff]
        %v6047 = vld [vmem:[%s154 + $0xf0] sm:$0xff]
        %v6048 = vld [vmem:[%s154 + $0xf8] sm:$0xff]
        %v6049 = vld [vmem:[%s154 + $0x100] sm:$0xff]
        %v6050 = vld [vmem:[%s154 + $0x108] sm:$0xff]
        %v6051 = vld [vmem:[%s154 + $0x110] sm:$0xff]
        %v6052 = vld [vmem:[%s154 + $0x118] sm:$0xff]
        %v6053 = vld [vmem:[%s154 + $0x120] sm:$0xff]
        %v6054 = vld [vmem:[%s154 + $0x128] sm:$0xff]
        %v6055 = vld [vmem:[%s154 + $0x130] sm:$0xff]
        %v6056 = vld [vmem:[%s154 + $0x138] sm:$0xff]
        %v6057 = vld [vmem:[%s154 + $0x140] sm:$0xff]
        %v6058 = vld [vmem:[%s154 + $0x148] sm:$0xff]
        %v6059 = vld [vmem:[%s154 + $0x150] sm:$0xff]
        %v6060 = vld [vmem:[%s154 + $0x158] sm:$0xff]
        %v6061 = vld [vmem:[%s154 + $0x160] sm:$0xff]
        %v6062 = vld [vmem:[%s154 + $0x168] sm:$0xff]
        %v6063 = vld [vmem:[%s154 + $0x170] sm:$0xff]
        %v6064 = vld [vmem:[%s154 + $0x178] sm:$0xff]
        %v6065 = vld [vmem:[%s154 + $0x180] sm:$0xff]
        %v6066 = vld [vmem:[%s154 + $0x188] sm:$0xff]
        %v6067 = vld [vmem:[%s154 + $0x190] sm:$0xff]
        %v6068 = vld [vmem:[%s154 + $0x198] sm:$0xff]
        %v6069 = vld [vmem:[%s154 + $0x1a0] sm:$0xff]
        %v6070 = vld [vmem:[%s154 + $0x1a8] sm:$0xff]
        %v6071 = vld [vmem:[%s154 + $0x1b0] sm:$0xff]
        %v6072 = vld [vmem:[%s154 + $0x1b8] sm:$0xff]
        %v6073 = vld [vmem:[%s154 + $0x1c0] sm:$0xff]
        %v6074 = vld [vmem:[%s154 + $0x1c8] sm:$0xff]
        %v6075 = vld [vmem:[%s154 + $0x1d0] sm:$0xff]
        %v6076 = vld [vmem:[%s154 + $0x1d8] sm:$0xff]
        %v6077 = vld [vmem:[%s154 + $0x1e0] sm:$0xff]
        %v6078 = vld [vmem:[%s154 + $0x1e8] sm:$0xff]
        %v6079 = vld [vmem:[%s154 + $0x1f0] sm:$0xff]
        %v6080 = vld [vmem:[%s154 + $0x1f8] sm:$0xff]
        %v6081 = vld [vmem:[%s154 + $0x200] sm:$0x1f]
        %v6082 = vld [vmem:[%s154 + $0x208] sm:$0x1f]
        %v6083 = vld [vmem:[%s154 + $0x210] sm:$0x1f]
        %v6084 = vld [vmem:[%s154 + $0x218] sm:$0x1f]
        %v6085 = vpack.c.bf16 %v6021, %v6017
        %v6086 = vpack.c.bf16 %v6022, %v6018
        %v6087 = vpack.c.bf16 %v6023, %v6019
        %v6088 = vpack.c.bf16 %v6024, %v6020
        %v6089 = vpack.c.bf16 %v6029, %v6025
        %v6090 = vpack.c.bf16 %v6030, %v6026
        %v6091 = vpack.c.bf16 %v6031, %v6027
        %v6092 = vpack.c.bf16 %v6032, %v6028
        %v6093 = vpack.c.bf16 %v6037, %v6033
        %v6094 = vpack.c.bf16 %v6038, %v6034
        %v6095 = vpack.c.bf16 %v6039, %v6035
        %v6096 = vpack.c.bf16 %v6040, %v6036
        %v6097 = vpack.c.bf16 %v6045, %v6041
        %v6098 = vpack.c.bf16 %v6046, %v6042
        %v6099 = vpack.c.bf16 %v6047, %v6043
        %v6100 = vpack.c.bf16 %v6048, %v6044
        %v6101 = vpack.c.bf16 %v6053, %v6049
        %v6102 = vpack.c.bf16 %v6054, %v6050
        %v6103 = vpack.c.bf16 %v6055, %v6051
        %v6104 = vpack.c.bf16 %v6056, %v6052
        %v6105 = vpack.c.bf16 %v6061, %v6057
        %v6106 = vpack.c.bf16 %v6062, %v6058
        %v6107 = vpack.c.bf16 %v6063, %v6059
        %v6108 = vpack.c.bf16 %v6064, %v6060
        %v6109 = vpack.c.bf16 %v6069, %v6065
        %v6110 = vpack.c.bf16 %v6070, %v6066
        %v6111 = vpack.c.bf16 %v6071, %v6067
        %v6112 = vpack.c.bf16 %v6072, %v6068
        %v6113 = vpack.c.bf16 %v6077, %v6073
        %v6114 = vpack.c.bf16 %v6078, %v6074
        %v6115 = vpack.c.bf16 %v6079, %v6075
        %v6116 = vpack.c.bf16 %v6080, %v6076
        %v6117 = vpack.c.bf16 %v6081, %v6081
        %v6118 = vpack.c.bf16 %v6082, %v6082
        %v6119 = vpack.c.bf16 %v6083, %v6083
        %v6120 = vpack.c.bf16 %v6084, %v6084
        %v6121 = vld [vmem:[#allocation6 + $0xa00] sm:$0xff]
        %v6122 = vld [vmem:[#allocation6 + $0xa08] sm:$0xff]
        %v6123 = vld [vmem:[#allocation6 + $0xa10] sm:$0xff]
        %v6124 = vld [vmem:[#allocation6 + $0xa18] sm:$0xff]
        %v6125 = vld [vmem:[#allocation6 + $0xa20] sm:$0xff]
        %v6126 = vld [vmem:[#allocation6 + $0xa28] sm:$0xff]
        %v6127 = vld [vmem:[#allocation6 + $0xa30] sm:$0xff]
        %v6128 = vld [vmem:[#allocation6 + $0xa38] sm:$0xff]
        %v6129 = vld [vmem:[#allocation6 + $0xa40] sm:$0xff]
        %v6130 = vld [vmem:[#allocation6 + $0xa48] sm:$0xff]
        %v6131 = vld [vmem:[#allocation6 + $0xa50] sm:$0xff]
        %v6132 = vld [vmem:[#allocation6 + $0xa58] sm:$0xff]
        %v6133 = vld [vmem:[#allocation6 + $0xa60] sm:$0xff]
        %v6134 = vld [vmem:[#allocation6 + $0xa68] sm:$0xff]
        %v6135 = vld [vmem:[#allocation6 + $0xa70] sm:$0xff]
        %v6136 = vld [vmem:[#allocation6 + $0xa78] sm:$0xff]
        %v6137 = vld [vmem:[#allocation6 + $0xa80] sm:$0xff]
        %v6138 = vld [vmem:[#allocation6 + $0xa88] sm:$0xff]
        %v6139 = vld [vmem:[#allocation6 + $0xa90] sm:$0xff]
        %v6140 = vld [vmem:[#allocation6 + $0xa98] sm:$0xff]
        %v6141 = vld [vmem:[#allocation6 + $0xaa0] sm:$0xff]
        %v6142 = vld [vmem:[#allocation6 + $0xaa8] sm:$0xff]
        %v6143 = vld [vmem:[#allocation6 + $0xab0] sm:$0xff]
        %v6144 = vld [vmem:[#allocation6 + $0xab8] sm:$0xff]
        %v6145 = vld [vmem:[#allocation6 + $0xac0] sm:$0xff]
        %v6146 = vld [vmem:[#allocation6 + $0xac8] sm:$0xff]
        %v6147 = vld [vmem:[#allocation6 + $0xad0] sm:$0xff]
        %v6148 = vld [vmem:[#allocation6 + $0xad8] sm:$0xff]
        %v6149 = vld [vmem:[#allocation6 + $0xae0] sm:$0xff]
        %v6150 = vld [vmem:[#allocation6 + $0xae8] sm:$0xff]
        %v6151 = vld [vmem:[#allocation6 + $0xaf0] sm:$0xff]
        %v6152 = vld [vmem:[#allocation6 + $0xaf8] sm:$0xff]
        %v6153 = vld [vmem:[#allocation6 + $0xb00] sm:$0xff]
        %v6154 = vld [vmem:[#allocation6 + $0xb08] sm:$0xff]
        %v6155 = vld [vmem:[#allocation6 + $0xb10] sm:$0xff]
        %v6156 = vld [vmem:[#allocation6 + $0xb18] sm:$0xff]
        %v6157 = vld [vmem:[#allocation6 + $0xb20] sm:$0xff]
        %v6158 = vld [vmem:[#allocation6 + $0xb28] sm:$0xff]
        %v6159 = vld [vmem:[#allocation6 + $0xb30] sm:$0xff]
        %v6160 = vld [vmem:[#allocation6 + $0xb38] sm:$0xff]
        %v6161 = vld [vmem:[#allocation6 + $0xb40] sm:$0xff]
        %v6162 = vld [vmem:[#allocation6 + $0xb48] sm:$0xff]
        %v6163 = vld [vmem:[#allocation6 + $0xb50] sm:$0xff]
        %v6164 = vld [vmem:[#allocation6 + $0xb58] sm:$0xff]
        %v6165 = vld [vmem:[#allocation6 + $0xb60] sm:$0xff]
        %v6166 = vld [vmem:[#allocation6 + $0xb68] sm:$0xff]
        %v6167 = vld [vmem:[#allocation6 + $0xb70] sm:$0xff]
        %v6168 = vld [vmem:[#allocation6 + $0xb78] sm:$0xff]
        %v6169 = vld [vmem:[#allocation6 + $0xb80] sm:$0xff]
        %v6170 = vld [vmem:[#allocation6 + $0xb88] sm:$0xff]
        %v6171 = vld [vmem:[#allocation6 + $0xb90] sm:$0xff]
        %v6172 = vld [vmem:[#allocation6 + $0xb98] sm:$0xff]
        %v6173 = vld [vmem:[#allocation6 + $0xba0] sm:$0xff]
        %v6174 = vld [vmem:[#allocation6 + $0xba8] sm:$0xff]
        %v6175 = vld [vmem:[#allocation6 + $0xbb0] sm:$0xff]
        %v6176 = vld [vmem:[#allocation6 + $0xbb8] sm:$0xff]
        %v6177 = vld [vmem:[#allocation6 + $0xbc0] sm:$0xff]
        %v6178 = vld [vmem:[#allocation6 + $0xbc8] sm:$0xff]
        %v6179 = vld [vmem:[#allocation6 + $0xbd0] sm:$0xff]
        %v6180 = vld [vmem:[#allocation6 + $0xbd8] sm:$0xff]
        %v6181 = vld [vmem:[#allocation6 + $0xbe0] sm:$0xff]
        %v6182 = vld [vmem:[#allocation6 + $0xbe8] sm:$0xff]
        %v6183 = vld [vmem:[#allocation6 + $0xbf0] sm:$0xff]
        %v6184 = vld [vmem:[#allocation6 + $0xbf8] sm:$0xff]
        %v6185 = vld [vmem:[#allocation2] sm:$0xff]
        %v6186 = vld [vmem:[#allocation2 + $0x8] sm:$0xff]
        %v6187 = vld [vmem:[#allocation2 + $0x10] sm:$0xff]
        %v6188 = vld [vmem:[#allocation2 + $0x18] sm:$0xff]
        %v6189 = vld [vmem:[#allocation2 + $0x20] sm:$0xff]
        %v6190 = vld [vmem:[#allocation2 + $0x28] sm:$0xff]
        %v6191 = vld [vmem:[#allocation2 + $0x30] sm:$0xff]
        %v6192 = vld [vmem:[#allocation2 + $0x38] sm:$0xff]
        %v6193 = vld [vmem:[#allocation2 + $0x40] sm:$0xff]
        %v6194 = vld [vmem:[#allocation2 + $0x48] sm:$0xff]
        %v6195 = vld [vmem:[#allocation2 + $0x50] sm:$0xff]
        %v6196 = vld [vmem:[#allocation2 + $0x58] sm:$0xff]
        %v6197 = vld [vmem:[#allocation2 + $0x60] sm:$0xff]
        %v6198 = vld [vmem:[#allocation2 + $0x68] sm:$0xff]
        %v6199 = vld [vmem:[#allocation2 + $0x70] sm:$0xff]
        %v6200 = vld [vmem:[#allocation2 + $0x78] sm:$0xff]
        %v6201 = vld [vmem:[#allocation2 + $0x80] sm:$0xff]
        %v6202 = vld [vmem:[#allocation2 + $0x88] sm:$0xff]
        %v6203 = vld [vmem:[#allocation2 + $0x90] sm:$0xff]
        %v6204 = vld [vmem:[#allocation2 + $0x98] sm:$0xff]
        %v6205 = vld [vmem:[#allocation2 + $0xa0] sm:$0xff]
        %v6206 = vld [vmem:[#allocation2 + $0xa8] sm:$0xff]
        %v6207 = vld [vmem:[#allocation2 + $0xb0] sm:$0xff]
        %v6208 = vld [vmem:[#allocation2 + $0xb8] sm:$0xff]
        %v6209 = vld [vmem:[#allocation2 + $0xc0] sm:$0xff]
        %v6210 = vld [vmem:[#allocation2 + $0xc8] sm:$0xff]
        %v6211 = vld [vmem:[#allocation2 + $0xd0] sm:$0xff]
        %v6212 = vld [vmem:[#allocation2 + $0xd8] sm:$0xff]
        %v6213 = vld [vmem:[#allocation2 + $0xe0] sm:$0xff]
        %v6214 = vld [vmem:[#allocation2 + $0xe8] sm:$0xff]
        %v6215 = vld [vmem:[#allocation2 + $0xf0] sm:$0xff]
        %v6216 = vld [vmem:[#allocation2 + $0xf8] sm:$0xff]
        %vm6217 = vsmask.f32 5376
        %v6219 = vshrl.u32 %v6085, 16
        %v6221 = vrot.slane %v6219, 2
        %v6222 = vshll.u32 %v6085, 16
        %v6224 = vrot.slane %v6222, 3
        %v6225 = vor.u32 %v6221, %v6224
        %v6227 = vshrl.u32 %v6089, 16
        %v6229 = vrot.slane %v6227, 2
        %v6230 = vshll.u32 %v6089, 16
        %v6232 = vrot.slane %v6230, 3
        %v6233 = vor.u32 %v6229, %v6232
        %v6234 = vsel %vm6217, %v6225, %v6233
        %v6236 = vshrl.u32 %v6086, 16
        %v6238 = vrot.slane %v6236, 2
        %v6239 = vshll.u32 %v6086, 16
        %v6241 = vrot.slane %v6239, 3
        %v6242 = vor.u32 %v6238, %v6241
        %v6244 = vshrl.u32 %v6090, 16
        %v6246 = vrot.slane %v6244, 2
        %v6247 = vshll.u32 %v6090, 16
        %v6249 = vrot.slane %v6247, 3
        %v6250 = vor.u32 %v6246, %v6249
        %v6251 = vsel %vm6217, %v6242, %v6250
        %v6253 = vshrl.u32 %v6087, 16
        %v6255 = vrot.slane %v6253, 2
        %v6256 = vshll.u32 %v6087, 16
        %v6258 = vrot.slane %v6256, 3
        %v6259 = vor.u32 %v6255, %v6258
        %v6261 = vshrl.u32 %v6091, 16
        %v6263 = vrot.slane %v6261, 2
        %v6264 = vshll.u32 %v6091, 16
        %v6266 = vrot.slane %v6264, 3
        %v6267 = vor.u32 %v6263, %v6266
        %v6268 = vsel %vm6217, %v6259, %v6267
        %v6270 = vshrl.u32 %v6088, 16
        %v6272 = vrot.slane %v6270, 2
        %v6273 = vshll.u32 %v6088, 16
        %v6275 = vrot.slane %v6273, 3
        %v6276 = vor.u32 %v6272, %v6275
        %v6278 = vshrl.u32 %v6092, 16
        %v6280 = vrot.slane %v6278, 2
        %v6281 = vshll.u32 %v6092, 16
        %v6283 = vrot.slane %v6281, 3
        %v6284 = vor.u32 %v6280, %v6283
        %v6285 = vsel %vm6217, %v6276, %v6284
        %v6287 = vshrl.u32 %v6093, 16
        %v6289 = vrot.slane %v6287, 2
        %v6290 = vshll.u32 %v6093, 16
        %v6292 = vrot.slane %v6290, 3
        %v6293 = vor.u32 %v6289, %v6292
        %v6294 = vsel %vm6217, %v6233, %v6293
        %v6296 = vshrl.u32 %v6094, 16
        %v6298 = vrot.slane %v6296, 2
        %v6299 = vshll.u32 %v6094, 16
        %v6301 = vrot.slane %v6299, 3
        %v6302 = vor.u32 %v6298, %v6301
        %v6303 = vsel %vm6217, %v6250, %v6302
        %v6305 = vshrl.u32 %v6095, 16
        %v6307 = vrot.slane %v6305, 2
        %v6308 = vshll.u32 %v6095, 16
        %v6310 = vrot.slane %v6308, 3
        %v6311 = vor.u32 %v6307, %v6310
        %v6312 = vsel %vm6217, %v6267, %v6311
        %v6314 = vshrl.u32 %v6096, 16
        %v6316 = vrot.slane %v6314, 2
        %v6317 = vshll.u32 %v6096, 16
        %v6319 = vrot.slane %v6317, 3
        %v6320 = vor.u32 %v6316, %v6319
        %v6321 = vsel %vm6217, %v6284, %v6320
        %v6323 = vshrl.u32 %v6097, 16
        %v6325 = vrot.slane %v6323, 2
        %v6326 = vshll.u32 %v6097, 16
        %v6328 = vrot.slane %v6326, 3
        %v6329 = vor.u32 %v6325, %v6328
        %v6330 = vsel %vm6217, %v6293, %v6329
        %v6332 = vshrl.u32 %v6098, 16
        %v6334 = vrot.slane %v6332, 2
        %v6335 = vshll.u32 %v6098, 16
        %v6337 = vrot.slane %v6335, 3
        %v6338 = vor.u32 %v6334, %v6337
        %v6339 = vsel %vm6217, %v6302, %v6338
        %v6341 = vshrl.u32 %v6099, 16
        %v6343 = vrot.slane %v6341, 2
        %v6344 = vshll.u32 %v6099, 16
        %v6346 = vrot.slane %v6344, 3
        %v6347 = vor.u32 %v6343, %v6346
        %v6348 = vsel %vm6217, %v6311, %v6347
        %v6350 = vshrl.u32 %v6100, 16
        %v6352 = vrot.slane %v6350, 2
        %v6353 = vshll.u32 %v6100, 16
        %v6355 = vrot.slane %v6353, 3
        %v6356 = vor.u32 %v6352, %v6355
        %v6357 = vsel %vm6217, %v6320, %v6356
        %v6359 = vshrl.u32 %v6101, 16
        %v6361 = vrot.slane %v6359, 2
        %v6362 = vshll.u32 %v6101, 16
        %v6364 = vrot.slane %v6362, 3
        %v6365 = vor.u32 %v6361, %v6364
        %v6366 = vsel %vm6217, %v6329, %v6365
        %v6368 = vshrl.u32 %v6102, 16
        %v6370 = vrot.slane %v6368, 2
        %v6371 = vshll.u32 %v6102, 16
        %v6373 = vrot.slane %v6371, 3
        %v6374 = vor.u32 %v6370, %v6373
        %v6375 = vsel %vm6217, %v6338, %v6374
        %v6377 = vshrl.u32 %v6103, 16
        %v6379 = vrot.slane %v6377, 2
        %v6380 = vshll.u32 %v6103, 16
        %v6382 = vrot.slane %v6380, 3
        %v6383 = vor.u32 %v6379, %v6382
        %v6384 = vsel %vm6217, %v6347, %v6383
        %v6386 = vshrl.u32 %v6104, 16
        %v6388 = vrot.slane %v6386, 2
        %v6389 = vshll.u32 %v6104, 16
        %v6391 = vrot.slane %v6389, 3
        %v6392 = vor.u32 %v6388, %v6391
        %v6393 = vsel %vm6217, %v6356, %v6392
        %v6395 = vshrl.u32 %v6105, 16
        %v6397 = vrot.slane %v6395, 2
        %v6398 = vshll.u32 %v6105, 16
        %v6400 = vrot.slane %v6398, 3
        %v6401 = vor.u32 %v6397, %v6400
        %v6402 = vsel %vm6217, %v6365, %v6401
        %v6404 = vshrl.u32 %v6106, 16
        %v6406 = vrot.slane %v6404, 2
        %v6407 = vshll.u32 %v6106, 16
        %v6409 = vrot.slane %v6407, 3
        %v6410 = vor.u32 %v6406, %v6409
        %v6411 = vsel %vm6217, %v6374, %v6410
        %v6413 = vshrl.u32 %v6107, 16
        %v6415 = vrot.slane %v6413, 2
        %v6416 = vshll.u32 %v6107, 16
        %v6418 = vrot.slane %v6416, 3
        %v6419 = vor.u32 %v6415, %v6418
        %v6420 = vsel %vm6217, %v6383, %v6419
        %v6422 = vshrl.u32 %v6108, 16
        %v6424 = vrot.slane %v6422, 2
        %v6425 = vshll.u32 %v6108, 16
        %v6427 = vrot.slane %v6425, 3
        %v6428 = vor.u32 %v6424, %v6427
        %v6429 = vsel %vm6217, %v6392, %v6428
        %v6431 = vshrl.u32 %v6109, 16
        %v6433 = vrot.slane %v6431, 2
        %v6434 = vshll.u32 %v6109, 16
        %v6436 = vrot.slane %v6434, 3
        %v6437 = vor.u32 %v6433, %v6436
        %v6438 = vsel %vm6217, %v6401, %v6437
        %v6440 = vshrl.u32 %v6110, 16
        %v6442 = vrot.slane %v6440, 2
        %v6443 = vshll.u32 %v6110, 16
        %v6445 = vrot.slane %v6443, 3
        %v6446 = vor.u32 %v6442, %v6445
        %v6447 = vsel %vm6217, %v6410, %v6446
        %v6449 = vshrl.u32 %v6111, 16
        %v6451 = vrot.slane %v6449, 2
        %v6452 = vshll.u32 %v6111, 16
        %v6454 = vrot.slane %v6452, 3
        %v6455 = vor.u32 %v6451, %v6454
        %v6456 = vsel %vm6217, %v6419, %v6455
        %v6458 = vshrl.u32 %v6112, 16
        %v6460 = vrot.slane %v6458, 2
        %v6461 = vshll.u32 %v6112, 16
        %v6463 = vrot.slane %v6461, 3
        %v6464 = vor.u32 %v6460, %v6463
        %v6465 = vsel %vm6217, %v6428, %v6464
        %v6467 = vshrl.u32 %v6113, 16
        %v6469 = vrot.slane %v6467, 2
        %v6470 = vshll.u32 %v6113, 16
        %v6472 = vrot.slane %v6470, 3
        %v6473 = vor.u32 %v6469, %v6472
        %v6474 = vsel %vm6217, %v6437, %v6473
        %v6476 = vshrl.u32 %v6114, 16
        %v6478 = vrot.slane %v6476, 2
        %v6479 = vshll.u32 %v6114, 16
        %v6481 = vrot.slane %v6479, 3
        %v6482 = vor.u32 %v6478, %v6481
        %v6483 = vsel %vm6217, %v6446, %v6482
        %v6485 = vshrl.u32 %v6115, 16
        %v6487 = vrot.slane %v6485, 2
        %v6488 = vshll.u32 %v6115, 16
        %v6490 = vrot.slane %v6488, 3
        %v6491 = vor.u32 %v6487, %v6490
        %v6492 = vsel %vm6217, %v6455, %v6491
        %v6494 = vshrl.u32 %v6116, 16
        %v6496 = vrot.slane %v6494, 2
        %v6497 = vshll.u32 %v6116, 16
        %v6499 = vrot.slane %v6497, 3
        %v6500 = vor.u32 %v6496, %v6499
        %v6501 = vsel %vm6217, %v6464, %v6500
        %v6503 = vshrl.u32 %v6117, 16
        %v6505 = vrot.slane %v6503, 2
        %v6506 = vshll.u32 %v6117, 16
        %v6508 = vrot.slane %v6506, 3
        %v6509 = vor.u32 %v6505, %v6508
        %v6510 = vsel %vm6217, %v6473, %v6509
        %v6512 = vshrl.u32 %v6118, 16
        %v6514 = vrot.slane %v6512, 2
        %v6515 = vshll.u32 %v6118, 16
        %v6517 = vrot.slane %v6515, 3
        %v6518 = vor.u32 %v6514, %v6517
        %v6519 = vsel %vm6217, %v6482, %v6518
        %v6521 = vshrl.u32 %v6119, 16
        %v6523 = vrot.slane %v6521, 2
        %v6524 = vshll.u32 %v6119, 16
        %v6526 = vrot.slane %v6524, 3
        %v6527 = vor.u32 %v6523, %v6526
        %v6528 = vsel %vm6217, %v6491, %v6527
        %v6530 = vshrl.u32 %v6120, 16
        %v6532 = vrot.slane %v6530, 2
        %v6533 = vshll.u32 %v6120, 16
        %v6535 = vrot.slane %v6533, 3
        %v6536 = vor.u32 %v6532, %v6535
        %v6537 = vsel %vm6217, %v6500, %v6536
        %v6634 = vunpack.c.l.b16 %v6121
        %v6635 = vunpack.c.h.b16 %v6121
        %v6636 = vunpack.c.l.b16 %v6122
        %v6637 = vunpack.c.h.b16 %v6122
        %v6638 = vunpack.c.l.b16 %v6123
        %v6639 = vunpack.c.h.b16 %v6123
        %v6640 = vunpack.c.l.b16 %v6124
        %v6641 = vunpack.c.h.b16 %v6124
        %v6642 = vunpack.c.l.b16 %v6125
        %v6643 = vunpack.c.h.b16 %v6125
        %v6644 = vunpack.c.l.b16 %v6126
        %v6645 = vunpack.c.h.b16 %v6126
        %v6646 = vunpack.c.l.b16 %v6127
        %v6647 = vunpack.c.h.b16 %v6127
        %v6648 = vunpack.c.l.b16 %v6128
        %v6649 = vunpack.c.h.b16 %v6128
        %v6650 = vunpack.c.l.b16 %v6129
        %v6651 = vunpack.c.h.b16 %v6129
        %v6652 = vunpack.c.l.b16 %v6130
        %v6653 = vunpack.c.h.b16 %v6130
        %v6654 = vunpack.c.l.b16 %v6131
        %v6655 = vunpack.c.h.b16 %v6131
        %v6656 = vunpack.c.l.b16 %v6132
        %v6657 = vunpack.c.h.b16 %v6132
        %v6658 = vunpack.c.l.b16 %v6133
        %v6659 = vunpack.c.h.b16 %v6133
        %v6660 = vunpack.c.l.b16 %v6134
        %v6661 = vunpack.c.h.b16 %v6134
        %v6662 = vunpack.c.l.b16 %v6135
        %v6663 = vunpack.c.h.b16 %v6135
        %v6664 = vunpack.c.l.b16 %v6136
        %v6665 = vunpack.c.h.b16 %v6136
        %v6666 = vunpack.c.l.b16 %v6137
        %v6667 = vunpack.c.h.b16 %v6137
        %v6668 = vunpack.c.l.b16 %v6138
        %v6669 = vunpack.c.h.b16 %v6138
        %v6670 = vunpack.c.l.b16 %v6139
        %v6671 = vunpack.c.h.b16 %v6139
        %v6672 = vunpack.c.l.b16 %v6140
        %v6673 = vunpack.c.h.b16 %v6140
        %v6674 = vunpack.c.l.b16 %v6141
        %v6675 = vunpack.c.h.b16 %v6141
        %v6676 = vunpack.c.l.b16 %v6142
        %v6677 = vunpack.c.h.b16 %v6142
        %v6678 = vunpack.c.l.b16 %v6143
        %v6679 = vunpack.c.h.b16 %v6143
        %v6680 = vunpack.c.l.b16 %v6144
        %v6681 = vunpack.c.h.b16 %v6144
        %v6682 = vunpack.c.l.b16 %v6145
        %v6683 = vunpack.c.h.b16 %v6145
        %v6684 = vunpack.c.l.b16 %v6146
        %v6685 = vunpack.c.h.b16 %v6146
        %v6686 = vunpack.c.l.b16 %v6147
        %v6687 = vunpack.c.h.b16 %v6147
        %v6688 = vunpack.c.l.b16 %v6148
        %v6689 = vunpack.c.h.b16 %v6148
        %v6690 = vunpack.c.l.b16 %v6149
        %v6691 = vunpack.c.h.b16 %v6149
        %v6692 = vunpack.c.l.b16 %v6150
        %v6693 = vunpack.c.h.b16 %v6150
        %v6694 = vunpack.c.l.b16 %v6151
        %v6695 = vunpack.c.h.b16 %v6151
        %v6696 = vunpack.c.l.b16 %v6152
        %v6697 = vunpack.c.h.b16 %v6152
        %v6698 = vunpack.c.l.b16 %v6153
        %v6699 = vunpack.c.h.b16 %v6153
        %v6700 = vunpack.c.l.b16 %v6154
        %v6701 = vunpack.c.h.b16 %v6154
        %v6702 = vunpack.c.l.b16 %v6155
        %v6703 = vunpack.c.h.b16 %v6155
        %v6704 = vunpack.c.l.b16 %v6156
        %v6705 = vunpack.c.h.b16 %v6156
        %v6706 = vunpack.c.l.b16 %v6157
        %v6707 = vunpack.c.h.b16 %v6157
        %v6708 = vunpack.c.l.b16 %v6158
        %v6709 = vunpack.c.h.b16 %v6158
        %v6710 = vunpack.c.l.b16 %v6159
        %v6711 = vunpack.c.h.b16 %v6159
        %v6712 = vunpack.c.l.b16 %v6160
        %v6713 = vunpack.c.h.b16 %v6160
        %v6714 = vunpack.c.l.b16 %v6161
        %v6715 = vunpack.c.h.b16 %v6161
        %v6716 = vunpack.c.l.b16 %v6162
        %v6717 = vunpack.c.h.b16 %v6162
        %v6718 = vunpack.c.l.b16 %v6163
        %v6719 = vunpack.c.h.b16 %v6163
        %v6720 = vunpack.c.l.b16 %v6164
        %v6721 = vunpack.c.h.b16 %v6164
        %v6722 = vunpack.c.l.b16 %v6165
        %v6723 = vunpack.c.h.b16 %v6165
        %v6724 = vunpack.c.l.b16 %v6166
        %v6725 = vunpack.c.h.b16 %v6166
        %v6726 = vunpack.c.l.b16 %v6167
        %v6727 = vunpack.c.h.b16 %v6167
        %v6728 = vunpack.c.l.b16 %v6168
        %v6729 = vunpack.c.h.b16 %v6168
        %v6730 = vunpack.c.l.b16 %v6169
        %v6731 = vunpack.c.h.b16 %v6169
        %v6732 = vunpack.c.l.b16 %v6170
        %v6733 = vunpack.c.h.b16 %v6170
        %v6734 = vunpack.c.l.b16 %v6171
        %v6735 = vunpack.c.h.b16 %v6171
        %v6736 = vunpack.c.l.b16 %v6172
        %v6737 = vunpack.c.h.b16 %v6172
        %v6738 = vunpack.c.l.b16 %v6173
        %v6739 = vunpack.c.h.b16 %v6173
        %v6740 = vunpack.c.l.b16 %v6174
        %v6741 = vunpack.c.h.b16 %v6174
        %v6742 = vunpack.c.l.b16 %v6175
        %v6743 = vunpack.c.h.b16 %v6175
        %v6744 = vunpack.c.l.b16 %v6176
        %v6745 = vunpack.c.h.b16 %v6176
        %v6746 = vunpack.c.l.b16 %v6177
        %v6747 = vunpack.c.h.b16 %v6177
        %v6748 = vunpack.c.l.b16 %v6178
        %v6749 = vunpack.c.h.b16 %v6178
        %v6750 = vunpack.c.l.b16 %v6179
        %v6751 = vunpack.c.h.b16 %v6179
        %v6752 = vunpack.c.l.b16 %v6180
        %v6753 = vunpack.c.h.b16 %v6180
        %v6754 = vunpack.c.l.b16 %v6181
        %v6755 = vunpack.c.h.b16 %v6181
        %v6756 = vunpack.c.l.b16 %v6182
        %v6757 = vunpack.c.h.b16 %v6182
        %v6758 = vunpack.c.l.b16 %v6183
        %v6759 = vunpack.c.h.b16 %v6183
        %v6760 = vunpack.c.l.b16 %v6184
        %v6761 = vunpack.c.h.b16 %v6184
        %v6762 = vpack.c.b16 %v6636, %v6634
        %v6763 = vpack.c.b16 %v6637, %v6635
        %v6764 = vpack.c.b16 %v6640, %v6638
        %v6765 = vpack.c.b16 %v6641, %v6639
        %v6766 = vpack.c.b16 %v6644, %v6642
        %v6767 = vpack.c.b16 %v6645, %v6643
        %v6768 = vpack.c.b16 %v6648, %v6646
        %v6769 = vpack.c.b16 %v6649, %v6647
        %v6770 = vpack.c.b16 %v6652, %v6650
        %v6771 = vpack.c.b16 %v6653, %v6651
        %v6772 = vpack.c.b16 %v6656, %v6654
        %v6773 = vpack.c.b16 %v6657, %v6655
        %v6774 = vpack.c.b16 %v6660, %v6658
        %v6775 = vpack.c.b16 %v6661, %v6659
        %v6776 = vpack.c.b16 %v6664, %v6662
        %v6777 = vpack.c.b16 %v6665, %v6663
        %v6778 = vpack.c.b16 %v6668, %v6666
        %v6779 = vpack.c.b16 %v6669, %v6667
        %v6780 = vpack.c.b16 %v6672, %v6670
        %v6781 = vpack.c.b16 %v6673, %v6671
        %v6782 = vpack.c.b16 %v6676, %v6674
        %v6783 = vpack.c.b16 %v6677, %v6675
        %v6784 = vpack.c.b16 %v6680, %v6678
        %v6785 = vpack.c.b16 %v6681, %v6679
        %v6786 = vpack.c.b16 %v6684, %v6682
        %v6787 = vpack.c.b16 %v6685, %v6683
        %v6788 = vpack.c.b16 %v6688, %v6686
        %v6789 = vpack.c.b16 %v6689, %v6687
        %v6790 = vpack.c.b16 %v6692, %v6690
        %v6791 = vpack.c.b16 %v6693, %v6691
        %v6792 = vpack.c.b16 %v6696, %v6694
        %v6793 = vpack.c.b16 %v6697, %v6695
        %v6794 = vpack.c.b16 %v6700, %v6698
        %v6795 = vpack.c.b16 %v6701, %v6699
        %v6796 = vpack.c.b16 %v6704, %v6702
        %v6797 = vpack.c.b16 %v6705, %v6703
        %v6798 = vpack.c.b16 %v6708, %v6706
        %v6799 = vpack.c.b16 %v6709, %v6707
        %v6800 = vpack.c.b16 %v6712, %v6710
        %v6801 = vpack.c.b16 %v6713, %v6711
        %v6802 = vpack.c.b16 %v6716, %v6714
        %v6803 = vpack.c.b16 %v6717, %v6715
        %v6804 = vpack.c.b16 %v6720, %v6718
        %v6805 = vpack.c.b16 %v6721, %v6719
        %v6806 = vpack.c.b16 %v6724, %v6722
        %v6807 = vpack.c.b16 %v6725, %v6723
        %v6808 = vpack.c.b16 %v6728, %v6726
        %v6809 = vpack.c.b16 %v6729, %v6727
        %v6810 = vpack.c.b16 %v6732, %v6730
        %v6811 = vpack.c.b16 %v6733, %v6731
        %v6812 = vpack.c.b16 %v6736, %v6734
        %v6813 = vpack.c.b16 %v6737, %v6735
        %v6814 = vpack.c.b16 %v6740, %v6738
        %v6815 = vpack.c.b16 %v6741, %v6739
        %v6816 = vpack.c.b16 %v6744, %v6742
        %v6817 = vpack.c.b16 %v6745, %v6743
        %v6818 = vpack.c.b16 %v6748, %v6746
        %v6819 = vpack.c.b16 %v6749, %v6747
        %v6820 = vpack.c.b16 %v6752, %v6750
        %v6821 = vpack.c.b16 %v6753, %v6751
        %v6822 = vpack.c.b16 %v6756, %v6754
        %v6823 = vpack.c.b16 %v6757, %v6755
        %v6824 = vpack.c.b16 %v6760, %v6758
        %v6825 = vpack.c.b16 %v6761, %v6759
        %6890 = vmatpush.bf16.msra.mxu0 %v6776
        %6891 = vmatpush.bf16.msra.mxu0 %v6774
        %6892 = vmatpush.bf16.msra.mxu0 %v6772
        %6893 = vmatpush.bf16.msra.mxu0 %v6770
        %6894 = vmatpush.bf16.msra.mxu0 %v6768
        %6895 = vmatpush.bf16.msra.mxu0 %v6766
        %6896 = vmatpush.bf16.msra.mxu0 %v6764
        %6897 = vmatpush.bf16.msra.mxu0 %v6762
        %6898 = vmatmul.bf16.gmra.mxu0 %v6234
        %v6899 = vpop.f32.mrf.mxu0
        %v6900 = vadd.f32 0.0, %v6899
        %v6901 = vpop.f32.mrf.mxu0
        %v6902 = vadd.f32 0.0, %v6901
        %6903 = vmatmul.bf16.gmra.mxu0 %v6294
        %v6904 = vpop.f32.mrf.mxu0
        %v6905 = vadd.f32 0.0, %v6904
        %v6906 = vpop.f32.mrf.mxu0
        %v6907 = vadd.f32 0.0, %v6906
        %6908 = vmatmul.bf16.gmra.mxu0 %v6330
        %v6909 = vpop.f32.mrf.mxu0
        %v6910 = vadd.f32 0.0, %v6909
        %v6911 = vpop.f32.mrf.mxu0
        %v6912 = vadd.f32 0.0, %v6911
        %6913 = vmatmul.bf16.gmra.mxu0 %v6366
        %v6914 = vpop.f32.mrf.mxu0
        %v6915 = vadd.f32 0.0, %v6914
        %v6916 = vpop.f32.mrf.mxu0
        %v6917 = vadd.f32 0.0, %v6916
        %6918 = vmatmul.bf16.gmra.mxu0 %v6402
        %v6919 = vpop.f32.mrf.mxu0
        %v6920 = vadd.f32 0.0, %v6919
        %v6921 = vpop.f32.mrf.mxu0
        %v6922 = vadd.f32 0.0, %v6921
        %6923 = vmatmul.bf16.gmra.mxu0 %v6438
        %v6924 = vpop.f32.mrf.mxu0
        %v6925 = vadd.f32 0.0, %v6924
        %v6926 = vpop.f32.mrf.mxu0
        %v6927 = vadd.f32 0.0, %v6926
        %6928 = vmatmul.bf16.gmra.mxu0 %v6474
        %v6929 = vpop.f32.mrf.mxu0
        %v6930 = vadd.f32 0.0, %v6929
        %v6931 = vpop.f32.mrf.mxu0
        %v6932 = vadd.f32 0.0, %v6931
        %6933 = vmatmul.bf16.gmra.mxu0 %v6510
        %v6934 = vpop.f32.mrf.mxu0
        %v6935 = vadd.f32 0.0, %v6934
        %v6936 = vpop.f32.mrf.mxu0
        %v6937 = vadd.f32 0.0, %v6936
        %6938 = vdwg.mxu0
        %6939 = vmatpush.bf16.msra.mxu0 %v6792
        %6940 = vmatpush.bf16.msra.mxu0 %v6790
        %6941 = vmatpush.bf16.msra.mxu0 %v6788
        %6942 = vmatpush.bf16.msra.mxu0 %v6786
        %6943 = vmatpush.bf16.msra.mxu0 %v6784
        %6944 = vmatpush.bf16.msra.mxu0 %v6782
        %6945 = vmatpush.bf16.msra.mxu0 %v6780
        %6946 = vmatpush.bf16.msra.mxu0 %v6778
        %6947 = vmatmul.bf16.gmra.mxu0 %v6251
        %v6948 = vpop.f32.mrf.mxu0
        %v6949 = vadd.f32 %v6900, %v6948
        %v6950 = vpop.f32.mrf.mxu0
        %v6951 = vadd.f32 %v6902, %v6950
        %6952 = vmatmul.bf16.gmra.mxu0 %v6303
        %v6953 = vpop.f32.mrf.mxu0
        %v6954 = vadd.f32 %v6905, %v6953
        %v6955 = vpop.f32.mrf.mxu0
        %v6956 = vadd.f32 %v6907, %v6955
        %6957 = vmatmul.bf16.gmra.mxu0 %v6339
        %v6958 = vpop.f32.mrf.mxu0
        %v6959 = vadd.f32 %v6910, %v6958
        %v6960 = vpop.f32.mrf.mxu0
        %v6961 = vadd.f32 %v6912, %v6960
        %6962 = vmatmul.bf16.gmra.mxu0 %v6375
        %v6963 = vpop.f32.mrf.mxu0
        %v6964 = vadd.f32 %v6915, %v6963
        %v6965 = vpop.f32.mrf.mxu0
        %v6966 = vadd.f32 %v6917, %v6965
        %6967 = vmatmul.bf16.gmra.mxu0 %v6411
        %v6968 = vpop.f32.mrf.mxu0
        %v6969 = vadd.f32 %v6920, %v6968
        %v6970 = vpop.f32.mrf.mxu0
        %v6971 = vadd.f32 %v6922, %v6970
        %6972 = vmatmul.bf16.gmra.mxu0 %v6447
        %v6973 = vpop.f32.mrf.mxu0
        %v6974 = vadd.f32 %v6925, %v6973
        %v6975 = vpop.f32.mrf.mxu0
        %v6976 = vadd.f32 %v6927, %v6975
        %6977 = vmatmul.bf16.gmra.mxu0 %v6483
        %v6978 = vpop.f32.mrf.mxu0
        %v6979 = vadd.f32 %v6930, %v6978
        %v6980 = vpop.f32.mrf.mxu0
        %v6981 = vadd.f32 %v6932, %v6980
        %6982 = vmatmul.bf16.gmra.mxu0 %v6519
        %v6983 = vpop.f32.mrf.mxu0
        %v6984 = vadd.f32 %v6935, %v6983
        %v6985 = vpop.f32.mrf.mxu0
        %v6986 = vadd.f32 %v6937, %v6985
        %6987 = vdwg.mxu0
        %6988 = vmatpush.bf16.msra.mxu0 %v6808
        %6989 = vmatpush.bf16.msra.mxu0 %v6806
        %6990 = vmatpush.bf16.msra.mxu0 %v6804
        %6991 = vmatpush.bf16.msra.mxu0 %v6802
        %6992 = vmatpush.bf16.msra.mxu0 %v6800
        %6993 = vmatpush.bf16.msra.mxu0 %v6798
        %6994 = vmatpush.bf16.msra.mxu0 %v6796
        %6995 = vmatpush.bf16.msra.mxu0 %v6794
        %6996 = vmatmul.bf16.gmra.mxu0 %v6268
        %v6997 = vpop.f32.mrf.mxu0
        %v6998 = vadd.f32 %v6949, %v6997
        %v6999 = vpop.f32.mrf.mxu0
        %v7000 = vadd.f32 %v6951, %v6999
        %7001 = vmatmul.bf16.gmra.mxu0 %v6312
        %v7002 = vpop.f32.mrf.mxu0
        %v7003 = vadd.f32 %v6954, %v7002
        %v7004 = vpop.f32.mrf.mxu0
        %v7005 = vadd.f32 %v6956, %v7004
        %7006 = vmatmul.bf16.gmra.mxu0 %v6348
        %v7007 = vpop.f32.mrf.mxu0
        %v7008 = vadd.f32 %v6959, %v7007
        %v7009 = vpop.f32.mrf.mxu0
        %v7010 = vadd.f32 %v6961, %v7009
        %7011 = vmatmul.bf16.gmra.mxu0 %v6384
        %v7012 = vpop.f32.mrf.mxu0
        %v7013 = vadd.f32 %v6964, %v7012
        %v7014 = vpop.f32.mrf.mxu0
        %v7015 = vadd.f32 %v6966, %v7014
        %7016 = vmatmul.bf16.gmra.mxu0 %v6420
        %v7017 = vpop.f32.mrf.mxu0
        %v7018 = vadd.f32 %v6969, %v7017
        %v7019 = vpop.f32.mrf.mxu0
        %v7020 = vadd.f32 %v6971, %v7019
        %7021 = vmatmul.bf16.gmra.mxu0 %v6456
        %v7022 = vpop.f32.mrf.mxu0
        %v7023 = vadd.f32 %v6974, %v7022
        %v7024 = vpop.f32.mrf.mxu0
        %v7025 = vadd.f32 %v6976, %v7024
        %7026 = vmatmul.bf16.gmra.mxu0 %v6492
        %v7027 = vpop.f32.mrf.mxu0
        %v7028 = vadd.f32 %v6979, %v7027
        %v7029 = vpop.f32.mrf.mxu0
        %v7030 = vadd.f32 %v6981, %v7029
        %7031 = vmatmul.bf16.gmra.mxu0 %v6528
        %v7032 = vpop.f32.mrf.mxu0
        %v7033 = vadd.f32 %v6984, %v7032
        %v7034 = vpop.f32.mrf.mxu0
        %v7035 = vadd.f32 %v6986, %v7034
        %7036 = vdwg.mxu0
        %7037 = vmatpush.bf16.msra.mxu0 %v6824
        %7038 = vmatpush.bf16.msra.mxu0 %v6822
        %7039 = vmatpush.bf16.msra.mxu0 %v6820
        %7040 = vmatpush.bf16.msra.mxu0 %v6818
        %7041 = vmatpush.bf16.msra.mxu0 %v6816
        %7042 = vmatpush.bf16.msra.mxu0 %v6814
        %7043 = vmatpush.bf16.msra.mxu0 %v6812
        %7044 = vmatpush.bf16.msra.mxu0 %v6810
        %7045 = vmatmul.bf16.gmra.mxu0 %v6285
        %v7046 = vpop.f32.mrf.mxu0
        %v7047 = vadd.f32 %v6998, %v7046
        %v7048 = vpop.f32.mrf.mxu0
        %v7049 = vadd.f32 %v7000, %v7048
        %7050 = vmatmul.bf16.gmra.mxu0 %v6321
        %v7051 = vpop.f32.mrf.mxu0
        %v7052 = vadd.f32 %v7003, %v7051
        %v7053 = vpop.f32.mrf.mxu0
        %v7054 = vadd.f32 %v7005, %v7053
        %7055 = vmatmul.bf16.gmra.mxu0 %v6357
        %v7056 = vpop.f32.mrf.mxu0
        %v7057 = vadd.f32 %v7008, %v7056
        %v7058 = vpop.f32.mrf.mxu0
        %v7059 = vadd.f32 %v7010, %v7058
        %7060 = vmatmul.bf16.gmra.mxu0 %v6393
        %v7061 = vpop.f32.mrf.mxu0
        %v7062 = vadd.f32 %v7013, %v7061
        %v7063 = vpop.f32.mrf.mxu0
        %v7064 = vadd.f32 %v7015, %v7063
        %7065 = vmatmul.bf16.gmra.mxu0 %v6429
        %v7066 = vpop.f32.mrf.mxu0
        %v7067 = vadd.f32 %v7018, %v7066
        %v7068 = vpop.f32.mrf.mxu0
        %v7069 = vadd.f32 %v7020, %v7068
        %7070 = vmatmul.bf16.gmra.mxu0 %v6465
        %v7071 = vpop.f32.mrf.mxu0
        %v7072 = vadd.f32 %v7023, %v7071
        %v7073 = vpop.f32.mrf.mxu0
        %v7074 = vadd.f32 %v7025, %v7073
        %7075 = vmatmul.bf16.gmra.mxu0 %v6501
        %v7076 = vpop.f32.mrf.mxu0
        %v7077 = vadd.f32 %v7028, %v7076
        %v7078 = vpop.f32.mrf.mxu0
        %v7079 = vadd.f32 %v7030, %v7078
        %7080 = vmatmul.bf16.gmra.mxu0 %v6537
        %v7081 = vpop.f32.mrf.mxu0
        %v7082 = vadd.f32 %v7033, %v7081
        %v7083 = vpop.f32.mrf.mxu0
        %v7084 = vadd.f32 %v7035, %v7083
        %7085 = vdwg.mxu0
        %7086 = vmatpush.bf16.msra.mxu0 %v6777
        %7087 = vmatpush.bf16.msra.mxu0 %v6775
        %7088 = vmatpush.bf16.msra.mxu0 %v6773
        %7089 = vmatpush.bf16.msra.mxu0 %v6771
        %7090 = vmatpush.bf16.msra.mxu0 %v6769
        %7091 = vmatpush.bf16.msra.mxu0 %v6767
        %7092 = vmatpush.bf16.msra.mxu0 %v6765
        %7093 = vmatpush.bf16.msra.mxu0 %v6763
        %7094 = vmatmul.bf16.gmra.mxu0 %v6234
        %v7095 = vpop.f32.mrf.mxu0
        %v7096 = vadd.f32 0.0, %v7095
        %v7097 = vpop.f32.mrf.mxu0
        %v7098 = vadd.f32 0.0, %v7097
        %7099 = vmatmul.bf16.gmra.mxu0 %v6294
        %v7100 = vpop.f32.mrf.mxu0
        %v7101 = vadd.f32 0.0, %v7100
        %v7102 = vpop.f32.mrf.mxu0
        %v7103 = vadd.f32 0.0, %v7102
        %7104 = vmatmul.bf16.gmra.mxu0 %v6330
        %v7105 = vpop.f32.mrf.mxu0
        %v7106 = vadd.f32 0.0, %v7105
        %v7107 = vpop.f32.mrf.mxu0
        %v7108 = vadd.f32 0.0, %v7107
        %7109 = vmatmul.bf16.gmra.mxu0 %v6366
        %v7110 = vpop.f32.mrf.mxu0
        %v7111 = vadd.f32 0.0, %v7110
        %v7112 = vpop.f32.mrf.mxu0
        %v7113 = vadd.f32 0.0, %v7112
        %7114 = vmatmul.bf16.gmra.mxu0 %v6402
        %v7115 = vpop.f32.mrf.mxu0
        %v7116 = vadd.f32 0.0, %v7115
        %v7117 = vpop.f32.mrf.mxu0
        %v7118 = vadd.f32 0.0, %v7117
        %7119 = vmatmul.bf16.gmra.mxu0 %v6438
        %v7120 = vpop.f32.mrf.mxu0
        %v7121 = vadd.f32 0.0, %v7120
        %v7122 = vpop.f32.mrf.mxu0
        %v7123 = vadd.f32 0.0, %v7122
        %7124 = vmatmul.bf16.gmra.mxu0 %v6474
        %v7125 = vpop.f32.mrf.mxu0
        %v7126 = vadd.f32 0.0, %v7125
        %v7127 = vpop.f32.mrf.mxu0
        %v7128 = vadd.f32 0.0, %v7127
        %7129 = vmatmul.bf16.gmra.mxu0 %v6510
        %v7130 = vpop.f32.mrf.mxu0
        %v7131 = vadd.f32 0.0, %v7130
        %v7132 = vpop.f32.mrf.mxu0
        %v7133 = vadd.f32 0.0, %v7132
        %7134 = vdwg.mxu0
        %7135 = vmatpush.bf16.msra.mxu0 %v6793
        %7136 = vmatpush.bf16.msra.mxu0 %v6791
        %7137 = vmatpush.bf16.msra.mxu0 %v6789
        %7138 = vmatpush.bf16.msra.mxu0 %v6787
        %7139 = vmatpush.bf16.msra.mxu0 %v6785
        %7140 = vmatpush.bf16.msra.mxu0 %v6783
        %7141 = vmatpush.bf16.msra.mxu0 %v6781
        %7142 = vmatpush.bf16.msra.mxu0 %v6779
        %7143 = vmatmul.bf16.gmra.mxu0 %v6251
        %v7144 = vpop.f32.mrf.mxu0
        %v7145 = vadd.f32 %v7096, %v7144
        %v7146 = vpop.f32.mrf.mxu0
        %v7147 = vadd.f32 %v7098, %v7146
        %7148 = vmatmul.bf16.gmra.mxu0 %v6303
        %v7149 = vpop.f32.mrf.mxu0
        %v7150 = vadd.f32 %v7101, %v7149
        %v7151 = vpop.f32.mrf.mxu0
        %v7152 = vadd.f32 %v7103, %v7151
        %7153 = vmatmul.bf16.gmra.mxu0 %v6339
        %v7154 = vpop.f32.mrf.mxu0
        %v7155 = vadd.f32 %v7106, %v7154
        %v7156 = vpop.f32.mrf.mxu0
        %v7157 = vadd.f32 %v7108, %v7156
        %7158 = vmatmul.bf16.gmra.mxu0 %v6375
        %v7159 = vpop.f32.mrf.mxu0
        %v7160 = vadd.f32 %v7111, %v7159
        %v7161 = vpop.f32.mrf.mxu0
        %v7162 = vadd.f32 %v7113, %v7161
        %7163 = vmatmul.bf16.gmra.mxu0 %v6411
        %v7164 = vpop.f32.mrf.mxu0
        %v7165 = vadd.f32 %v7116, %v7164
        %v7166 = vpop.f32.mrf.mxu0
        %v7167 = vadd.f32 %v7118, %v7166
        %7168 = vmatmul.bf16.gmra.mxu0 %v6447
        %v7169 = vpop.f32.mrf.mxu0
        %v7170 = vadd.f32 %v7121, %v7169
        %v7171 = vpop.f32.mrf.mxu0
        %v7172 = vadd.f32 %v7123, %v7171
        %7173 = vmatmul.bf16.gmra.mxu0 %v6483
        %v7174 = vpop.f32.mrf.mxu0
        %v7175 = vadd.f32 %v7126, %v7174
        %v7176 = vpop.f32.mrf.mxu0
        %v7177 = vadd.f32 %v7128, %v7176
        %7178 = vmatmul.bf16.gmra.mxu0 %v6519
        %v7179 = vpop.f32.mrf.mxu0
        %v7180 = vadd.f32 %v7131, %v7179
        %v7181 = vpop.f32.mrf.mxu0
        %v7182 = vadd.f32 %v7133, %v7181
        %7183 = vdwg.mxu0
        %7184 = vmatpush.bf16.msra.mxu0 %v6809
        %7185 = vmatpush.bf16.msra.mxu0 %v6807
        %7186 = vmatpush.bf16.msra.mxu0 %v6805
        %7187 = vmatpush.bf16.msra.mxu0 %v6803
        %7188 = vmatpush.bf16.msra.mxu0 %v6801
        %7189 = vmatpush.bf16.msra.mxu0 %v6799
        %7190 = vmatpush.bf16.msra.mxu0 %v6797
        %7191 = vmatpush.bf16.msra.mxu0 %v6795
        %7192 = vmatmul.bf16.gmra.mxu0 %v6268
        %v7193 = vpop.f32.mrf.mxu0
        %v7194 = vadd.f32 %v7145, %v7193
        %v7195 = vpop.f32.mrf.mxu0
        %v7196 = vadd.f32 %v7147, %v7195
        %7197 = vmatmul.bf16.gmra.mxu0 %v6312
        %v7198 = vpop.f32.mrf.mxu0
        %v7199 = vadd.f32 %v7150, %v7198
        %v7200 = vpop.f32.mrf.mxu0
        %v7201 = vadd.f32 %v7152, %v7200
        %7202 = vmatmul.bf16.gmra.mxu0 %v6348
        %v7203 = vpop.f32.mrf.mxu0
        %v7204 = vadd.f32 %v7155, %v7203
        %v7205 = vpop.f32.mrf.mxu0
        %v7206 = vadd.f32 %v7157, %v7205
        %7207 = vmatmul.bf16.gmra.mxu0 %v6384
        %v7208 = vpop.f32.mrf.mxu0
        %v7209 = vadd.f32 %v7160, %v7208
        %v7210 = vpop.f32.mrf.mxu0
        %v7211 = vadd.f32 %v7162, %v7210
        %7212 = vmatmul.bf16.gmra.mxu0 %v6420
        %v7213 = vpop.f32.mrf.mxu0
        %v7214 = vadd.f32 %v7165, %v7213
        %v7215 = vpop.f32.mrf.mxu0
        %v7216 = vadd.f32 %v7167, %v7215
        %7217 = vmatmul.bf16.gmra.mxu0 %v6456
        %v7218 = vpop.f32.mrf.mxu0
        %v7219 = vadd.f32 %v7170, %v7218
        %v7220 = vpop.f32.mrf.mxu0
        %v7221 = vadd.f32 %v7172, %v7220
        %7222 = vmatmul.bf16.gmra.mxu0 %v6492
        %v7223 = vpop.f32.mrf.mxu0
        %v7224 = vadd.f32 %v7175, %v7223
        %v7225 = vpop.f32.mrf.mxu0
        %v7226 = vadd.f32 %v7177, %v7225
        %7227 = vmatmul.bf16.gmra.mxu0 %v6528
        %v7228 = vpop.f32.mrf.mxu0
        %v7229 = vadd.f32 %v7180, %v7228
        %v7230 = vpop.f32.mrf.mxu0
        %v7231 = vadd.f32 %v7182, %v7230
        %7232 = vdwg.mxu0
        %7233 = vmatpush.bf16.msra.mxu0 %v6825
        %7234 = vmatpush.bf16.msra.mxu0 %v6823
        %7235 = vmatpush.bf16.msra.mxu0 %v6821
        %7236 = vmatpush.bf16.msra.mxu0 %v6819
        %7237 = vmatpush.bf16.msra.mxu0 %v6817
        %7238 = vmatpush.bf16.msra.mxu0 %v6815
        %7239 = vmatpush.bf16.msra.mxu0 %v6813
        %7240 = vmatpush.bf16.msra.mxu0 %v6811
        %7241 = vmatmul.bf16.gmra.mxu0 %v6285
        %v7242 = vpop.f32.mrf.mxu0
        %v7243 = vadd.f32 %v7194, %v7242
        %v7244 = vpop.f32.mrf.mxu0
        %v7245 = vadd.f32 %v7196, %v7244
        %7246 = vmatmul.bf16.gmra.mxu0 %v6321
        %v7247 = vpop.f32.mrf.mxu0
        %v7248 = vadd.f32 %v7199, %v7247
        %v7249 = vpop.f32.mrf.mxu0
        %v7250 = vadd.f32 %v7201, %v7249
        %7251 = vmatmul.bf16.gmra.mxu0 %v6357
        %v7252 = vpop.f32.mrf.mxu0
        %v7253 = vadd.f32 %v7204, %v7252
        %v7254 = vpop.f32.mrf.mxu0
        %v7255 = vadd.f32 %v7206, %v7254
        %7256 = vmatmul.bf16.gmra.mxu0 %v6393
        %v7257 = vpop.f32.mrf.mxu0
        %v7258 = vadd.f32 %v7209, %v7257
        %v7259 = vpop.f32.mrf.mxu0
        %v7260 = vadd.f32 %v7211, %v7259
        %7261 = vmatmul.bf16.gmra.mxu0 %v6429
        %v7262 = vpop.f32.mrf.mxu0
        %v7263 = vadd.f32 %v7214, %v7262
        %v7264 = vpop.f32.mrf.mxu0
        %v7265 = vadd.f32 %v7216, %v7264
        %7266 = vmatmul.bf16.gmra.mxu0 %v6465
        %v7267 = vpop.f32.mrf.mxu0
        %v7268 = vadd.f32 %v7219, %v7267
        %v7269 = vpop.f32.mrf.mxu0
        %v7270 = vadd.f32 %v7221, %v7269
        %7271 = vmatmul.bf16.gmra.mxu0 %v6501
        %v7272 = vpop.f32.mrf.mxu0
        %v7273 = vadd.f32 %v7224, %v7272
        %v7274 = vpop.f32.mrf.mxu0
        %v7275 = vadd.f32 %v7226, %v7274
        %7276 = vmatmul.bf16.gmra.mxu0 %v6537
        %v7277 = vpop.f32.mrf.mxu0
        %v7278 = vadd.f32 %v7229, %v7277
        %v7279 = vpop.f32.mrf.mxu0
        %v7280 = vadd.f32 %v7231, %v7279
        %7281 = vdwg.mxu0
        %v7282 = vadd.f32 %v6185, %v7047
        %v7283 = vadd.f32 %v6186, %v7243
        %v7284 = vadd.f32 %v6187, %v7049
        %v7285 = vadd.f32 %v6188, %v7245
        %v7286 = vadd.f32 %v6189, %v7052
        %v7287 = vadd.f32 %v6190, %v7248
        %v7288 = vadd.f32 %v6191, %v7054
        %v7289 = vadd.f32 %v6192, %v7250
        %v7290 = vadd.f32 %v6193, %v7057
        %v7291 = vadd.f32 %v6194, %v7253
        %v7292 = vadd.f32 %v6195, %v7059
        %v7293 = vadd.f32 %v6196, %v7255
        %v7294 = vadd.f32 %v6197, %v7062
        %v7295 = vadd.f32 %v6198, %v7258
        %v7296 = vadd.f32 %v6199, %v7064
        %v7297 = vadd.f32 %v6200, %v7260
        %v7298 = vadd.f32 %v6201, %v7067
        %v7299 = vadd.f32 %v6202, %v7263
        %v7300 = vadd.f32 %v6203, %v7069
        %v7301 = vadd.f32 %v6204, %v7265
        %v7302 = vadd.f32 %v6205, %v7072
        %v7303 = vadd.f32 %v6206, %v7268
        %v7304 = vadd.f32 %v6207, %v7074
        %v7305 = vadd.f32 %v6208, %v7270
        %v7306 = vadd.f32 %v6209, %v7077
        %v7307 = vadd.f32 %v6210, %v7273
        %v7308 = vadd.f32 %v6211, %v7079
        %v7309 = vadd.f32 %v6212, %v7275
        %v7310 = vadd.f32 %v6213, %v7082
        %v7311 = vadd.f32 %v6214, %v7278
        %v7312 = vadd.f32 %v6215, %v7084
        %v7313 = vadd.f32 %v6216, %v7280
        %7314 = vst [vmem:[#allocation2] sm:$0xff] %v7282
        %7315 = vst [vmem:[#allocation2 + $0x8] sm:$0xff] %v7283
        %7316 = vst [vmem:[#allocation2 + $0x10] sm:$0xff] %v7284
        %7317 = vst [vmem:[#allocation2 + $0x18] sm:$0xff] %v7285
        %7318 = vst [vmem:[#allocation2 + $0x20] sm:$0xff] %v7286
        %7319 = vst [vmem:[#allocation2 + $0x28] sm:$0xff] %v7287
        %7320 = vst [vmem:[#allocation2 + $0x30] sm:$0xff] %v7288
        %7321 = vst [vmem:[#allocation2 + $0x38] sm:$0xff] %v7289
        %7322 = vst [vmem:[#allocation2 + $0x40] sm:$0xff] %v7290
        %7323 = vst [vmem:[#allocation2 + $0x48] sm:$0xff] %v7291
        %7324 = vst [vmem:[#allocation2 + $0x50] sm:$0xff] %v7292
        %7325 = vst [vmem:[#allocation2 + $0x58] sm:$0xff] %v7293
        %7326 = vst [vmem:[#allocation2 + $0x60] sm:$0xff] %v7294
        %7327 = vst [vmem:[#allocation2 + $0x68] sm:$0xff] %v7295
        %7328 = vst [vmem:[#allocation2 + $0x70] sm:$0xff] %v7296
        %7329 = vst [vmem:[#allocation2 + $0x78] sm:$0xff] %v7297
        %7330 = vst [vmem:[#allocation2 + $0x80] sm:$0xff] %v7298
        %7331 = vst [vmem:[#allocation2 + $0x88] sm:$0xff] %v7299
        %7332 = vst [vmem:[#allocation2 + $0x90] sm:$0xff] %v7300
        %7333 = vst [vmem:[#allocation2 + $0x98] sm:$0xff] %v7301
        %7334 = vst [vmem:[#allocation2 + $0xa0] sm:$0xff] %v7302
        %7335 = vst [vmem:[#allocation2 + $0xa8] sm:$0xff] %v7303
        %7336 = vst [vmem:[#allocation2 + $0xb0] sm:$0xff] %v7304
        %7337 = vst [vmem:[#allocation2 + $0xb8] sm:$0xff] %v7305
        %7338 = vst [vmem:[#allocation2 + $0xc0] sm:$0xff] %v7306
        %7339 = vst [vmem:[#allocation2 + $0xc8] sm:$0xff] %v7307
        %7340 = vst [vmem:[#allocation2 + $0xd0] sm:$0xff] %v7308
        %7341 = vst [vmem:[#allocation2 + $0xd8] sm:$0xff] %v7309
        %7342 = vst [vmem:[#allocation2 + $0xe0] sm:$0xff] %v7310
        %7343 = vst [vmem:[#allocation2 + $0xe8] sm:$0xff] %v7311
        %7344 = vst [vmem:[#allocation2 + $0xf0] sm:$0xff] %v7312
        %7345 = vst [vmem:[#allocation2 + $0xf8] sm:$0xff] %v7313
        %v7346 = vld [vmem:[%s154] sm:$0xc0]
        %v7347 = vld [vmem:[%s154 + $0x8] sm:$0xc0]
        %v7348 = vld [vmem:[%s154 + $0x10] sm:$0xc0]
        %v7349 = vld [vmem:[%s154 + $0x18] sm:$0xc0]
        %v7350 = vld [vmem:[%s154 + $0x20] sm:$0xff]
        %v7351 = vld [vmem:[%s154 + $0x28] sm:$0xff]
        %v7352 = vld [vmem:[%s154 + $0x30] sm:$0xff]
        %v7353 = vld [vmem:[%s154 + $0x38] sm:$0xff]
        %v7354 = vld [vmem:[%s154 + $0x40] sm:$0xff]
        %v7355 = vld [vmem:[%s154 + $0x48] sm:$0xff]
        %v7356 = vld [vmem:[%s154 + $0x50] sm:$0xff]
        %v7357 = vld [vmem:[%s154 + $0x58] sm:$0xff]
        %v7358 = vld [vmem:[%s154 + $0x60] sm:$0xff]
        %v7359 = vld [vmem:[%s154 + $0x68] sm:$0xff]
        %v7360 = vld [vmem:[%s154 + $0x70] sm:$0xff]
        %v7361 = vld [vmem:[%s154 + $0x78] sm:$0xff]
        %v7362 = vld [vmem:[%s154 + $0x80] sm:$0xff]
        %v7363 = vld [vmem:[%s154 + $0x88] sm:$0xff]
        %v7364 = vld [vmem:[%s154 + $0x90] sm:$0xff]
        %v7365 = vld [vmem:[%s154 + $0x98] sm:$0xff]
        %v7366 = vld [vmem:[%s154 + $0xa0] sm:$0xff]
        %v7367 = vld [vmem:[%s154 + $0xa8] sm:$0xff]
        %v7368 = vld [vmem:[%s154 + $0xb0] sm:$0xff]
        %v7369 = vld [vmem:[%s154 + $0xb8] sm:$0xff]
        %v7370 = vld [vmem:[%s154 + $0xc0] sm:$0xff]
        %v7371 = vld [vmem:[%s154 + $0xc8] sm:$0xff]
        %v7372 = vld [vmem:[%s154 + $0xd0] sm:$0xff]
        %v7373 = vld [vmem:[%s154 + $0xd8] sm:$0xff]
        %v7374 = vld [vmem:[%s154 + $0xe0] sm:$0xff]
        %v7375 = vld [vmem:[%s154 + $0xe8] sm:$0xff]
        %v7376 = vld [vmem:[%s154 + $0xf0] sm:$0xff]
        %v7377 = vld [vmem:[%s154 + $0xf8] sm:$0xff]
        %v7378 = vld [vmem:[%s154 + $0x100] sm:$0xff]
        %v7379 = vld [vmem:[%s154 + $0x108] sm:$0xff]
        %v7380 = vld [vmem:[%s154 + $0x110] sm:$0xff]
        %v7381 = vld [vmem:[%s154 + $0x118] sm:$0xff]
        %v7382 = vld [vmem:[%s154 + $0x120] sm:$0xff]
        %v7383 = vld [vmem:[%s154 + $0x128] sm:$0xff]
        %v7384 = vld [vmem:[%s154 + $0x130] sm:$0xff]
        %v7385 = vld [vmem:[%s154 + $0x138] sm:$0xff]
        %v7386 = vld [vmem:[%s154 + $0x140] sm:$0xff]
        %v7387 = vld [vmem:[%s154 + $0x148] sm:$0xff]
        %v7388 = vld [vmem:[%s154 + $0x150] sm:$0xff]
        %v7389 = vld [vmem:[%s154 + $0x158] sm:$0xff]
        %v7390 = vld [vmem:[%s154 + $0x160] sm:$0xff]
        %v7391 = vld [vmem:[%s154 + $0x168] sm:$0xff]
        %v7392 = vld [vmem:[%s154 + $0x170] sm:$0xff]
        %v7393 = vld [vmem:[%s154 + $0x178] sm:$0xff]
        %v7394 = vld [vmem:[%s154 + $0x180] sm:$0xff]
        %v7395 = vld [vmem:[%s154 + $0x188] sm:$0xff]
        %v7396 = vld [vmem:[%s154 + $0x190] sm:$0xff]
        %v7397 = vld [vmem:[%s154 + $0x198] sm:$0xff]
        %v7398 = vld [vmem:[%s154 + $0x1a0] sm:$0xff]
        %v7399 = vld [vmem:[%s154 + $0x1a8] sm:$0xff]
        %v7400 = vld [vmem:[%s154 + $0x1b0] sm:$0xff]
        %v7401 = vld [vmem:[%s154 + $0x1b8] sm:$0xff]
        %v7402 = vld [vmem:[%s154 + $0x1c0] sm:$0xff]
        %v7403 = vld [vmem:[%s154 + $0x1c8] sm:$0xff]
        %v7404 = vld [vmem:[%s154 + $0x1d0] sm:$0xff]
        %v7405 = vld [vmem:[%s154 + $0x1d8] sm:$0xff]
        %v7406 = vld [vmem:[%s154 + $0x1e0] sm:$0xff]
        %v7407 = vld [vmem:[%s154 + $0x1e8] sm:$0xff]
        %v7408 = vld [vmem:[%s154 + $0x1f0] sm:$0xff]
        %v7409 = vld [vmem:[%s154 + $0x1f8] sm:$0xff]
        %v7410 = vld [vmem:[%s154 + $0x200] sm:$0x3f]
        %v7411 = vld [vmem:[%s154 + $0x208] sm:$0x3f]
        %v7412 = vld [vmem:[%s154 + $0x210] sm:$0x3f]
        %v7413 = vld [vmem:[%s154 + $0x218] sm:$0x3f]
        %v7414 = vpack.c.bf16 %v7350, %v7346
        %v7415 = vpack.c.bf16 %v7351, %v7347
        %v7416 = vpack.c.bf16 %v7352, %v7348
        %v7417 = vpack.c.bf16 %v7353, %v7349
        %v7418 = vpack.c.bf16 %v7358, %v7354
        %v7419 = vpack.c.bf16 %v7359, %v7355
        %v7420 = vpack.c.bf16 %v7360, %v7356
        %v7421 = vpack.c.bf16 %v7361, %v7357
        %v7422 = vpack.c.bf16 %v7366, %v7362
        %v7423 = vpack.c.bf16 %v7367, %v7363
        %v7424 = vpack.c.bf16 %v7368, %v7364
        %v7425 = vpack.c.bf16 %v7369, %v7365
        %v7426 = vpack.c.bf16 %v7374, %v7370
        %v7427 = vpack.c.bf16 %v7375, %v7371
        %v7428 = vpack.c.bf16 %v7376, %v7372
        %v7429 = vpack.c.bf16 %v7377, %v7373
        %v7430 = vpack.c.bf16 %v7382, %v7378
        %v7431 = vpack.c.bf16 %v7383, %v7379
        %v7432 = vpack.c.bf16 %v7384, %v7380
        %v7433 = vpack.c.bf16 %v7385, %v7381
        %v7434 = vpack.c.bf16 %v7390, %v7386
        %v7435 = vpack.c.bf16 %v7391, %v7387
        %v7436 = vpack.c.bf16 %v7392, %v7388
        %v7437 = vpack.c.bf16 %v7393, %v7389
        %v7438 = vpack.c.bf16 %v7398, %v7394
        %v7439 = vpack.c.bf16 %v7399, %v7395
        %v7440 = vpack.c.bf16 %v7400, %v7396
        %v7441 = vpack.c.bf16 %v7401, %v7397
        %v7442 = vpack.c.bf16 %v7406, %v7402
        %v7443 = vpack.c.bf16 %v7407, %v7403
        %v7444 = vpack.c.bf16 %v7408, %v7404
        %v7445 = vpack.c.bf16 %v7409, %v7405
        %v7446 = vpack.c.bf16 %v7410, %v7410
        %v7447 = vpack.c.bf16 %v7411, %v7411
        %v7448 = vpack.c.bf16 %v7412, %v7412
        %v7449 = vpack.c.bf16 %v7413, %v7413
        %v7450 = vld [vmem:[#allocation6 + $0xc00] sm:$0xff]
        %v7451 = vld [vmem:[#allocation6 + $0xc08] sm:$0xff]
        %v7452 = vld [vmem:[#allocation6 + $0xc10] sm:$0xff]
        %v7453 = vld [vmem:[#allocation6 + $0xc18] sm:$0xff]
        %v7454 = vld [vmem:[#allocation6 + $0xc20] sm:$0xff]
        %v7455 = vld [vmem:[#allocation6 + $0xc28] sm:$0xff]
        %v7456 = vld [vmem:[#allocation6 + $0xc30] sm:$0xff]
        %v7457 = vld [vmem:[#allocation6 + $0xc38] sm:$0xff]
        %v7458 = vld [vmem:[#allocation6 + $0xc40] sm:$0xff]
        %v7459 = vld [vmem:[#allocation6 + $0xc48] sm:$0xff]
        %v7460 = vld [vmem:[#allocation6 + $0xc50] sm:$0xff]
        %v7461 = vld [vmem:[#allocation6 + $0xc58] sm:$0xff]
        %v7462 = vld [vmem:[#allocation6 + $0xc60] sm:$0xff]
        %v7463 = vld [vmem:[#allocation6 + $0xc68] sm:$0xff]
        %v7464 = vld [vmem:[#allocation6 + $0xc70] sm:$0xff]
        %v7465 = vld [vmem:[#allocation6 + $0xc78] sm:$0xff]
        %v7466 = vld [vmem:[#allocation6 + $0xc80] sm:$0xff]
        %v7467 = vld [vmem:[#allocation6 + $0xc88] sm:$0xff]
        %v7468 = vld [vmem:[#allocation6 + $0xc90] sm:$0xff]
        %v7469 = vld [vmem:[#allocation6 + $0xc98] sm:$0xff]
        %v7470 = vld [vmem:[#allocation6 + $0xca0] sm:$0xff]
        %v7471 = vld [vmem:[#allocation6 + $0xca8] sm:$0xff]
        %v7472 = vld [vmem:[#allocation6 + $0xcb0] sm:$0xff]
        %v7473 = vld [vmem:[#allocation6 + $0xcb8] sm:$0xff]
        %v7474 = vld [vmem:[#allocation6 + $0xcc0] sm:$0xff]
        %v7475 = vld [vmem:[#allocation6 + $0xcc8] sm:$0xff]
        %v7476 = vld [vmem:[#allocation6 + $0xcd0] sm:$0xff]
        %v7477 = vld [vmem:[#allocation6 + $0xcd8] sm:$0xff]
        %v7478 = vld [vmem:[#allocation6 + $0xce0] sm:$0xff]
        %v7479 = vld [vmem:[#allocation6 + $0xce8] sm:$0xff]
        %v7480 = vld [vmem:[#allocation6 + $0xcf0] sm:$0xff]
        %v7481 = vld [vmem:[#allocation6 + $0xcf8] sm:$0xff]
        %v7482 = vld [vmem:[#allocation6 + $0xd00] sm:$0xff]
        %v7483 = vld [vmem:[#allocation6 + $0xd08] sm:$0xff]
        %v7484 = vld [vmem:[#allocation6 + $0xd10] sm:$0xff]
        %v7485 = vld [vmem:[#allocation6 + $0xd18] sm:$0xff]
        %v7486 = vld [vmem:[#allocation6 + $0xd20] sm:$0xff]
        %v7487 = vld [vmem:[#allocation6 + $0xd28] sm:$0xff]
        %v7488 = vld [vmem:[#allocation6 + $0xd30] sm:$0xff]
        %v7489 = vld [vmem:[#allocation6 + $0xd38] sm:$0xff]
        %v7490 = vld [vmem:[#allocation6 + $0xd40] sm:$0xff]
        %v7491 = vld [vmem:[#allocation6 + $0xd48] sm:$0xff]
        %v7492 = vld [vmem:[#allocation6 + $0xd50] sm:$0xff]
        %v7493 = vld [vmem:[#allocation6 + $0xd58] sm:$0xff]
        %v7494 = vld [vmem:[#allocation6 + $0xd60] sm:$0xff]
        %v7495 = vld [vmem:[#allocation6 + $0xd68] sm:$0xff]
        %v7496 = vld [vmem:[#allocation6 + $0xd70] sm:$0xff]
        %v7497 = vld [vmem:[#allocation6 + $0xd78] sm:$0xff]
        %v7498 = vld [vmem:[#allocation6 + $0xd80] sm:$0xff]
        %v7499 = vld [vmem:[#allocation6 + $0xd88] sm:$0xff]
        %v7500 = vld [vmem:[#allocation6 + $0xd90] sm:$0xff]
        %v7501 = vld [vmem:[#allocation6 + $0xd98] sm:$0xff]
        %v7502 = vld [vmem:[#allocation6 + $0xda0] sm:$0xff]
        %v7503 = vld [vmem:[#allocation6 + $0xda8] sm:$0xff]
        %v7504 = vld [vmem:[#allocation6 + $0xdb0] sm:$0xff]
        %v7505 = vld [vmem:[#allocation6 + $0xdb8] sm:$0xff]
        %v7506 = vld [vmem:[#allocation6 + $0xdc0] sm:$0xff]
        %v7507 = vld [vmem:[#allocation6 + $0xdc8] sm:$0xff]
        %v7508 = vld [vmem:[#allocation6 + $0xdd0] sm:$0xff]
        %v7509 = vld [vmem:[#allocation6 + $0xdd8] sm:$0xff]
        %v7510 = vld [vmem:[#allocation6 + $0xde0] sm:$0xff]
        %v7511 = vld [vmem:[#allocation6 + $0xde8] sm:$0xff]
        %v7512 = vld [vmem:[#allocation6 + $0xdf0] sm:$0xff]
        %v7513 = vld [vmem:[#allocation6 + $0xdf8] sm:$0xff]
        %v7514 = vld [vmem:[#allocation2] sm:$0xff]
        %v7515 = vld [vmem:[#allocation2 + $0x8] sm:$0xff]
        %v7516 = vld [vmem:[#allocation2 + $0x10] sm:$0xff]
        %v7517 = vld [vmem:[#allocation2 + $0x18] sm:$0xff]
        %v7518 = vld [vmem:[#allocation2 + $0x20] sm:$0xff]
        %v7519 = vld [vmem:[#allocation2 + $0x28] sm:$0xff]
        %v7520 = vld [vmem:[#allocation2 + $0x30] sm:$0xff]
        %v7521 = vld [vmem:[#allocation2 + $0x38] sm:$0xff]
        %v7522 = vld [vmem:[#allocation2 + $0x40] sm:$0xff]
        %v7523 = vld [vmem:[#allocation2 + $0x48] sm:$0xff]
        %v7524 = vld [vmem:[#allocation2 + $0x50] sm:$0xff]
        %v7525 = vld [vmem:[#allocation2 + $0x58] sm:$0xff]
        %v7526 = vld [vmem:[#allocation2 + $0x60] sm:$0xff]
        %v7527 = vld [vmem:[#allocation2 + $0x68] sm:$0xff]
        %v7528 = vld [vmem:[#allocation2 + $0x70] sm:$0xff]
        %v7529 = vld [vmem:[#allocation2 + $0x78] sm:$0xff]
        %v7530 = vld [vmem:[#allocation2 + $0x80] sm:$0xff]
        %v7531 = vld [vmem:[#allocation2 + $0x88] sm:$0xff]
        %v7532 = vld [vmem:[#allocation2 + $0x90] sm:$0xff]
        %v7533 = vld [vmem:[#allocation2 + $0x98] sm:$0xff]
        %v7534 = vld [vmem:[#allocation2 + $0xa0] sm:$0xff]
        %v7535 = vld [vmem:[#allocation2 + $0xa8] sm:$0xff]
        %v7536 = vld [vmem:[#allocation2 + $0xb0] sm:$0xff]
        %v7537 = vld [vmem:[#allocation2 + $0xb8] sm:$0xff]
        %v7538 = vld [vmem:[#allocation2 + $0xc0] sm:$0xff]
        %v7539 = vld [vmem:[#allocation2 + $0xc8] sm:$0xff]
        %v7540 = vld [vmem:[#allocation2 + $0xd0] sm:$0xff]
        %v7541 = vld [vmem:[#allocation2 + $0xd8] sm:$0xff]
        %v7542 = vld [vmem:[#allocation2 + $0xe0] sm:$0xff]
        %v7543 = vld [vmem:[#allocation2 + $0xe8] sm:$0xff]
        %v7544 = vld [vmem:[#allocation2 + $0xf0] sm:$0xff]
        %v7545 = vld [vmem:[#allocation2 + $0xf8] sm:$0xff]
        %vm7582 = vcmask 1044480
        %v7583 = vrot.slane %v7414, 3
        %v7584 = vrot.slane %v7418, 3
        %v7585 = vsel %vm7582, %v7583, %v7584
        %v7586 = vrot.slane %v7415, 3
        %v7587 = vrot.slane %v7419, 3
        %v7588 = vsel %vm7582, %v7586, %v7587
        %v7589 = vrot.slane %v7416, 3
        %v7590 = vrot.slane %v7420, 3
        %v7591 = vsel %vm7582, %v7589, %v7590
        %v7592 = vrot.slane %v7417, 3
        %v7593 = vrot.slane %v7421, 3
        %v7594 = vsel %vm7582, %v7592, %v7593
        %v7595 = vrot.slane %v7422, 3
        %v7596 = vsel %vm7582, %v7584, %v7595
        %v7597 = vrot.slane %v7423, 3
        %v7598 = vsel %vm7582, %v7587, %v7597
        %v7599 = vrot.slane %v7424, 3
        %v7600 = vsel %vm7582, %v7590, %v7599
        %v7601 = vrot.slane %v7425, 3
        %v7602 = vsel %vm7582, %v7593, %v7601
        %v7603 = vrot.slane %v7426, 3
        %v7604 = vsel %vm7582, %v7595, %v7603
        %v7605 = vrot.slane %v7427, 3
        %v7606 = vsel %vm7582, %v7597, %v7605
        %v7607 = vrot.slane %v7428, 3
        %v7608 = vsel %vm7582, %v7599, %v7607
        %v7609 = vrot.slane %v7429, 3
        %v7610 = vsel %vm7582, %v7601, %v7609
        %v7611 = vrot.slane %v7430, 3
        %v7612 = vsel %vm7582, %v7603, %v7611
        %v7613 = vrot.slane %v7431, 3
        %v7614 = vsel %vm7582, %v7605, %v7613
        %v7615 = vrot.slane %v7432, 3
        %v7616 = vsel %vm7582, %v7607, %v7615
        %v7617 = vrot.slane %v7433, 3
        %v7618 = vsel %vm7582, %v7609, %v7617
        %v7619 = vrot.slane %v7434, 3
        %v7620 = vsel %vm7582, %v7611, %v7619
        %v7621 = vrot.slane %v7435, 3
        %v7622 = vsel %vm7582, %v7613, %v7621
        %v7623 = vrot.slane %v7436, 3
        %v7624 = vsel %vm7582, %v7615, %v7623
        %v7625 = vrot.slane %v7437, 3
        %v7626 = vsel %vm7582, %v7617, %v7625
        %v7627 = vrot.slane %v7438, 3
        %v7628 = vsel %vm7582, %v7619, %v7627
        %v7629 = vrot.slane %v7439, 3
        %v7630 = vsel %vm7582, %v7621, %v7629
        %v7631 = vrot.slane %v7440, 3
        %v7632 = vsel %vm7582, %v7623, %v7631
        %v7633 = vrot.slane %v7441, 3
        %v7634 = vsel %vm7582, %v7625, %v7633
        %v7635 = vrot.slane %v7442, 3
        %v7636 = vsel %vm7582, %v7627, %v7635
        %v7637 = vrot.slane %v7443, 3
        %v7638 = vsel %vm7582, %v7629, %v7637
        %v7639 = vrot.slane %v7444, 3
        %v7640 = vsel %vm7582, %v7631, %v7639
        %v7641 = vrot.slane %v7445, 3
        %v7642 = vsel %vm7582, %v7633, %v7641
        %v7643 = vrot.slane %v7446, 3
        %v7644 = vsel %vm7582, %v7635, %v7643
        %v7645 = vrot.slane %v7447, 3
        %v7646 = vsel %vm7582, %v7637, %v7645
        %v7647 = vrot.slane %v7448, 3
        %v7648 = vsel %vm7582, %v7639, %v7647
        %v7649 = vrot.slane %v7449, 3
        %v7650 = vsel %vm7582, %v7641, %v7649
        %v7747 = vunpack.c.l.b16 %v7450
        %v7748 = vunpack.c.h.b16 %v7450
        %v7749 = vunpack.c.l.b16 %v7451
        %v7750 = vunpack.c.h.b16 %v7451
        %v7751 = vunpack.c.l.b16 %v7452
        %v7752 = vunpack.c.h.b16 %v7452
        %v7753 = vunpack.c.l.b16 %v7453
        %v7754 = vunpack.c.h.b16 %v7453
        %v7755 = vunpack.c.l.b16 %v7454
        %v7756 = vunpack.c.h.b16 %v7454
        %v7757 = vunpack.c.l.b16 %v7455
        %v7758 = vunpack.c.h.b16 %v7455
        %v7759 = vunpack.c.l.b16 %v7456
        %v7760 = vunpack.c.h.b16 %v7456
        %v7761 = vunpack.c.l.b16 %v7457
        %v7762 = vunpack.c.h.b16 %v7457
        %v7763 = vunpack.c.l.b16 %v7458
        %v7764 = vunpack.c.h.b16 %v7458
        %v7765 = vunpack.c.l.b16 %v7459
        %v7766 = vunpack.c.h.b16 %v7459
        %v7767 = vunpack.c.l.b16 %v7460
        %v7768 = vunpack.c.h.b16 %v7460
        %v7769 = vunpack.c.l.b16 %v7461
        %v7770 = vunpack.c.h.b16 %v7461
        %v7771 = vunpack.c.l.b16 %v7462
        %v7772 = vunpack.c.h.b16 %v7462
        %v7773 = vunpack.c.l.b16 %v7463
        %v7774 = vunpack.c.h.b16 %v7463
        %v7775 = vunpack.c.l.b16 %v7464
        %v7776 = vunpack.c.h.b16 %v7464
        %v7777 = vunpack.c.l.b16 %v7465
        %v7778 = vunpack.c.h.b16 %v7465
        %v7779 = vunpack.c.l.b16 %v7466
        %v7780 = vunpack.c.h.b16 %v7466
        %v7781 = vunpack.c.l.b16 %v7467
        %v7782 = vunpack.c.h.b16 %v7467
        %v7783 = vunpack.c.l.b16 %v7468
        %v7784 = vunpack.c.h.b16 %v7468
        %v7785 = vunpack.c.l.b16 %v7469
        %v7786 = vunpack.c.h.b16 %v7469
        %v7787 = vunpack.c.l.b16 %v7470
        %v7788 = vunpack.c.h.b16 %v7470
        %v7789 = vunpack.c.l.b16 %v7471
        %v7790 = vunpack.c.h.b16 %v7471
        %v7791 = vunpack.c.l.b16 %v7472
        %v7792 = vunpack.c.h.b16 %v7472
        %v7793 = vunpack.c.l.b16 %v7473
        %v7794 = vunpack.c.h.b16 %v7473
        %v7795 = vunpack.c.l.b16 %v7474
        %v7796 = vunpack.c.h.b16 %v7474
        %v7797 = vunpack.c.l.b16 %v7475
        %v7798 = vunpack.c.h.b16 %v7475
        %v7799 = vunpack.c.l.b16 %v7476
        %v7800 = vunpack.c.h.b16 %v7476
        %v7801 = vunpack.c.l.b16 %v7477
        %v7802 = vunpack.c.h.b16 %v7477
        %v7803 = vunpack.c.l.b16 %v7478
        %v7804 = vunpack.c.h.b16 %v7478
        %v7805 = vunpack.c.l.b16 %v7479
        %v7806 = vunpack.c.h.b16 %v7479
        %v7807 = vunpack.c.l.b16 %v7480
        %v7808 = vunpack.c.h.b16 %v7480
        %v7809 = vunpack.c.l.b16 %v7481
        %v7810 = vunpack.c.h.b16 %v7481
        %v7811 = vunpack.c.l.b16 %v7482
        %v7812 = vunpack.c.h.b16 %v7482
        %v7813 = vunpack.c.l.b16 %v7483
        %v7814 = vunpack.c.h.b16 %v7483
        %v7815 = vunpack.c.l.b16 %v7484
        %v7816 = vunpack.c.h.b16 %v7484
        %v7817 = vunpack.c.l.b16 %v7485
        %v7818 = vunpack.c.h.b16 %v7485
        %v7819 = vunpack.c.l.b16 %v7486
        %v7820 = vunpack.c.h.b16 %v7486
        %v7821 = vunpack.c.l.b16 %v7487
        %v7822 = vunpack.c.h.b16 %v7487
        %v7823 = vunpack.c.l.b16 %v7488
        %v7824 = vunpack.c.h.b16 %v7488
        %v7825 = vunpack.c.l.b16 %v7489
        %v7826 = vunpack.c.h.b16 %v7489
        %v7827 = vunpack.c.l.b16 %v7490
        %v7828 = vunpack.c.h.b16 %v7490
        %v7829 = vunpack.c.l.b16 %v7491
        %v7830 = vunpack.c.h.b16 %v7491
        %v7831 = vunpack.c.l.b16 %v7492
        %v7832 = vunpack.c.h.b16 %v7492
        %v7833 = vunpack.c.l.b16 %v7493
        %v7834 = vunpack.c.h.b16 %v7493
        %v7835 = vunpack.c.l.b16 %v7494
        %v7836 = vunpack.c.h.b16 %v7494
        %v7837 = vunpack.c.l.b16 %v7495
        %v7838 = vunpack.c.h.b16 %v7495
        %v7839 = vunpack.c.l.b16 %v7496
        %v7840 = vunpack.c.h.b16 %v7496
        %v7841 = vunpack.c.l.b16 %v7497
        %v7842 = vunpack.c.h.b16 %v7497
        %v7843 = vunpack.c.l.b16 %v7498
        %v7844 = vunpack.c.h.b16 %v7498
        %v7845 = vunpack.c.l.b16 %v7499
        %v7846 = vunpack.c.h.b16 %v7499
        %v7847 = vunpack.c.l.b16 %v7500
        %v7848 = vunpack.c.h.b16 %v7500
        %v7849 = vunpack.c.l.b16 %v7501
        %v7850 = vunpack.c.h.b16 %v7501
        %v7851 = vunpack.c.l.b16 %v7502
        %v7852 = vunpack.c.h.b16 %v7502
        %v7853 = vunpack.c.l.b16 %v7503
        %v7854 = vunpack.c.h.b16 %v7503
        %v7855 = vunpack.c.l.b16 %v7504
        %v7856 = vunpack.c.h.b16 %v7504
        %v7857 = vunpack.c.l.b16 %v7505
        %v7858 = vunpack.c.h.b16 %v7505
        %v7859 = vunpack.c.l.b16 %v7506
        %v7860 = vunpack.c.h.b16 %v7506
        %v7861 = vunpack.c.l.b16 %v7507
        %v7862 = vunpack.c.h.b16 %v7507
        %v7863 = vunpack.c.l.b16 %v7508
        %v7864 = vunpack.c.h.b16 %v7508
        %v7865 = vunpack.c.l.b16 %v7509
        %v7866 = vunpack.c.h.b16 %v7509
        %v7867 = vunpack.c.l.b16 %v7510
        %v7868 = vunpack.c.h.b16 %v7510
        %v7869 = vunpack.c.l.b16 %v7511
        %v7870 = vunpack.c.h.b16 %v7511
        %v7871 = vunpack.c.l.b16 %v7512
        %v7872 = vunpack.c.h.b16 %v7512
        %v7873 = vunpack.c.l.b16 %v7513
        %v7874 = vunpack.c.h.b16 %v7513
        %v7875 = vpack.c.b16 %v7749, %v7747
        %v7876 = vpack.c.b16 %v7750, %v7748
        %v7877 = vpack.c.b16 %v7753, %v7751
        %v7878 = vpack.c.b16 %v7754, %v7752
        %v7879 = vpack.c.b16 %v7757, %v7755
        %v7880 = vpack.c.b16 %v7758, %v7756
        %v7881 = vpack.c.b16 %v7761, %v7759
        %v7882 = vpack.c.b16 %v7762, %v7760
        %v7883 = vpack.c.b16 %v7765, %v7763
        %v7884 = vpack.c.b16 %v7766, %v7764
        %v7885 = vpack.c.b16 %v7769, %v7767
        %v7886 = vpack.c.b16 %v7770, %v7768
        %v7887 = vpack.c.b16 %v7773, %v7771
        %v7888 = vpack.c.b16 %v7774, %v7772
        %v7889 = vpack.c.b16 %v7777, %v7775
        %v7890 = vpack.c.b16 %v7778, %v7776
        %v7891 = vpack.c.b16 %v7781, %v7779
        %v7892 = vpack.c.b16 %v7782, %v7780
        %v7893 = vpack.c.b16 %v7785, %v7783
        %v7894 = vpack.c.b16 %v7786, %v7784
        %v7895 = vpack.c.b16 %v7789, %v7787
        %v7896 = vpack.c.b16 %v7790, %v7788
        %v7897 = vpack.c.b16 %v7793, %v7791
        %v7898 = vpack.c.b16 %v7794, %v7792
        %v7899 = vpack.c.b16 %v7797, %v7795
        %v7900 = vpack.c.b16 %v7798, %v7796
        %v7901 = vpack.c.b16 %v7801, %v7799
        %v7902 = vpack.c.b16 %v7802, %v7800
        %v7903 = vpack.c.b16 %v7805, %v7803
        %v7904 = vpack.c.b16 %v7806, %v7804
        %v7905 = vpack.c.b16 %v7809, %v7807
        %v7906 = vpack.c.b16 %v7810, %v7808
        %v7907 = vpack.c.b16 %v7813, %v7811
        %v7908 = vpack.c.b16 %v7814, %v7812
        %v7909 = vpack.c.b16 %v7817, %v7815
        %v7910 = vpack.c.b16 %v7818, %v7816
        %v7911 = vpack.c.b16 %v7821, %v7819
        %v7912 = vpack.c.b16 %v7822, %v7820
        %v7913 = vpack.c.b16 %v7825, %v7823
        %v7914 = vpack.c.b16 %v7826, %v7824
        %v7915 = vpack.c.b16 %v7829, %v7827
        %v7916 = vpack.c.b16 %v7830, %v7828
        %v7917 = vpack.c.b16 %v7833, %v7831
        %v7918 = vpack.c.b16 %v7834, %v7832
        %v7919 = vpack.c.b16 %v7837, %v7835
        %v7920 = vpack.c.b16 %v7838, %v7836
        %v7921 = vpack.c.b16 %v7841, %v7839
        %v7922 = vpack.c.b16 %v7842, %v7840
        %v7923 = vpack.c.b16 %v7845, %v7843
        %v7924 = vpack.c.b16 %v7846, %v7844
        %v7925 = vpack.c.b16 %v7849, %v7847
        %v7926 = vpack.c.b16 %v7850, %v7848
        %v7927 = vpack.c.b16 %v7853, %v7851
        %v7928 = vpack.c.b16 %v7854, %v7852
        %v7929 = vpack.c.b16 %v7857, %v7855
        %v7930 = vpack.c.b16 %v7858, %v7856
        %v7931 = vpack.c.b16 %v7861, %v7859
        %v7932 = vpack.c.b16 %v7862, %v7860
        %v7933 = vpack.c.b16 %v7865, %v7863
        %v7934 = vpack.c.b16 %v7866, %v7864
        %v7935 = vpack.c.b16 %v7869, %v7867
        %v7936 = vpack.c.b16 %v7870, %v7868
        %v7937 = vpack.c.b16 %v7873, %v7871
        %v7938 = vpack.c.b16 %v7874, %v7872
        %8003 = vmatpush.bf16.msra.mxu0 %v7889
        %8004 = vmatpush.bf16.msra.mxu0 %v7887
        %8005 = vmatpush.bf16.msra.mxu0 %v7885
        %8006 = vmatpush.bf16.msra.mxu0 %v7883
        %8007 = vmatpush.bf16.msra.mxu0 %v7881
        %8008 = vmatpush.bf16.msra.mxu0 %v7879
        %8009 = vmatpush.bf16.msra.mxu0 %v7877
        %8010 = vmatpush.bf16.msra.mxu0 %v7875
        %8011 = vmatmul.bf16.gmra.mxu0 %v7585
        %v8012 = vpop.f32.mrf.mxu0
        %v8013 = vadd.f32 0.0, %v8012
        %v8014 = vpop.f32.mrf.mxu0
        %v8015 = vadd.f32 0.0, %v8014
        %8016 = vmatmul.bf16.gmra.mxu0 %v7596
        %v8017 = vpop.f32.mrf.mxu0
        %v8018 = vadd.f32 0.0, %v8017
        %v8019 = vpop.f32.mrf.mxu0
        %v8020 = vadd.f32 0.0, %v8019
        %8021 = vmatmul.bf16.gmra.mxu0 %v7604
        %v8022 = vpop.f32.mrf.mxu0
        %v8023 = vadd.f32 0.0, %v8022
        %v8024 = vpop.f32.mrf.mxu0
        %v8025 = vadd.f32 0.0, %v8024
        %8026 = vmatmul.bf16.gmra.mxu0 %v7612
        %v8027 = vpop.f32.mrf.mxu0
        %v8028 = vadd.f32 0.0, %v8027
        %v8029 = vpop.f32.mrf.mxu0
        %v8030 = vadd.f32 0.0, %v8029
        %8031 = vmatmul.bf16.gmra.mxu0 %v7620
        %v8032 = vpop.f32.mrf.mxu0
        %v8033 = vadd.f32 0.0, %v8032
        %v8034 = vpop.f32.mrf.mxu0
        %v8035 = vadd.f32 0.0, %v8034
        %8036 = vmatmul.bf16.gmra.mxu0 %v7628
        %v8037 = vpop.f32.mrf.mxu0
        %v8038 = vadd.f32 0.0, %v8037
        %v8039 = vpop.f32.mrf.mxu0
        %v8040 = vadd.f32 0.0, %v8039
        %8041 = vmatmul.bf16.gmra.mxu0 %v7636
        %v8042 = vpop.f32.mrf.mxu0
        %v8043 = vadd.f32 0.0, %v8042
        %v8044 = vpop.f32.mrf.mxu0
        %v8045 = vadd.f32 0.0, %v8044
        %8046 = vmatmul.bf16.gmra.mxu0 %v7644
        %v8047 = vpop.f32.mrf.mxu0
        %v8048 = vadd.f32 0.0, %v8047
        %v8049 = vpop.f32.mrf.mxu0
        %v8050 = vadd.f32 0.0, %v8049
        %8051 = vdwg.mxu0
        %8052 = vmatpush.bf16.msra.mxu0 %v7905
        %8053 = vmatpush.bf16.msra.mxu0 %v7903
        %8054 = vmatpush.bf16.msra.mxu0 %v7901
        %8055 = vmatpush.bf16.msra.mxu0 %v7899
        %8056 = vmatpush.bf16.msra.mxu0 %v7897
        %8057 = vmatpush.bf16.msra.mxu0 %v7895
        %8058 = vmatpush.bf16.msra.mxu0 %v7893
        %8059 = vmatpush.bf16.msra.mxu0 %v7891
        %8060 = vmatmul.bf16.gmra.mxu0 %v7588
        %v8061 = vpop.f32.mrf.mxu0
        %v8062 = vadd.f32 %v8013, %v8061
        %v8063 = vpop.f32.mrf.mxu0
        %v8064 = vadd.f32 %v8015, %v8063
        %8065 = vmatmul.bf16.gmra.mxu0 %v7598
        %v8066 = vpop.f32.mrf.mxu0
        %v8067 = vadd.f32 %v8018, %v8066
        %v8068 = vpop.f32.mrf.mxu0
        %v8069 = vadd.f32 %v8020, %v8068
        %8070 = vmatmul.bf16.gmra.mxu0 %v7606
        %v8071 = vpop.f32.mrf.mxu0
        %v8072 = vadd.f32 %v8023, %v8071
        %v8073 = vpop.f32.mrf.mxu0
        %v8074 = vadd.f32 %v8025, %v8073
        %8075 = vmatmul.bf16.gmra.mxu0 %v7614
        %v8076 = vpop.f32.mrf.mxu0
        %v8077 = vadd.f32 %v8028, %v8076
        %v8078 = vpop.f32.mrf.mxu0
        %v8079 = vadd.f32 %v8030, %v8078
        %8080 = vmatmul.bf16.gmra.mxu0 %v7622
        %v8081 = vpop.f32.mrf.mxu0
        %v8082 = vadd.f32 %v8033, %v8081
        %v8083 = vpop.f32.mrf.mxu0
        %v8084 = vadd.f32 %v8035, %v8083
        %8085 = vmatmul.bf16.gmra.mxu0 %v7630
        %v8086 = vpop.f32.mrf.mxu0
        %v8087 = vadd.f32 %v8038, %v8086
        %v8088 = vpop.f32.mrf.mxu0
        %v8089 = vadd.f32 %v8040, %v8088
        %8090 = vmatmul.bf16.gmra.mxu0 %v7638
        %v8091 = vpop.f32.mrf.mxu0
        %v8092 = vadd.f32 %v8043, %v8091
        %v8093 = vpop.f32.mrf.mxu0
        %v8094 = vadd.f32 %v8045, %v8093
        %8095 = vmatmul.bf16.gmra.mxu0 %v7646
        %v8096 = vpop.f32.mrf.mxu0
        %v8097 = vadd.f32 %v8048, %v8096
        %v8098 = vpop.f32.mrf.mxu0
        %v8099 = vadd.f32 %v8050, %v8098
        %8100 = vdwg.mxu0
        %8101 = vmatpush.bf16.msra.mxu0 %v7921
        %8102 = vmatpush.bf16.msra.mxu0 %v7919
        %8103 = vmatpush.bf16.msra.mxu0 %v7917
        %8104 = vmatpush.bf16.msra.mxu0 %v7915
        %8105 = vmatpush.bf16.msra.mxu0 %v7913
        %8106 = vmatpush.bf16.msra.mxu0 %v7911
        %8107 = vmatpush.bf16.msra.mxu0 %v7909
        %8108 = vmatpush.bf16.msra.mxu0 %v7907
        %8109 = vmatmul.bf16.gmra.mxu0 %v7591
        %v8110 = vpop.f32.mrf.mxu0
        %v8111 = vadd.f32 %v8062, %v8110
        %v8112 = vpop.f32.mrf.mxu0
        %v8113 = vadd.f32 %v8064, %v8112
        %8114 = vmatmul.bf16.gmra.mxu0 %v7600
        %v8115 = vpop.f32.mrf.mxu0
        %v8116 = vadd.f32 %v8067, %v8115
        %v8117 = vpop.f32.mrf.mxu0
        %v8118 = vadd.f32 %v8069, %v8117
        %8119 = vmatmul.bf16.gmra.mxu0 %v7608
        %v8120 = vpop.f32.mrf.mxu0
        %v8121 = vadd.f32 %v8072, %v8120
        %v8122 = vpop.f32.mrf.mxu0
        %v8123 = vadd.f32 %v8074, %v8122
        %8124 = vmatmul.bf16.gmra.mxu0 %v7616
        %v8125 = vpop.f32.mrf.mxu0
        %v8126 = vadd.f32 %v8077, %v8125
        %v8127 = vpop.f32.mrf.mxu0
        %v8128 = vadd.f32 %v8079, %v8127
        %8129 = vmatmul.bf16.gmra.mxu0 %v7624
        %v8130 = vpop.f32.mrf.mxu0
        %v8131 = vadd.f32 %v8082, %v8130
        %v8132 = vpop.f32.mrf.mxu0
        %v8133 = vadd.f32 %v8084, %v8132
        %8134 = vmatmul.bf16.gmra.mxu0 %v7632
        %v8135 = vpop.f32.mrf.mxu0
        %v8136 = vadd.f32 %v8087, %v8135
        %v8137 = vpop.f32.mrf.mxu0
        %v8138 = vadd.f32 %v8089, %v8137
        %8139 = vmatmul.bf16.gmra.mxu0 %v7640
        %v8140 = vpop.f32.mrf.mxu0
        %v8141 = vadd.f32 %v8092, %v8140
        %v8142 = vpop.f32.mrf.mxu0
        %v8143 = vadd.f32 %v8094, %v8142
        %8144 = vmatmul.bf16.gmra.mxu0 %v7648
        %v8145 = vpop.f32.mrf.mxu0
        %v8146 = vadd.f32 %v8097, %v8145
        %v8147 = vpop.f32.mrf.mxu0
        %v8148 = vadd.f32 %v8099, %v8147
        %8149 = vdwg.mxu0
        %8150 = vmatpush.bf16.msra.mxu0 %v7937
        %8151 = vmatpush.bf16.msra.mxu0 %v7935
        %8152 = vmatpush.bf16.msra.mxu0 %v7933
        %8153 = vmatpush.bf16.msra.mxu0 %v7931
        %8154 = vmatpush.bf16.msra.mxu0 %v7929
        %8155 = vmatpush.bf16.msra.mxu0 %v7927
        %8156 = vmatpush.bf16.msra.mxu0 %v7925
        %8157 = vmatpush.bf16.msra.mxu0 %v7923
        %8158 = vmatmul.bf16.gmra.mxu0 %v7594
        %v8159 = vpop.f32.mrf.mxu0
        %v8160 = vadd.f32 %v8111, %v8159
        %v8161 = vpop.f32.mrf.mxu0
        %v8162 = vadd.f32 %v8113, %v8161
        %8163 = vmatmul.bf16.gmra.mxu0 %v7602
        %v8164 = vpop.f32.mrf.mxu0
        %v8165 = vadd.f32 %v8116, %v8164
        %v8166 = vpop.f32.mrf.mxu0
        %v8167 = vadd.f32 %v8118, %v8166
        %8168 = vmatmul.bf16.gmra.mxu0 %v7610
        %v8169 = vpop.f32.mrf.mxu0
        %v8170 = vadd.f32 %v8121, %v8169
        %v8171 = vpop.f32.mrf.mxu0
        %v8172 = vadd.f32 %v8123, %v8171
        %8173 = vmatmul.bf16.gmra.mxu0 %v7618
        %v8174 = vpop.f32.mrf.mxu0
        %v8175 = vadd.f32 %v8126, %v8174
        %v8176 = vpop.f32.mrf.mxu0
        %v8177 = vadd.f32 %v8128, %v8176
        %8178 = vmatmul.bf16.gmra.mxu0 %v7626
        %v8179 = vpop.f32.mrf.mxu0
        %v8180 = vadd.f32 %v8131, %v8179
        %v8181 = vpop.f32.mrf.mxu0
        %v8182 = vadd.f32 %v8133, %v8181
        %8183 = vmatmul.bf16.gmra.mxu0 %v7634
        %v8184 = vpop.f32.mrf.mxu0
        %v8185 = vadd.f32 %v8136, %v8184
        %v8186 = vpop.f32.mrf.mxu0
        %v8187 = vadd.f32 %v8138, %v8186
        %8188 = vmatmul.bf16.gmra.mxu0 %v7642
        %v8189 = vpop.f32.mrf.mxu0
        %v8190 = vadd.f32 %v8141, %v8189
        %v8191 = vpop.f32.mrf.mxu0
        %v8192 = vadd.f32 %v8143, %v8191
        %8193 = vmatmul.bf16.gmra.mxu0 %v7650
        %v8194 = vpop.f32.mrf.mxu0
        %v8195 = vadd.f32 %v8146, %v8194
        %v8196 = vpop.f32.mrf.mxu0
        %v8197 = vadd.f32 %v8148, %v8196
        %8198 = vdwg.mxu0
        %8199 = vmatpush.bf16.msra.mxu0 %v7890
        %8200 = vmatpush.bf16.msra.mxu0 %v7888
        %8201 = vmatpush.bf16.msra.mxu0 %v7886
        %8202 = vmatpush.bf16.msra.mxu0 %v7884
        %8203 = vmatpush.bf16.msra.mxu0 %v7882
        %8204 = vmatpush.bf16.msra.mxu0 %v7880
        %8205 = vmatpush.bf16.msra.mxu0 %v7878
        %8206 = vmatpush.bf16.msra.mxu0 %v7876
        %8207 = vmatmul.bf16.gmra.mxu0 %v7585
        %v8208 = vpop.f32.mrf.mxu0
        %v8209 = vadd.f32 0.0, %v8208
        %v8210 = vpop.f32.mrf.mxu0
        %v8211 = vadd.f32 0.0, %v8210
        %8212 = vmatmul.bf16.gmra.mxu0 %v7596
        %v8213 = vpop.f32.mrf.mxu0
        %v8214 = vadd.f32 0.0, %v8213
        %v8215 = vpop.f32.mrf.mxu0
        %v8216 = vadd.f32 0.0, %v8215
        %8217 = vmatmul.bf16.gmra.mxu0 %v7604
        %v8218 = vpop.f32.mrf.mxu0
        %v8219 = vadd.f32 0.0, %v8218
        %v8220 = vpop.f32.mrf.mxu0
        %v8221 = vadd.f32 0.0, %v8220
        %8222 = vmatmul.bf16.gmra.mxu0 %v7612
        %v8223 = vpop.f32.mrf.mxu0
        %v8224 = vadd.f32 0.0, %v8223
        %v8225 = vpop.f32.mrf.mxu0
        %v8226 = vadd.f32 0.0, %v8225
        %8227 = vmatmul.bf16.gmra.mxu0 %v7620
        %v8228 = vpop.f32.mrf.mxu0
        %v8229 = vadd.f32 0.0, %v8228
        %v8230 = vpop.f32.mrf.mxu0
        %v8231 = vadd.f32 0.0, %v8230
        %8232 = vmatmul.bf16.gmra.mxu0 %v7628
        %v8233 = vpop.f32.mrf.mxu0
        %v8234 = vadd.f32 0.0, %v8233
        %v8235 = vpop.f32.mrf.mxu0
        %v8236 = vadd.f32 0.0, %v8235
        %8237 = vmatmul.bf16.gmra.mxu0 %v7636
        %v8238 = vpop.f32.mrf.mxu0
        %v8239 = vadd.f32 0.0, %v8238
        %v8240 = vpop.f32.mrf.mxu0
        %v8241 = vadd.f32 0.0, %v8240
        %8242 = vmatmul.bf16.gmra.mxu0 %v7644
        %v8243 = vpop.f32.mrf.mxu0
        %v8244 = vadd.f32 0.0, %v8243
        %v8245 = vpop.f32.mrf.mxu0
        %v8246 = vadd.f32 0.0, %v8245
        %8247 = vdwg.mxu0
        %8248 = vmatpush.bf16.msra.mxu0 %v7906
        %8249 = vmatpush.bf16.msra.mxu0 %v7904
        %8250 = vmatpush.bf16.msra.mxu0 %v7902
        %8251 = vmatpush.bf16.msra.mxu0 %v7900
        %8252 = vmatpush.bf16.msra.mxu0 %v7898
        %8253 = vmatpush.bf16.msra.mxu0 %v7896
        %8254 = vmatpush.bf16.msra.mxu0 %v7894
        %8255 = vmatpush.bf16.msra.mxu0 %v7892
        %8256 = vmatmul.bf16.gmra.mxu0 %v7588
        %v8257 = vpop.f32.mrf.mxu0
        %v8258 = vadd.f32 %v8209, %v8257
        %v8259 = vpop.f32.mrf.mxu0
        %v8260 = vadd.f32 %v8211, %v8259
        %8261 = vmatmul.bf16.gmra.mxu0 %v7598
        %v8262 = vpop.f32.mrf.mxu0
        %v8263 = vadd.f32 %v8214, %v8262
        %v8264 = vpop.f32.mrf.mxu0
        %v8265 = vadd.f32 %v8216, %v8264
        %8266 = vmatmul.bf16.gmra.mxu0 %v7606
        %v8267 = vpop.f32.mrf.mxu0
        %v8268 = vadd.f32 %v8219, %v8267
        %v8269 = vpop.f32.mrf.mxu0
        %v8270 = vadd.f32 %v8221, %v8269
        %8271 = vmatmul.bf16.gmra.mxu0 %v7614
        %v8272 = vpop.f32.mrf.mxu0
        %v8273 = vadd.f32 %v8224, %v8272
        %v8274 = vpop.f32.mrf.mxu0
        %v8275 = vadd.f32 %v8226, %v8274
        %8276 = vmatmul.bf16.gmra.mxu0 %v7622
        %v8277 = vpop.f32.mrf.mxu0
        %v8278 = vadd.f32 %v8229, %v8277
        %v8279 = vpop.f32.mrf.mxu0
        %v8280 = vadd.f32 %v8231, %v8279
        %8281 = vmatmul.bf16.gmra.mxu0 %v7630
        %v8282 = vpop.f32.mrf.mxu0
        %v8283 = vadd.f32 %v8234, %v8282
        %v8284 = vpop.f32.mrf.mxu0
        %v8285 = vadd.f32 %v8236, %v8284
        %8286 = vmatmul.bf16.gmra.mxu0 %v7638
        %v8287 = vpop.f32.mrf.mxu0
        %v8288 = vadd.f32 %v8239, %v8287
        %v8289 = vpop.f32.mrf.mxu0
        %v8290 = vadd.f32 %v8241, %v8289
        %8291 = vmatmul.bf16.gmra.mxu0 %v7646
        %v8292 = vpop.f32.mrf.mxu0
        %v8293 = vadd.f32 %v8244, %v8292
        %v8294 = vpop.f32.mrf.mxu0
        %v8295 = vadd.f32 %v8246, %v8294
        %8296 = vdwg.mxu0
        %8297 = vmatpush.bf16.msra.mxu0 %v7922
        %8298 = vmatpush.bf16.msra.mxu0 %v7920
        %8299 = vmatpush.bf16.msra.mxu0 %v7918
        %8300 = vmatpush.bf16.msra.mxu0 %v7916
        %8301 = vmatpush.bf16.msra.mxu0 %v7914
        %8302 = vmatpush.bf16.msra.mxu0 %v7912
        %8303 = vmatpush.bf16.msra.mxu0 %v7910
        %8304 = vmatpush.bf16.msra.mxu0 %v7908
        %8305 = vmatmul.bf16.gmra.mxu0 %v7591
        %v8306 = vpop.f32.mrf.mxu0
        %v8307 = vadd.f32 %v8258, %v8306
        %v8308 = vpop.f32.mrf.mxu0
        %v8309 = vadd.f32 %v8260, %v8308
        %8310 = vmatmul.bf16.gmra.mxu0 %v7600
        %v8311 = vpop.f32.mrf.mxu0
        %v8312 = vadd.f32 %v8263, %v8311
        %v8313 = vpop.f32.mrf.mxu0
        %v8314 = vadd.f32 %v8265, %v8313
        %8315 = vmatmul.bf16.gmra.mxu0 %v7608
        %v8316 = vpop.f32.mrf.mxu0
        %v8317 = vadd.f32 %v8268, %v8316
        %v8318 = vpop.f32.mrf.mxu0
        %v8319 = vadd.f32 %v8270, %v8318
        %8320 = vmatmul.bf16.gmra.mxu0 %v7616
        %v8321 = vpop.f32.mrf.mxu0
        %v8322 = vadd.f32 %v8273, %v8321
        %v8323 = vpop.f32.mrf.mxu0
        %v8324 = vadd.f32 %v8275, %v8323
        %8325 = vmatmul.bf16.gmra.mxu0 %v7624
        %v8326 = vpop.f32.mrf.mxu0
        %v8327 = vadd.f32 %v8278, %v8326
        %v8328 = vpop.f32.mrf.mxu0
        %v8329 = vadd.f32 %v8280, %v8328
        %8330 = vmatmul.bf16.gmra.mxu0 %v7632
        %v8331 = vpop.f32.mrf.mxu0
        %v8332 = vadd.f32 %v8283, %v8331
        %v8333 = vpop.f32.mrf.mxu0
        %v8334 = vadd.f32 %v8285, %v8333
        %8335 = vmatmul.bf16.gmra.mxu0 %v7640
        %v8336 = vpop.f32.mrf.mxu0
        %v8337 = vadd.f32 %v8288, %v8336
        %v8338 = vpop.f32.mrf.mxu0
        %v8339 = vadd.f32 %v8290, %v8338
        %8340 = vmatmul.bf16.gmra.mxu0 %v7648
        %v8341 = vpop.f32.mrf.mxu0
        %v8342 = vadd.f32 %v8293, %v8341
        %v8343 = vpop.f32.mrf.mxu0
        %v8344 = vadd.f32 %v8295, %v8343
        %8345 = vdwg.mxu0
        %8346 = vmatpush.bf16.msra.mxu0 %v7938
        %8347 = vmatpush.bf16.msra.mxu0 %v7936
        %8348 = vmatpush.bf16.msra.mxu0 %v7934
        %8349 = vmatpush.bf16.msra.mxu0 %v7932
        %8350 = vmatpush.bf16.msra.mxu0 %v7930
        %8351 = vmatpush.bf16.msra.mxu0 %v7928
        %8352 = vmatpush.bf16.msra.mxu0 %v7926
        %8353 = vmatpush.bf16.msra.mxu0 %v7924
        %8354 = vmatmul.bf16.gmra.mxu0 %v7594
        %v8355 = vpop.f32.mrf.mxu0
        %v8356 = vadd.f32 %v8307, %v8355
        %v8357 = vpop.f32.mrf.mxu0
        %v8358 = vadd.f32 %v8309, %v8357
        %8359 = vmatmul.bf16.gmra.mxu0 %v7602
        %v8360 = vpop.f32.mrf.mxu0
        %v8361 = vadd.f32 %v8312, %v8360
        %v8362 = vpop.f32.mrf.mxu0
        %v8363 = vadd.f32 %v8314, %v8362
        %8364 = vmatmul.bf16.gmra.mxu0 %v7610
        %v8365 = vpop.f32.mrf.mxu0
        %v8366 = vadd.f32 %v8317, %v8365
        %v8367 = vpop.f32.mrf.mxu0
        %v8368 = vadd.f32 %v8319, %v8367
        %8369 = vmatmul.bf16.gmra.mxu0 %v7618
        %v8370 = vpop.f32.mrf.mxu0
        %v8371 = vadd.f32 %v8322, %v8370
        %v8372 = vpop.f32.mrf.mxu0
        %v8373 = vadd.f32 %v8324, %v8372
        %8374 = vmatmul.bf16.gmra.mxu0 %v7626
        %v8375 = vpop.f32.mrf.mxu0
        %v8376 = vadd.f32 %v8327, %v8375
        %v8377 = vpop.f32.mrf.mxu0
        %v8378 = vadd.f32 %v8329, %v8377
        %8379 = vmatmul.bf16.gmra.mxu0 %v7634
        %v8380 = vpop.f32.mrf.mxu0
        %v8381 = vadd.f32 %v8332, %v8380
        %v8382 = vpop.f32.mrf.mxu0
        %v8383 = vadd.f32 %v8334, %v8382
        %8384 = vmatmul.bf16.gmra.mxu0 %v7642
        %v8385 = vpop.f32.mrf.mxu0
        %v8386 = vadd.f32 %v8337, %v8385
        %v8387 = vpop.f32.mrf.mxu0
        %v8388 = vadd.f32 %v8339, %v8387
        %8389 = vmatmul.bf16.gmra.mxu0 %v7650
        %v8390 = vpop.f32.mrf.mxu0
        %v8391 = vadd.f32 %v8342, %v8390
        %v8392 = vpop.f32.mrf.mxu0
        %v8393 = vadd.f32 %v8344, %v8392
        %8394 = vdwg.mxu0
        %v8395 = vadd.f32 %v7514, %v8160
        %v8396 = vadd.f32 %v7515, %v8356
        %v8397 = vadd.f32 %v7516, %v8162
        %v8398 = vadd.f32 %v7517, %v8358
        %v8399 = vadd.f32 %v7518, %v8165
        %v8400 = vadd.f32 %v7519, %v8361
        %v8401 = vadd.f32 %v7520, %v8167
        %v8402 = vadd.f32 %v7521, %v8363
        %v8403 = vadd.f32 %v7522, %v8170
        %v8404 = vadd.f32 %v7523, %v8366
        %v8405 = vadd.f32 %v7524, %v8172
        %v8406 = vadd.f32 %v7525, %v8368
        %v8407 = vadd.f32 %v7526, %v8175
        %v8408 = vadd.f32 %v7527, %v8371
        %v8409 = vadd.f32 %v7528, %v8177
        %v8410 = vadd.f32 %v7529, %v8373
        %v8411 = vadd.f32 %v7530, %v8180
        %v8412 = vadd.f32 %v7531, %v8376
        %v8413 = vadd.f32 %v7532, %v8182
        %v8414 = vadd.f32 %v7533, %v8378
        %v8415 = vadd.f32 %v7534, %v8185
        %v8416 = vadd.f32 %v7535, %v8381
        %v8417 = vadd.f32 %v7536, %v8187
        %v8418 = vadd.f32 %v7537, %v8383
        %v8419 = vadd.f32 %v7538, %v8190
        %v8420 = vadd.f32 %v7539, %v8386
        %v8421 = vadd.f32 %v7540, %v8192
        %v8422 = vadd.f32 %v7541, %v8388
        %v8423 = vadd.f32 %v7542, %v8195
        %v8424 = vadd.f32 %v7543, %v8391
        %v8425 = vadd.f32 %v7544, %v8197
        %v8426 = vadd.f32 %v7545, %v8393
        %8427 = vst [vmem:[#allocation2] sm:$0xff] %v8395
        %8428 = vst [vmem:[#allocation2 + $0x8] sm:$0xff] %v8396
        %8429 = vst [vmem:[#allocation2 + $0x10] sm:$0xff] %v8397
        %8430 = vst [vmem:[#allocation2 + $0x18] sm:$0xff] %v8398
        %8431 = vst [vmem:[#allocation2 + $0x20] sm:$0xff] %v8399
        %8432 = vst [vmem:[#allocation2 + $0x28] sm:$0xff] %v8400
        %8433 = vst [vmem:[#allocation2 + $0x30] sm:$0xff] %v8401
        %8434 = vst [vmem:[#allocation2 + $0x38] sm:$0xff] %v8402
        %8435 = vst [vmem:[#allocation2 + $0x40] sm:$0xff] %v8403
        %8436 = vst [vmem:[#allocation2 + $0x48] sm:$0xff] %v8404
        %8437 = vst [vmem:[#allocation2 + $0x50] sm:$0xff] %v8405
        %8438 = vst [vmem:[#allocation2 + $0x58] sm:$0xff] %v8406
        %8439 = vst [vmem:[#allocation2 + $0x60] sm:$0xff] %v8407
        %8440 = vst [vmem:[#allocation2 + $0x68] sm:$0xff] %v8408
        %8441 = vst [vmem:[#allocation2 + $0x70] sm:$0xff] %v8409
        %8442 = vst [vmem:[#allocation2 + $0x78] sm:$0xff] %v8410
        %8443 = vst [vmem:[#allocation2 + $0x80] sm:$0xff] %v8411
        %8444 = vst [vmem:[#allocation2 + $0x88] sm:$0xff] %v8412
        %8445 = vst [vmem:[#allocation2 + $0x90] sm:$0xff] %v8413
        %8446 = vst [vmem:[#allocation2 + $0x98] sm:$0xff] %v8414
        %8447 = vst [vmem:[#allocation2 + $0xa0] sm:$0xff] %v8415
        %8448 = vst [vmem:[#allocation2 + $0xa8] sm:$0xff] %v8416
        %8449 = vst [vmem:[#allocation2 + $0xb0] sm:$0xff] %v8417
        %8450 = vst [vmem:[#allocation2 + $0xb8] sm:$0xff] %v8418
        %8451 = vst [vmem:[#allocation2 + $0xc0] sm:$0xff] %v8419
        %8452 = vst [vmem:[#allocation2 + $0xc8] sm:$0xff] %v8420
        %8453 = vst [vmem:[#allocation2 + $0xd0] sm:$0xff] %v8421
        %8454 = vst [vmem:[#allocation2 + $0xd8] sm:$0xff] %v8422
        %8455 = vst [vmem:[#allocation2 + $0xe0] sm:$0xff] %v8423
        %8456 = vst [vmem:[#allocation2 + $0xe8] sm:$0xff] %v8424
        %8457 = vst [vmem:[#allocation2 + $0xf0] sm:$0xff] %v8425
        %8458 = vst [vmem:[#allocation2 + $0xf8] sm:$0xff] %v8426
        %v8459 = vld [vmem:[%s154] sm:$0x80]
        %v8460 = vld [vmem:[%s154 + $0x8] sm:$0x80]
        %v8461 = vld [vmem:[%s154 + $0x10] sm:$0x80]
        %v8462 = vld [vmem:[%s154 + $0x18] sm:$0x80]
        %v8463 = vld [vmem:[%s154 + $0x20] sm:$0xff]
        %v8464 = vld [vmem:[%s154 + $0x28] sm:$0xff]
        %v8465 = vld [vmem:[%s154 + $0x30] sm:$0xff]
        %v8466 = vld [vmem:[%s154 + $0x38] sm:$0xff]
        %v8467 = vld [vmem:[%s154 + $0x40] sm:$0xff]
        %v8468 = vld [vmem:[%s154 + $0x48] sm:$0xff]
        %v8469 = vld [vmem:[%s154 + $0x50] sm:$0xff]
        %v8470 = vld [vmem:[%s154 + $0x58] sm:$0xff]
        %v8471 = vld [vmem:[%s154 + $0x60] sm:$0xff]
        %v8472 = vld [vmem:[%s154 + $0x68] sm:$0xff]
        %v8473 = vld [vmem:[%s154 + $0x70] sm:$0xff]
        %v8474 = vld [vmem:[%s154 + $0x78] sm:$0xff]
        %v8475 = vld [vmem:[%s154 + $0x80] sm:$0xff]
        %v8476 = vld [vmem:[%s154 + $0x88] sm:$0xff]
        %v8477 = vld [vmem:[%s154 + $0x90] sm:$0xff]
        %v8478 = vld [vmem:[%s154 + $0x98] sm:$0xff]
        %v8479 = vld [vmem:[%s154 + $0xa0] sm:$0xff]
        %v8480 = vld [vmem:[%s154 + $0xa8] sm:$0xff]
        %v8481 = vld [vmem:[%s154 + $0xb0] sm:$0xff]
        %v8482 = vld [vmem:[%s154 + $0xb8] sm:$0xff]
        %v8483 = vld [vmem:[%s154 + $0xc0] sm:$0xff]
        %v8484 = vld [vmem:[%s154 + $0xc8] sm:$0xff]
        %v8485 = vld [vmem:[%s154 + $0xd0] sm:$0xff]
        %v8486 = vld [vmem:[%s154 + $0xd8] sm:$0xff]
        %v8487 = vld [vmem:[%s154 + $0xe0] sm:$0xff]
        %v8488 = vld [vmem:[%s154 + $0xe8] sm:$0xff]
        %v8489 = vld [vmem:[%s154 + $0xf0] sm:$0xff]
        %v8490 = vld [vmem:[%s154 + $0xf8] sm:$0xff]
        %v8491 = vld [vmem:[%s154 + $0x100] sm:$0xff]
        %v8492 = vld [vmem:[%s154 + $0x108] sm:$0xff]
        %v8493 = vld [vmem:[%s154 + $0x110] sm:$0xff]
        %v8494 = vld [vmem:[%s154 + $0x118] sm:$0xff]
        %v8495 = vld [vmem:[%s154 + $0x120] sm:$0xff]
        %v8496 = vld [vmem:[%s154 + $0x128] sm:$0xff]
        %v8497 = vld [vmem:[%s154 + $0x130] sm:$0xff]
        %v8498 = vld [vmem:[%s154 + $0x138] sm:$0xff]
        %v8499 = vld [vmem:[%s154 + $0x140] sm:$0xff]
        %v8500 = vld [vmem:[%s154 + $0x148] sm:$0xff]
        %v8501 = vld [vmem:[%s154 + $0x150] sm:$0xff]
        %v8502 = vld [vmem:[%s154 + $0x158] sm:$0xff]
        %v8503 = vld [vmem:[%s154 + $0x160] sm:$0xff]
        %v8504 = vld [vmem:[%s154 + $0x168] sm:$0xff]
        %v8505 = vld [vmem:[%s154 + $0x170] sm:$0xff]
        %v8506 = vld [vmem:[%s154 + $0x178] sm:$0xff]
        %v8507 = vld [vmem:[%s154 + $0x180] sm:$0xff]
        %v8508 = vld [vmem:[%s154 + $0x188] sm:$0xff]
        %v8509 = vld [vmem:[%s154 + $0x190] sm:$0xff]
        %v8510 = vld [vmem:[%s154 + $0x198] sm:$0xff]
        %v8511 = vld [vmem:[%s154 + $0x1a0] sm:$0xff]
        %v8512 = vld [vmem:[%s154 + $0x1a8] sm:$0xff]
        %v8513 = vld [vmem:[%s154 + $0x1b0] sm:$0xff]
        %v8514 = vld [vmem:[%s154 + $0x1b8] sm:$0xff]
        %v8515 = vld [vmem:[%s154 + $0x1c0] sm:$0xff]
        %v8516 = vld [vmem:[%s154 + $0x1c8] sm:$0xff]
        %v8517 = vld [vmem:[%s154 + $0x1d0] sm:$0xff]
        %v8518 = vld [vmem:[%s154 + $0x1d8] sm:$0xff]
        %v8519 = vld [vmem:[%s154 + $0x1e0] sm:$0xff]
        %v8520 = vld [vmem:[%s154 + $0x1e8] sm:$0xff]
        %v8521 = vld [vmem:[%s154 + $0x1f0] sm:$0xff]
        %v8522 = vld [vmem:[%s154 + $0x1f8] sm:$0xff]
        %v8523 = vld [vmem:[%s154 + $0x200] sm:$0x7f]
        %v8524 = vld [vmem:[%s154 + $0x208] sm:$0x7f]
        %v8525 = vld [vmem:[%s154 + $0x210] sm:$0x7f]
        %v8526 = vld [vmem:[%s154 + $0x218] sm:$0x7f]
        %v8527 = vpack.c.bf16 %v8463, %v8459
        %v8528 = vpack.c.bf16 %v8464, %v8460
        %v8529 = vpack.c.bf16 %v8465, %v8461
        %v8530 = vpack.c.bf16 %v8466, %v8462
        %v8531 = vpack.c.bf16 %v8471, %v8467
        %v8532 = vpack.c.bf16 %v8472, %v8468
        %v8533 = vpack.c.bf16 %v8473, %v8469
        %v8534 = vpack.c.bf16 %v8474, %v8470
        %v8535 = vpack.c.bf16 %v8479, %v8475
        %v8536 = vpack.c.bf16 %v8480, %v8476
        %v8537 = vpack.c.bf16 %v8481, %v8477
        %v8538 = vpack.c.bf16 %v8482, %v8478
        %v8539 = vpack.c.bf16 %v8487, %v8483
        %v8540 = vpack.c.bf16 %v8488, %v8484
        %v8541 = vpack.c.bf16 %v8489, %v8485
        %v8542 = vpack.c.bf16 %v8490, %v8486
        %v8543 = vpack.c.bf16 %v8495, %v8491
        %v8544 = vpack.c.bf16 %v8496, %v8492
        %v8545 = vpack.c.bf16 %v8497, %v8493
        %v8546 = vpack.c.bf16 %v8498, %v8494
        %v8547 = vpack.c.bf16 %v8503, %v8499
        %v8548 = vpack.c.bf16 %v8504, %v8500
        %v8549 = vpack.c.bf16 %v8505, %v8501
        %v8550 = vpack.c.bf16 %v8506, %v8502
        %v8551 = vpack.c.bf16 %v8511, %v8507
        %v8552 = vpack.c.bf16 %v8512, %v8508
        %v8553 = vpack.c.bf16 %v8513, %v8509
        %v8554 = vpack.c.bf16 %v8514, %v8510
        %v8555 = vpack.c.bf16 %v8519, %v8515
        %v8556 = vpack.c.bf16 %v8520, %v8516
        %v8557 = vpack.c.bf16 %v8521, %v8517
        %v8558 = vpack.c.bf16 %v8522, %v8518
        %v8559 = vpack.c.bf16 %v8523, %v8523
        %v8560 = vpack.c.bf16 %v8524, %v8524
        %v8561 = vpack.c.bf16 %v8525, %v8525
        %v8562 = vpack.c.bf16 %v8526, %v8526
        %v8563 = vld [vmem:[#allocation6 + $0xe00] sm:$0xff]
        %v8564 = vld [vmem:[#allocation6 + $0xe08] sm:$0xff]
        %v8565 = vld [vmem:[#allocation6 + $0xe10] sm:$0xff]
        %v8566 = vld [vmem:[#allocation6 + $0xe18] sm:$0xff]
        %v8567 = vld [vmem:[#allocation6 + $0xe20] sm:$0xff]
        %v8568 = vld [vmem:[#allocation6 + $0xe28] sm:$0xff]
        %v8569 = vld [vmem:[#allocation6 + $0xe30] sm:$0xff]
        %v8570 = vld [vmem:[#allocation6 + $0xe38] sm:$0xff]
        %v8571 = vld [vmem:[#allocation6 + $0xe40] sm:$0xff]
        %v8572 = vld [vmem:[#allocation6 + $0xe48] sm:$0xff]
        %v8573 = vld [vmem:[#allocation6 + $0xe50] sm:$0xff]
        %v8574 = vld [vmem:[#allocation6 + $0xe58] sm:$0xff]
        %v8575 = vld [vmem:[#allocation6 + $0xe60] sm:$0xff]
        %v8576 = vld [vmem:[#allocation6 + $0xe68] sm:$0xff]
        %v8577 = vld [vmem:[#allocation6 + $0xe70] sm:$0xff]
        %v8578 = vld [vmem:[#allocation6 + $0xe78] sm:$0xff]
        %v8579 = vld [vmem:[#allocation6 + $0xe80] sm:$0xff]
        %v8580 = vld [vmem:[#allocation6 + $0xe88] sm:$0xff]
        %v8581 = vld [vmem:[#allocation6 + $0xe90] sm:$0xff]
        %v8582 = vld [vmem:[#allocation6 + $0xe98] sm:$0xff]
        %v8583 = vld [vmem:[#allocation6 + $0xea0] sm:$0xff]
        %v8584 = vld [vmem:[#allocation6 + $0xea8] sm:$0xff]
        %v8585 = vld [vmem:[#allocation6 + $0xeb0] sm:$0xff]
        %v8586 = vld [vmem:[#allocation6 + $0xeb8] sm:$0xff]
        %v8587 = vld [vmem:[#allocation6 + $0xec0] sm:$0xff]
        %v8588 = vld [vmem:[#allocation6 + $0xec8] sm:$0xff]
        %v8589 = vld [vmem:[#allocation6 + $0xed0] sm:$0xff]
        %v8590 = vld [vmem:[#allocation6 + $0xed8] sm:$0xff]
        %v8591 = vld [vmem:[#allocation6 + $0xee0] sm:$0xff]
        %v8592 = vld [vmem:[#allocation6 + $0xee8] sm:$0xff]
        %v8593 = vld [vmem:[#allocation6 + $0xef0] sm:$0xff]
        %v8594 = vld [vmem:[#allocation6 + $0xef8] sm:$0xff]
        %v8595 = vld [vmem:[#allocation6 + $0xf00] sm:$0xff]
        %v8596 = vld [vmem:[#allocation6 + $0xf08] sm:$0xff]
        %v8597 = vld [vmem:[#allocation6 + $0xf10] sm:$0xff]
        %v8598 = vld [vmem:[#allocation6 + $0xf18] sm:$0xff]
        %v8599 = vld [vmem:[#allocation6 + $0xf20] sm:$0xff]
        %v8600 = vld [vmem:[#allocation6 + $0xf28] sm:$0xff]
        %v8601 = vld [vmem:[#allocation6 + $0xf30] sm:$0xff]
        %v8602 = vld [vmem:[#allocation6 + $0xf38] sm:$0xff]
        %v8603 = vld [vmem:[#allocation6 + $0xf40] sm:$0xff]
        %v8604 = vld [vmem:[#allocation6 + $0xf48] sm:$0xff]
        %v8605 = vld [vmem:[#allocation6 + $0xf50] sm:$0xff]
        %v8606 = vld [vmem:[#allocation6 + $0xf58] sm:$0xff]
        %v8607 = vld [vmem:[#allocation6 + $0xf60] sm:$0xff]
        %v8608 = vld [vmem:[#allocation6 + $0xf68] sm:$0xff]
        %v8609 = vld [vmem:[#allocation6 + $0xf70] sm:$0xff]
        %v8610 = vld [vmem:[#allocation6 + $0xf78] sm:$0xff]
        %v8611 = vld [vmem:[#allocation6 + $0xf80] sm:$0xff]
        %v8612 = vld [vmem:[#allocation6 + $0xf88] sm:$0xff]
        %v8613 = vld [vmem:[#allocation6 + $0xf90] sm:$0xff]
        %v8614 = vld [vmem:[#allocation6 + $0xf98] sm:$0xff]
        %v8615 = vld [vmem:[#allocation6 + $0xfa0] sm:$0xff]
        %v8616 = vld [vmem:[#allocation6 + $0xfa8] sm:$0xff]
        %v8617 = vld [vmem:[#allocation6 + $0xfb0] sm:$0xff]
        %v8618 = vld [vmem:[#allocation6 + $0xfb8] sm:$0xff]
        %v8619 = vld [vmem:[#allocation6 + $0xfc0] sm:$0xff]
        %v8620 = vld [vmem:[#allocation6 + $0xfc8] sm:$0xff]
        %v8621 = vld [vmem:[#allocation6 + $0xfd0] sm:$0xff]
        %v8622 = vld [vmem:[#allocation6 + $0xfd8] sm:$0xff]
        %v8623 = vld [vmem:[#allocation6 + $0xfe0] sm:$0xff]
        %v8624 = vld [vmem:[#allocation6 + $0xfe8] sm:$0xff]
        %v8625 = vld [vmem:[#allocation6 + $0xff0] sm:$0xff]
        %v8626 = vld [vmem:[#allocation6 + $0xff8] sm:$0xff]
        %v8627 = vld [vmem:[#allocation2] sm:$0xff]
        %v8628 = vld [vmem:[#allocation2 + $0x8] sm:$0xff]
        %v8629 = vld [vmem:[#allocation2 + $0x10] sm:$0xff]
        %v8630 = vld [vmem:[#allocation2 + $0x18] sm:$0xff]
        %v8631 = vld [vmem:[#allocation2 + $0x20] sm:$0xff]
        %v8632 = vld [vmem:[#allocation2 + $0x28] sm:$0xff]
        %v8633 = vld [vmem:[#allocation2 + $0x30] sm:$0xff]
        %v8634 = vld [vmem:[#allocation2 + $0x38] sm:$0xff]
        %v8635 = vld [vmem:[#allocation2 + $0x40] sm:$0xff]
        %v8636 = vld [vmem:[#allocation2 + $0x48] sm:$0xff]
        %v8637 = vld [vmem:[#allocation2 + $0x50] sm:$0xff]
        %v8638 = vld [vmem:[#allocation2 + $0x58] sm:$0xff]
        %v8639 = vld [vmem:[#allocation2 + $0x60] sm:$0xff]
        %v8640 = vld [vmem:[#allocation2 + $0x68] sm:$0xff]
        %v8641 = vld [vmem:[#allocation2 + $0x70] sm:$0xff]
        %v8642 = vld [vmem:[#allocation2 + $0x78] sm:$0xff]
        %v8643 = vld [vmem:[#allocation2 + $0x80] sm:$0xff]
        %v8644 = vld [vmem:[#allocation2 + $0x88] sm:$0xff]
        %v8645 = vld [vmem:[#allocation2 + $0x90] sm:$0xff]
        %v8646 = vld [vmem:[#allocation2 + $0x98] sm:$0xff]
        %v8647 = vld [vmem:[#allocation2 + $0xa0] sm:$0xff]
        %v8648 = vld [vmem:[#allocation2 + $0xa8] sm:$0xff]
        %v8649 = vld [vmem:[#allocation2 + $0xb0] sm:$0xff]
        %v8650 = vld [vmem:[#allocation2 + $0xb8] sm:$0xff]
        %v8651 = vld [vmem:[#allocation2 + $0xc0] sm:$0xff]
        %v8652 = vld [vmem:[#allocation2 + $0xc8] sm:$0xff]
        %v8653 = vld [vmem:[#allocation2 + $0xd0] sm:$0xff]
        %v8654 = vld [vmem:[#allocation2 + $0xd8] sm:$0xff]
        %v8655 = vld [vmem:[#allocation2 + $0xe0] sm:$0xff]
        %v8656 = vld [vmem:[#allocation2 + $0xe8] sm:$0xff]
        %v8657 = vld [vmem:[#allocation2 + $0xf0] sm:$0xff]
        %v8658 = vld [vmem:[#allocation2 + $0xf8] sm:$0xff]
        %vm8659 = vsmask.f32 4352
        %v8661 = vshrl.u32 %v8527, 16
        %v8663 = vrot.slane %v8661, 3
        %v8664 = vshll.u32 %v8527, 16
        %v8666 = vrot.slane %v8664, 4
        %v8667 = vor.u32 %v8663, %v8666
        %v8669 = vshrl.u32 %v8531, 16
        %v8671 = vrot.slane %v8669, 3
        %v8672 = vshll.u32 %v8531, 16
        %v8674 = vrot.slane %v8672, 4
        %v8675 = vor.u32 %v8671, %v8674
        %v8676 = vsel %vm8659, %v8667, %v8675
        %v8678 = vshrl.u32 %v8528, 16
        %v8680 = vrot.slane %v8678, 3
        %v8681 = vshll.u32 %v8528, 16
        %v8683 = vrot.slane %v8681, 4
        %v8684 = vor.u32 %v8680, %v8683
        %v8686 = vshrl.u32 %v8532, 16
        %v8688 = vrot.slane %v8686, 3
        %v8689 = vshll.u32 %v8532, 16
        %v8691 = vrot.slane %v8689, 4
        %v8692 = vor.u32 %v8688, %v8691
        %v8693 = vsel %vm8659, %v8684, %v8692
        %v8695 = vshrl.u32 %v8529, 16
        %v8697 = vrot.slane %v8695, 3
        %v8698 = vshll.u32 %v8529, 16
        %v8700 = vrot.slane %v8698, 4
        %v8701 = vor.u32 %v8697, %v8700
        %v8703 = vshrl.u32 %v8533, 16
        %v8705 = vrot.slane %v8703, 3
        %v8706 = vshll.u32 %v8533, 16
        %v8708 = vrot.slane %v8706, 4
        %v8709 = vor.u32 %v8705, %v8708
        %v8710 = vsel %vm8659, %v8701, %v8709
        %v8712 = vshrl.u32 %v8530, 16
        %v8714 = vrot.slane %v8712, 3
        %v8715 = vshll.u32 %v8530, 16
        %v8717 = vrot.slane %v8715, 4
        %v8718 = vor.u32 %v8714, %v8717
        %v8720 = vshrl.u32 %v8534, 16
        %v8722 = vrot.slane %v8720, 3
        %v8723 = vshll.u32 %v8534, 16
        %v8725 = vrot.slane %v8723, 4
        %v8726 = vor.u32 %v8722, %v8725
        %v8727 = vsel %vm8659, %v8718, %v8726
        %v8729 = vshrl.u32 %v8535, 16
        %v8731 = vrot.slane %v8729, 3
        %v8732 = vshll.u32 %v8535, 16
        %v8734 = vrot.slane %v8732, 4
        %v8735 = vor.u32 %v8731, %v8734
        %v8736 = vsel %vm8659, %v8675, %v8735
        %v8738 = vshrl.u32 %v8536, 16
        %v8740 = vrot.slane %v8738, 3
        %v8741 = vshll.u32 %v8536, 16
        %v8743 = vrot.slane %v8741, 4
        %v8744 = vor.u32 %v8740, %v8743
        %v8745 = vsel %vm8659, %v8692, %v8744
        %v8747 = vshrl.u32 %v8537, 16
        %v8749 = vrot.slane %v8747, 3
        %v8750 = vshll.u32 %v8537, 16
        %v8752 = vrot.slane %v8750, 4
        %v8753 = vor.u32 %v8749, %v8752
        %v8754 = vsel %vm8659, %v8709, %v8753
        %v8756 = vshrl.u32 %v8538, 16
        %v8758 = vrot.slane %v8756, 3
        %v8759 = vshll.u32 %v8538, 16
        %v8761 = vrot.slane %v8759, 4
        %v8762 = vor.u32 %v8758, %v8761
        %v8763 = vsel %vm8659, %v8726, %v8762
        %v8765 = vshrl.u32 %v8539, 16
        %v8767 = vrot.slane %v8765, 3
        %v8768 = vshll.u32 %v8539, 16
        %v8770 = vrot.slane %v8768, 4
        %v8771 = vor.u32 %v8767, %v8770
        %v8772 = vsel %vm8659, %v8735, %v8771
        %v8774 = vshrl.u32 %v8540, 16
        %v8776 = vrot.slane %v8774, 3
        %v8777 = vshll.u32 %v8540, 16
        %v8779 = vrot.slane %v8777, 4
        %v8780 = vor.u32 %v8776, %v8779
        %v8781 = vsel %vm8659, %v8744, %v8780
        %v8783 = vshrl.u32 %v8541, 16
        %v8785 = vrot.slane %v8783, 3
        %v8786 = vshll.u32 %v8541, 16
        %v8788 = vrot.slane %v8786, 4
        %v8789 = vor.u32 %v8785, %v8788
        %v8790 = vsel %vm8659, %v8753, %v8789
        %v8792 = vshrl.u32 %v8542, 16
        %v8794 = vrot.slane %v8792, 3
        %v8795 = vshll.u32 %v8542, 16
        %v8797 = vrot.slane %v8795, 4
        %v8798 = vor.u32 %v8794, %v8797
        %v8799 = vsel %vm8659, %v8762, %v8798
        %v8801 = vshrl.u32 %v8543, 16
        %v8803 = vrot.slane %v8801, 3
        %v8804 = vshll.u32 %v8543, 16
        %v8806 = vrot.slane %v8804, 4
        %v8807 = vor.u32 %v8803, %v8806
        %v8808 = vsel %vm8659, %v8771, %v8807
        %v8810 = vshrl.u32 %v8544, 16
        %v8812 = vrot.slane %v8810, 3
        %v8813 = vshll.u32 %v8544, 16
        %v8815 = vrot.slane %v8813, 4
        %v8816 = vor.u32 %v8812, %v8815
        %v8817 = vsel %vm8659, %v8780, %v8816
        %v8819 = vshrl.u32 %v8545, 16
        %v8821 = vrot.slane %v8819, 3
        %v8822 = vshll.u32 %v8545, 16
        %v8824 = vrot.slane %v8822, 4
        %v8825 = vor.u32 %v8821, %v8824
        %v8826 = vsel %vm8659, %v8789, %v8825
        %v8828 = vshrl.u32 %v8546, 16
        %v8830 = vrot.slane %v8828, 3
        %v8831 = vshll.u32 %v8546, 16
        %v8833 = vrot.slane %v8831, 4
        %v8834 = vor.u32 %v8830, %v8833
        %v8835 = vsel %vm8659, %v8798, %v8834
        %v8837 = vshrl.u32 %v8547, 16
        %v8839 = vrot.slane %v8837, 3
        %v8840 = vshll.u32 %v8547, 16
        %v8842 = vrot.slane %v8840, 4
        %v8843 = vor.u32 %v8839, %v8842
        %v8844 = vsel %vm8659, %v8807, %v8843
        %v8846 = vshrl.u32 %v8548, 16
        %v8848 = vrot.slane %v8846, 3
        %v8849 = vshll.u32 %v8548, 16
        %v8851 = vrot.slane %v8849, 4
        %v8852 = vor.u32 %v8848, %v8851
        %v8853 = vsel %vm8659, %v8816, %v8852
        %v8855 = vshrl.u32 %v8549, 16
        %v8857 = vrot.slane %v8855, 3
        %v8858 = vshll.u32 %v8549, 16
        %v8860 = vrot.slane %v8858, 4
        %v8861 = vor.u32 %v8857, %v8860
        %v8862 = vsel %vm8659, %v8825, %v8861
        %v8864 = vshrl.u32 %v8550, 16
        %v8866 = vrot.slane %v8864, 3
        %v8867 = vshll.u32 %v8550, 16
        %v8869 = vrot.slane %v8867, 4
        %v8870 = vor.u32 %v8866, %v8869
        %v8871 = vsel %vm8659, %v8834, %v8870
        %v8873 = vshrl.u32 %v8551, 16
        %v8875 = vrot.slane %v8873, 3
        %v8876 = vshll.u32 %v8551, 16
        %v8878 = vrot.slane %v8876, 4
        %v8879 = vor.u32 %v8875, %v8878
        %v8880 = vsel %vm8659, %v8843, %v8879
        %v8882 = vshrl.u32 %v8552, 16
        %v8884 = vrot.slane %v8882, 3
        %v8885 = vshll.u32 %v8552, 16
        %v8887 = vrot.slane %v8885, 4
        %v8888 = vor.u32 %v8884, %v8887
        %v8889 = vsel %vm8659, %v8852, %v8888
        %v8891 = vshrl.u32 %v8553, 16
        %v8893 = vrot.slane %v8891, 3
        %v8894 = vshll.u32 %v8553, 16
        %v8896 = vrot.slane %v8894, 4
        %v8897 = vor.u32 %v8893, %v8896
        %v8898 = vsel %vm8659, %v8861, %v8897
        %v8900 = vshrl.u32 %v8554, 16
        %v8902 = vrot.slane %v8900, 3
        %v8903 = vshll.u32 %v8554, 16
        %v8905 = vrot.slane %v8903, 4
        %v8906 = vor.u32 %v8902, %v8905
        %v8907 = vsel %vm8659, %v8870, %v8906
        %v8909 = vshrl.u32 %v8555, 16
        %v8911 = vrot.slane %v8909, 3
        %v8912 = vshll.u32 %v8555, 16
        %v8914 = vrot.slane %v8912, 4
        %v8915 = vor.u32 %v8911, %v8914
        %v8916 = vsel %vm8659, %v8879, %v8915
        %v8918 = vshrl.u32 %v8556, 16
        %v8920 = vrot.slane %v8918, 3
        %v8921 = vshll.u32 %v8556, 16
        %v8923 = vrot.slane %v8921, 4
        %v8924 = vor.u32 %v8920, %v8923
        %v8925 = vsel %vm8659, %v8888, %v8924
        %v8927 = vshrl.u32 %v8557, 16
        %v8929 = vrot.slane %v8927, 3
        %v8930 = vshll.u32 %v8557, 16
        %v8932 = vrot.slane %v8930, 4
        %v8933 = vor.u32 %v8929, %v8932
        %v8934 = vsel %vm8659, %v8897, %v8933
        %v8936 = vshrl.u32 %v8558, 16
        %v8938 = vrot.slane %v8936, 3
        %v8939 = vshll.u32 %v8558, 16
        %v8941 = vrot.slane %v8939, 4
        %v8942 = vor.u32 %v8938, %v8941
        %v8943 = vsel %vm8659, %v8906, %v8942
        %v8945 = vshrl.u32 %v8559, 16
        %v8947 = vrot.slane %v8945, 3
        %v8948 = vshll.u32 %v8559, 16
        %v8950 = vrot.slane %v8948, 4
        %v8951 = vor.u32 %v8947, %v8950
        %v8952 = vsel %vm8659, %v8915, %v8951
        %v8954 = vshrl.u32 %v8560, 16
        %v8956 = vrot.slane %v8954, 3
        %v8957 = vshll.u32 %v8560, 16
        %v8959 = vrot.slane %v8957, 4
        %v8960 = vor.u32 %v8956, %v8959
        %v8961 = vsel %vm8659, %v8924, %v8960
        %v8963 = vshrl.u32 %v8561, 16
        %v8965 = vrot.slane %v8963, 3
        %v8966 = vshll.u32 %v8561, 16
        %v8968 = vrot.slane %v8966, 4
        %v8969 = vor.u32 %v8965, %v8968
        %v8970 = vsel %vm8659, %v8933, %v8969
        %v8972 = vshrl.u32 %v8562, 16
        %v8974 = vrot.slane %v8972, 3
        %v8975 = vshll.u32 %v8562, 16
        %v8977 = vrot.slane %v8975, 4
        %v8978 = vor.u32 %v8974, %v8977
        %v8979 = vsel %vm8659, %v8942, %v8978
        %v9076 = vunpack.c.l.b16 %v8563
        %v9077 = vunpack.c.h.b16 %v8563
        %v9078 = vunpack.c.l.b16 %v8564
        %v9079 = vunpack.c.h.b16 %v8564
        %v9080 = vunpack.c.l.b16 %v8565
        %v9081 = vunpack.c.h.b16 %v8565
        %v9082 = vunpack.c.l.b16 %v8566
        %v9083 = vunpack.c.h.b16 %v8566
        %v9084 = vunpack.c.l.b16 %v8567
        %v9085 = vunpack.c.h.b16 %v8567
        %v9086 = vunpack.c.l.b16 %v8568
        %v9087 = vunpack.c.h.b16 %v8568
        %v9088 = vunpack.c.l.b16 %v8569
        %v9089 = vunpack.c.h.b16 %v8569
        %v9090 = vunpack.c.l.b16 %v8570
        %v9091 = vunpack.c.h.b16 %v8570
        %v9092 = vunpack.c.l.b16 %v8571
        %v9093 = vunpack.c.h.b16 %v8571
        %v9094 = vunpack.c.l.b16 %v8572
        %v9095 = vunpack.c.h.b16 %v8572
        %v9096 = vunpack.c.l.b16 %v8573
        %v9097 = vunpack.c.h.b16 %v8573
        %v9098 = vunpack.c.l.b16 %v8574
        %v9099 = vunpack.c.h.b16 %v8574
        %v9100 = vunpack.c.l.b16 %v8575
        %v9101 = vunpack.c.h.b16 %v8575
        %v9102 = vunpack.c.l.b16 %v8576
        %v9103 = vunpack.c.h.b16 %v8576
        %v9104 = vunpack.c.l.b16 %v8577
        %v9105 = vunpack.c.h.b16 %v8577
        %v9106 = vunpack.c.l.b16 %v8578
        %v9107 = vunpack.c.h.b16 %v8578
        %v9108 = vunpack.c.l.b16 %v8579
        %v9109 = vunpack.c.h.b16 %v8579
        %v9110 = vunpack.c.l.b16 %v8580
        %v9111 = vunpack.c.h.b16 %v8580
        %v9112 = vunpack.c.l.b16 %v8581
        %v9113 = vunpack.c.h.b16 %v8581
        %v9114 = vunpack.c.l.b16 %v8582
        %v9115 = vunpack.c.h.b16 %v8582
        %v9116 = vunpack.c.l.b16 %v8583
        %v9117 = vunpack.c.h.b16 %v8583
        %v9118 = vunpack.c.l.b16 %v8584
        %v9119 = vunpack.c.h.b16 %v8584
        %v9120 = vunpack.c.l.b16 %v8585
        %v9121 = vunpack.c.h.b16 %v8585
        %v9122 = vunpack.c.l.b16 %v8586
        %v9123 = vunpack.c.h.b16 %v8586
        %v9124 = vunpack.c.l.b16 %v8587
        %v9125 = vunpack.c.h.b16 %v8587
        %v9126 = vunpack.c.l.b16 %v8588
        %v9127 = vunpack.c.h.b16 %v8588
        %v9128 = vunpack.c.l.b16 %v8589
        %v9129 = vunpack.c.h.b16 %v8589
        %v9130 = vunpack.c.l.b16 %v8590
        %v9131 = vunpack.c.h.b16 %v8590
        %v9132 = vunpack.c.l.b16 %v8591
        %v9133 = vunpack.c.h.b16 %v8591
        %v9134 = vunpack.c.l.b16 %v8592
        %v9135 = vunpack.c.h.b16 %v8592
        %v9136 = vunpack.c.l.b16 %v8593
        %v9137 = vunpack.c.h.b16 %v8593
        %v9138 = vunpack.c.l.b16 %v8594
        %v9139 = vunpack.c.h.b16 %v8594
        %v9140 = vunpack.c.l.b16 %v8595
        %v9141 = vunpack.c.h.b16 %v8595
        %v9142 = vunpack.c.l.b16 %v8596
        %v9143 = vunpack.c.h.b16 %v8596
        %v9144 = vunpack.c.l.b16 %v8597
        %v9145 = vunpack.c.h.b16 %v8597
        %v9146 = vunpack.c.l.b16 %v8598
        %v9147 = vunpack.c.h.b16 %v8598
        %v9148 = vunpack.c.l.b16 %v8599
        %v9149 = vunpack.c.h.b16 %v8599
        %v9150 = vunpack.c.l.b16 %v8600
        %v9151 = vunpack.c.h.b16 %v8600
        %v9152 = vunpack.c.l.b16 %v8601
        %v9153 = vunpack.c.h.b16 %v8601
        %v9154 = vunpack.c.l.b16 %v8602
        %v9155 = vunpack.c.h.b16 %v8602
        %v9156 = vunpack.c.l.b16 %v8603
        %v9157 = vunpack.c.h.b16 %v8603
        %v9158 = vunpack.c.l.b16 %v8604
        %v9159 = vunpack.c.h.b16 %v8604
        %v9160 = vunpack.c.l.b16 %v8605
        %v9161 = vunpack.c.h.b16 %v8605
        %v9162 = vunpack.c.l.b16 %v8606
        %v9163 = vunpack.c.h.b16 %v8606
        %v9164 = vunpack.c.l.b16 %v8607
        %v9165 = vunpack.c.h.b16 %v8607
        %v9166 = vunpack.c.l.b16 %v8608
        %v9167 = vunpack.c.h.b16 %v8608
        %v9168 = vunpack.c.l.b16 %v8609
        %v9169 = vunpack.c.h.b16 %v8609
        %v9170 = vunpack.c.l.b16 %v8610
        %v9171 = vunpack.c.h.b16 %v8610
        %v9172 = vunpack.c.l.b16 %v8611
        %v9173 = vunpack.c.h.b16 %v8611
        %v9174 = vunpack.c.l.b16 %v8612
        %v9175 = vunpack.c.h.b16 %v8612
        %v9176 = vunpack.c.l.b16 %v8613
        %v9177 = vunpack.c.h.b16 %v8613
        %v9178 = vunpack.c.l.b16 %v8614
        %v9179 = vunpack.c.h.b16 %v8614
        %v9180 = vunpack.c.l.b16 %v8615
        %v9181 = vunpack.c.h.b16 %v8615
        %v9182 = vunpack.c.l.b16 %v8616
        %v9183 = vunpack.c.h.b16 %v8616
        %v9184 = vunpack.c.l.b16 %v8617
        %v9185 = vunpack.c.h.b16 %v8617
        %v9186 = vunpack.c.l.b16 %v8618
        %v9187 = vunpack.c.h.b16 %v8618
        %v9188 = vunpack.c.l.b16 %v8619
        %v9189 = vunpack.c.h.b16 %v8619
        %v9190 = vunpack.c.l.b16 %v8620
        %v9191 = vunpack.c.h.b16 %v8620
        %v9192 = vunpack.c.l.b16 %v8621
        %v9193 = vunpack.c.h.b16 %v8621
        %v9194 = vunpack.c.l.b16 %v8622
        %v9195 = vunpack.c.h.b16 %v8622
        %v9196 = vunpack.c.l.b16 %v8623
        %v9197 = vunpack.c.h.b16 %v8623
        %v9198 = vunpack.c.l.b16 %v8624
        %v9199 = vunpack.c.h.b16 %v8624
        %v9200 = vunpack.c.l.b16 %v8625
        %v9201 = vunpack.c.h.b16 %v8625
        %v9202 = vunpack.c.l.b16 %v8626
        %v9203 = vunpack.c.h.b16 %v8626
        %v9204 = vpack.c.b16 %v9078, %v9076
        %v9205 = vpack.c.b16 %v9079, %v9077
        %v9206 = vpack.c.b16 %v9082, %v9080
        %v9207 = vpack.c.b16 %v9083, %v9081
        %v9208 = vpack.c.b16 %v9086, %v9084
        %v9209 = vpack.c.b16 %v9087, %v9085
        %v9210 = vpack.c.b16 %v9090, %v9088
        %v9211 = vpack.c.b16 %v9091, %v9089
        %v9212 = vpack.c.b16 %v9094, %v9092
        %v9213 = vpack.c.b16 %v9095, %v9093
        %v9214 = vpack.c.b16 %v9098, %v9096
        %v9215 = vpack.c.b16 %v9099, %v9097
        %v9216 = vpack.c.b16 %v9102, %v9100
        %v9217 = vpack.c.b16 %v9103, %v9101
        %v9218 = vpack.c.b16 %v9106, %v9104
        %v9219 = vpack.c.b16 %v9107, %v9105
        %v9220 = vpack.c.b16 %v9110, %v9108
        %v9221 = vpack.c.b16 %v9111, %v9109
        %v9222 = vpack.c.b16 %v9114, %v9112
        %v9223 = vpack.c.b16 %v9115, %v9113
        %v9224 = vpack.c.b16 %v9118, %v9116
        %v9225 = vpack.c.b16 %v9119, %v9117
        %v9226 = vpack.c.b16 %v9122, %v9120
        %v9227 = vpack.c.b16 %v9123, %v9121
        %v9228 = vpack.c.b16 %v9126, %v9124
        %v9229 = vpack.c.b16 %v9127, %v9125
        %v9230 = vpack.c.b16 %v9130, %v9128
        %v9231 = vpack.c.b16 %v9131, %v9129
        %v9232 = vpack.c.b16 %v9134, %v9132
        %v9233 = vpack.c.b16 %v9135, %v9133
        %v9234 = vpack.c.b16 %v9138, %v9136
        %v9235 = vpack.c.b16 %v9139, %v9137
        %v9236 = vpack.c.b16 %v9142, %v9140
        %v9237 = vpack.c.b16 %v9143, %v9141
        %v9238 = vpack.c.b16 %v9146, %v9144
        %v9239 = vpack.c.b16 %v9147, %v9145
        %v9240 = vpack.c.b16 %v9150, %v9148
        %v9241 = vpack.c.b16 %v9151, %v9149
        %v9242 = vpack.c.b16 %v9154, %v9152
        %v9243 = vpack.c.b16 %v9155, %v9153
        %v9244 = vpack.c.b16 %v9158, %v9156
        %v9245 = vpack.c.b16 %v9159, %v9157
        %v9246 = vpack.c.b16 %v9162, %v9160
        %v9247 = vpack.c.b16 %v9163, %v9161
        %v9248 = vpack.c.b16 %v9166, %v9164
        %v9249 = vpack.c.b16 %v9167, %v9165
        %v9250 = vpack.c.b16 %v9170, %v9168
        %v9251 = vpack.c.b16 %v9171, %v9169
        %v9252 = vpack.c.b16 %v9174, %v9172
        %v9253 = vpack.c.b16 %v9175, %v9173
        %v9254 = vpack.c.b16 %v9178, %v9176
        %v9255 = vpack.c.b16 %v9179, %v9177
        %v9256 = vpack.c.b16 %v9182, %v9180
        %v9257 = vpack.c.b16 %v9183, %v9181
        %v9258 = vpack.c.b16 %v9186, %v9184
        %v9259 = vpack.c.b16 %v9187, %v9185
        %v9260 = vpack.c.b16 %v9190, %v9188
        %v9261 = vpack.c.b16 %v9191, %v9189
        %v9262 = vpack.c.b16 %v9194, %v9192
        %v9263 = vpack.c.b16 %v9195, %v9193
        %v9264 = vpack.c.b16 %v9198, %v9196
        %v9265 = vpack.c.b16 %v9199, %v9197
        %v9266 = vpack.c.b16 %v9202, %v9200
        %v9267 = vpack.c.b16 %v9203, %v9201
        %9332 = vmatpush.bf16.msra.mxu0 %v9218
        %9333 = vmatpush.bf16.msra.mxu0 %v9216
        %9334 = vmatpush.bf16.msra.mxu0 %v9214
        %9335 = vmatpush.bf16.msra.mxu0 %v9212
        %9336 = vmatpush.bf16.msra.mxu0 %v9210
        %9337 = vmatpush.bf16.msra.mxu0 %v9208
        %9338 = vmatpush.bf16.msra.mxu0 %v9206
        %9339 = vmatpush.bf16.msra.mxu0 %v9204
        %9340 = vmatmul.bf16.gmra.mxu0 %v8676
        %v9341 = vpop.f32.mrf.mxu0
        %v9342 = vadd.f32 0.0, %v9341
        %v9343 = vpop.f32.mrf.mxu0
        %v9344 = vadd.f32 0.0, %v9343
        %9345 = vmatmul.bf16.gmra.mxu0 %v8736
        %v9346 = vpop.f32.mrf.mxu0
        %v9347 = vadd.f32 0.0, %v9346
        %v9348 = vpop.f32.mrf.mxu0
        %v9349 = vadd.f32 0.0, %v9348
        %9350 = vmatmul.bf16.gmra.mxu0 %v8772
        %v9351 = vpop.f32.mrf.mxu0
        %v9352 = vadd.f32 0.0, %v9351
        %v9353 = vpop.f32.mrf.mxu0
        %v9354 = vadd.f32 0.0, %v9353
        %9355 = vmatmul.bf16.gmra.mxu0 %v8808
        %v9356 = vpop.f32.mrf.mxu0
        %v9357 = vadd.f32 0.0, %v9356
        %v9358 = vpop.f32.mrf.mxu0
        %v9359 = vadd.f32 0.0, %v9358
        %9360 = vmatmul.bf16.gmra.mxu0 %v8844
        %v9361 = vpop.f32.mrf.mxu0
        %v9362 = vadd.f32 0.0, %v9361
        %v9363 = vpop.f32.mrf.mxu0
        %v9364 = vadd.f32 0.0, %v9363
        %9365 = vmatmul.bf16.gmra.mxu0 %v8880
        %v9366 = vpop.f32.mrf.mxu0
        %v9367 = vadd.f32 0.0, %v9366
        %v9368 = vpop.f32.mrf.mxu0
        %v9369 = vadd.f32 0.0, %v9368
        %9370 = vmatmul.bf16.gmra.mxu0 %v8916
        %v9371 = vpop.f32.mrf.mxu0
        %v9372 = vadd.f32 0.0, %v9371
        %v9373 = vpop.f32.mrf.mxu0
        %v9374 = vadd.f32 0.0, %v9373
        %9375 = vmatmul.bf16.gmra.mxu0 %v8952
        %v9376 = vpop.f32.mrf.mxu0
        %v9377 = vadd.f32 0.0, %v9376
        %v9378 = vpop.f32.mrf.mxu0
        %v9379 = vadd.f32 0.0, %v9378
        %9380 = vdwg.mxu0
        %9381 = vmatpush.bf16.msra.mxu0 %v9234
        %9382 = vmatpush.bf16.msra.mxu0 %v9232
        %9383 = vmatpush.bf16.msra.mxu0 %v9230
        %9384 = vmatpush.bf16.msra.mxu0 %v9228
        %9385 = vmatpush.bf16.msra.mxu0 %v9226
        %9386 = vmatpush.bf16.msra.mxu0 %v9224
        %9387 = vmatpush.bf16.msra.mxu0 %v9222
        %9388 = vmatpush.bf16.msra.mxu0 %v9220
        %9389 = vmatmul.bf16.gmra.mxu0 %v8693
        %v9390 = vpop.f32.mrf.mxu0
        %v9391 = vadd.f32 %v9342, %v9390
        %v9392 = vpop.f32.mrf.mxu0
        %v9393 = vadd.f32 %v9344, %v9392
        %9394 = vmatmul.bf16.gmra.mxu0 %v8745
        %v9395 = vpop.f32.mrf.mxu0
        %v9396 = vadd.f32 %v9347, %v9395
        %v9397 = vpop.f32.mrf.mxu0
        %v9398 = vadd.f32 %v9349, %v9397
        %9399 = vmatmul.bf16.gmra.mxu0 %v8781
        %v9400 = vpop.f32.mrf.mxu0
        %v9401 = vadd.f32 %v9352, %v9400
        %v9402 = vpop.f32.mrf.mxu0
        %v9403 = vadd.f32 %v9354, %v9402
        %9404 = vmatmul.bf16.gmra.mxu0 %v8817
        %v9405 = vpop.f32.mrf.mxu0
        %v9406 = vadd.f32 %v9357, %v9405
        %v9407 = vpop.f32.mrf.mxu0
        %v9408 = vadd.f32 %v9359, %v9407
        %9409 = vmatmul.bf16.gmra.mxu0 %v8853
        %v9410 = vpop.f32.mrf.mxu0
        %v9411 = vadd.f32 %v9362, %v9410
        %v9412 = vpop.f32.mrf.mxu0
        %v9413 = vadd.f32 %v9364, %v9412
        %9414 = vmatmul.bf16.gmra.mxu0 %v8889
        %v9415 = vpop.f32.mrf.mxu0
        %v9416 = vadd.f32 %v9367, %v9415
        %v9417 = vpop.f32.mrf.mxu0
        %v9418 = vadd.f32 %v9369, %v9417
        %9419 = vmatmul.bf16.gmra.mxu0 %v8925
        %v9420 = vpop.f32.mrf.mxu0
        %v9421 = vadd.f32 %v9372, %v9420
        %v9422 = vpop.f32.mrf.mxu0
        %v9423 = vadd.f32 %v9374, %v9422
        %9424 = vmatmul.bf16.gmra.mxu0 %v8961
        %v9425 = vpop.f32.mrf.mxu0
        %v9426 = vadd.f32 %v9377, %v9425
        %v9427 = vpop.f32.mrf.mxu0
        %v9428 = vadd.f32 %v9379, %v9427
        %9429 = vdwg.mxu0
        %9430 = vmatpush.bf16.msra.mxu0 %v9250
        %9431 = vmatpush.bf16.msra.mxu0 %v9248
        %9432 = vmatpush.bf16.msra.mxu0 %v9246
        %9433 = vmatpush.bf16.msra.mxu0 %v9244
        %9434 = vmatpush.bf16.msra.mxu0 %v9242
        %9435 = vmatpush.bf16.msra.mxu0 %v9240
        %9436 = vmatpush.bf16.msra.mxu0 %v9238
        %9437 = vmatpush.bf16.msra.mxu0 %v9236
        %9438 = vmatmul.bf16.gmra.mxu0 %v8710
        %v9439 = vpop.f32.mrf.mxu0
        %v9440 = vadd.f32 %v9391, %v9439
        %v9441 = vpop.f32.mrf.mxu0
        %v9442 = vadd.f32 %v9393, %v9441
        %9443 = vmatmul.bf16.gmra.mxu0 %v8754
        %v9444 = vpop.f32.mrf.mxu0
        %v9445 = vadd.f32 %v9396, %v9444
        %v9446 = vpop.f32.mrf.mxu0
        %v9447 = vadd.f32 %v9398, %v9446
        %9448 = vmatmul.bf16.gmra.mxu0 %v8790
        %v9449 = vpop.f32.mrf.mxu0
        %v9450 = vadd.f32 %v9401, %v9449
        %v9451 = vpop.f32.mrf.mxu0
        %v9452 = vadd.f32 %v9403, %v9451
        %9453 = vmatmul.bf16.gmra.mxu0 %v8826
        %v9454 = vpop.f32.mrf.mxu0
        %v9455 = vadd.f32 %v9406, %v9454
        %v9456 = vpop.f32.mrf.mxu0
        %v9457 = vadd.f32 %v9408, %v9456
        %9458 = vmatmul.bf16.gmra.mxu0 %v8862
        %v9459 = vpop.f32.mrf.mxu0
        %v9460 = vadd.f32 %v9411, %v9459
        %v9461 = vpop.f32.mrf.mxu0
        %v9462 = vadd.f32 %v9413, %v9461
        %9463 = vmatmul.bf16.gmra.mxu0 %v8898
        %v9464 = vpop.f32.mrf.mxu0
        %v9465 = vadd.f32 %v9416, %v9464
        %v9466 = vpop.f32.mrf.mxu0
        %v9467 = vadd.f32 %v9418, %v9466
        %9468 = vmatmul.bf16.gmra.mxu0 %v8934
        %v9469 = vpop.f32.mrf.mxu0
        %v9470 = vadd.f32 %v9421, %v9469
        %v9471 = vpop.f32.mrf.mxu0
        %v9472 = vadd.f32 %v9423, %v9471
        %9473 = vmatmul.bf16.gmra.mxu0 %v8970
        %v9474 = vpop.f32.mrf.mxu0
        %v9475 = vadd.f32 %v9426, %v9474
        %v9476 = vpop.f32.mrf.mxu0
        %v9477 = vadd.f32 %v9428, %v9476
        %9478 = vdwg.mxu0
        %9479 = vmatpush.bf16.msra.mxu0 %v9266
        %9480 = vmatpush.bf16.msra.mxu0 %v9264
        %9481 = vmatpush.bf16.msra.mxu0 %v9262
        %9482 = vmatpush.bf16.msra.mxu0 %v9260
        %9483 = vmatpush.bf16.msra.mxu0 %v9258
        %9484 = vmatpush.bf16.msra.mxu0 %v9256
        %9485 = vmatpush.bf16.msra.mxu0 %v9254
        %9486 = vmatpush.bf16.msra.mxu0 %v9252
        %9487 = vmatmul.bf16.gmra.mxu0 %v8727
        %v9488 = vpop.f32.mrf.mxu0
        %v9489 = vadd.f32 %v9440, %v9488
        %v9490 = vpop.f32.mrf.mxu0
        %v9491 = vadd.f32 %v9442, %v9490
        %9492 = vmatmul.bf16.gmra.mxu0 %v8763
        %v9493 = vpop.f32.mrf.mxu0
        %v9494 = vadd.f32 %v9445, %v9493
        %v9495 = vpop.f32.mrf.mxu0
        %v9496 = vadd.f32 %v9447, %v9495
        %9497 = vmatmul.bf16.gmra.mxu0 %v8799
        %v9498 = vpop.f32.mrf.mxu0
        %v9499 = vadd.f32 %v9450, %v9498
        %v9500 = vpop.f32.mrf.mxu0
        %v9501 = vadd.f32 %v9452, %v9500
        %9502 = vmatmul.bf16.gmra.mxu0 %v8835
        %v9503 = vpop.f32.mrf.mxu0
        %v9504 = vadd.f32 %v9455, %v9503
        %v9505 = vpop.f32.mrf.mxu0
        %v9506 = vadd.f32 %v9457, %v9505
        %9507 = vmatmul.bf16.gmra.mxu0 %v8871
        %v9508 = vpop.f32.mrf.mxu0
        %v9509 = vadd.f32 %v9460, %v9508
        %v9510 = vpop.f32.mrf.mxu0
        %v9511 = vadd.f32 %v9462, %v9510
        %9512 = vmatmul.bf16.gmra.mxu0 %v8907
        %v9513 = vpop.f32.mrf.mxu0
        %v9514 = vadd.f32 %v9465, %v9513
        %v9515 = vpop.f32.mrf.mxu0
        %v9516 = vadd.f32 %v9467, %v9515
        %9517 = vmatmul.bf16.gmra.mxu0 %v8943
        %v9518 = vpop.f32.mrf.mxu0
        %v9519 = vadd.f32 %v9470, %v9518
        %v9520 = vpop.f32.mrf.mxu0
        %v9521 = vadd.f32 %v9472, %v9520
        %9522 = vmatmul.bf16.gmra.mxu0 %v8979
        %v9523 = vpop.f32.mrf.mxu0
        %v9524 = vadd.f32 %v9475, %v9523
        %v9525 = vpop.f32.mrf.mxu0
        %v9526 = vadd.f32 %v9477, %v9525
        %9527 = vdwg.mxu0
        %9528 = vmatpush.bf16.msra.mxu0 %v9219
        %9529 = vmatpush.bf16.msra.mxu0 %v9217
        %9530 = vmatpush.bf16.msra.mxu0 %v9215
        %9531 = vmatpush.bf16.msra.mxu0 %v9213
        %9532 = vmatpush.bf16.msra.mxu0 %v9211
        %9533 = vmatpush.bf16.msra.mxu0 %v9209
        %9534 = vmatpush.bf16.msra.mxu0 %v9207
        %9535 = vmatpush.bf16.msra.mxu0 %v9205
        %9536 = vmatmul.bf16.gmra.mxu0 %v8676
        %v9537 = vpop.f32.mrf.mxu0
        %v9538 = vadd.f32 0.0, %v9537
        %v9539 = vpop.f32.mrf.mxu0
        %v9540 = vadd.f32 0.0, %v9539
        %9541 = vmatmul.bf16.gmra.mxu0 %v8736
        %v9542 = vpop.f32.mrf.mxu0
        %v9543 = vadd.f32 0.0, %v9542
        %v9544 = vpop.f32.mrf.mxu0
        %v9545 = vadd.f32 0.0, %v9544
        %9546 = vmatmul.bf16.gmra.mxu0 %v8772
        %v9547 = vpop.f32.mrf.mxu0
        %v9548 = vadd.f32 0.0, %v9547
        %v9549 = vpop.f32.mrf.mxu0
        %v9550 = vadd.f32 0.0, %v9549
        %9551 = vmatmul.bf16.gmra.mxu0 %v8808
        %v9552 = vpop.f32.mrf.mxu0
        %v9553 = vadd.f32 0.0, %v9552
        %v9554 = vpop.f32.mrf.mxu0
        %v9555 = vadd.f32 0.0, %v9554
        %9556 = vmatmul.bf16.gmra.mxu0 %v8844
        %v9557 = vpop.f32.mrf.mxu0
        %v9558 = vadd.f32 0.0, %v9557
        %v9559 = vpop.f32.mrf.mxu0
        %v9560 = vadd.f32 0.0, %v9559
        %9561 = vmatmul.bf16.gmra.mxu0 %v8880
        %v9562 = vpop.f32.mrf.mxu0
        %v9563 = vadd.f32 0.0, %v9562
        %v9564 = vpop.f32.mrf.mxu0
        %v9565 = vadd.f32 0.0, %v9564
        %9566 = vmatmul.bf16.gmra.mxu0 %v8916
        %v9567 = vpop.f32.mrf.mxu0
        %v9568 = vadd.f32 0.0, %v9567
        %v9569 = vpop.f32.mrf.mxu0
        %v9570 = vadd.f32 0.0, %v9569
        %9571 = vmatmul.bf16.gmra.mxu0 %v8952
        %v9572 = vpop.f32.mrf.mxu0
        %v9573 = vadd.f32 0.0, %v9572
        %v9574 = vpop.f32.mrf.mxu0
        %v9575 = vadd.f32 0.0, %v9574
        %9576 = vdwg.mxu0
        %9577 = vmatpush.bf16.msra.mxu0 %v9235
        %9578 = vmatpush.bf16.msra.mxu0 %v9233
        %9579 = vmatpush.bf16.msra.mxu0 %v9231
        %9580 = vmatpush.bf16.msra.mxu0 %v9229
        %9581 = vmatpush.bf16.msra.mxu0 %v9227
        %9582 = vmatpush.bf16.msra.mxu0 %v9225
        %9583 = vmatpush.bf16.msra.mxu0 %v9223
        %9584 = vmatpush.bf16.msra.mxu0 %v9221
        %9585 = vmatmul.bf16.gmra.mxu0 %v8693
        %v9586 = vpop.f32.mrf.mxu0
        %v9587 = vadd.f32 %v9538, %v9586
        %v9588 = vpop.f32.mrf.mxu0
        %v9589 = vadd.f32 %v9540, %v9588
        %9590 = vmatmul.bf16.gmra.mxu0 %v8745
        %v9591 = vpop.f32.mrf.mxu0
        %v9592 = vadd.f32 %v9543, %v9591
        %v9593 = vpop.f32.mrf.mxu0
        %v9594 = vadd.f32 %v9545, %v9593
        %9595 = vmatmul.bf16.gmra.mxu0 %v8781
        %v9596 = vpop.f32.mrf.mxu0
        %v9597 = vadd.f32 %v9548, %v9596
        %v9598 = vpop.f32.mrf.mxu0
        %v9599 = vadd.f32 %v9550, %v9598
        %9600 = vmatmul.bf16.gmra.mxu0 %v8817
        %v9601 = vpop.f32.mrf.mxu0
        %v9602 = vadd.f32 %v9553, %v9601
        %v9603 = vpop.f32.mrf.mxu0
        %v9604 = vadd.f32 %v9555, %v9603
        %9605 = vmatmul.bf16.gmra.mxu0 %v8853
        %v9606 = vpop.f32.mrf.mxu0
        %v9607 = vadd.f32 %v9558, %v9606
        %v9608 = vpop.f32.mrf.mxu0
        %v9609 = vadd.f32 %v9560, %v9608
        %9610 = vmatmul.bf16.gmra.mxu0 %v8889
        %v9611 = vpop.f32.mrf.mxu0
        %v9612 = vadd.f32 %v9563, %v9611
        %v9613 = vpop.f32.mrf.mxu0
        %v9614 = vadd.f32 %v9565, %v9613
        %9615 = vmatmul.bf16.gmra.mxu0 %v8925
        %v9616 = vpop.f32.mrf.mxu0
        %v9617 = vadd.f32 %v9568, %v9616
        %v9618 = vpop.f32.mrf.mxu0
        %v9619 = vadd.f32 %v9570, %v9618
        %9620 = vmatmul.bf16.gmra.mxu0 %v8961
        %v9621 = vpop.f32.mrf.mxu0
        %v9622 = vadd.f32 %v9573, %v9621
        %v9623 = vpop.f32.mrf.mxu0
        %v9624 = vadd.f32 %v9575, %v9623
        %9625 = vdwg.mxu0
        %9626 = vmatpush.bf16.msra.mxu0 %v9251
        %9627 = vmatpush.bf16.msra.mxu0 %v9249
        %9628 = vmatpush.bf16.msra.mxu0 %v9247
        %9629 = vmatpush.bf16.msra.mxu0 %v9245
        %9630 = vmatpush.bf16.msra.mxu0 %v9243
        %9631 = vmatpush.bf16.msra.mxu0 %v9241
        %9632 = vmatpush.bf16.msra.mxu0 %v9239
        %9633 = vmatpush.bf16.msra.mxu0 %v9237
        %9634 = vmatmul.bf16.gmra.mxu0 %v8710
        %v9635 = vpop.f32.mrf.mxu0
        %v9636 = vadd.f32 %v9587, %v9635
        %v9637 = vpop.f32.mrf.mxu0
        %v9638 = vadd.f32 %v9589, %v9637
        %9639 = vmatmul.bf16.gmra.mxu0 %v8754
        %v9640 = vpop.f32.mrf.mxu0
        %v9641 = vadd.f32 %v9592, %v9640
        %v9642 = vpop.f32.mrf.mxu0
        %v9643 = vadd.f32 %v9594, %v9642
        %9644 = vmatmul.bf16.gmra.mxu0 %v8790
        %v9645 = vpop.f32.mrf.mxu0
        %v9646 = vadd.f32 %v9597, %v9645
        %v9647 = vpop.f32.mrf.mxu0
        %v9648 = vadd.f32 %v9599, %v9647
        %9649 = vmatmul.bf16.gmra.mxu0 %v8826
        %v9650 = vpop.f32.mrf.mxu0
        %v9651 = vadd.f32 %v9602, %v9650
        %v9652 = vpop.f32.mrf.mxu0
        %v9653 = vadd.f32 %v9604, %v9652
        %9654 = vmatmul.bf16.gmra.mxu0 %v8862
        %v9655 = vpop.f32.mrf.mxu0
        %v9656 = vadd.f32 %v9607, %v9655
        %v9657 = vpop.f32.mrf.mxu0
        %v9658 = vadd.f32 %v9609, %v9657
        %9659 = vmatmul.bf16.gmra.mxu0 %v8898
        %v9660 = vpop.f32.mrf.mxu0
        %v9661 = vadd.f32 %v9612, %v9660
        %v9662 = vpop.f32.mrf.mxu0
        %v9663 = vadd.f32 %v9614, %v9662
        %9664 = vmatmul.bf16.gmra.mxu0 %v8934
        %v9665 = vpop.f32.mrf.mxu0
        %v9666 = vadd.f32 %v9617, %v9665
        %v9667 = vpop.f32.mrf.mxu0
        %v9668 = vadd.f32 %v9619, %v9667
        %9669 = vmatmul.bf16.gmra.mxu0 %v8970
        %v9670 = vpop.f32.mrf.mxu0
        %v9671 = vadd.f32 %v9622, %v9670
        %v9672 = vpop.f32.mrf.mxu0
        %v9673 = vadd.f32 %v9624, %v9672
        %9674 = vdwg.mxu0
        %9675 = vmatpush.bf16.msra.mxu0 %v9267
        %9676 = vmatpush.bf16.msra.mxu0 %v9265
        %9677 = vmatpush.bf16.msra.mxu0 %v9263
        %9678 = vmatpush.bf16.msra.mxu0 %v9261
        %9679 = vmatpush.bf16.msra.mxu0 %v9259
        %9680 = vmatpush.bf16.msra.mxu0 %v9257
        %9681 = vmatpush.bf16.msra.mxu0 %v9255
        %9682 = vmatpush.bf16.msra.mxu0 %v9253
        %9683 = vmatmul.bf16.gmra.mxu0 %v8727
        %v9684 = vpop.f32.mrf.mxu0
        %v9685 = vadd.f32 %v9636, %v9684
        %v9686 = vpop.f32.mrf.mxu0
        %v9687 = vadd.f32 %v9638, %v9686
        %9688 = vmatmul.bf16.gmra.mxu0 %v8763
        %v9689 = vpop.f32.mrf.mxu0
        %v9690 = vadd.f32 %v9641, %v9689
        %v9691 = vpop.f32.mrf.mxu0
        %v9692 = vadd.f32 %v9643, %v9691
        %9693 = vmatmul.bf16.gmra.mxu0 %v8799
        %v9694 = vpop.f32.mrf.mxu0
        %v9695 = vadd.f32 %v9646, %v9694
        %v9696 = vpop.f32.mrf.mxu0
        %v9697 = vadd.f32 %v9648, %v9696
        %9698 = vmatmul.bf16.gmra.mxu0 %v8835
        %v9699 = vpop.f32.mrf.mxu0
        %v9700 = vadd.f32 %v9651, %v9699
        %v9701 = vpop.f32.mrf.mxu0
        %v9702 = vadd.f32 %v9653, %v9701
        %9703 = vmatmul.bf16.gmra.mxu0 %v8871
        %v9704 = vpop.f32.mrf.mxu0
        %v9705 = vadd.f32 %v9656, %v9704
        %v9706 = vpop.f32.mrf.mxu0
        %v9707 = vadd.f32 %v9658, %v9706
        %9708 = vmatmul.bf16.gmra.mxu0 %v8907
        %v9709 = vpop.f32.mrf.mxu0
        %v9710 = vadd.f32 %v9661, %v9709
        %v9711 = vpop.f32.mrf.mxu0
        %v9712 = vadd.f32 %v9663, %v9711
        %9713 = vmatmul.bf16.gmra.mxu0 %v8943
        %v9714 = vpop.f32.mrf.mxu0
        %v9715 = vadd.f32 %v9666, %v9714
        %v9716 = vpop.f32.mrf.mxu0
        %v9717 = vadd.f32 %v9668, %v9716
        %9718 = vmatmul.bf16.gmra.mxu0 %v8979
        %v9719 = vpop.f32.mrf.mxu0
        %v9720 = vadd.f32 %v9671, %v9719
        %v9721 = vpop.f32.mrf.mxu0
        %v9722 = vadd.f32 %v9673, %v9721
        %9723 = vdwg.mxu0
        %v9724 = vadd.f32 %v8627, %v9489
        %v9725 = vadd.f32 %v8628, %v9685
        %v9726 = vadd.f32 %v8629, %v9491
        %v9727 = vadd.f32 %v8630, %v9687
        %v9728 = vadd.f32 %v8631, %v9494
        %v9729 = vadd.f32 %v8632, %v9690
        %v9730 = vadd.f32 %v8633, %v9496
        %v9731 = vadd.f32 %v8634, %v9692
        %v9732 = vadd.f32 %v8635, %v9499
        %v9733 = vadd.f32 %v8636, %v9695
        %v9734 = vadd.f32 %v8637, %v9501
        %v9735 = vadd.f32 %v8638, %v9697
        %v9736 = vadd.f32 %v8639, %v9504
        %v9737 = vadd.f32 %v8640, %v9700
        %v9738 = vadd.f32 %v8641, %v9506
        %v9739 = vadd.f32 %v8642, %v9702
        %v9740 = vadd.f32 %v8643, %v9509
        %v9741 = vadd.f32 %v8644, %v9705
        %v9742 = vadd.f32 %v8645, %v9511
        %v9743 = vadd.f32 %v8646, %v9707
        %v9744 = vadd.f32 %v8647, %v9514
        %v9745 = vadd.f32 %v8648, %v9710
        %v9746 = vadd.f32 %v8649, %v9516
        %v9747 = vadd.f32 %v8650, %v9712
        %v9748 = vadd.f32 %v8651, %v9519
        %v9749 = vadd.f32 %v8652, %v9715
        %v9750 = vadd.f32 %v8653, %v9521
        %v9751 = vadd.f32 %v8654, %v9717
        %v9752 = vadd.f32 %v8655, %v9524
        %v9753 = vadd.f32 %v8656, %v9720
        %v9754 = vadd.f32 %v8657, %v9526
        %v9755 = vadd.f32 %v8658, %v9722
        %9756 = vst [vmem:[#allocation2] sm:$0xff] %v9724
        %9757 = vst [vmem:[#allocation2 + $0x8] sm:$0xff] %v9725
        %9758 = vst [vmem:[#allocation2 + $0x10] sm:$0xff] %v9726
        %9759 = vst [vmem:[#allocation2 + $0x18] sm:$0xff] %v9727
        %9760 = vst [vmem:[#allocation2 + $0x20] sm:$0xff] %v9728
        %9761 = vst [vmem:[#allocation2 + $0x28] sm:$0xff] %v9729
        %9762 = vst [vmem:[#allocation2 + $0x30] sm:$0xff] %v9730
        %9763 = vst [vmem:[#allocation2 + $0x38] sm:$0xff] %v9731
        %9764 = vst [vmem:[#allocation2 + $0x40] sm:$0xff] %v9732
        %9765 = vst [vmem:[#allocation2 + $0x48] sm:$0xff] %v9733
        %9766 = vst [vmem:[#allocation2 + $0x50] sm:$0xff] %v9734
        %9767 = vst [vmem:[#allocation2 + $0x58] sm:$0xff] %v9735
        %9768 = vst [vmem:[#allocation2 + $0x60] sm:$0xff] %v9736
        %9769 = vst [vmem:[#allocation2 + $0x68] sm:$0xff] %v9737
        %9770 = vst [vmem:[#allocation2 + $0x70] sm:$0xff] %v9738
        %9771 = vst [vmem:[#allocation2 + $0x78] sm:$0xff] %v9739
        %9772 = vst [vmem:[#allocation2 + $0x80] sm:$0xff] %v9740
        %9773 = vst [vmem:[#allocation2 + $0x88] sm:$0xff] %v9741
        %9774 = vst [vmem:[#allocation2 + $0x90] sm:$0xff] %v9742
        %9775 = vst [vmem:[#allocation2 + $0x98] sm:$0xff] %v9743
        %9776 = vst [vmem:[#allocation2 + $0xa0] sm:$0xff] %v9744
        %9777 = vst [vmem:[#allocation2 + $0xa8] sm:$0xff] %v9745
        %9778 = vst [vmem:[#allocation2 + $0xb0] sm:$0xff] %v9746
        %9779 = vst [vmem:[#allocation2 + $0xb8] sm:$0xff] %v9747
        %9780 = vst [vmem:[#allocation2 + $0xc0] sm:$0xff] %v9748
        %9781 = vst [vmem:[#allocation2 + $0xc8] sm:$0xff] %v9749
        %9782 = vst [vmem:[#allocation2 + $0xd0] sm:$0xff] %v9750
        %9783 = vst [vmem:[#allocation2 + $0xd8] sm:$0xff] %v9751
        %9784 = vst [vmem:[#allocation2 + $0xe0] sm:$0xff] %v9752
        %9785 = vst [vmem:[#allocation2 + $0xe8] sm:$0xff] %v9753
        %9786 = vst [vmem:[#allocation2 + $0xf0] sm:$0xff] %v9754
        %9787 = vst [vmem:[#allocation2 + $0xf8] sm:$0xff] %v9755
        %v9788 = vld [vmem:[%s154 + $0x20] sm:$0xff]
        %v9789 = vld [vmem:[%s154 + $0x28] sm:$0xff]
        %v9790 = vld [vmem:[%s154 + $0x30] sm:$0xff]
        %v9791 = vld [vmem:[%s154 + $0x38] sm:$0xff]
        %v9792 = vld [vmem:[%s154 + $0x40] sm:$0xff]
        %v9793 = vld [vmem:[%s154 + $0x48] sm:$0xff]
        %v9794 = vld [vmem:[%s154 + $0x50] sm:$0xff]
        %v9795 = vld [vmem:[%s154 + $0x58] sm:$0xff]
        %v9796 = vld [vmem:[%s154 + $0x60] sm:$0xff]
        %v9797 = vld [vmem:[%s154 + $0x68] sm:$0xff]
        %v9798 = vld [vmem:[%s154 + $0x70] sm:$0xff]
        %v9799 = vld [vmem:[%s154 + $0x78] sm:$0xff]
        %v9800 = vld [vmem:[%s154 + $0x80] sm:$0xff]
        %v9801 = vld [vmem:[%s154 + $0x88] sm:$0xff]
        %v9802 = vld [vmem:[%s154 + $0x90] sm:$0xff]
        %v9803 = vld [vmem:[%s154 + $0x98] sm:$0xff]
        %v9804 = vld [vmem:[%s154 + $0xa0] sm:$0xff]
        %v9805 = vld [vmem:[%s154 + $0xa8] sm:$0xff]
        %v9806 = vld [vmem:[%s154 + $0xb0] sm:$0xff]
        %v9807 = vld [vmem:[%s154 + $0xb8] sm:$0xff]
        %v9808 = vld [vmem:[%s154 + $0xc0] sm:$0xff]
        %v9809 = vld [vmem:[%s154 + $0xc8] sm:$0xff]
        %v9810 = vld [vmem:[%s154 + $0xd0] sm:$0xff]
        %v9811 = vld [vmem:[%s154 + $0xd8] sm:$0xff]
        %v9812 = vld [vmem:[%s154 + $0xe0] sm:$0xff]
        %v9813 = vld [vmem:[%s154 + $0xe8] sm:$0xff]
        %v9814 = vld [vmem:[%s154 + $0xf0] sm:$0xff]
        %v9815 = vld [vmem:[%s154 + $0xf8] sm:$0xff]
        %v9816 = vld [vmem:[%s154 + $0x100] sm:$0xff]
        %v9817 = vld [vmem:[%s154 + $0x108] sm:$0xff]
        %v9818 = vld [vmem:[%s154 + $0x110] sm:$0xff]
        %v9819 = vld [vmem:[%s154 + $0x118] sm:$0xff]
        %v9820 = vld [vmem:[%s154 + $0x120] sm:$0xff]
        %v9821 = vld [vmem:[%s154 + $0x128] sm:$0xff]
        %v9822 = vld [vmem:[%s154 + $0x130] sm:$0xff]
        %v9823 = vld [vmem:[%s154 + $0x138] sm:$0xff]
        %v9824 = vld [vmem:[%s154 + $0x140] sm:$0xff]
        %v9825 = vld [vmem:[%s154 + $0x148] sm:$0xff]
        %v9826 = vld [vmem:[%s154 + $0x150] sm:$0xff]
        %v9827 = vld [vmem:[%s154 + $0x158] sm:$0xff]
        %v9828 = vld [vmem:[%s154 + $0x160] sm:$0xff]
        %v9829 = vld [vmem:[%s154 + $0x168] sm:$0xff]
        %v9830 = vld [vmem:[%s154 + $0x170] sm:$0xff]
        %v9831 = vld [vmem:[%s154 + $0x178] sm:$0xff]
        %v9832 = vld [vmem:[%s154 + $0x180] sm:$0xff]
        %v9833 = vld [vmem:[%s154 + $0x188] sm:$0xff]
        %v9834 = vld [vmem:[%s154 + $0x190] sm:$0xff]
        %v9835 = vld [vmem:[%s154 + $0x198] sm:$0xff]
        %v9836 = vld [vmem:[%s154 + $0x1a0] sm:$0xff]
        %v9837 = vld [vmem:[%s154 + $0x1a8] sm:$0xff]
        %v9838 = vld [vmem:[%s154 + $0x1b0] sm:$0xff]
        %v9839 = vld [vmem:[%s154 + $0x1b8] sm:$0xff]
        %v9840 = vld [vmem:[%s154 + $0x1c0] sm:$0xff]
        %v9841 = vld [vmem:[%s154 + $0x1c8] sm:$0xff]
        %v9842 = vld [vmem:[%s154 + $0x1d0] sm:$0xff]
        %v9843 = vld [vmem:[%s154 + $0x1d8] sm:$0xff]
        %v9844 = vld [vmem:[%s154 + $0x1e0] sm:$0xff]
        %v9845 = vld [vmem:[%s154 + $0x1e8] sm:$0xff]
        %v9846 = vld [vmem:[%s154 + $0x1f0] sm:$0xff]
        %v9847 = vld [vmem:[%s154 + $0x1f8] sm:$0xff]
        %v9848 = vld [vmem:[%s154 + $0x200] sm:$0xff]
        %v9849 = vld [vmem:[%s154 + $0x208] sm:$0xff]
        %v9850 = vld [vmem:[%s154 + $0x210] sm:$0xff]
        %v9851 = vld [vmem:[%s154 + $0x218] sm:$0xff]
        %v9852 = vpack.c.bf16 %v9792, %v9788
        %v9853 = vpack.c.bf16 %v9793, %v9789
        %v9854 = vpack.c.bf16 %v9794, %v9790
        %v9855 = vpack.c.bf16 %v9795, %v9791
        %v9856 = vpack.c.bf16 %v9800, %v9796
        %v9857 = vpack.c.bf16 %v9801, %v9797
        %v9858 = vpack.c.bf16 %v9802, %v9798
        %v9859 = vpack.c.bf16 %v9803, %v9799
        %v9860 = vpack.c.bf16 %v9808, %v9804
        %v9861 = vpack.c.bf16 %v9809, %v9805
        %v9862 = vpack.c.bf16 %v9810, %v9806
        %v9863 = vpack.c.bf16 %v9811, %v9807
        %v9864 = vpack.c.bf16 %v9816, %v9812
        %v9865 = vpack.c.bf16 %v9817, %v9813
        %v9866 = vpack.c.bf16 %v9818, %v9814
        %v9867 = vpack.c.bf16 %v9819, %v9815
        %v9868 = vpack.c.bf16 %v9824, %v9820
        %v9869 = vpack.c.bf16 %v9825, %v9821
        %v9870 = vpack.c.bf16 %v9826, %v9822
        %v9871 = vpack.c.bf16 %v9827, %v9823
        %v9872 = vpack.c.bf16 %v9832, %v9828
        %v9873 = vpack.c.bf16 %v9833, %v9829
        %v9874 = vpack.c.bf16 %v9834, %v9830
        %v9875 = vpack.c.bf16 %v9835, %v9831
        %v9876 = vpack.c.bf16 %v9840, %v9836
        %v9877 = vpack.c.bf16 %v9841, %v9837
        %v9878 = vpack.c.bf16 %v9842, %v9838
        %v9879 = vpack.c.bf16 %v9843, %v9839
        %v9880 = vpack.c.bf16 %v9848, %v9844
        %v9881 = vpack.c.bf16 %v9849, %v9845
        %v9882 = vpack.c.bf16 %v9850, %v9846
        %v9883 = vpack.c.bf16 %v9851, %v9847
        %v9884 = vld [vmem:[#allocation6 + $0x1000] sm:$0xff]
        %v9885 = vld [vmem:[#allocation6 + $0x1008] sm:$0xff]
        %v9886 = vld [vmem:[#allocation6 + $0x1010] sm:$0xff]
        %v9887 = vld [vmem:[#allocation6 + $0x1018] sm:$0xff]
        %v9888 = vld [vmem:[#allocation6 + $0x1020] sm:$0xff]
        %v9889 = vld [vmem:[#allocation6 + $0x1028] sm:$0xff]
        %v9890 = vld [vmem:[#allocation6 + $0x1030] sm:$0xff]
        %v9891 = vld [vmem:[#allocation6 + $0x1038] sm:$0xff]
        %v9892 = vld [vmem:[#allocation6 + $0x1040] sm:$0xff]
        %v9893 = vld [vmem:[#allocation6 + $0x1048] sm:$0xff]
        %v9894 = vld [vmem:[#allocation6 + $0x1050] sm:$0xff]
        %v9895 = vld [vmem:[#allocation6 + $0x1058] sm:$0xff]
        %v9896 = vld [vmem:[#allocation6 + $0x1060] sm:$0xff]
        %v9897 = vld [vmem:[#allocation6 + $0x1068] sm:$0xff]
        %v9898 = vld [vmem:[#allocation6 + $0x1070] sm:$0xff]
        %v9899 = vld [vmem:[#allocation6 + $0x1078] sm:$0xff]
        %v9900 = vld [vmem:[#allocation6 + $0x1080] sm:$0xff]
        %v9901 = vld [vmem:[#allocation6 + $0x1088] sm:$0xff]
        %v9902 = vld [vmem:[#allocation6 + $0x1090] sm:$0xff]
        %v9903 = vld [vmem:[#allocation6 + $0x1098] sm:$0xff]
        %v9904 = vld [vmem:[#allocation6 + $0x10a0] sm:$0xff]
        %v9905 = vld [vmem:[#allocation6 + $0x10a8] sm:$0xff]
        %v9906 = vld [vmem:[#allocation6 + $0x10b0] sm:$0xff]
        %v9907 = vld [vmem:[#allocation6 + $0x10b8] sm:$0xff]
        %v9908 = vld [vmem:[#allocation6 + $0x10c0] sm:$0xff]
        %v9909 = vld [vmem:[#allocation6 + $0x10c8] sm:$0xff]
        %v9910 = vld [vmem:[#allocation6 + $0x10d0] sm:$0xff]
        %v9911 = vld [vmem:[#allocation6 + $0x10d8] sm:$0xff]
        %v9912 = vld [vmem:[#allocation6 + $0x10e0] sm:$0xff]
        %v9913 = vld [vmem:[#allocation6 + $0x10e8] sm:$0xff]
        %v9914 = vld [vmem:[#allocation6 + $0x10f0] sm:$0xff]
        %v9915 = vld [vmem:[#allocation6 + $0x10f8] sm:$0xff]
        %v9916 = vld [vmem:[#allocation6 + $0x1100] sm:$0xff]
        %v9917 = vld [vmem:[#allocation6 + $0x1108] sm:$0xff]
        %v9918 = vld [vmem:[#allocation6 + $0x1110] sm:$0xff]
        %v9919 = vld [vmem:[#allocation6 + $0x1118] sm:$0xff]
        %v9920 = vld [vmem:[#allocation6 + $0x1120] sm:$0xff]
        %v9921 = vld [vmem:[#allocation6 + $0x1128] sm:$0xff]
        %v9922 = vld [vmem:[#allocation6 + $0x1130] sm:$0xff]
        %v9923 = vld [vmem:[#allocation6 + $0x1138] sm:$0xff]
        %v9924 = vld [vmem:[#allocation6 + $0x1140] sm:$0xff]
        %v9925 = vld [vmem:[#allocation6 + $0x1148] sm:$0xff]
        %v9926 = vld [vmem:[#allocation6 + $0x1150] sm:$0xff]
        %v9927 = vld [vmem:[#allocation6 + $0x1158] sm:$0xff]
        %v9928 = vld [vmem:[#allocation6 + $0x1160] sm:$0xff]
        %v9929 = vld [vmem:[#allocation6 + $0x1168] sm:$0xff]
        %v9930 = vld [vmem:[#allocation6 + $0x1170] sm:$0xff]
        %v9931 = vld [vmem:[#allocation6 + $0x1178] sm:$0xff]
        %v9932 = vld [vmem:[#allocation6 + $0x1180] sm:$0xff]
        %v9933 = vld [vmem:[#allocation6 + $0x1188] sm:$0xff]
        %v9934 = vld [vmem:[#allocation6 + $0x1190] sm:$0xff]
        %v9935 = vld [vmem:[#allocation6 + $0x1198] sm:$0xff]
        %v9936 = vld [vmem:[#allocation6 + $0x11a0] sm:$0xff]
        %v9937 = vld [vmem:[#allocation6 + $0x11a8] sm:$0xff]
        %v9938 = vld [vmem:[#allocation6 + $0x11b0] sm:$0xff]
        %v9939 = vld [vmem:[#allocation6 + $0x11b8] sm:$0xff]
        %v9940 = vld [vmem:[#allocation6 + $0x11c0] sm:$0xff]
        %v9941 = vld [vmem:[#allocation6 + $0x11c8] sm:$0xff]
        %v9942 = vld [vmem:[#allocation6 + $0x11d0] sm:$0xff]
        %v9943 = vld [vmem:[#allocation6 + $0x11d8] sm:$0xff]
        %v9944 = vld [vmem:[#allocation6 + $0x11e0] sm:$0xff]
        %v9945 = vld [vmem:[#allocation6 + $0x11e8] sm:$0xff]
        %v9946 = vld [vmem:[#allocation6 + $0x11f0] sm:$0xff]
        %v9947 = vld [vmem:[#allocation6 + $0x11f8] sm:$0xff]
        %v9948 = vld [vmem:[#allocation2] sm:$0xff]
        %v9949 = vld [vmem:[#allocation2 + $0x8] sm:$0xff]
        %v9950 = vld [vmem:[#allocation2 + $0x10] sm:$0xff]
        %v9951 = vld [vmem:[#allocation2 + $0x18] sm:$0xff]
        %v9952 = vld [vmem:[#allocation2 + $0x20] sm:$0xff]
        %v9953 = vld [vmem:[#allocation2 + $0x28] sm:$0xff]
        %v9954 = vld [vmem:[#allocation2 + $0x30] sm:$0xff]
        %v9955 = vld [vmem:[#allocation2 + $0x38] sm:$0xff]
        %v9956 = vld [vmem:[#allocation2 + $0x40] sm:$0xff]
        %v9957 = vld [vmem:[#allocation2 + $0x48] sm:$0xff]
        %v9958 = vld [vmem:[#allocation2 + $0x50] sm:$0xff]
        %v9959 = vld [vmem:[#allocation2 + $0x58] sm:$0xff]
        %v9960 = vld [vmem:[#allocation2 + $0x60] sm:$0xff]
        %v9961 = vld [vmem:[#allocation2 + $0x68] sm:$0xff]
        %v9962 = vld [vmem:[#allocation2 + $0x70] sm:$0xff]
        %v9963 = vld [vmem:[#allocation2 + $0x78] sm:$0xff]
        %v9964 = vld [vmem:[#allocation2 + $0x80] sm:$0xff]
        %v9965 = vld [vmem:[#allocation2 + $0x88] sm:$0xff]
        %v9966 = vld [vmem:[#allocation2 + $0x90] sm:$0xff]
        %v9967 = vld [vmem:[#allocation2 + $0x98] sm:$0xff]
        %v9968 = vld [vmem:[#allocation2 + $0xa0] sm:$0xff]
        %v9969 = vld [vmem:[#allocation2 + $0xa8] sm:$0xff]
        %v9970 = vld [vmem:[#allocation2 + $0xb0] sm:$0xff]
        %v9971 = vld [vmem:[#allocation2 + $0xb8] sm:$0xff]
        %v9972 = vld [vmem:[#allocation2 + $0xc0] sm:$0xff]
        %v9973 = vld [vmem:[#allocation2 + $0xc8] sm:$0xff]
        %v9974 = vld [vmem:[#allocation2 + $0xd0] sm:$0xff]
        %v9975 = vld [vmem:[#allocation2 + $0xd8] sm:$0xff]
        %v9976 = vld [vmem:[#allocation2 + $0xe0] sm:$0xff]
        %v9977 = vld [vmem:[#allocation2 + $0xe8] sm:$0xff]
        %v9978 = vld [vmem:[#allocation2 + $0xf0] sm:$0xff]
        %v9979 = vld [vmem:[#allocation2 + $0xf8] sm:$0xff]
        %v10044 = vunpack.c.l.b16 %v9884
        %v10045 = vunpack.c.h.b16 %v9884
        %v10046 = vunpack.c.l.b16 %v9885
        %v10047 = vunpack.c.h.b16 %v9885
        %v10048 = vunpack.c.l.b16 %v9886
        %v10049 = vunpack.c.h.b16 %v9886
        %v10050 = vunpack.c.l.b16 %v9887
        %v10051 = vunpack.c.h.b16 %v9887
        %v10052 = vunpack.c.l.b16 %v9888
        %v10053 = vunpack.c.h.b16 %v9888
        %v10054 = vunpack.c.l.b16 %v9889
        %v10055 = vunpack.c.h.b16 %v9889
        %v10056 = vunpack.c.l.b16 %v9890
        %v10057 = vunpack.c.h.b16 %v9890
        %v10058 = vunpack.c.l.b16 %v9891
        %v10059 = vunpack.c.h.b16 %v9891
        %v10060 = vunpack.c.l.b16 %v9892
        %v10061 = vunpack.c.h.b16 %v9892
        %v10062 = vunpack.c.l.b16 %v9893
        %v10063 = vunpack.c.h.b16 %v9893
        %v10064 = vunpack.c.l.b16 %v9894
        %v10065 = vunpack.c.h.b16 %v9894
        %v10066 = vunpack.c.l.b16 %v9895
        %v10067 = vunpack.c.h.b16 %v9895
        %v10068 = vunpack.c.l.b16 %v9896
        %v10069 = vunpack.c.h.b16 %v9896
        %v10070 = vunpack.c.l.b16 %v9897
        %v10071 = vunpack.c.h.b16 %v9897
        %v10072 = vunpack.c.l.b16 %v9898
        %v10073 = vunpack.c.h.b16 %v9898
        %v10074 = vunpack.c.l.b16 %v9899
        %v10075 = vunpack.c.h.b16 %v9899
        %v10076 = vunpack.c.l.b16 %v9900
        %v10077 = vunpack.c.h.b16 %v9900
        %v10078 = vunpack.c.l.b16 %v9901
        %v10079 = vunpack.c.h.b16 %v9901
        %v10080 = vunpack.c.l.b16 %v9902
        %v10081 = vunpack.c.h.b16 %v9902
        %v10082 = vunpack.c.l.b16 %v9903
        %v10083 = vunpack.c.h.b16 %v9903
        %v10084 = vunpack.c.l.b16 %v9904
        %v10085 = vunpack.c.h.b16 %v9904
        %v10086 = vunpack.c.l.b16 %v9905
        %v10087 = vunpack.c.h.b16 %v9905
        %v10088 = vunpack.c.l.b16 %v9906
        %v10089 = vunpack.c.h.b16 %v9906
        %v10090 = vunpack.c.l.b16 %v9907
        %v10091 = vunpack.c.h.b16 %v9907
        %v10092 = vunpack.c.l.b16 %v9908
        %v10093 = vunpack.c.h.b16 %v9908
        %v10094 = vunpack.c.l.b16 %v9909
        %v10095 = vunpack.c.h.b16 %v9909
        %v10096 = vunpack.c.l.b16 %v9910
        %v10097 = vunpack.c.h.b16 %v9910
        %v10098 = vunpack.c.l.b16 %v9911
        %v10099 = vunpack.c.h.b16 %v9911
        %v10100 = vunpack.c.l.b16 %v9912
        %v10101 = vunpack.c.h.b16 %v9912
        %v10102 = vunpack.c.l.b16 %v9913
        %v10103 = vunpack.c.h.b16 %v9913
        %v10104 = vunpack.c.l.b16 %v9914
        %v10105 = vunpack.c.h.b16 %v9914
        %v10106 = vunpack.c.l.b16 %v9915
        %v10107 = vunpack.c.h.b16 %v9915
        %v10108 = vunpack.c.l.b16 %v9916
        %v10109 = vunpack.c.h.b16 %v9916
        %v10110 = vunpack.c.l.b16 %v9917
        %v10111 = vunpack.c.h.b16 %v9917
        %v10112 = vunpack.c.l.b16 %v9918
        %v10113 = vunpack.c.h.b16 %v9918
        %v10114 = vunpack.c.l.b16 %v9919
        %v10115 = vunpack.c.h.b16 %v9919
        %v10116 = vunpack.c.l.b16 %v9920
        %v10117 = vunpack.c.h.b16 %v9920
        %v10118 = vunpack.c.l.b16 %v9921
        %v10119 = vunpack.c.h.b16 %v9921
        %v10120 = vunpack.c.l.b16 %v9922
        %v10121 = vunpack.c.h.b16 %v9922
        %v10122 = vunpack.c.l.b16 %v9923
        %v10123 = vunpack.c.h.b16 %v9923
        %v10124 = vunpack.c.l.b16 %v9924
        %v10125 = vunpack.c.h.b16 %v9924
        %v10126 = vunpack.c.l.b16 %v9925
        %v10127 = vunpack.c.h.b16 %v9925
        %v10128 = vunpack.c.l.b16 %v9926
        %v10129 = vunpack.c.h.b16 %v9926
        %v10130 = vunpack.c.l.b16 %v9927
        %v10131 = vunpack.c.h.b16 %v9927
        %v10132 = vunpack.c.l.b16 %v9928
        %v10133 = vunpack.c.h.b16 %v9928
        %v10134 = vunpack.c.l.b16 %v9929
        %v10135 = vunpack.c.h.b16 %v9929
        %v10136 = vunpack.c.l.b16 %v9930
        %v10137 = vunpack.c.h.b16 %v9930
        %v10138 = vunpack.c.l.b16 %v9931
        %v10139 = vunpack.c.h.b16 %v9931
        %v10140 = vunpack.c.l.b16 %v9932
        %v10141 = vunpack.c.h.b16 %v9932
        %v10142 = vunpack.c.l.b16 %v9933
        %v10143 = vunpack.c.h.b16 %v9933
        %v10144 = vunpack.c.l.b16 %v9934
        %v10145 = vunpack.c.h.b16 %v9934
        %v10146 = vunpack.c.l.b16 %v9935
        %v10147 = vunpack.c.h.b16 %v9935
        %v10148 = vunpack.c.l.b16 %v9936
        %v10149 = vunpack.c.h.b16 %v9936
        %v10150 = vunpack.c.l.b16 %v9937
        %v10151 = vunpack.c.h.b16 %v9937
        %v10152 = vunpack.c.l.b16 %v9938
        %v10153 = vunpack.c.h.b16 %v9938
        %v10154 = vunpack.c.l.b16 %v9939
        %v10155 = vunpack.c.h.b16 %v9939
        %v10156 = vunpack.c.l.b16 %v9940
        %v10157 = vunpack.c.h.b16 %v9940
        %v10158 = vunpack.c.l.b16 %v9941
        %v10159 = vunpack.c.h.b16 %v9941
        %v10160 = vunpack.c.l.b16 %v9942
        %v10161 = vunpack.c.h.b16 %v9942
        %v10162 = vunpack.c.l.b16 %v9943
        %v10163 = vunpack.c.h.b16 %v9943
        %v10164 = vunpack.c.l.b16 %v9944
        %v10165 = vunpack.c.h.b16 %v9944
        %v10166 = vunpack.c.l.b16 %v9945
        %v10167 = vunpack.c.h.b16 %v9945
        %v10168 = vunpack.c.l.b16 %v9946
        %v10169 = vunpack.c.h.b16 %v9946
        %v10170 = vunpack.c.l.b16 %v9947
        %v10171 = vunpack.c.h.b16 %v9947
        %v10172 = vpack.c.b16 %v10046, %v10044
        %v10173 = vpack.c.b16 %v10047, %v10045
        %v10174 = vpack.c.b16 %v10050, %v10048
        %v10175 = vpack.c.b16 %v10051, %v10049
        %v10176 = vpack.c.b16 %v10054, %v10052
        %v10177 = vpack.c.b16 %v10055, %v10053
        %v10178 = vpack.c.b16 %v10058, %v10056
        %v10179 = vpack.c.b16 %v10059, %v10057
        %v10180 = vpack.c.b16 %v10062, %v10060
        %v10181 = vpack.c.b16 %v10063, %v10061
        %v10182 = vpack.c.b16 %v10066, %v10064
        %v10183 = vpack.c.b16 %v10067, %v10065
        %v10184 = vpack.c.b16 %v10070, %v10068
        %v10185 = vpack.c.b16 %v10071, %v10069
        %v10186 = vpack.c.b16 %v10074, %v10072
        %v10187 = vpack.c.b16 %v10075, %v10073
        %v10188 = vpack.c.b16 %v10078, %v10076
        %v10189 = vpack.c.b16 %v10079, %v10077
        %v10190 = vpack.c.b16 %v10082, %v10080
        %v10191 = vpack.c.b16 %v10083, %v10081
        %v10192 = vpack.c.b16 %v10086, %v10084
        %v10193 = vpack.c.b16 %v10087, %v10085
        %v10194 = vpack.c.b16 %v10090, %v10088
        %v10195 = vpack.c.b16 %v10091, %v10089
        %v10196 = vpack.c.b16 %v10094, %v10092
        %v10197 = vpack.c.b16 %v10095, %v10093
        %v10198 = vpack.c.b16 %v10098, %v10096
        %v10199 = vpack.c.b16 %v10099, %v10097
        %v10200 = vpack.c.b16 %v10102, %v10100
        %v10201 = vpack.c.b16 %v10103, %v10101
        %v10202 = vpack.c.b16 %v10106, %v10104
        %v10203 = vpack.c.b16 %v10107, %v10105
        %v10204 = vpack.c.b16 %v10110, %v10108
        %v10205 = vpack.c.b16 %v10111, %v10109
        %v10206 = vpack.c.b16 %v10114, %v10112
        %v10207 = vpack.c.b16 %v10115, %v10113
        %v10208 = vpack.c.b16 %v10118, %v10116
        %v10209 = vpack.c.b16 %v10119, %v10117
        %v10210 = vpack.c.b16 %v10122, %v10120
        %v10211 = vpack.c.b16 %v10123, %v10121
        %v10212 = vpack.c.b16 %v10126, %v10124
        %v10213 = vpack.c.b16 %v10127, %v10125
        %v10214 = vpack.c.b16 %v10130, %v10128
        %v10215 = vpack.c.b16 %v10131, %v10129
        %v10216 = vpack.c.b16 %v10134, %v10132
        %v10217 = vpack.c.b16 %v10135, %v10133
        %v10218 = vpack.c.b16 %v10138, %v10136
        %v10219 = vpack.c.b16 %v10139, %v10137
        %v10220 = vpack.c.b16 %v10142, %v10140
        %v10221 = vpack.c.b16 %v10143, %v10141
        %v10222 = vpack.c.b16 %v10146, %v10144
        %v10223 = vpack.c.b16 %v10147, %v10145
        %v10224 = vpack.c.b16 %v10150, %v10148
        %v10225 = vpack.c.b16 %v10151, %v10149
        %v10226 = vpack.c.b16 %v10154, %v10152
        %v10227 = vpack.c.b16 %v10155, %v10153
        %v10228 = vpack.c.b16 %v10158, %v10156
        %v10229 = vpack.c.b16 %v10159, %v10157
        %v10230 = vpack.c.b16 %v10162, %v10160
        %v10231 = vpack.c.b16 %v10163, %v10161
        %v10232 = vpack.c.b16 %v10166, %v10164
        %v10233 = vpack.c.b16 %v10167, %v10165
        %v10234 = vpack.c.b16 %v10170, %v10168
        %v10235 = vpack.c.b16 %v10171, %v10169
        %10300 = vmatpush.bf16.msra.mxu0 %v10186
        %10301 = vmatpush.bf16.msra.mxu0 %v10184
        %10302 = vmatpush.bf16.msra.mxu0 %v10182
        %10303 = vmatpush.bf16.msra.mxu0 %v10180
        %10304 = vmatpush.bf16.msra.mxu0 %v10178
        %10305 = vmatpush.bf16.msra.mxu0 %v10176
        %10306 = vmatpush.bf16.msra.mxu0 %v10174
        %10307 = vmatpush.bf16.msra.mxu0 %v10172
        %10308 = vmatmul.bf16.gmra.mxu0 %v9852
        %v10309 = vpop.f32.mrf.mxu0
        %v10310 = vadd.f32 0.0, %v10309
        %v10311 = vpop.f32.mrf.mxu0
        %v10312 = vadd.f32 0.0, %v10311
        %10313 = vmatmul.bf16.gmra.mxu0 %v9856
        %v10314 = vpop.f32.mrf.mxu0
        %v10315 = vadd.f32 0.0, %v10314
        %v10316 = vpop.f32.mrf.mxu0
        %v10317 = vadd.f32 0.0, %v10316
        %10318 = vmatmul.bf16.gmra.mxu0 %v9860
        %v10319 = vpop.f32.mrf.mxu0
        %v10320 = vadd.f32 0.0, %v10319
        %v10321 = vpop.f32.mrf.mxu0
        %v10322 = vadd.f32 0.0, %v10321
        %10323 = vmatmul.bf16.gmra.mxu0 %v9864
        %v10324 = vpop.f32.mrf.mxu0
        %v10325 = vadd.f32 0.0, %v10324
        %v10326 = vpop.f32.mrf.mxu0
        %v10327 = vadd.f32 0.0, %v10326
        %10328 = vmatmul.bf16.gmra.mxu0 %v9868
        %v10329 = vpop.f32.mrf.mxu0
        %v10330 = vadd.f32 0.0, %v10329
        %v10331 = vpop.f32.mrf.mxu0
        %v10332 = vadd.f32 0.0, %v10331
        %10333 = vmatmul.bf16.gmra.mxu0 %v9872
        %v10334 = vpop.f32.mrf.mxu0
        %v10335 = vadd.f32 0.0, %v10334
        %v10336 = vpop.f32.mrf.mxu0
        %v10337 = vadd.f32 0.0, %v10336
        %10338 = vmatmul.bf16.gmra.mxu0 %v9876
        %v10339 = vpop.f32.mrf.mxu0
        %v10340 = vadd.f32 0.0, %v10339
        %v10341 = vpop.f32.mrf.mxu0
        %v10342 = vadd.f32 0.0, %v10341
        %10343 = vmatmul.bf16.gmra.mxu0 %v9880
        %v10344 = vpop.f32.mrf.mxu0
        %v10345 = vadd.f32 0.0, %v10344
        %v10346 = vpop.f32.mrf.mxu0
        %v10347 = vadd.f32 0.0, %v10346
        %10348 = vdwg.mxu0
        %10349 = vmatpush.bf16.msra.mxu0 %v10202
        %10350 = vmatpush.bf16.msra.mxu0 %v10200
        %10351 = vmatpush.bf16.msra.mxu0 %v10198
        %10352 = vmatpush.bf16.msra.mxu0 %v10196
        %10353 = vmatpush.bf16.msra.mxu0 %v10194
        %10354 = vmatpush.bf16.msra.mxu0 %v10192
        %10355 = vmatpush.bf16.msra.mxu0 %v10190
        %10356 = vmatpush.bf16.msra.mxu0 %v10188
        %10357 = vmatmul.bf16.gmra.mxu0 %v9853
        %v10358 = vpop.f32.mrf.mxu0
        %v10359 = vadd.f32 %v10310, %v10358
        %v10360 = vpop.f32.mrf.mxu0
        %v10361 = vadd.f32 %v10312, %v10360
        %10362 = vmatmul.bf16.gmra.mxu0 %v9857
        %v10363 = vpop.f32.mrf.mxu0
        %v10364 = vadd.f32 %v10315, %v10363
        %v10365 = vpop.f32.mrf.mxu0
        %v10366 = vadd.f32 %v10317, %v10365
        %10367 = vmatmul.bf16.gmra.mxu0 %v9861
        %v10368 = vpop.f32.mrf.mxu0
        %v10369 = vadd.f32 %v10320, %v10368
        %v10370 = vpop.f32.mrf.mxu0
        %v10371 = vadd.f32 %v10322, %v10370
        %10372 = vmatmul.bf16.gmra.mxu0 %v9865
        %v10373 = vpop.f32.mrf.mxu0
        %v10374 = vadd.f32 %v10325, %v10373
        %v10375 = vpop.f32.mrf.mxu0
        %v10376 = vadd.f32 %v10327, %v10375
        %10377 = vmatmul.bf16.gmra.mxu0 %v9869
        %v10378 = vpop.f32.mrf.mxu0
        %v10379 = vadd.f32 %v10330, %v10378
        %v10380 = vpop.f32.mrf.mxu0
        %v10381 = vadd.f32 %v10332, %v10380
        %10382 = vmatmul.bf16.gmra.mxu0 %v9873
        %v10383 = vpop.f32.mrf.mxu0
        %v10384 = vadd.f32 %v10335, %v10383
        %v10385 = vpop.f32.mrf.mxu0
        %v10386 = vadd.f32 %v10337, %v10385
        %10387 = vmatmul.bf16.gmra.mxu0 %v9877
        %v10388 = vpop.f32.mrf.mxu0
        %v10389 = vadd.f32 %v10340, %v10388
        %v10390 = vpop.f32.mrf.mxu0
        %v10391 = vadd.f32 %v10342, %v10390
        %10392 = vmatmul.bf16.gmra.mxu0 %v9881
        %v10393 = vpop.f32.mrf.mxu0
        %v10394 = vadd.f32 %v10345, %v10393
        %v10395 = vpop.f32.mrf.mxu0
        %v10396 = vadd.f32 %v10347, %v10395
        %10397 = vdwg.mxu0
        %10398 = vmatpush.bf16.msra.mxu0 %v10218
        %10399 = vmatpush.bf16.msra.mxu0 %v10216
        %10400 = vmatpush.bf16.msra.mxu0 %v10214
        %10401 = vmatpush.bf16.msra.mxu0 %v10212
        %10402 = vmatpush.bf16.msra.mxu0 %v10210
        %10403 = vmatpush.bf16.msra.mxu0 %v10208
        %10404 = vmatpush.bf16.msra.mxu0 %v10206
        %10405 = vmatpush.bf16.msra.mxu0 %v10204
        %10406 = vmatmul.bf16.gmra.mxu0 %v9854
        %v10407 = vpop.f32.mrf.mxu0
        %v10408 = vadd.f32 %v10359, %v10407
        %v10409 = vpop.f32.mrf.mxu0
        %v10410 = vadd.f32 %v10361, %v10409
        %10411 = vmatmul.bf16.gmra.mxu0 %v9858
        %v10412 = vpop.f32.mrf.mxu0
        %v10413 = vadd.f32 %v10364, %v10412
        %v10414 = vpop.f32.mrf.mxu0
        %v10415 = vadd.f32 %v10366, %v10414
        %10416 = vmatmul.bf16.gmra.mxu0 %v9862
        %v10417 = vpop.f32.mrf.mxu0
        %v10418 = vadd.f32 %v10369, %v10417
        %v10419 = vpop.f32.mrf.mxu0
        %v10420 = vadd.f32 %v10371, %v10419
        %10421 = vmatmul.bf16.gmra.mxu0 %v9866
        %v10422 = vpop.f32.mrf.mxu0
        %v10423 = vadd.f32 %v10374, %v10422
        %v10424 = vpop.f32.mrf.mxu0
        %v10425 = vadd.f32 %v10376, %v10424
        %10426 = vmatmul.bf16.gmra.mxu0 %v9870
        %v10427 = vpop.f32.mrf.mxu0
        %v10428 = vadd.f32 %v10379, %v10427
        %v10429 = vpop.f32.mrf.mxu0
        %v10430 = vadd.f32 %v10381, %v10429
        %10431 = vmatmul.bf16.gmra.mxu0 %v9874
        %v10432 = vpop.f32.mrf.mxu0
        %v10433 = vadd.f32 %v10384, %v10432
        %v10434 = vpop.f32.mrf.mxu0
        %v10435 = vadd.f32 %v10386, %v10434
        %10436 = vmatmul.bf16.gmra.mxu0 %v9878
        %v10437 = vpop.f32.mrf.mxu0
        %v10438 = vadd.f32 %v10389, %v10437
        %v10439 = vpop.f32.mrf.mxu0
        %v10440 = vadd.f32 %v10391, %v10439
        %10441 = vmatmul.bf16.gmra.mxu0 %v9882
        %v10442 = vpop.f32.mrf.mxu0
        %v10443 = vadd.f32 %v10394, %v10442
        %v10444 = vpop.f32.mrf.mxu0
        %v10445 = vadd.f32 %v10396, %v10444
        %10446 = vdwg.mxu0
        %10447 = vmatpush.bf16.msra.mxu0 %v10234
        %10448 = vmatpush.bf16.msra.mxu0 %v10232
        %10449 = vmatpush.bf16.msra.mxu0 %v10230
        %10450 = vmatpush.bf16.msra.mxu0 %v10228
        %10451 = vmatpush.bf16.msra.mxu0 %v10226
        %10452 = vmatpush.bf16.msra.mxu0 %v10224
        %10453 = vmatpush.bf16.msra.mxu0 %v10222
        %10454 = vmatpush.bf16.msra.mxu0 %v10220
        %10455 = vmatmul.bf16.gmra.mxu0 %v9855
        %v10456 = vpop.f32.mrf.mxu0
        %v10457 = vadd.f32 %v10408, %v10456
        %v10458 = vpop.f32.mrf.mxu0
        %v10459 = vadd.f32 %v10410, %v10458
        %10460 = vmatmul.bf16.gmra.mxu0 %v9859
        %v10461 = vpop.f32.mrf.mxu0
        %v10462 = vadd.f32 %v10413, %v10461
        %v10463 = vpop.f32.mrf.mxu0
        %v10464 = vadd.f32 %v10415, %v10463
        %10465 = vmatmul.bf16.gmra.mxu0 %v9863
        %v10466 = vpop.f32.mrf.mxu0
        %v10467 = vadd.f32 %v10418, %v10466
        %v10468 = vpop.f32.mrf.mxu0
        %v10469 = vadd.f32 %v10420, %v10468
        %10470 = vmatmul.bf16.gmra.mxu0 %v9867
        %v10471 = vpop.f32.mrf.mxu0
        %v10472 = vadd.f32 %v10423, %v10471
        %v10473 = vpop.f32.mrf.mxu0
        %v10474 = vadd.f32 %v10425, %v10473
        %10475 = vmatmul.bf16.gmra.mxu0 %v9871
        %v10476 = vpop.f32.mrf.mxu0
        %v10477 = vadd.f32 %v10428, %v10476
        %v10478 = vpop.f32.mrf.mxu0
        %v10479 = vadd.f32 %v10430, %v10478
        %10480 = vmatmul.bf16.gmra.mxu0 %v9875
        %v10481 = vpop.f32.mrf.mxu0
        %v10482 = vadd.f32 %v10433, %v10481
        %v10483 = vpop.f32.mrf.mxu0
        %v10484 = vadd.f32 %v10435, %v10483
        %10485 = vmatmul.bf16.gmra.mxu0 %v9879
        %v10486 = vpop.f32.mrf.mxu0
        %v10487 = vadd.f32 %v10438, %v10486
        %v10488 = vpop.f32.mrf.mxu0
        %v10489 = vadd.f32 %v10440, %v10488
        %10490 = vmatmul.bf16.gmra.mxu0 %v9883
        %v10491 = vpop.f32.mrf.mxu0
        %v10492 = vadd.f32 %v10443, %v10491
        %v10493 = vpop.f32.mrf.mxu0
        %v10494 = vadd.f32 %v10445, %v10493
        %10495 = vdwg.mxu0
        %10496 = vmatpush.bf16.msra.mxu0 %v10187
        %10497 = vmatpush.bf16.msra.mxu0 %v10185
        %10498 = vmatpush.bf16.msra.mxu0 %v10183
        %10499 = vmatpush.bf16.msra.mxu0 %v10181
        %10500 = vmatpush.bf16.msra.mxu0 %v10179
        %10501 = vmatpush.bf16.msra.mxu0 %v10177
        %10502 = vmatpush.bf16.msra.mxu0 %v10175
        %10503 = vmatpush.bf16.msra.mxu0 %v10173
        %10504 = vmatmul.bf16.gmra.mxu0 %v9852
        %v10505 = vpop.f32.mrf.mxu0
        %v10506 = vadd.f32 0.0, %v10505
        %v10507 = vpop.f32.mrf.mxu0
        %v10508 = vadd.f32 0.0, %v10507
        %10509 = vmatmul.bf16.gmra.mxu0 %v9856
        %v10510 = vpop.f32.mrf.mxu0
        %v10511 = vadd.f32 0.0, %v10510
        %v10512 = vpop.f32.mrf.mxu0
        %v10513 = vadd.f32 0.0, %v10512
        %10514 = vmatmul.bf16.gmra.mxu0 %v9860
        %v10515 = vpop.f32.mrf.mxu0
        %v10516 = vadd.f32 0.0, %v10515
        %v10517 = vpop.f32.mrf.mxu0
        %v10518 = vadd.f32 0.0, %v10517
        %10519 = vmatmul.bf16.gmra.mxu0 %v9864
        %v10520 = vpop.f32.mrf.mxu0
        %v10521 = vadd.f32 0.0, %v10520
        %v10522 = vpop.f32.mrf.mxu0
        %v10523 = vadd.f32 0.0, %v10522
        %10524 = vmatmul.bf16.gmra.mxu0 %v9868
        %v10525 = vpop.f32.mrf.mxu0
        %v10526 = vadd.f32 0.0, %v10525
        %v10527 = vpop.f32.mrf.mxu0
        %v10528 = vadd.f32 0.0, %v10527
        %10529 = vmatmul.bf16.gmra.mxu0 %v9872
        %v10530 = vpop.f32.mrf.mxu0
        %v10531 = vadd.f32 0.0, %v10530
        %v10532 = vpop.f32.mrf.mxu0
        %v10533 = vadd.f32 0.0, %v10532
        %10534 = vmatmul.bf16.gmra.mxu0 %v9876
        %v10535 = vpop.f32.mrf.mxu0
        %v10536 = vadd.f32 0.0, %v10535
        %v10537 = vpop.f32.mrf.mxu0
        %v10538 = vadd.f32 0.0, %v10537
        %10539 = vmatmul.bf16.gmra.mxu0 %v9880
        %v10540 = vpop.f32.mrf.mxu0
        %v10541 = vadd.f32 0.0, %v10540
        %v10542 = vpop.f32.mrf.mxu0
        %v10543 = vadd.f32 0.0, %v10542
        %10544 = vdwg.mxu0
        %10545 = vmatpush.bf16.msra.mxu0 %v10203
        %10546 = vmatpush.bf16.msra.mxu0 %v10201
        %10547 = vmatpush.bf16.msra.mxu0 %v10199
        %10548 = vmatpush.bf16.msra.mxu0 %v10197
        %10549 = vmatpush.bf16.msra.mxu0 %v10195
        %10550 = vmatpush.bf16.msra.mxu0 %v10193
        %10551 = vmatpush.bf16.msra.mxu0 %v10191
        %10552 = vmatpush.bf16.msra.mxu0 %v10189
        %10553 = vmatmul.bf16.gmra.mxu0 %v9853
        %v10554 = vpop.f32.mrf.mxu0
        %v10555 = vadd.f32 %v10506, %v10554
        %v10556 = vpop.f32.mrf.mxu0
        %v10557 = vadd.f32 %v10508, %v10556
        %10558 = vmatmul.bf16.gmra.mxu0 %v9857
        %v10559 = vpop.f32.mrf.mxu0
        %v10560 = vadd.f32 %v10511, %v10559
        %v10561 = vpop.f32.mrf.mxu0
        %v10562 = vadd.f32 %v10513, %v10561
        %10563 = vmatmul.bf16.gmra.mxu0 %v9861
        %v10564 = vpop.f32.mrf.mxu0
        %v10565 = vadd.f32 %v10516, %v10564
        %v10566 = vpop.f32.mrf.mxu0
        %v10567 = vadd.f32 %v10518, %v10566
        %10568 = vmatmul.bf16.gmra.mxu0 %v9865
        %v10569 = vpop.f32.mrf.mxu0
        %v10570 = vadd.f32 %v10521, %v10569
        %v10571 = vpop.f32.mrf.mxu0
        %v10572 = vadd.f32 %v10523, %v10571
        %10573 = vmatmul.bf16.gmra.mxu0 %v9869
        %v10574 = vpop.f32.mrf.mxu0
        %v10575 = vadd.f32 %v10526, %v10574
        %v10576 = vpop.f32.mrf.mxu0
        %v10577 = vadd.f32 %v10528, %v10576
        %10578 = vmatmul.bf16.gmra.mxu0 %v9873
        %v10579 = vpop.f32.mrf.mxu0
        %v10580 = vadd.f32 %v10531, %v10579
        %v10581 = vpop.f32.mrf.mxu0
        %v10582 = vadd.f32 %v10533, %v10581
        %10583 = vmatmul.bf16.gmra.mxu0 %v9877
        %v10584 = vpop.f32.mrf.mxu0
        %v10585 = vadd.f32 %v10536, %v10584
        %v10586 = vpop.f32.mrf.mxu0
        %v10587 = vadd.f32 %v10538, %v10586
        %10588 = vmatmul.bf16.gmra.mxu0 %v9881
        %v10589 = vpop.f32.mrf.mxu0
        %v10590 = vadd.f32 %v10541, %v10589
        %v10591 = vpop.f32.mrf.mxu0
        %v10592 = vadd.f32 %v10543, %v10591
        %10593 = vdwg.mxu0
        %10594 = vmatpush.bf16.msra.mxu0 %v10219
        %10595 = vmatpush.bf16.msra.mxu0 %v10217
        %10596 = vmatpush.bf16.msra.mxu0 %v10215
        %10597 = vmatpush.bf16.msra.mxu0 %v10213
        %10598 = vmatpush.bf16.msra.mxu0 %v10211
        %10599 = vmatpush.bf16.msra.mxu0 %v10209
        %10600 = vmatpush.bf16.msra.mxu0 %v10207
        %10601 = vmatpush.bf16.msra.mxu0 %v10205
        %10602 = vmatmul.bf16.gmra.mxu0 %v9854
        %v10603 = vpop.f32.mrf.mxu0
        %v10604 = vadd.f32 %v10555, %v10603
        %v10605 = vpop.f32.mrf.mxu0
        %v10606 = vadd.f32 %v10557, %v10605
        %10607 = vmatmul.bf16.gmra.mxu0 %v9858
        %v10608 = vpop.f32.mrf.mxu0
        %v10609 = vadd.f32 %v10560, %v10608
        %v10610 = vpop.f32.mrf.mxu0
        %v10611 = vadd.f32 %v10562, %v10610
        %10612 = vmatmul.bf16.gmra.mxu0 %v9862
        %v10613 = vpop.f32.mrf.mxu0
        %v10614 = vadd.f32 %v10565, %v10613
        %v10615 = vpop.f32.mrf.mxu0
        %v10616 = vadd.f32 %v10567, %v10615
        %10617 = vmatmul.bf16.gmra.mxu0 %v9866
        %v10618 = vpop.f32.mrf.mxu0
        %v10619 = vadd.f32 %v10570, %v10618
        %v10620 = vpop.f32.mrf.mxu0
        %v10621 = vadd.f32 %v10572, %v10620
        %10622 = vmatmul.bf16.gmra.mxu0 %v9870
        %v10623 = vpop.f32.mrf.mxu0
        %v10624 = vadd.f32 %v10575, %v10623
        %v10625 = vpop.f32.mrf.mxu0
        %v10626 = vadd.f32 %v10577, %v10625
        %10627 = vmatmul.bf16.gmra.mxu0 %v9874
        %v10628 = vpop.f32.mrf.mxu0
        %v10629 = vadd.f32 %v10580, %v10628
        %v10630 = vpop.f32.mrf.mxu0
        %v10631 = vadd.f32 %v10582, %v10630
        %10632 = vmatmul.bf16.gmra.mxu0 %v9878
        %v10633 = vpop.f32.mrf.mxu0
        %v10634 = vadd.f32 %v10585, %v10633
        %v10635 = vpop.f32.mrf.mxu0
        %v10636 = vadd.f32 %v10587, %v10635
        %10637 = vmatmul.bf16.gmra.mxu0 %v9882
        %v10638 = vpop.f32.mrf.mxu0
        %v10639 = vadd.f32 %v10590, %v10638
        %v10640 = vpop.f32.mrf.mxu0
        %v10641 = vadd.f32 %v10592, %v10640
        %10642 = vdwg.mxu0
        %10643 = vmatpush.bf16.msra.mxu0 %v10235
        %10644 = vmatpush.bf16.msra.mxu0 %v10233
        %10645 = vmatpush.bf16.msra.mxu0 %v10231
        %10646 = vmatpush.bf16.msra.mxu0 %v10229
        %10647 = vmatpush.bf16.msra.mxu0 %v10227
        %10648 = vmatpush.bf16.msra.mxu0 %v10225
        %10649 = vmatpush.bf16.msra.mxu0 %v10223
        %10650 = vmatpush.bf16.msra.mxu0 %v10221
        %10651 = vmatmul.bf16.gmra.mxu0 %v9855
        %v10652 = vpop.f32.mrf.mxu0
        %v10653 = vadd.f32 %v10604, %v10652
        %v10654 = vpop.f32.mrf.mxu0
        %v10655 = vadd.f32 %v10606, %v10654
        %10656 = vmatmul.bf16.gmra.mxu0 %v9859
        %v10657 = vpop.f32.mrf.mxu0
        %v10658 = vadd.f32 %v10609, %v10657
        %v10659 = vpop.f32.mrf.mxu0
        %v10660 = vadd.f32 %v10611, %v10659
        %10661 = vmatmul.bf16.gmra.mxu0 %v9863
        %v10662 = vpop.f32.mrf.mxu0
        %v10663 = vadd.f32 %v10614, %v10662
        %v10664 = vpop.f32.mrf.mxu0
        %v10665 = vadd.f32 %v10616, %v10664
        %10666 = vmatmul.bf16.gmra.mxu0 %v9867
        %v10667 = vpop.f32.mrf.mxu0
        %v10668 = vadd.f32 %v10619, %v10667
        %v10669 = vpop.f32.mrf.mxu0
        %v10670 = vadd.f32 %v10621, %v10669
        %10671 = vmatmul.bf16.gmra.mxu0 %v9871
        %v10672 = vpop.f32.mrf.mxu0
        %v10673 = vadd.f32 %v10624, %v10672
        %v10674 = vpop.f32.mrf.mxu0
        %v10675 = vadd.f32 %v10626, %v10674
        %10676 = vmatmul.bf16.gmra.mxu0 %v9875
        %v10677 = vpop.f32.mrf.mxu0
        %v10678 = vadd.f32 %v10629, %v10677
        %v10679 = vpop.f32.mrf.mxu0
        %v10680 = vadd.f32 %v10631, %v10679
        %10681 = vmatmul.bf16.gmra.mxu0 %v9879
        %v10682 = vpop.f32.mrf.mxu0
        %v10683 = vadd.f32 %v10634, %v10682
        %v10684 = vpop.f32.mrf.mxu0
        %v10685 = vadd.f32 %v10636, %v10684
        %10686 = vmatmul.bf16.gmra.mxu0 %v9883
        %v10687 = vpop.f32.mrf.mxu0
        %v10688 = vadd.f32 %v10639, %v10687
        %v10689 = vpop.f32.mrf.mxu0
        %v10690 = vadd.f32 %v10641, %v10689
        %10691 = vdwg.mxu0
        %v10692 = vadd.f32 %v9948, %v10457
        %v10693 = vadd.f32 %v9949, %v10653
        %v10694 = vadd.f32 %v9950, %v10459
        %v10695 = vadd.f32 %v9951, %v10655
        %v10696 = vadd.f32 %v9952, %v10462
        %v10697 = vadd.f32 %v9953, %v10658
        %v10698 = vadd.f32 %v9954, %v10464
        %v10699 = vadd.f32 %v9955, %v10660
        %v10700 = vadd.f32 %v9956, %v10467
        %v10701 = vadd.f32 %v9957, %v10663
        %v10702 = vadd.f32 %v9958, %v10469
        %v10703 = vadd.f32 %v9959, %v10665
        %v10704 = vadd.f32 %v9960, %v10472
        %v10705 = vadd.f32 %v9961, %v10668
        %v10706 = vadd.f32 %v9962, %v10474
        %v10707 = vadd.f32 %v9963, %v10670
        %v10708 = vadd.f32 %v9964, %v10477
        %v10709 = vadd.f32 %v9965, %v10673
        %v10710 = vadd.f32 %v9966, %v10479
        %v10711 = vadd.f32 %v9967, %v10675
        %v10712 = vadd.f32 %v9968, %v10482
        %v10713 = vadd.f32 %v9969, %v10678
        %v10714 = vadd.f32 %v9970, %v10484
        %v10715 = vadd.f32 %v9971, %v10680
        %v10716 = vadd.f32 %v9972, %v10487
        %v10717 = vadd.f32 %v9973, %v10683
        %v10718 = vadd.f32 %v9974, %v10489
        %v10719 = vadd.f32 %v9975, %v10685
        %v10720 = vadd.f32 %v9976, %v10492
        %v10721 = vadd.f32 %v9977, %v10688
        %v10722 = vadd.f32 %v9978, %v10494
        %v10723 = vadd.f32 %v9979, %v10690
        %10724 = vst [vmem:[#allocation2] sm:$0xff] %v10692
        %10725 = vst [vmem:[#allocation2 + $0x8] sm:$0xff] %v10693
        %10726 = vst [vmem:[#allocation2 + $0x10] sm:$0xff] %v10694
        %10727 = vst [vmem:[#allocation2 + $0x18] sm:$0xff] %v10695
        %10728 = vst [vmem:[#allocation2 + $0x20] sm:$0xff] %v10696
        %10729 = vst [vmem:[#allocation2 + $0x28] sm:$0xff] %v10697
        %10730 = vst [vmem:[#allocation2 + $0x30] sm:$0xff] %v10698
        %10731 = vst [vmem:[#allocation2 + $0x38] sm:$0xff] %v10699
        %10732 = vst [vmem:[#allocation2 + $0x40] sm:$0xff] %v10700
        %10733 = vst [vmem:[#allocation2 + $0x48] sm:$0xff] %v10701
        %10734 = vst [vmem:[#allocation2 + $0x50] sm:$0xff] %v10702
        %10735 = vst [vmem:[#allocation2 + $0x58] sm:$0xff] %v10703
        %10736 = vst [vmem:[#allocation2 + $0x60] sm:$0xff] %v10704
        %10737 = vst [vmem:[#allocation2 + $0x68] sm:$0xff] %v10705
        %10738 = vst [vmem:[#allocation2 + $0x70] sm:$0xff] %v10706
        %10739 = vst [vmem:[#allocation2 + $0x78] sm:$0xff] %v10707
        %10740 = vst [vmem:[#allocation2 + $0x80] sm:$0xff] %v10708
        %10741 = vst [vmem:[#allocation2 + $0x88] sm:$0xff] %v10709
        %10742 = vst [vmem:[#allocation2 + $0x90] sm:$0xff] %v10710
        %10743 = vst [vmem:[#allocation2 + $0x98] sm:$0xff] %v10711
        %10744 = vst [vmem:[#allocation2 + $0xa0] sm:$0xff] %v10712
        %10745 = vst [vmem:[#allocation2 + $0xa8] sm:$0xff] %v10713
        %10746 = vst [vmem:[#allocation2 + $0xb0] sm:$0xff] %v10714
        %10747 = vst [vmem:[#allocation2 + $0xb8] sm:$0xff] %v10715
        %10748 = vst [vmem:[#allocation2 + $0xc0] sm:$0xff] %v10716
        %10749 = vst [vmem:[#allocation2 + $0xc8] sm:$0xff] %v10717
        %10750 = vst [vmem:[#allocation2 + $0xd0] sm:$0xff] %v10718
        %10751 = vst [vmem:[#allocation2 + $0xd8] sm:$0xff] %v10719
        %10752 = vst [vmem:[#allocation2 + $0xe0] sm:$0xff] %v10720
        %10753 = vst [vmem:[#allocation2 + $0xe8] sm:$0xff] %v10721
        %10754 = vst [vmem:[#allocation2 + $0xf0] sm:$0xff] %v10722
        %10755 = vst [vmem:[#allocation2 + $0xf8] sm:$0xff] %v10723
        %v10756 = vld [vmem:[#allocation2] sm:$0xff]
        %v10757 = vld [vmem:[#allocation2 + $0x8] sm:$0xff]
        %v10758 = vld [vmem:[#allocation2 + $0x10] sm:$0xff]
        %v10759 = vld [vmem:[#allocation2 + $0x18] sm:$0xff]
        %v10760 = vld [vmem:[#allocation2 + $0x20] sm:$0xff]
        %v10761 = vld [vmem:[#allocation2 + $0x28] sm:$0xff]
        %v10762 = vld [vmem:[#allocation2 + $0x30] sm:$0xff]
        %v10763 = vld [vmem:[#allocation2 + $0x38] sm:$0xff]
        %v10764 = vld [vmem:[#allocation2 + $0x40] sm:$0xff]
        %v10765 = vld [vmem:[#allocation2 + $0x48] sm:$0xff]
        %v10766 = vld [vmem:[#allocation2 + $0x50] sm:$0xff]
        %v10767 = vld [vmem:[#allocation2 + $0x58] sm:$0xff]
        %v10768 = vld [vmem:[#allocation2 + $0x60] sm:$0xff]
        %v10769 = vld [vmem:[#allocation2 + $0x68] sm:$0xff]
        %v10770 = vld [vmem:[#allocation2 + $0x70] sm:$0xff]
        %v10771 = vld [vmem:[#allocation2 + $0x78] sm:$0xff]
        %v10772 = vld [vmem:[#allocation2 + $0x80] sm:$0xff]
        %v10773 = vld [vmem:[#allocation2 + $0x88] sm:$0xff]
        %v10774 = vld [vmem:[#allocation2 + $0x90] sm:$0xff]
        %v10775 = vld [vmem:[#allocation2 + $0x98] sm:$0xff]
        %v10776 = vld [vmem:[#allocation2 + $0xa0] sm:$0xff]
        %v10777 = vld [vmem:[#allocation2 + $0xa8] sm:$0xff]
        %v10778 = vld [vmem:[#allocation2 + $0xb0] sm:$0xff]
        %v10779 = vld [vmem:[#allocation2 + $0xb8] sm:$0xff]
        %v10780 = vld [vmem:[#allocation2 + $0xc0] sm:$0xff]
        %v10781 = vld [vmem:[#allocation2 + $0xc8] sm:$0xff]
        %v10782 = vld [vmem:[#allocation2 + $0xd0] sm:$0xff]
        %v10783 = vld [vmem:[#allocation2 + $0xd8] sm:$0xff]
        %v10784 = vld [vmem:[#allocation2 + $0xe0] sm:$0xff]
        %v10785 = vld [vmem:[#allocation2 + $0xe8] sm:$0xff]
        %v10786 = vld [vmem:[#allocation2 + $0xf0] sm:$0xff]
        %v10787 = vld [vmem:[#allocation2 + $0xf8] sm:$0xff]
        %v10788 = vmul.f32 %v10756, %v10756
        %v10789 = vmul.f32 %v10758, %v10758
        %v10790 = vmul.f32 %v10760, %v10760
        %v10791 = vmul.f32 %v10762, %v10762
        %v10792 = vmul.f32 %v10764, %v10764
        %v10793 = vmul.f32 %v10766, %v10766
        %v10794 = vmul.f32 %v10768, %v10768
        %v10795 = vmul.f32 %v10770, %v10770
        %v10796 = vmul.f32 %v10772, %v10772
        %v10797 = vmul.f32 %v10774, %v10774
        %v10798 = vmul.f32 %v10776, %v10776
        %v10799 = vmul.f32 %v10778, %v10778
        %v10800 = vmul.f32 %v10780, %v10780
        %v10801 = vmul.f32 %v10782, %v10782
        %v10802 = vmul.f32 %v10784, %v10784
        %v10803 = vmul.f32 %v10786, %v10786
        %v10804 = vmul.f32 %v10757, %v10757
        %v10805 = vmul.f32 %v10759, %v10759
        %v10806 = vmul.f32 %v10761, %v10761
        %v10807 = vmul.f32 %v10763, %v10763
        %v10808 = vmul.f32 %v10765, %v10765
        %v10809 = vmul.f32 %v10767, %v10767
        %v10810 = vmul.f32 %v10769, %v10769
        %v10811 = vmul.f32 %v10771, %v10771
        %v10812 = vmul.f32 %v10773, %v10773
        %v10813 = vmul.f32 %v10775, %v10775
        %v10814 = vmul.f32 %v10777, %v10777
        %v10815 = vmul.f32 %v10779, %v10779
        %v10816 = vmul.f32 %v10781, %v10781
        %v10817 = vmul.f32 %v10783, %v10783
        %v10818 = vmul.f32 %v10785, %v10785
        %v10819 = vmul.f32 %v10787, %v10787
        %v10820 = vadd.f32 %v10788, %v10804
        %v10821 = vadd.f32 %v10789, %v10805
        %v10822 = vadd.f32 %v10790, %v10806
        %v10823 = vadd.f32 %v10791, %v10807
        %v10824 = vadd.f32 %v10792, %v10808
        %v10825 = vadd.f32 %v10793, %v10809
        %v10826 = vadd.f32 %v10794, %v10810
        %v10827 = vadd.f32 %v10795, %v10811
        %v10828 = vadd.f32 %v10796, %v10812
        %v10829 = vadd.f32 %v10797, %v10813
        %v10830 = vadd.f32 %v10798, %v10814
        %v10831 = vadd.f32 %v10799, %v10815
        %v10832 = vadd.f32 %v10800, %v10816
        %v10833 = vadd.f32 %v10801, %v10817
        %v10834 = vadd.f32 %v10802, %v10818
        %v10835 = vadd.f32 %v10803, %v10819
        %v10836 = vlaneseq
        %v10837 = vshrl.u32 %v10836, 7
        %v10838 = vadd.s32 %v10837, 8
        %v10839 = vadd.s32 %v10837, 16
        %v10840 = vadd.s32 %v10837, 24
        %v10841 = vadd.s32 %v10837, 32
        %v10842 = vadd.s32 %v10837, 40
        %v10843 = vadd.s32 %v10837, 48
        %v10844 = vadd.s32 %v10837, 56
        %v10845 = vadd.s32 %v10837, 64
        %v10846 = vadd.s32 %v10837, 72
        %v10847 = vadd.s32 %v10837, 80
        %v10848 = vadd.s32 %v10837, 88
        %v10849 = vadd.s32 %v10837, 96
        %v10850 = vadd.s32 %v10837, 104
        %v10851 = vadd.s32 %v10837, 112
        %v10852 = vadd.s32 %v10837, 120
        %vm10853 = vcmp.lt.s32.totalorder %v10837, 126
        %vm10854 = vcmp.lt.s32.totalorder %v10838, 126
        %vm10855 = vcmp.lt.s32.totalorder %v10839, 126
        %vm10856 = vcmp.lt.s32.totalorder %v10840, 126
        %vm10857 = vcmp.lt.s32.totalorder %v10841, 126
        %vm10858 = vcmp.lt.s32.totalorder %v10842, 126
        %vm10859 = vcmp.lt.s32.totalorder %v10843, 126
        %vm10860 = vcmp.lt.s32.totalorder %v10844, 126
        %vm10861 = vcmp.lt.s32.totalorder %v10845, 126
        %vm10862 = vcmp.lt.s32.totalorder %v10846, 126
        %vm10863 = vcmp.lt.s32.totalorder %v10847, 126
        %vm10864 = vcmp.lt.s32.totalorder %v10848, 126
        %vm10865 = vcmp.lt.s32.totalorder %v10849, 126
        %vm10866 = vcmp.lt.s32.totalorder %v10850, 126
        %vm10867 = vcmp.lt.s32.totalorder %v10851, 126
        %vm10868 = vcmp.lt.s32.totalorder %v10852, 126
        %v10869 = vsel %vm10853, %v10820, 0.0
        %v10870 = vsel %vm10854, %v10821, 0.0
        %v10871 = vsel %vm10855, %v10822, 0.0
        %v10872 = vsel %vm10856, %v10823, 0.0
        %v10873 = vsel %vm10857, %v10824, 0.0
        %v10874 = vsel %vm10858, %v10825, 0.0
        %v10875 = vsel %vm10859, %v10826, 0.0
        %v10876 = vsel %vm10860, %v10827, 0.0
        %v10877 = vsel %vm10861, %v10828, 0.0
        %v10878 = vsel %vm10862, %v10829, 0.0
        %v10879 = vsel %vm10863, %v10830, 0.0
        %v10880 = vsel %vm10864, %v10831, 0.0
        %v10881 = vsel %vm10865, %v10832, 0.0
        %v10882 = vsel %vm10866, %v10833, 0.0
        %v10883 = vsel %vm10867, %v10834, 0.0
        %v10884 = vsel %vm10868, %v10835, 0.0
        %v10885 = vmax.f32 %v10869, %v10873
        %v10886 = vmax.f32 %v10870, %v10874
        %v10887 = vmax.f32 %v10871, %v10875
        %v10888 = vmax.f32 %v10872, %v10876
        %v10889 = vmax.f32 %v10885, %v10877
        %v10890 = vmax.f32 %v10886, %v10878
        %v10891 = vmax.f32 %v10887, %v10879
        %v10892 = vmax.f32 %v10888, %v10880
        %v10893 = vmax.f32 %v10889, %v10881
        %v10894 = vmax.f32 %v10890, %v10882
        %v10895 = vmax.f32 %v10891, %v10883
        %v10896 = vmax.f32 %v10892, %v10884
        %v10897 = vmax.f32 %v10893, %v10894
        %v10898 = vmax.f32 %v10895, %v10896
        %v10899 = vmax.f32 %v10897, %v10898
        %10900 = vmax.xlane.f32.xlu0 %v10899
        %v10901 = vpop.xlane.xlu0 %10900
        %v10902 = vrot.slane %v10901, 4
        %v10903 = vmax.f32 %v10901, %v10902
        %v10904 = vrot.slane %v10903, 2
        %v10905 = vmax.f32 %v10903, %v10904
        %v10906 = vrot.slane %v10905, 1
        %v10907 = vmax.f32 %v10905, %v10906
        %s10908 = vtos %v10907
        %v10909 = vmax.f32 %v10869, 1e-10
        %v10910 = vmax.f32 %v10870, 1e-10
        %v10911 = vmax.f32 %v10871, 1e-10
        %v10912 = vmax.f32 %v10872, 1e-10
        %v10913 = vmax.f32 %v10873, 1e-10
        %v10914 = vmax.f32 %v10874, 1e-10
        %v10915 = vmax.f32 %v10875, 1e-10
        %v10916 = vmax.f32 %v10876, 1e-10
        %v10917 = vmax.f32 %v10877, 1e-10
        %v10918 = vmax.f32 %v10878, 1e-10
        %v10919 = vmax.f32 %v10879, 1e-10
        %v10920 = vmax.f32 %v10880, 1e-10
        %v10921 = vmax.f32 %v10881, 1e-10
        %v10922 = vmax.f32 %v10882, 1e-10
        %v10923 = vmax.f32 %v10883, 1e-10
        %v10924 = vmax.f32 %v10884, 1e-10
        %v10925 = vlog2.pop %v10909
        %v10926 = vmul.f32 %v10925, 0.6931472
        %v10927 = vlog2.pop %v10910
        %v10928 = vmul.f32 %v10927, 0.6931472
        %v10929 = vlog2.pop %v10911
        %v10930 = vmul.f32 %v10929, 0.6931472
        %v10931 = vlog2.pop %v10912
        %v10932 = vmul.f32 %v10931, 0.6931472
        %v10933 = vlog2.pop %v10913
        %v10934 = vmul.f32 %v10933, 0.6931472
        %v10935 = vlog2.pop %v10914
        %v10936 = vmul.f32 %v10935, 0.6931472
        %v10937 = vlog2.pop %v10915
        %v10938 = vmul.f32 %v10937, 0.6931472
        %v10939 = vlog2.pop %v10916
        %v10940 = vmul.f32 %v10939, 0.6931472
        %v10941 = vlog2.pop %v10917
        %v10942 = vmul.f32 %v10941, 0.6931472
        %v10943 = vlog2.pop %v10918
        %v10944 = vmul.f32 %v10943, 0.6931472
        %v10945 = vlog2.pop %v10919
        %v10946 = vmul.f32 %v10945, 0.6931472
        %v10947 = vlog2.pop %v10920
        %v10948 = vmul.f32 %v10947, 0.6931472
        %v10949 = vlog2.pop %v10921
        %v10950 = vmul.f32 %v10949, 0.6931472
        %v10951 = vlog2.pop %v10922
        %v10952 = vmul.f32 %v10951, 0.6931472
        %v10953 = vlog2.pop %v10923
        %v10954 = vmul.f32 %v10953, 0.6931472
        %v10955 = vlog2.pop %v10924
        %v10956 = vmul.f32 %v10955, 0.6931472
        %v10957 = vmul.f32 %v10926, 0.4342945
        %v10958 = vmul.f32 %v10928, 0.4342945
        %v10959 = vmul.f32 %v10930, 0.4342945
        %v10960 = vmul.f32 %v10932, 0.4342945
        %v10961 = vmul.f32 %v10934, 0.4342945
        %v10962 = vmul.f32 %v10936, 0.4342945
        %v10963 = vmul.f32 %v10938, 0.4342945
        %v10964 = vmul.f32 %v10940, 0.4342945
        %v10965 = vmul.f32 %v10942, 0.4342945
        %v10966 = vmul.f32 %v10944, 0.4342945
        %v10967 = vmul.f32 %v10946, 0.4342945
        %v10968 = vmul.f32 %v10948, 0.4342945
        %v10969 = vmul.f32 %v10950, 0.4342945
        %v10970 = vmul.f32 %v10952, 0.4342945
        %v10971 = vmul.f32 %v10954, 0.4342945
        %v10972 = vmul.f32 %v10956, 0.4342945
        %v10973 = vmul.f32 %v10957, 10.0
        %v10974 = vmul.f32 %v10958, 10.0
        %v10975 = vmul.f32 %v10959, 10.0
        %v10976 = vmul.f32 %v10960, 10.0
        %v10977 = vmul.f32 %v10961, 10.0
        %v10978 = vmul.f32 %v10962, 10.0
        %v10979 = vmul.f32 %v10963, 10.0
        %v10980 = vmul.f32 %v10964, 10.0
        %v10981 = vmul.f32 %v10965, 10.0
        %v10982 = vmul.f32 %v10966, 10.0
        %v10983 = vmul.f32 %v10967, 10.0
        %v10984 = vmul.f32 %v10968, 10.0
        %v10985 = vmul.f32 %v10969, 10.0
        %v10986 = vmul.f32 %v10970, 10.0
        %v10987 = vmul.f32 %v10971, 10.0
        %v10988 = vmul.f32 %v10972, 10.0
        %s10989 = smax.f32 %s10908, 1e-10
        %v10990 = vstv %s10989
        %v10991 = vlog2.pop %v10990
        %v10992 = vmul.f32 %v10991, 0.6931472
        %s10993 = vtos %v10992
        %s10994 = smul.f32 %s10993, 0.4342945
        %s10995 = smul.f32 %s10994, 10.0
        %v10996 = vstv %s10995
        %v10997 = vsub.f32 %v10973, %v10996
        %v10998 = vsub.f32 %v10974, %v10996
        %v10999 = vsub.f32 %v10975, %v10996
        %v11000 = vsub.f32 %v10976, %v10996
        %v11001 = vsub.f32 %v10977, %v10996
        %v11002 = vsub.f32 %v10978, %v10996
        %v11003 = vsub.f32 %v10979, %v10996
        %v11004 = vsub.f32 %v10980, %v10996
        %v11005 = vsub.f32 %v10981, %v10996
        %v11006 = vsub.f32 %v10982, %v10996
        %v11007 = vsub.f32 %v10983, %v10996
        %v11008 = vsub.f32 %v10984, %v10996
        %v11009 = vsub.f32 %v10985, %v10996
        %v11010 = vsub.f32 %v10986, %v10996
        %v11011 = vsub.f32 %v10987, %v10996
        %v11012 = vsub.f32 %v10988, %v10996
        %v11013 = vmax.f32 %v10997, -80.0
        %v11014 = vmax.f32 %v10998, -80.0
        %v11015 = vmax.f32 %v10999, -80.0
        %v11016 = vmax.f32 %v11000, -80.0
        %v11017 = vmax.f32 %v11001, -80.0
        %v11018 = vmax.f32 %v11002, -80.0
        %v11019 = vmax.f32 %v11003, -80.0
        %v11020 = vmax.f32 %v11004, -80.0
        %v11021 = vmax.f32 %v11005, -80.0
        %v11022 = vmax.f32 %v11006, -80.0
        %v11023 = vmax.f32 %v11007, -80.0
        %v11024 = vmax.f32 %v11008, -80.0
        %v11025 = vmax.f32 %v11009, -80.0
        %v11026 = vmax.f32 %v11010, -80.0
        %v11027 = vmax.f32 %v11011, -80.0
        %v11028 = vmax.f32 %v11012, -80.0
        %11029 = vst [vmem:[%s180] sm:$0xff] %v11013
        %11030 = vst [vmem:[%s180 + $0x8] sm:$0xff] %v11014
        %11031 = vst [vmem:[%s180 + $0x10] sm:$0xff] %v11015
        %11032 = vst [vmem:[%s180 + $0x18] sm:$0xff] %v11016
        %11033 = vst [vmem:[%s180 + $0x20] sm:$0xff] %v11017
        %11034 = vst [vmem:[%s180 + $0x28] sm:$0xff] %v11018
        %11035 = vst [vmem:[%s180 + $0x30] sm:$0xff] %v11019
        %11036 = vst [vmem:[%s180 + $0x38] sm:$0xff] %v11020
        %11037 = vst [vmem:[%s180 + $0x40] sm:$0xff] %v11021
        %11038 = vst [vmem:[%s180 + $0x48] sm:$0xff] %v11022
        %11039 = vst [vmem:[%s180 + $0x50] sm:$0xff] %v11023
        %11040 = vst [vmem:[%s180 + $0x58] sm:$0xff] %v11024
        %11041 = vst [vmem:[%s180 + $0x60] sm:$0xff] %v11025
        %11042 = vst [vmem:[%s180 + $0x68] sm:$0xff] %v11026
        %11043 = vst [vmem:[%s180 + $0x70] sm:$0xff] %v11027
        %11044 = vst [vmem:[%s180 + $0x78] sm:$0xff] %v11028
        %s11045 = sand.u32 %s75, 1
        %s11046 = scalar_lea.sflag [#allocation5], %s11045
        %s11047 = sand.u32 %s75, 1
        %s11048 = smul.addr %s11047, 128
        %s11049 = scalar_lea.vmem [#allocation8], %s11048
        // Predicated region
        $region37: #{tpu_custom_call.1} parent=27 // pred_check
          %p11050 = pneg %p85
        $region38: #{tpu_custom_call.1} parent=27 // pred_check_branch
          %11052 = sbr.rel (%p11050) target = $region40
        $region39: #{tpu_custom_call.1} parent=27 // pred_region
          %11054 = vsyncadd %s11046, 0
          %s11055 = smul.addr %s20, 16
          %s11056 = smul.addr %s11055, 8
          %s11057 = scalar_lea.hbm %s2, %s11056
          %s11058 = sshll.u32 %s11049, 4
          %s11059 = int_to_ptr.vmem [resolvable:$true] %s11058
          %s11060 = sshll.u32 %s11057, 4
          %s11061 = int_to_ptr.hbm [resolvable:$true] %s11060
          %11066 = dma.vmem_to_hbm [thread:$0]  %s11059, 2048, %s11061, %s11046, 128, 128, 8
        $region40: #{tpu_custom_call.1} parent=27 // pred_fallthru
          _
      $region28: #{tpu_custom_call.1} parent=5 // pred_fallthru
        _
      %p11067 = scmp.le.s32.totalorder 2, %s15
      // Predicated region
      $region41: #{tpu_custom_call.1} parent=5 // pred_check
        %p11068 = pneg %p11067
      $region42: #{tpu_custom_call.1} parent=5 // pred_check_branch
        %11070 = sbr.rel (%p11068) target = $region44
      $region43: #{tpu_custom_call.1} parent=5 // pred_region
        %s11071 = ssub.s32 %s15, 2
        // Predicated region
        $region45: #{tpu_custom_call.1} parent=43 // pred_check
          %p11072 = pneg %p91
        $region46: #{tpu_custom_call.1} parent=43 // pred_check_branch
          %11074 = sbr.rel (%p11072) target = $region48
        $region47: #{tpu_custom_call.1} parent=43 // pred_region
          %s11075 = sand.u32 %s76, 1
          %s11076 = scalar_lea.sflag [#allocation5], %s11075
          %s11077 = sand.u32 %s76, 1
          %s11078 = smul.addr %s11077, 128
          %s11079 = scalar_lea.vmem [#allocation8], %s11078
          %11081 = dma.done %s11076, 2048
        $region48: #{tpu_custom_call.1} parent=43 // pred_fallthru
          _
      $region44: #{tpu_custom_call.1} parent=5 // pred_fallthru
        _
    $region6: #{tpu_custom_call.1} parent=1 // loop_footer
      %s19 = sadd.s32 1, %s15
    $region7: #{tpu_custom_call.1} parent=1 // loop_footer_branch
      %14 = sbr.rel target = $region3
    $region8: #{tpu_custom_call.1} parent=1 // loop_exit
      _
    %11082 = vsyncpa [#allocation4], 1
    %s11083 = scalar_lea.sflag [#allocation4], 1
    %11084 = vsyncpa %s11083, 1
    %11085 = vsyncpa [#allocation7], 1
    %11086 = vsyncpa [#allocation5], 1
    %s11087 = scalar_lea.sflag [#allocation5], 1
    %11088 = vsyncpa %s11087, 1

</llo_original>
